<compile_context>
chip_gen: v7x
topology: tpu7x:2x2x1
jax: 0.10.0
libtpu: 0.0.40
codegen_flags: <defaults>
</compile_context>

<pallas_src>
import functools
import math

import jax
import jax.numpy as jnp
from jax.experimental import pallas as pl
from jax.experimental.pallas import tpu as pltpu


# ----------------------------------------------------------------------------
# helpers
# ----------------------------------------------------------------------------
def _round_up(x, m):
    return (x + m - 1) // m * m


def _pick_tm(M, cap=512):
    """Pick an M-tile <= cap that divides the 8-rounded M with minimal waste."""
    nblk = max(1, -(-M // cap))          # ceil(M / cap)
    return _round_up(-(-M // nblk), 8)   # ceil(M / nblk) rounded to sublane


# ----------------------------------------------------------------------------
# Pallas kernels
# ----------------------------------------------------------------------------
def _matmul_bias_act_kernel(x_ref, w_ref, b_ref, o_ref, *, activation):
    """One GEMM tile (full K, full N) with fused bias (+ ReLU).

    bf16 operands feed the MXU at native rate; accumulate + epilogue in f32.
    """
    acc = jnp.dot(x_ref[...], w_ref[...], preferred_element_type=jnp.float32)
    acc = acc + b_ref[...]
    if activation == "relu":
        acc = jnp.maximum(acc, 0.0)
    o_ref[...] = acc.astype(o_ref.dtype)


def pallas_matmul_bias(x, w, b, activation=None, out_dtype=jnp.float32):
    """y = act(x @ w + b).  1-D grid over M; K/N are single full-extent blocks."""
    M, K = x.shape
    K2, N = w.shape
    assert K == K2
    Kp = _round_up(K, 16)            # bf16 sublane packing only (no 128 pad)
    Np = _round_up(N, 128)           # lane-dense output stores
    tm = _pick_tm(M)
    Mp = _round_up(M, tm)

    xp = jnp.pad(x.astype(jnp.bfloat16), ((0, Mp - M), (0, Kp - K)))
    wp = jnp.pad(w.astype(jnp.bfloat16), ((0, Kp - K), (0, Np - N)))
    bp = jnp.pad(b.astype(jnp.float32), (0, Np - N)).reshape(1, Np)

    kernel = functools.partial(_matmul_bias_act_kernel, activation=activation)
    out = pl.pallas_call(
        kernel,
        out_shape=jax.ShapeDtypeStruct((Mp, Np), out_dtype),
        grid_spec=pltpu.PrefetchScalarGridSpec(
            num_scalar_prefetch=0,
            grid=(Mp // tm,),
            in_specs=[
                pl.BlockSpec((tm, Kp), lambda i: (i, 0)),
                pl.BlockSpec((Kp, Np), lambda i: (0, 0)),
                pl.BlockSpec((1, Np), lambda i: (0, 0)),
            ],
            out_specs=pl.BlockSpec((tm, Np), lambda i: (i, 0)),
        ),
        compiler_params=pltpu.CompilerParams(
            dimension_semantics=("parallel",)),
    )(xp, wp, bp)
    return out[:M, :N]


def _avgpool_fc_kernel(x_ref, w_ref, b_ref, o_ref):
    # x: (R, HW, C) -> pooled (R, C) -> FC on the MXU; all fused in VMEM,
    # removing the separate avg-pool pallas_call and its HBM round trip.
    pooled = jnp.mean(x_ref[...].astype(jnp.float32), axis=1)
    acc = jnp.dot(pooled.astype(jnp.bfloat16), w_ref[...],
                  preferred_element_type=jnp.float32)
    o_ref[...] = acc + b_ref[...]


def pallas_avgpool_fc(x, w, b):
    """Fused global-average-pool (axis 1) + fully-connected layer."""
    R, HW, C = x.shape
    _, N = w.shape
    Rp = _round_up(R, 8)
    Np = _round_up(N, 128)
    xp = jnp.pad(x.astype(jnp.bfloat16), ((0, Rp - R), (0, 0), (0, 0)))
    wp = jnp.pad(w.astype(jnp.bfloat16), ((0, 0), (0, Np - N)))
    bp = jnp.pad(b.astype(jnp.float32), (0, Np - N)).reshape(1, Np)
    out = pl.pallas_call(
        _avgpool_fc_kernel,
        out_shape=jax.ShapeDtypeStruct((Rp, Np), jnp.float32),
    )(xp, wp, bp)
    return out[:R, :N]


def _roi_pool_kernel(idx_ref, m_ref, feat_ref, o_ref):
    # Per-ROI bilinear pooling as a tiny MXU matmul:
    #   pooled[bin, c] = sum_p M[bin, p] * feat[img, p, c]
    # The image block is selected by the scalar-prefetched roi_indices inside
    # the feat BlockSpec index_map, so no gather ever runs in XLA / on the VPU.
    del idx_ref
    o_ref[0] = jnp.dot(m_ref[0], feat_ref[0],
                       preferred_element_type=jnp.float32).astype(o_ref.dtype)


def pallas_roi_pool(feat, rois_fm, roi_indices, out_size):
    # TODO(synk): torchvision RoIPool (quantized max-pool) is approximated by
    # RoIAlign-style bilinear sampling (1 sample per bin), expressed as a
    # per-ROI interpolation-matrix matmul so it maps onto the MXU.
    N, Hf, Wf, C = feat.shape
    R = rois_fm.shape[0]
    P = Hf * Wf
    SS = out_size * out_size

    x1, y1, x2, y2 = rois_fm[:, 0], rois_fm[:, 1], rois_fm[:, 2], rois_fm[:, 3]
    rw = jnp.maximum(x2 - x1, 1.0)
    rh = jnp.maximum(y2 - y1, 1.0)
    g = (jnp.arange(out_size, dtype=jnp.float32) + 0.5) / out_size
    sx = x1[:, None] + g[None, :] * rw[:, None]          # (R, S)
    sy = y1[:, None] + g[None, :] * rh[:, None]          # (R, S)

    def axis_weights(s, size):
        s0 = jnp.floor(s)
        frac = s - s0
        i0 = jnp.clip(s0, 0, size - 1).astype(jnp.int32)
        i1 = jnp.clip(s0 + 1, 0, size - 1).astype(jnp.int32)
        oh0 = jax.nn.one_hot(i0, size, dtype=jnp.float32)
        oh1 = jax.nn.one_hot(i1, size, dtype=jnp.float32)
        return (1.0 - frac)[..., None] * oh0 + frac[..., None] * oh1  # (R,S,size)

    wy = axis_weights(sy, Hf)                            # (R, S, Hf)
    wx = axis_weights(sx, Wf)                            # (R, S, Wf)
    m = jnp.einsum("rih,rjw->rijhw", wy, wx).reshape(R, SS, P)

    feat_flat = feat.reshape(N, P, C).astype(jnp.bfloat16)
    out = pl.pallas_call(
        _roi_pool_kernel,
        out_shape=jax.ShapeDtypeStruct((R, SS, C), jnp.bfloat16),
        grid_spec=pltpu.PrefetchScalarGridSpec(
            num_scalar_prefetch=1,
            grid=(R,),
            in_specs=[
                pl.BlockSpec((1, SS, P), lambda r, idx: (r, 0, 0)),
                pl.BlockSpec((1, P, C), lambda r, idx: (idx[r], 0, 0)),
            ],
            out_specs=pl.BlockSpec((1, SS, C), lambda r, idx: (r, 0, 0)),
        ),
        compiler_params=pltpu.CompilerParams(
            dimension_semantics=("arbitrary",)),
    )(roi_indices.astype(jnp.int32), m.astype(jnp.bfloat16), feat_flat)
    return out.reshape(R, out_size, out_size, C)


# ----------------------------------------------------------------------------
# Conv = (im2col glue for 3x3) + Pallas GEMM; 1x1 convs go straight to GEMM
# ----------------------------------------------------------------------------
def _im2col(x, kh, kw, stride, padding):
    # x: (N, H, W, C) bf16 -> patches: (N, Ho, Wo, kh*kw*C)
    if padding > 0:
        x = jnp.pad(x, ((0, 0), (padding, padding), (padding, padding), (0, 0)))
    N, Hp, Wp, C = x.shape
    Ho = (Hp - kh) // stride + 1
    Wo = (Wp - kw) // stride + 1
    cols = []
    for i in range(kh):
        for j in range(kw):
            cols.append(x[:, i:i + stride * Ho:stride, j:j + stride * Wo:stride, :])
    patches = jnp.stack(cols, axis=-2)                   # (N, Ho, Wo, kh*kw, C)
    return patches.reshape(N, Ho, Wo, kh * kw * C), Ho, Wo


def conv2d(x, w, b, stride=1, padding=0, activation=None, out_dtype=jnp.bfloat16):
    # x: NHWC (bf16), w: (kh, kw, Cin, Cout)
    kh, kw, cin, cout = w.shape
    N = x.shape[0]
    if kh == 1 and kw == 1 and stride == 1 and padding == 0:
        H, W = x.shape[1], x.shape[2]
        y = pallas_matmul_bias(x.reshape(N * H * W, cin), w.reshape(cin, cout),
                               b, activation, out_dtype)
        return y.reshape(N, H, W, cout)
    # TODO(synk): 3x3 convs still go through an XLA-side im2col (now in bf16);
    # a direct shifted-accumulation Pallas conv would remove the patch blow-up.
    patches, Ho, Wo = _im2col(x, kh, kw, stride, padding)
    y = pallas_matmul_bias(patches.reshape(N * Ho * Wo, kh * kw * cin),
                           w.reshape(kh * kw * cin, cout), b, activation, out_dtype)
    return y.reshape(N, Ho, Wo, cout)


# ----------------------------------------------------------------------------
# Anchors / proposals (glue)
# ----------------------------------------------------------------------------
def generate_anchor_base(base_size=16, ratios=(0.5, 1, 2), anchor_scales=(8, 16, 32)):
    ab = []
    for r in ratios:
        for s in anchor_scales:
            h = base_size * s * math.sqrt(r)
            w = base_size * s * math.sqrt(1.0 / r)
            ab.append([-w / 2.0, -h / 2.0, w / 2.0, h / 2.0])   # (x1,y1,x2,y2)
    return jnp.asarray(ab, jnp.float32)


def enumerate_shifted_anchor(anchor_base, feat_stride, H, W):
    shift_x = jnp.arange(0, W * feat_stride, feat_stride, dtype=jnp.float32)
    shift_y = jnp.arange(0, H * feat_stride, feat_stride, dtype=jnp.float32)
    sx, sy = jnp.meshgrid(shift_x, shift_y)
    shift = jnp.stack([sx.ravel(), sy.ravel(), sx.ravel(), sy.ravel()], axis=1)
    anchors = anchor_base[None, :, :] + shift[:, None, :]
    return anchors.reshape(-1, 4)


def loc2bbox(src, loc):
    w = src[:, 2] - src[:, 0]
    h = src[:, 3] - src[:, 1]
    cx = src[:, 0] + 0.5 * w
    cy = src[:, 1] + 0.5 * h
    dx, dy, dw, dh = loc[:, 0], loc[:, 1], loc[:, 2], loc[:, 3]
    ncx = dx * w + cx
    ncy = dy * h + cy
    nw = jnp.exp(jnp.clip(dw, -10.0, 10.0)) * w
    nh = jnp.exp(jnp.clip(dh, -10.0, 10.0)) * h
    return jnp.stack([ncx - 0.5 * nw, ncy - 0.5 * nh,
                      ncx + 0.5 * nw, ncy + 0.5 * nh], axis=1)


def clip_boxes(boxes, img_size):
    H, W = img_size
    x = jnp.clip(boxes[:, 0::2], 0.0, float(W))
    y = jnp.clip(boxes[:, 1::2], 0.0, float(H))
    return jnp.stack([x[:, 0], y[:, 0], x[:, 1], y[:, 1]], axis=1)


# ----------------------------------------------------------------------------
# Model config / parameters (deterministic synthetic init)
# ----------------------------------------------------------------------------
FEAT_STRIDE = 16
N_ANCHOR = 9          # len(ratios) * len(anchor_scales)
ROI_SIZE = 14
N_ROIS_PER_IMG = 16   # proxy for n_post_nms on this tiny input
# scaled-down channel plan (stand-ins for ResNet50's 1024 / 512 / 2048)
EXTRACTOR_PLAN = [(3, 16), (16, 32), (32, 48), (48, 64)]   # each 3x3 stride-2
FEAT_C = 64
RPN_MID = 32
HEAD_C = 128


def _init_conv(key, kh, kw, cin, cout, wscale=0.05):
    kw_, kb_ = jax.random.split(key)
    # weights stored MXU-ready (bf16); biases stay f32 for the epilogue
    w = (jax.random.normal(kw_, (kh, kw, cin, cout), jnp.float32) * wscale
         ).astype(jnp.bfloat16)
    b = jax.random.normal(kb_, (cout,), jnp.float32) * 0.01
    return w, b


def _init_fc(key, cin, cout, wscale=0.05):
    kw_, kb_ = jax.random.split(key)
    w = (jax.random.normal(kw_, (cin, cout), jnp.float32) * wscale
         ).astype(jnp.bfloat16)
    b = jax.random.normal(kb_, (cout,), jnp.float32) * 0.01
    return w, b


def init_params(key, num_classes):
    n_class = num_classes + 1
    keys = jax.random.split(key, 16)
    params = {}
    # TODO(synk): full pretrained ResNet50 backbone/classifier not replicated;
    # scaled-down conv stack with the same overall stride (16) and roles.
    for i, (cin, cout) in enumerate(EXTRACTOR_PLAN):
        params[f"ext{i}_w"], params[f"ext{i}_b"] = _init_conv(keys[i], 3, 3, cin, cout)
    params["rpn_conv_w"], params["rpn_conv_b"] = _init_conv(keys[5], 3, 3, FEAT_C, RPN_MID)
    params["rpn_loc_w"], params["rpn_loc_b"] = _init_conv(keys[6], 1, 1, RPN_MID, N_ANCHOR * 4, 0.01)
    params["rpn_score_w"], params["rpn_score_b"] = _init_conv(keys[7], 1, 1, RPN_MID, N_ANCHOR * 2, 0.01)
    params["head_conv_w"], params["head_conv_b"] = _init_conv(keys[8], 3, 3, FEAT_C, HEAD_C)
    params["cls_loc_w"], params["cls_loc_b"] = _init_fc(keys[9], HEAD_C, n_class * 4, 0.001)
    params["score_w"], params["score_b"] = _init_fc(keys[10], HEAD_C, n_class, 0.01)
    return params


# ----------------------------------------------------------------------------
# Network stages
# ----------------------------------------------------------------------------
def extractor_forward(params, x_nhwc):
    h = x_nhwc
    for i in range(len(EXTRACTOR_PLAN)):
        h = conv2d(h, params[f"ext{i}_w"], params[f"ext{i}_b"],
                   stride=2, padding=1, activation="relu")
    return h                                             # (N, H/16, W/16, FEAT_C) bf16


def rpn_forward(params, feat, img_size, scale=1.0):
    N, Hf, Wf, _ = feat.shape
    h = conv2d(feat, params["rpn_conv_w"], params["rpn_conv_b"], 1, 1, "relu")
    # fused loc + score 1x1 conv: one GEMM over the shared RPN hidden feature
    w_ls = jnp.concatenate([params["rpn_loc_w"], params["rpn_score_w"]], axis=3)
    b_ls = jnp.concatenate([params["rpn_loc_b"], params["rpn_score_b"]])
    ls = conv2d(h, w_ls, b_ls, 1, 0, None, out_dtype=jnp.float32)
    locs = ls[..., :N_ANCHOR * 4]
    scores = ls[..., N_ANCHOR * 4:]

    rpn_locs = locs.reshape(N, Hf * Wf * N_ANCHOR, 4)
    rpn_scores = scores.reshape(N, Hf * Wf * N_ANCHOR, 2)
    fg_scores = jax.nn.softmax(rpn_scores, axis=-1)[..., 1]

    anchor = enumerate_shifted_anchor(generate_anchor_base(), FEAT_STRIDE, Hf, Wf)

    rois_list, idx_list = [], []
    for n in range(N):
        boxes = loc2bbox(anchor, rpn_locs[n])
        boxes = clip_boxes(boxes, img_size)
        # TODO(synk): true NMS has no clean Pallas/TPU equivalent here; proposals
        # are selected by top-k objectness score instead.
        _, top = jax.lax.top_k(fg_scores[n], N_ROIS_PER_IMG)
        rois_list.append(boxes[top])
        idx_list.append(jnp.full((N_ROIS_PER_IMG,), n, jnp.int32))
    rois = jnp.stack(rois_list)                          # (N, R, 4) image coords
    roi_indices = jnp.stack(idx_list)                    # (N, R)
    return rpn_locs, rpn_scores, rois, roi_indices, anchor


def head_forward(params, feat, rois, roi_indices, img_size):
    N, Hf, Wf, C = feat.shape
    R_per = rois.shape[1]
    rois_flat = rois.reshape(-1, 4)
    idx_flat = roi_indices.reshape(-1)

    # map rois from image coords to feature-map coords (spatial_scale = 1 path)
    scale_vec = jnp.array([Wf / img_size[1], Hf / img_size[0],
                           Wf / img_size[1], Hf / img_size[0]], jnp.float32)
    rois_fm = rois_flat * scale_vec

    pooled = pallas_roi_pool(feat, rois_fm, idx_flat, ROI_SIZE)   # (R,14,14,C) bf16
    h = conv2d(pooled, params["head_conv_w"], params["head_conv_b"],
               stride=2, padding=1, activation="relu")            # (R,7,7,HEAD_C)
    R = h.shape[0]
    # fused: global average pool + (cls_loc | score) FC in one Pallas call
    w_fc = jnp.concatenate([params["cls_loc_w"], params["score_w"]], axis=1)
    b_fc = jnp.concatenate([params["cls_loc_b"], params["score_b"]])
    out = pallas_avgpool_fc(h.reshape(R, 7 * 7, HEAD_C), w_fc, b_fc)  # (R, 20) f32
    n_loc = params["cls_loc_w"].shape[1]
    roi_cls_locs = out[:, :n_loc]
    roi_scores = out[:, n_loc:]
    return (roi_cls_locs.reshape(N, R_per, -1),
            roi_scores.reshape(N, R_per, -1))


def faster_rcnn_forward(params, x_nchw, scale=1.0):
    # mode == 'forward' path of the PyTorch module
    img_size = x_nchw.shape[2:]
    x = jnp.transpose(x_nchw, (0, 2, 3, 1)).astype(jnp.bfloat16)  # NCHW -> NHWC bf16
    base_feature = extractor_forward(params, x)
    _, _, rois, roi_indices, _ = rpn_forward(params, base_feature, img_size, scale)
    roi_cls_locs, roi_scores = head_forward(params, base_feature, rois,
                                            roi_indices, img_size)
    return roi_cls_locs, roi_scores, rois, roi_indices


# ----------------------------------------------------------------------------
if __name__ == "__main__":
    key = jax.random.PRNGKey(0)
    kx, kp = jax.random.split(key)
    x = jax.random.normal(kx, (2, 3, 64, 64), jnp.float32)   # NCHW input
    params = init_params(kp, num_classes=3)

    fwd = jax.jit(functools.partial(faster_rcnn_forward, params))
    roi_cls_locs, roi_scores, rois, roi_indices = fwd(x)
    jax.block_until_ready((roi_cls_locs, roi_scores, rois, roi_indices))

    assert roi_cls_locs.shape == (2, N_ROIS_PER_IMG, 4 * 4)
    assert roi_scores.shape == (2, N_ROIS_PER_IMG, 4)
    assert rois.shape == (2, N_ROIS_PER_IMG, 4)
    assert roi_indices.shape == (2, N_ROIS_PER_IMG)
    print("KERNEL_OK")
</pallas_src>

<mosaic_0001>
module attributes {stable_mosaic.version = 11 : i64} {
  func.func @_matmul_bias_act_kernel(%arg0: i32, %arg1: memref<512x32xbf16, #tpu.memory_space<vmem>>, %arg2: memref<32x128xbf16, #tpu.memory_space<vmem>>, %arg3: memref<1x128xf32, #tpu.memory_space<vmem>>, %arg4: memref<512x128xbf16, #tpu.memory_space<vmem>>) attributes {dimension_semantics = [#tpu.dimension_semantics<parallel>], iteration_bounds = array<i64: 4>, scalar_prefetch = 0 : i64, scratch_operands = 0 : i64, tpu.core_type = #tpu.core_type<tc>, window_params = [{transform_indices = @transform_0, window_bounds = array<i64: 512, 32>}, {pipeline_mode = #tpu.pipeline_mode<synchronous>, transform_indices = @transform_1, window_bounds = array<i64: 32, 128>}, {pipeline_mode = #tpu.pipeline_mode<synchronous>, transform_indices = @transform_2, window_bounds = array<i64: 1, 128>}, {transform_indices = @transform_3, window_bounds = array<i64: 512, 128>}]} {
    %c0 = arith.constant 0 : index
    %c0_0 = arith.constant 0 : index
    %0 = vector.load %arg1[%c0, %c0_0] : memref<512x32xbf16, #tpu.memory_space<vmem>>, vector<512x32xbf16>
    %c0_1 = arith.constant 0 : index
    %c0_2 = arith.constant 0 : index
    %1 = vector.load %arg2[%c0_1, %c0_2] : memref<32x128xbf16, #tpu.memory_space<vmem>>, vector<32x128xbf16>
    %cst = arith.constant dense<0.000000e+00> : vector<512x128xf32>
    %2 = tpu.matmul %0, %1, %cst {dimension_numbers = #tpu.dot_dimension_numbers<[1], [0], [0], [1], [0, 0, 1, 1], [], []>} : vector<512x32xbf16>, vector<32x128xbf16>, vector<512x128xf32> -> vector<512x128xf32>
    %c0_3 = arith.constant 0 : index
    %c0_4 = arith.constant 0 : index
    %3 = vector.load %arg3[%c0_3, %c0_4] : memref<1x128xf32, #tpu.memory_space<vmem>>, vector<1x128xf32>
    %4 = vector.broadcast %3 : vector<1x128xf32> to vector<512x128xf32>
    %5 = arith.addf %2, %4 : vector<512x128xf32>
    %cst_5 = arith.constant 0.000000e+00 : f32
    %6 = vector.broadcast %cst_5 : f32 to vector<512x128xf32>
    %7 = arith.maximumf %5, %6 : vector<512x128xf32>
    %8 = arith.truncf %7 : vector<512x128xf32> to vector<512x128xbf16>
    %c0_6 = arith.constant 0 : index
    %c0_7 = arith.constant 0 : index
    %9 = vector.load %arg4[%c0_6, %c0_7] : memref<512x128xbf16, #tpu.memory_space<vmem>>, vector<512x128xbf16>
    tpu.vector_store %arg4[%c0_6, %c0_7], %8 {strides = array<i32>} : memref<512x128xbf16, #tpu.memory_space<vmem>>, vector<512x128xbf16>,
    return
  }
  func.func @transform_0(%arg0: i32) -> (i32, i32) {
    %c0_i32 = arith.constant 0 : i32
    %c0_i32_0 = arith.constant 0 : i32
    return %arg0, %c0_i32 : i32, i32
  }
  func.func @transform_1(%arg0: i32) -> (i32, i32) {
    %c0_i32 = arith.constant 0 : i32
    %c0_i32_0 = arith.constant 0 : i32
    %c0_i32_1 = arith.constant 0 : i32
    return %c0_i32, %c0_i32_0 : i32, i32
  }
  func.func @transform_2(%arg0: i32) -> (i32, i32) {
    %c0_i32 = arith.constant 0 : i32
    %c0_i32_0 = arith.constant 0 : i32
    %c0_i32_1 = arith.constant 0 : i32
    return %c0_i32, %c0_i32_0 : i32, i32
  }
  func.func @transform_3(%arg0: i32) -> (i32, i32) {
    %c0_i32 = arith.constant 0 : i32
    %c0_i32_0 = arith.constant 0 : i32
    return %arg0, %c0_i32 : i32, i32
  }
}

module attributes {stable_mosaic.version = 11 : i64} {
  func.func @_matmul_bias_act_kernel(%arg0: i32, %arg1: memref<512x144xbf16, #tpu.memory_space<vmem>>, %arg2: memref<144x128xbf16, #tpu.memory_space<vmem>>, %arg3: memref<1x128xf32, #tpu.memory_space<vmem>>, %arg4: memref<512x128xbf16, #tpu.memory_space<vmem>>) attributes {dimension_semantics = [#tpu.dimension_semantics<parallel>], iteration_bounds = array<i64: 1>, scalar_prefetch = 0 : i64, scratch_operands = 0 : i64, tpu.core_type = #tpu.core_type<tc>, window_params = [{transform_indices = @transform_0, window_bounds = array<i64: 512, 144>}, {pipeline_mode = #tpu.pipeline_mode<synchronous>, transform_indices = @transform_1, window_bounds = array<i64: 144, 128>}, {pipeline_mode = #tpu.pipeline_mode<synchronous>, transform_indices = @transform_2, window_bounds = array<i64: 1, 128>}, {transform_indices = @transform_3, window_bounds = array<i64: 512, 128>}]} {
    %c0 = arith.constant 0 : index
    %c0_0 = arith.constant 0 : index
    %0 = vector.load %arg1[%c0, %c0_0] : memref<512x144xbf16, #tpu.memory_space<vmem>>, vector<512x144xbf16>
    %c0_1 = arith.constant 0 : index
    %c0_2 = arith.constant 0 : index
    %1 = vector.load %arg2[%c0_1, %c0_2] : memref<144x128xbf16, #tpu.memory_space<vmem>>, vector<144x128xbf16>
    %cst = arith.constant dense<0.000000e+00> : vector<512x128xf32>
    %2 = tpu.matmul %0, %1, %cst {dimension_numbers = #tpu.dot_dimension_numbers<[1], [0], [0], [1], [0, 0, 1, 1], [], []>} : vector<512x144xbf16>, vector<144x128xbf16>, vector<512x128xf32> -> vector<512x128xf32>
    %c0_3 = arith.constant 0 : index
    %c0_4 = arith.constant 0 : index
    %3 = vector.load %arg3[%c0_3, %c0_4] : memref<1x128xf32, #tpu.memory_space<vmem>>, vector<1x128xf32>
    %4 = vector.broadcast %3 : vector<1x128xf32> to vector<512x128xf32>
    %5 = arith.addf %2, %4 : vector<512x128xf32>
    %cst_5 = arith.constant 0.000000e+00 : f32
    %6 = vector.broadcast %cst_5 : f32 to vector<512x128xf32>
    %7 = arith.maximumf %5, %6 : vector<512x128xf32>
    %8 = arith.truncf %7 : vector<512x128xf32> to vector<512x128xbf16>
    %c0_6 = arith.constant 0 : index
    %c0_7 = arith.constant 0 : index
    %9 = vector.load %arg4[%c0_6, %c0_7] : memref<512x128xbf16, #tpu.memory_space<vmem>>, vector<512x128xbf16>
    tpu.vector_store %arg4[%c0_6, %c0_7], %8 {strides = array<i32>} : memref<512x128xbf16, #tpu.memory_space<vmem>>, vector<512x128xbf16>,
    return
  }
  func.func @transform_0(%arg0: i32) -> (i32, i32) {
    %c0_i32 = arith.constant 0 : i32
    %c0_i32_0 = arith.constant 0 : i32
    return %arg0, %c0_i32 : i32, i32
  }
  func.func @transform_1(%arg0: i32) -> (i32, i32) {
    %c0_i32 = arith.constant 0 : i32
    %c0_i32_0 = arith.constant 0 : i32
    %c0_i32_1 = arith.constant 0 : i32
    return %c0_i32, %c0_i32_0 : i32, i32
  }
  func.func @transform_2(%arg0: i32) -> (i32, i32) {
    %c0_i32 = arith.constant 0 : i32
    %c0_i32_0 = arith.constant 0 : i32
    %c0_i32_1 = arith.constant 0 : i32
    return %c0_i32, %c0_i32_0 : i32, i32
  }
  func.func @transform_3(%arg0: i32) -> (i32, i32) {
    %c0_i32 = arith.constant 0 : i32
    %c0_i32_0 = arith.constant 0 : i32
    return %arg0, %c0_i32 : i32, i32
  }
}

module attributes {stable_mosaic.version = 11 : i64} {
  func.func @_matmul_bias_act_kernel(%arg0: i32, %arg1: memref<128x288xbf16, #tpu.memory_space<vmem>>, %arg2: memref<288x128xbf16, #tpu.memory_space<vmem>>, %arg3: memref<1x128xf32, #tpu.memory_space<vmem>>, %arg4: memref<128x128xbf16, #tpu.memory_space<vmem>>) attributes {dimension_semantics = [#tpu.dimension_semantics<parallel>], iteration_bounds = array<i64: 1>, scalar_prefetch = 0 : i64, scratch_operands = 0 : i64, tpu.core_type = #tpu.core_type<tc>, window_params = [{transform_indices = @transform_0, window_bounds = array<i64: 128, 288>}, {pipeline_mode = #tpu.pipeline_mode<synchronous>, transform_indices = @transform_1, window_bounds = array<i64: 288, 128>}, {pipeline_mode = #tpu.pipeline_mode<synchronous>, transform_indices = @transform_2, window_bounds = array<i64: 1, 128>}, {transform_indices = @transform_3, window_bounds = array<i64: 128, 128>}]} {
    %c0 = arith.constant 0 : index
    %c0_0 = arith.constant 0 : index
    %0 = vector.load %arg1[%c0, %c0_0] : memref<128x288xbf16, #tpu.memory_space<vmem>>, vector<128x288xbf16>
    %c0_1 = arith.constant 0 : index
    %c0_2 = arith.constant 0 : index
    %1 = vector.load %arg2[%c0_1, %c0_2] : memref<288x128xbf16, #tpu.memory_space<vmem>>, vector<288x128xbf16>
    %cst = arith.constant dense<0.000000e+00> : vector<128x128xf32>
    %2 = tpu.matmul %0, %1, %cst {dimension_numbers = #tpu.dot_dimension_numbers<[1], [0], [0], [1], [0, 0, 1, 1], [], []>} : vector<128x288xbf16>, vector<288x128xbf16>, vector<128x128xf32> -> vector<128x128xf32>
    %c0_3 = arith.constant 0 : index
    %c0_4 = arith.constant 0 : index
    %3 = vector.load %arg3[%c0_3, %c0_4] : memref<1x128xf32, #tpu.memory_space<vmem>>, vector<1x128xf32>
    %4 = vector.broadcast %3 : vector<1x128xf32> to vector<128x128xf32>
    %5 = arith.addf %2, %4 : vector<128x128xf32>
    %cst_5 = arith.constant 0.000000e+00 : f32
    %6 = vector.broadcast %cst_5 : f32 to vector<128x128xf32>
    %7 = arith.maximumf %5, %6 : vector<128x128xf32>
    %8 = arith.truncf %7 : vector<128x128xf32> to vector<128x128xbf16>
    %c0_6 = arith.constant 0 : index
    %c0_7 = arith.constant 0 : index
    %9 = vector.load %arg4[%c0_6, %c0_7] : memref<128x128xbf16, #tpu.memory_space<vmem>>, vector<128x128xbf16>
    tpu.vector_store %arg4[%c0_6, %c0_7], %8 {strides = array<i32>} : memref<128x128xbf16, #tpu.memory_space<vmem>>, vector<128x128xbf16>,
    return
  }
  func.func @transform_0(%arg0: i32) -> (i32, i32) {
    %c0_i32 = arith.constant 0 : i32
    %c0_i32_0 = arith.constant 0 : i32
    return %arg0, %c0_i32 : i32, i32
  }
  func.func @transform_1(%arg0: i32) -> (i32, i32) {
    %c0_i32 = arith.constant 0 : i32
    %c0_i32_0 = arith.constant 0 : i32
    %c0_i32_1 = arith.constant 0 : i32
    return %c0_i32, %c0_i32_0 : i32, i32
  }
  func.func @transform_2(%arg0: i32) -> (i32, i32) {
    %c0_i32 = arith.constant 0 : i32
    %c0_i32_0 = arith.constant 0 : i32
    %c0_i32_1 = arith.constant 0 : i32
    return %c0_i32, %c0_i32_0 : i32, i32
  }
  func.func @transform_3(%arg0: i32) -> (i32, i32) {
    %c0_i32 = arith.constant 0 : i32
    %c0_i32_0 = arith.constant 0 : i32
    return %arg0, %c0_i32 : i32, i32
  }
}

module attributes {stable_mosaic.version = 11 : i64} {
  func.func @_matmul_bias_act_kernel(%arg0: i32, %arg1: memref<32x432xbf16, #tpu.memory_space<vmem>>, %arg2: memref<432x128xbf16, #tpu.memory_space<vmem>>, %arg3: memref<1x128xf32, #tpu.memory_space<vmem>>, %arg4: memref<32x128xbf16, #tpu.memory_space<vmem>>) attributes {dimension_semantics = [#tpu.dimension_semantics<parallel>], iteration_bounds = array<i64: 1>, scalar_prefetch = 0 : i64, scratch_operands = 0 : i64, tpu.core_type = #tpu.core_type<tc>, window_params = [{transform_indices = @transform_0, window_bounds = array<i64: 32, 432>}, {pipeline_mode = #tpu.pipeline_mode<synchronous>, transform_indices = @transform_1, window_bounds = array<i64: 432, 128>}, {pipeline_mode = #tpu.pipeline_mode<synchronous>, transform_indices = @transform_2, window_bounds = array<i64: 1, 128>}, {transform_indices = @transform_3, window_bounds = array<i64: 32, 128>}]} {
    %c0 = arith.constant 0 : index
    %c0_0 = arith.constant 0 : index
    %0 = vector.load %arg1[%c0, %c0_0] : memref<32x432xbf16, #tpu.memory_space<vmem>>, vector<32x432xbf16>
    %c0_1 = arith.constant 0 : index
    %c0_2 = arith.constant 0 : index
    %1 = vector.load %arg2[%c0_1, %c0_2] : memref<432x128xbf16, #tpu.memory_space<vmem>>, vector<432x128xbf16>
    %cst = arith.constant dense<0.000000e+00> : vector<32x128xf32>
    %2 = tpu.matmul %0, %1, %cst {dimension_numbers = #tpu.dot_dimension_numbers<[1], [0], [0], [1], [0, 0, 1, 1], [], []>} : vector<32x432xbf16>, vector<432x128xbf16>, vector<32x128xf32> -> vector<32x128xf32>
    %c0_3 = arith.constant 0 : index
    %c0_4 = arith.constant 0 : index
    %3 = vector.load %arg3[%c0_3, %c0_4] : memref<1x128xf32, #tpu.memory_space<vmem>>, vector<1x128xf32>
    %4 = vector.broadcast %3 : vector<1x128xf32> to vector<32x128xf32>
    %5 = arith.addf %2, %4 : vector<32x128xf32>
    %cst_5 = arith.constant 0.000000e+00 : f32
    %6 = vector.broadcast %cst_5 : f32 to vector<32x128xf32>
    %7 = arith.maximumf %5, %6 : vector<32x128xf32>
    %8 = arith.truncf %7 : vector<32x128xf32> to vector<32x128xbf16>
    %c0_6 = arith.constant 0 : index
    %c0_7 = arith.constant 0 : index
    %9 = vector.load %arg4[%c0_6, %c0_7] : memref<32x128xbf16, #tpu.memory_space<vmem>>, vector<32x128xbf16>
    tpu.vector_store %arg4[%c0_6, %c0_7], %8 {strides = array<i32>} : memref<32x128xbf16, #tpu.memory_space<vmem>>, vector<32x128xbf16>,
    return
  }
  func.func @transform_0(%arg0: i32) -> (i32, i32) {
    %c0_i32 = arith.constant 0 : i32
    %c0_i32_0 = arith.constant 0 : i32
    return %arg0, %c0_i32 : i32, i32
  }
  func.func @transform_1(%arg0: i32) -> (i32, i32) {
    %c0_i32 = arith.constant 0 : i32
    %c0_i32_0 = arith.constant 0 : i32
    %c0_i32_1 = arith.constant 0 : i32
    return %c0_i32, %c0_i32_0 : i32, i32
  }
  func.func @transform_2(%arg0: i32) -> (i32, i32) {
    %c0_i32 = arith.constant 0 : i32
    %c0_i32_0 = arith.constant 0 : i32
    %c0_i32_1 = arith.constant 0 : i32
    return %c0_i32, %c0_i32_0 : i32, i32
  }
  func.func @transform_3(%arg0: i32) -> (i32, i32) {
    %c0_i32 = arith.constant 0 : i32
    %c0_i32_0 = arith.constant 0 : i32
    return %arg0, %c0_i32 : i32, i32
  }
}

module attributes {stable_mosaic.version = 11 : i64} {
  func.func @_matmul_bias_act_kernel(%arg0: i32, %arg1: memref<32x576xbf16, #tpu.memory_space<vmem>>, %arg2: memref<576x128xbf16, #tpu.memory_space<vmem>>, %arg3: memref<1x128xf32, #tpu.memory_space<vmem>>, %arg4: memref<32x128xbf16, #tpu.memory_space<vmem>>) attributes {dimension_semantics = [#tpu.dimension_semantics<parallel>], iteration_bounds = array<i64: 1>, scalar_prefetch = 0 : i64, scratch_operands = 0 : i64, tpu.core_type = #tpu.core_type<tc>, window_params = [{transform_indices = @transform_0, window_bounds = array<i64: 32, 576>}, {pipeline_mode = #tpu.pipeline_mode<synchronous>, transform_indices = @transform_1, window_bounds = array<i64: 576, 128>}, {pipeline_mode = #tpu.pipeline_mode<synchronous>, transform_indices = @transform_2, window_bounds = array<i64: 1, 128>}, {transform_indices = @transform_3, window_bounds = array<i64: 32, 128>}]} {
    %c0 = arith.constant 0 : index
    %c0_0 = arith.constant 0 : index
    %0 = vector.load %arg1[%c0, %c0_0] : memref<32x576xbf16, #tpu.memory_space<vmem>>, vector<32x576xbf16>
    %c0_1 = arith.constant 0 : index
    %c0_2 = arith.constant 0 : index
    %1 = vector.load %arg2[%c0_1, %c0_2] : memref<576x128xbf16, #tpu.memory_space<vmem>>, vector<576x128xbf16>
    %cst = arith.constant dense<0.000000e+00> : vector<32x128xf32>
    %2 = tpu.matmul %0, %1, %cst {dimension_numbers = #tpu.dot_dimension_numbers<[1], [0], [0], [1], [0, 0, 1, 1], [], []>} : vector<32x576xbf16>, vector<576x128xbf16>, vector<32x128xf32> -> vector<32x128xf32>
    %c0_3 = arith.constant 0 : index
    %c0_4 = arith.constant 0 : index
    %3 = vector.load %arg3[%c0_3, %c0_4] : memref<1x128xf32, #tpu.memory_space<vmem>>, vector<1x128xf32>
    %4 = vector.broadcast %3 : vector<1x128xf32> to vector<32x128xf32>
    %5 = arith.addf %2, %4 : vector<32x128xf32>
    %cst_5 = arith.constant 0.000000e+00 : f32
    %6 = vector.broadcast %cst_5 : f32 to vector<32x128xf32>
    %7 = arith.maximumf %5, %6 : vector<32x128xf32>
    %8 = arith.truncf %7 : vector<32x128xf32> to vector<32x128xbf16>
    %c0_6 = arith.constant 0 : index
    %c0_7 = arith.constant 0 : index
    %9 = vector.load %arg4[%c0_6, %c0_7] : memref<32x128xbf16, #tpu.memory_space<vmem>>, vector<32x128xbf16>
    tpu.vector_store %arg4[%c0_6, %c0_7], %8 {strides = array<i32>} : memref<32x128xbf16, #tpu.memory_space<vmem>>, vector<32x128xbf16>,
    return
  }
  func.func @transform_0(%arg0: i32) -> (i32, i32) {
    %c0_i32 = arith.constant 0 : i32
    %c0_i32_0 = arith.constant 0 : i32
    return %arg0, %c0_i32 : i32, i32
  }
  func.func @transform_1(%arg0: i32) -> (i32, i32) {
    %c0_i32 = arith.constant 0 : i32
    %c0_i32_0 = arith.constant 0 : i32
    %c0_i32_1 = arith.constant 0 : i32
    return %c0_i32, %c0_i32_0 : i32, i32
  }
  func.func @transform_2(%arg0: i32) -> (i32, i32) {
    %c0_i32 = arith.constant 0 : i32
    %c0_i32_0 = arith.constant 0 : i32
    %c0_i32_1 = arith.constant 0 : i32
    return %c0_i32, %c0_i32_0 : i32, i32
  }
  func.func @transform_3(%arg0: i32) -> (i32, i32) {
    %c0_i32 = arith.constant 0 : i32
    %c0_i32_0 = arith.constant 0 : i32
    return %arg0, %c0_i32 : i32, i32
  }
}

module attributes {stable_mosaic.version = 11 : i64} {
  func.func @_matmul_bias_act_kernel(%arg0: i32, %arg1: memref<32x32xbf16, #tpu.memory_space<vmem>>, %arg2: memref<32x128xbf16, #tpu.memory_space<vmem>>, %arg3: memref<1x128xf32, #tpu.memory_space<vmem>>, %arg4: memref<32x128xf32, #tpu.memory_space<vmem>>) attributes {dimension_semantics = [#tpu.dimension_semantics<parallel>], iteration_bounds = array<i64: 1>, scalar_prefetch = 0 : i64, scratch_operands = 0 : i64, tpu.core_type = #tpu.core_type<tc>, window_params = [{transform_indices = @transform_0, window_bounds = array<i64: 32, 32>}, {pipeline_mode = #tpu.pipeline_mode<synchronous>, transform_indices = @transform_1, window_bounds = array<i64: 32, 128>}, {pipeline_mode = #tpu.pipeline_mode<synchronous>, transform_indices = @transform_2, window_bounds = array<i64: 1, 128>}, {transform_indices = @transform_3, window_bounds = array<i64: 32, 128>}]} {
    %c0 = arith.constant 0 : index
    %c0_0 = arith.constant 0 : index
    %0 = vector.load %arg1[%c0, %c0_0] : memref<32x32xbf16, #tpu.memory_space<vmem>>, vector<32x32xbf16>
    %c0_1 = arith.constant 0 : index
    %c0_2 = arith.constant 0 : index
    %1 = vector.load %arg2[%c0_1, %c0_2] : memref<32x128xbf16, #tpu.memory_space<vmem>>, vector<32x128xbf16>
    %cst = arith.constant dense<0.000000e+00> : vector<32x128xf32>
    %2 = tpu.matmul %0, %1, %cst {dimension_numbers = #tpu.dot_dimension_numbers<[1], [0], [0], [1], [0, 0, 1, 1], [], []>} : vector<32x32xbf16>, vector<32x128xbf16>, vector<32x128xf32> -> vector<32x128xf32>
    %c0_3 = arith.constant 0 : index
    %c0_4 = arith.constant 0 : index
    %3 = vector.load %arg3[%c0_3, %c0_4] : memref<1x128xf32, #tpu.memory_space<vmem>>, vector<1x128xf32>
    %4 = vector.broadcast %3 : vector<1x128xf32> to vector<32x128xf32>
    %5 = arith.addf %2, %4 : vector<32x128xf32>
    %c0_5 = arith.constant 0 : index
    %c0_6 = arith.constant 0 : index
    %6 = vector.load %arg4[%c0_5, %c0_6] : memref<32x128xf32, #tpu.memory_space<vmem>>, vector<32x128xf32>
    tpu.vector_store %arg4[%c0_5, %c0_6], %5 {strides = array<i32>} : memref<32x128xf32, #tpu.memory_space<vmem>>, vector<32x128xf32>,
    return
  }
  func.func @transform_0(%arg0: i32) -> (i32, i32) {
    %c0_i32 = arith.constant 0 : i32
    %c0_i32_0 = arith.constant 0 : i32
    return %arg0, %c0_i32 : i32, i32
  }
  func.func @transform_1(%arg0: i32) -> (i32, i32) {
    %c0_i32 = arith.constant 0 : i32
    %c0_i32_0 = arith.constant 0 : i32
    %c0_i32_1 = arith.constant 0 : i32
    return %c0_i32, %c0_i32_0 : i32, i32
  }
  func.func @transform_2(%arg0: i32) -> (i32, i32) {
    %c0_i32 = arith.constant 0 : i32
    %c0_i32_0 = arith.constant 0 : i32
    %c0_i32_1 = arith.constant 0 : i32
    return %c0_i32, %c0_i32_0 : i32, i32
  }
  func.func @transform_3(%arg0: i32) -> (i32, i32) {
    %c0_i32 = arith.constant 0 : i32
    %c0_i32_0 = arith.constant 0 : i32
    return %arg0, %c0_i32 : i32, i32
  }
}

module attributes {stable_mosaic.version = 11 : i64} {
  func.func @_roi_pool_kernel(%arg0: i32, %arg1: memref<32xi32, #tpu.memory_space<smem>>, %arg2: memref<1x196x16xbf16, #tpu.memory_space<vmem>>, %arg3: memref<1x16x64xbf16, #tpu.memory_space<vmem>>, %arg4: memref<1x196x64xbf16, #tpu.memory_space<vmem>>) attributes {dimension_semantics = [#tpu.dimension_semantics<arbitrary>], iteration_bounds = array<i64: 32>, scalar_prefetch = 1 : i64, scratch_operands = 0 : i64, tpu.core_type = #tpu.core_type<tc>, window_params = [{transform_indices = @transform_0, window_bounds = array<i64: 1, 196, 16>}, {transform_indices = @transform_1, window_bounds = array<i64: 1, 16, 64>}, {transform_indices = @transform_2, window_bounds = array<i64: 1, 196, 64>}]} {
    %c0 = arith.constant 0 : index
    %c0_0 = arith.constant 0 : index
    %c0_1 = arith.constant 0 : index
    %0 = vector.load %arg2[%c0, %c0_0, %c0_1] : memref<1x196x16xbf16, #tpu.memory_space<vmem>>, vector<1x196x16xbf16>
    %1 = vector.shape_cast %0 : vector<1x196x16xbf16> to vector<196x16xbf16>
    %c0_2 = arith.constant 0 : index
    %c0_3 = arith.constant 0 : index
    %c0_4 = arith.constant 0 : index
    %2 = vector.load %arg3[%c0_2, %c0_3, %c0_4] : memref<1x16x64xbf16, #tpu.memory_space<vmem>>, vector<1x16x64xbf16>
    %3 = vector.shape_cast %2 : vector<1x16x64xbf16> to vector<16x64xbf16>
    %cst = arith.constant dense<0.000000e+00> : vector<196x64xf32>
    %4 = tpu.matmul %1, %3, %cst {dimension_numbers = #tpu.dot_dimension_numbers<[1], [0], [0], [1], [0, 0, 1, 1], [], []>} : vector<196x16xbf16>, vector<16x64xbf16>, vector<196x64xf32> -> vector<196x64xf32>
    %5 = arith.truncf %4 : vector<196x64xf32> to vector<196x64xbf16>
    %c0_5 = arith.constant 0 : index
    %c0_6 = arith.constant 0 : index
    %c0_7 = arith.constant 0 : index
    %6 = vector.load %arg4[%c0_5, %c0_6, %c0_7] : memref<1x196x64xbf16, #tpu.memory_space<vmem>>, vector<1x196x64xbf16>
    %7 = vector.shape_cast %6 : vector<1x196x64xbf16> to vector<196x64xbf16>
    %8 = vector.shape_cast %5 : vector<196x64xbf16> to vector<1x196x64xbf16>
    tpu.vector_store %arg4[%c0_5, %c0_6, %c0_7], %8 {strides = array<i32>} : memref<1x196x64xbf16, #tpu.memory_space<vmem>>, vector<1x196x64xbf16>,
    return
  }
  func.func @transform_0(%arg0: i32, %arg1: memref<32xi32, #tpu.memory_space<smem>>) -> (i32, i32, i32) {
    %c0_i32 = arith.constant 0 : i32
    %c0_i32_0 = arith.constant 0 : i32
    %c0_i32_1 = arith.constant 0 : i32
    return %arg0, %c0_i32, %c0_i32_0 : i32, i32, i32
  }
  func.func @transform_1(%arg0: i32, %arg1: memref<32xi32, #tpu.memory_space<smem>>) -> (i32, i32, i32) {
    %0 = arith.index_cast %arg0 : i32 to index
    %1 = memref.load %arg1[%0] : memref<32xi32, #tpu.memory_space<smem>>
    %c0_i32 = arith.constant 0 : i32
    %c0_i32_0 = arith.constant 0 : i32
    %c0_i32_1 = arith.constant 0 : i32
    return %1, %c0_i32, %c0_i32_0 : i32, i32, i32
  }
  func.func @transform_2(%arg0: i32, %arg1: memref<32xi32, #tpu.memory_space<smem>>) -> (i32, i32, i32) {
    %c0_i32 = arith.constant 0 : i32
    %c0_i32_0 = arith.constant 0 : i32
    %c0_i32_1 = arith.constant 0 : i32
    return %arg0, %c0_i32, %c0_i32_0 : i32, i32, i32
  }
}

module attributes {stable_mosaic.version = 11 : i64} {
  func.func @_matmul_bias_act_kernel(%arg0: i32, %arg1: memref<392x576xbf16, #tpu.memory_space<vmem>>, %arg2: memref<576x128xbf16, #tpu.memory_space<vmem>>, %arg3: memref<1x128xf32, #tpu.memory_space<vmem>>, %arg4: memref<392x128xbf16, #tpu.memory_space<vmem>>) attributes {dimension_semantics = [#tpu.dimension_semantics<parallel>], iteration_bounds = array<i64: 4>, scalar_prefetch = 0 : i64, scratch_operands = 0 : i64, tpu.core_type = #tpu.core_type<tc>, window_params = [{transform_indices = @transform_0, window_bounds = array<i64: 392, 576>}, {pipeline_mode = #tpu.pipeline_mode<synchronous>, transform_indices = @transform_1, window_bounds = array<i64: 576, 128>}, {pipeline_mode = #tpu.pipeline_mode<synchronous>, transform_indices = @transform_2, window_bounds = array<i64: 1, 128>}, {transform_indices = @transform_3, window_bounds = array<i64: 392, 128>}]} {
    %c0 = arith.constant 0 : index
    %c0_0 = arith.constant 0 : index
    %0 = vector.load %arg1[%c0, %c0_0] : memref<392x576xbf16, #tpu.memory_space<vmem>>, vector<392x576xbf16>
    %c0_1 = arith.constant 0 : index
    %c0_2 = arith.constant 0 : index
    %1 = vector.load %arg2[%c0_1, %c0_2] : memref<576x128xbf16, #tpu.memory_space<vmem>>, vector<576x128xbf16>
    %cst = arith.constant dense<0.000000e+00> : vector<392x128xf32>
    %2 = tpu.matmul %0, %1, %cst {dimension_numbers = #tpu.dot_dimension_numbers<[1], [0], [0], [1], [0, 0, 1, 1], [], []>} : vector<392x576xbf16>, vector<576x128xbf16>, vector<392x128xf32> -> vector<392x128xf32>
    %c0_3 = arith.constant 0 : index
    %c0_4 = arith.constant 0 : index
    %3 = vector.load %arg3[%c0_3, %c0_4] : memref<1x128xf32, #tpu.memory_space<vmem>>, vector<1x128xf32>
    %4 = vector.broadcast %3 : vector<1x128xf32> to vector<392x128xf32>
    %5 = arith.addf %2, %4 : vector<392x128xf32>
    %cst_5 = arith.constant 0.000000e+00 : f32
    %6 = vector.broadcast %cst_5 : f32 to vector<392x128xf32>
    %7 = arith.maximumf %5, %6 : vector<392x128xf32>
    %8 = arith.truncf %7 : vector<392x128xf32> to vector<392x128xbf16>
    %c0_6 = arith.constant 0 : index
    %c0_7 = arith.constant 0 : index
    %9 = vector.load %arg4[%c0_6, %c0_7] : memref<392x128xbf16, #tpu.memory_space<vmem>>, vector<392x128xbf16>
    tpu.vector_store %arg4[%c0_6, %c0_7], %8 {strides = array<i32>} : memref<392x128xbf16, #tpu.memory_space<vmem>>, vector<392x128xbf16>,
    return
  }
  func.func @transform_0(%arg0: i32) -> (i32, i32) {
    %c0_i32 = arith.constant 0 : i32
    %c0_i32_0 = arith.constant 0 : i32
    return %arg0, %c0_i32 : i32, i32
  }
  func.func @transform_1(%arg0: i32) -> (i32, i32) {
    %c0_i32 = arith.constant 0 : i32
    %c0_i32_0 = arith.constant 0 : i32
    %c0_i32_1 = arith.constant 0 : i32
    return %c0_i32, %c0_i32_0 : i32, i32
  }
  func.func @transform_2(%arg0: i32) -> (i32, i32) {
    %c0_i32 = arith.constant 0 : i32
    %c0_i32_0 = arith.constant 0 : i32
    %c0_i32_1 = arith.constant 0 : i32
    return %c0_i32, %c0_i32_0 : i32, i32
  }
  func.func @transform_3(%arg0: i32) -> (i32, i32) {
    %c0_i32 = arith.constant 0 : i32
    %c0_i32_0 = arith.constant 0 : i32
    return %arg0, %c0_i32 : i32, i32
  }
}

module attributes {stable_mosaic.version = 11 : i64} {
  func.func @_avgpool_fc_kernel(%arg0: memref<32x49x128xbf16, #tpu.memory_space<vmem>>, %arg1: memref<128x128xbf16, #tpu.memory_space<vmem>>, %arg2: memref<1x128xf32, #tpu.memory_space<vmem>>, %arg3: memref<32x128xf32, #tpu.memory_space<vmem>>) attributes {dimension_semantics = [], scalar_prefetch = 0 : i64, scratch_operands = 0 : i64, tpu.core_type = #tpu.core_type<tc>} {
    %c0 = arith.constant 0 : index
    %c0_0 = arith.constant 0 : index
    %c0_1 = arith.constant 0 : index
    %0 = vector.load %arg0[%c0, %c0_0, %c0_1] : memref<32x49x128xbf16, #tpu.memory_space<vmem>>, vector<32x49x128xbf16>
    %1 = arith.extf %0 : vector<32x49x128xbf16> to vector<32x49x128xf32>
    %cst = arith.constant dense<0.000000e+00> : vector<32x128xf32>
    %2 = vector.multi_reduction <add>, %1, %cst [1] : vector<32x49x128xf32> to vector<32x128xf32>
    %cst_2 = arith.constant 4.900000e+01 : f32
    %3 = vector.broadcast %cst_2 : f32 to vector<32x128xf32>
    %4 = arith.divf %2, %3 : vector<32x128xf32>
    %5 = arith.truncf %4 : vector<32x128xf32> to vector<32x128xbf16>
    %c0_3 = arith.constant 0 : index
    %c0_4 = arith.constant 0 : index
    %6 = vector.load %arg1[%c0_3, %c0_4] : memref<128x128xbf16, #tpu.memory_space<vmem>>, vector<128x128xbf16>
    %cst_5 = arith.constant dense<0.000000e+00> : vector<32x128xf32>
    %7 = tpu.matmul %5, %6, %cst_5 {dimension_numbers = #tpu.dot_dimension_numbers<[1], [0], [0], [1], [0, 0, 1, 1], [], []>} : vector<32x128xbf16>, vector<128x128xbf16>, vector<32x128xf32> -> vector<32x128xf32>
    %c0_6 = arith.constant 0 : index
    %c0_7 = arith.constant 0 : index
    %8 = vector.load %arg2[%c0_6, %c0_7] : memref<1x128xf32, #tpu.memory_space<vmem>>, vector<1x128xf32>
    %9 = vector.broadcast %8 : vector<1x128xf32> to vector<32x128xf32>
    %10 = arith.addf %7, %9 : vector<32x128xf32>
    %c0_8 = arith.constant 0 : index
    %c0_9 = arith.constant 0 : index
    %11 = vector.load %arg3[%c0_8, %c0_9] : memref<32x128xf32, #tpu.memory_space<vmem>>, vector<32x128xf32>
    tpu.vector_store %arg3[%c0_8, %c0_9], %10 {strides = array<i32>} : memref<32x128xf32, #tpu.memory_space<vmem>>, vector<32x128xf32>,
    return
  }
}

</mosaic_0001>

<llo_original>
// kernel: faster_rcnn_forward.9
$region0: #{faster_rcnn_forward.9}
  #allocation0 [shape = 'u32[]', space=smem, size = 0x4, offset = 0x4, fixed_abs, tag = 'smem constant byte address 0x4 - core index']
  #allocation1 [shape = 'u32[144,128]{1,0:T(1,128)}', space=vmem, size = 0x12000, scoped, tag = 'internal scratch']
  %s0 = inlined_call_operand.vmem [shape: bf16[2048,32], index: 0, kind: input, shape index: {}]
  %s1 = inlined_call_operand.vmem [shape: bf16[32,128], index: 1, kind: input, shape index: {}]
  %s2 = inlined_call_operand.vmem [shape: f32[1,128], index: 2, kind: input, shape index: {}]
  %s3 = inlined_call_operand.vmem [shape: bf16[2048,128], index: 3, kind: output, shape index: {}]
  %s4 = sld [smem:[#allocation0]]
  $region45: #{faster_rcnn_forward.9} parent=0
    _
  %s6 = ssub.s32 1, %s4
  %s7 = scalar_select 0, %s6, %s4
  loop: start=0, step=1, limit=6
  $region2: #{faster_rcnn_forward.9} parent=0 // loop_pre_header
    _
  $region3: #{faster_rcnn_forward.9} parent=0 // loop_header
    %s9 = sphi 0, %s13
    %p10 = scmp.ge.s32.totalorder %s9, 6
    %s19 = sphi 0, %s21
    %s22 = sphi 0, %s19
    %s23 = sphi 0, %s22
    %s39 = sphi 0, %s23
    %s43 = sphi 0, %s43
    %s45 = sphi 0, %s43
    %s46 = sphi 0, %s45
    %s60 = sphi 0, %s46
    %s64 = sphi 0, %s64
    %s66 = sphi 0, %s64
    %s67 = sphi 0, %s66
    %s81 = sphi 0, %s67
    %s87 = sphi 0, %s89
    %s90 = sphi 0, %s87
    %s91 = sphi 0, %s90
    %s107 = sphi 0, %s91
  $region4: #{faster_rcnn_forward.9} parent=0 // loop_header_branch
    %12 = sbr.rel (%p10) target = $region8
  $region5: #{faster_rcnn_forward.9} parent=0 // loop_body
    %s14 = ssub.s32 %s9, 1
    %s15 = ssub.s32 %s9, 2
    %s16 = sadd.s32 %s9, 1
    %s17 = ssub.s32 %s9, %s16
    %p18 = scmp.eq.s32.totalorder %s17, 0
    %s20 = sadd.s32 %s19, 1
    %s21 = scalar_select %p18, %s19, %s20
    %p24 = pneg %p18
    %p25 = scmp.eq.s32.totalorder %s9, 3
    %p26 = por %p24, %p25
    %p27 = scmp.ne.s32.totalorder %s19, %s22
    %p28 = scmp.eq.s32.totalorder %s9, 0
    %p29 = por %p27, %p28
    %p30 = scmp.ne.s32.totalorder %s19, %s22
    %p31 = scmp.eq.s32.totalorder %s14, 3
    %p32 = por %p30, %p31
    %p33 = scmp.ne.s32.totalorder %s22, %s23
    %p34 = scmp.eq.s32.totalorder %s14, 0
    %p35 = por %p33, %p34
    %p36 = scmp.ne.s32.totalorder %s22, %s23
    %p37 = scmp.eq.s32.totalorder %s15, 3
    %p38 = por %p36, %p37
    %p40 = scmp.ne.s32.totalorder %s23, %s39
    %p41 = scmp.eq.s32.totalorder %s15, 0
    %p42 = por %p40, %p41
    %s44 = sadd.s32 %s43, 1
    %p47 = scmp.eq.s32.totalorder %s9, 3
    %p48 = scmp.ne.s32.totalorder %s43, %s45
    %p49 = scmp.eq.s32.totalorder %s9, 0
    %p50 = por %p48, %p49
    %p51 = scmp.ne.s32.totalorder %s43, %s45
    %p52 = scmp.eq.s32.totalorder %s14, 3
    %p53 = por %p51, %p52
    %p54 = scmp.ne.s32.totalorder %s45, %s46
    %p55 = scmp.eq.s32.totalorder %s14, 0
    %p56 = por %p54, %p55
    %p57 = scmp.ne.s32.totalorder %s45, %s46
    %p58 = scmp.eq.s32.totalorder %s15, 3
    %p59 = por %p57, %p58
    %p61 = scmp.ne.s32.totalorder %s46, %s60
    %p62 = scmp.eq.s32.totalorder %s15, 0
    %p63 = por %p61, %p62
    %s65 = sadd.s32 %s64, 1
    %p68 = scmp.eq.s32.totalorder %s9, 3
    %p69 = scmp.ne.s32.totalorder %s64, %s66
    %p70 = scmp.eq.s32.totalorder %s9, 0
    %p71 = por %p69, %p70
    %p72 = scmp.ne.s32.totalorder %s64, %s66
    %p73 = scmp.eq.s32.totalorder %s14, 3
    %p74 = por %p72, %p73
    %p75 = scmp.ne.s32.totalorder %s66, %s67
    %p76 = scmp.eq.s32.totalorder %s14, 0
    %p77 = por %p75, %p76
    %p78 = scmp.ne.s32.totalorder %s66, %s67
    %p79 = scmp.eq.s32.totalorder %s15, 3
    %p80 = por %p78, %p79
    %p82 = scmp.ne.s32.totalorder %s67, %s81
    %p83 = scmp.eq.s32.totalorder %s15, 0
    %p84 = por %p82, %p83
    %s85 = ssub.s32 %s9, %s16
    %p86 = scmp.eq.s32.totalorder %s85, 0
    %s88 = sadd.s32 %s87, 1
    %s89 = scalar_select %p86, %s87, %s88
    %p92 = pneg %p86
    %p93 = scmp.eq.s32.totalorder %s9, 3
    %p94 = por %p92, %p93
    %p95 = scmp.ne.s32.totalorder %s87, %s90
    %p96 = scmp.eq.s32.totalorder %s9, 0
    %p97 = por %p95, %p96
    %p98 = scmp.ne.s32.totalorder %s87, %s90
    %p99 = scmp.eq.s32.totalorder %s14, 3
    %p100 = por %p98, %p99
    %p101 = scmp.ne.s32.totalorder %s90, %s91
    %p102 = scmp.eq.s32.totalorder %s14, 0
    %p103 = por %p101, %p102
    %p104 = scmp.ne.s32.totalorder %s90, %s91
    %p105 = scmp.eq.s32.totalorder %s15, 3
    %p106 = por %p104, %p105
    %p108 = scmp.ne.s32.totalorder %s91, %s107
    %p109 = scmp.eq.s32.totalorder %s15, 0
    %p110 = por %p108, %p109
    %p111 = scmp.le.s32.totalorder 1, %s9
    %p112 = scmp.lt.s32.totalorder %s9, 5
    %p113 = pnand %p111, %p112
    %p114 = pneg %p113
    // Predicated region
    $region9: #{faster_rcnn_forward.9} parent=5 // pred_check
      _
    $region10: #{faster_rcnn_forward.9} parent=5 // pred_check_branch
      %116 = sbr.rel (%p113) target = $region12
    $region11: #{faster_rcnn_forward.9} parent=5 // pred_region
      %s117 = ssub.s32 %s9, 1
      // Predicated region
      $region13: #{faster_rcnn_forward.9} parent=11 // pred_check
        %p118 = pneg %p56
      $region14: #{faster_rcnn_forward.9} parent=11 // pred_check_branch
        %120 = sbr.rel (%p118) target = $region16
      $region15: #{faster_rcnn_forward.9} parent=11 // pred_region
        _
      $region16: #{faster_rcnn_forward.9} parent=11 // pred_fallthru
        _
      // Predicated region
      $region17: #{faster_rcnn_forward.9} parent=11 // pred_check
        %p121 = pneg %p77
      $region18: #{faster_rcnn_forward.9} parent=11 // pred_check_branch
        %123 = sbr.rel (%p121) target = $region20
      $region19: #{faster_rcnn_forward.9} parent=11 // pred_region
        _
      $region20: #{faster_rcnn_forward.9} parent=11 // pred_fallthru
        _
    $region12: #{faster_rcnn_forward.9} parent=5 // pred_fallthru
      _
    %p124 = scmp.lt.s32.totalorder %s9, 4
    // Predicated region
    $region21: #{faster_rcnn_forward.9} parent=5 // pred_check
      %p125 = pneg %p124
    $region22: #{faster_rcnn_forward.9} parent=5 // pred_check_branch
      %127 = sbr.rel (%p125) target = $region24
    $region23: #{faster_rcnn_forward.9} parent=5 // pred_region
      // Predicated region
      $region25: #{faster_rcnn_forward.9} parent=23 // pred_check
        %p128 = pneg %p29
      $region26: #{faster_rcnn_forward.9} parent=23 // pred_check_branch
        %130 = sbr.rel (%p128) target = $region28
      $region27: #{faster_rcnn_forward.9} parent=23 // pred_region
        %s131 = smul.u32 64, %s9
        %p132 = scmp.lt.s32.totalorder %s131, 255
        %s133 = scalar_select %p132, %s131, 255
        %s134 = smul.addr %s133, 4
        %s135 = scalar_lea.vmem %s0, %s134
        %s136 = smul.u32 64, %s9
      $region28: #{faster_rcnn_forward.9} parent=23 // pred_fallthru
        _
    $region24: #{faster_rcnn_forward.9} parent=5 // pred_fallthru
      _
    %p137 = scmp.le.s32.totalorder 1, %s9
    %p138 = scmp.lt.s32.totalorder %s9, 5
    %p139 = pnand %p137, %p138
    %p140 = pneg %p139
    // Predicated region
    $region29: #{faster_rcnn_forward.9} parent=5 // pred_check
      _
    $region30: #{faster_rcnn_forward.9} parent=5 // pred_check_branch
      %142 = sbr.rel (%p139) target = $region32
    $region31: #{faster_rcnn_forward.9} parent=5 // pred_region
      %s143 = ssub.s32 %s9, 1
      %s144 = smul.u32 64, %s14
      %p145 = scmp.lt.s32.totalorder %s144, 255
      %s146 = scalar_select %p145, %s144, 255
      %s147 = smul.addr %s146, 4
      %s148 = scalar_lea.vmem %s0, %s147
      %p149 = pneg %p35
      %p150 = pneg %p32
      %p151 = pneg %p56
      %p152 = pneg %p53
      %p153 = pneg %p77
      %p154 = pneg %p74
      %p155 = pneg %p103
      %p156 = pneg %p100
      %s157 = smul.u32 64, %s14
      %p158 = scmp.lt.s32.totalorder %s157, 255
      %s159 = scalar_select %p158, %s157, 255
      %s160 = smul.addr %s159, 4
      %s161 = scalar_lea.vmem %s3, %s160
      %s162 = smul.u32 64, %s14
      %p163 = scmp.lt.s32.totalorder %s162, 255
      %s164 = scalar_select %p163, %s162, 255
      %s165 = smul.addr %s164, 4
      %s166 = scalar_lea.vmem %s0, %s165
      %s167 = smul.u32 64, %s14
      %s168 = smul.u32 64, %s14
      %p169 = scmp.lt.s32.totalorder %s168, 255
      %s170 = scalar_select %p169, %s168, 255
      %s171 = smul.addr %s170, 4
      %s172 = scalar_lea.vmem %s3, %s171
      %s173 = smul.u32 64, %s14
      %v175 = vld [vmem:[%s166] sm:$0xf]
      %v176 = vld [vmem:[%s166 + $0x4] sm:$0xf]
      %v177 = vld [vmem:[%s166 + $0x8] sm:$0xf]
      %v178 = vld [vmem:[%s166 + $0xc] sm:$0xf]
      %v179 = vld [vmem:[%s166 + $0x10] sm:$0xf]
      %v180 = vld [vmem:[%s166 + $0x14] sm:$0xf]
      %v181 = vld [vmem:[%s166 + $0x18] sm:$0xf]
      %v182 = vld [vmem:[%s166 + $0x1c] sm:$0xf]
      %v183 = vld [vmem:[%s166 + $0x20] sm:$0xf]
      %v184 = vld [vmem:[%s166 + $0x24] sm:$0xf]
      %v185 = vld [vmem:[%s166 + $0x28] sm:$0xf]
      %v186 = vld [vmem:[%s166 + $0x2c] sm:$0xf]
      %v187 = vld [vmem:[%s166 + $0x30] sm:$0xf]
      %v188 = vld [vmem:[%s166 + $0x34] sm:$0xf]
      %v189 = vld [vmem:[%s166 + $0x38] sm:$0xf]
      %v190 = vld [vmem:[%s166 + $0x3c] sm:$0xf]
      %v191 = vld [vmem:[%s166 + $0x40] sm:$0xf]
      %v192 = vld [vmem:[%s166 + $0x44] sm:$0xf]
      %v193 = vld [vmem:[%s166 + $0x48] sm:$0xf]
      %v194 = vld [vmem:[%s166 + $0x4c] sm:$0xf]
      %v195 = vld [vmem:[%s166 + $0x50] sm:$0xf]
      %v196 = vld [vmem:[%s166 + $0x54] sm:$0xf]
      %v197 = vld [vmem:[%s166 + $0x58] sm:$0xf]
      %v198 = vld [vmem:[%s166 + $0x5c] sm:$0xf]
      %v199 = vld [vmem:[%s166 + $0x60] sm:$0xf]
      %v200 = vld [vmem:[%s166 + $0x64] sm:$0xf]
      %v201 = vld [vmem:[%s166 + $0x68] sm:$0xf]
      %v202 = vld [vmem:[%s166 + $0x6c] sm:$0xf]
      %v203 = vld [vmem:[%s166 + $0x70] sm:$0xf]
      %v204 = vld [vmem:[%s166 + $0x74] sm:$0xf]
      %v205 = vld [vmem:[%s166 + $0x78] sm:$0xf]
      %v206 = vld [vmem:[%s166 + $0x7c] sm:$0xf]
      %v207 = vld [vmem:[%s166 + $0x80] sm:$0xf]
      %v208 = vld [vmem:[%s166 + $0x84] sm:$0xf]
      %v209 = vld [vmem:[%s166 + $0x88] sm:$0xf]
      %v210 = vld [vmem:[%s166 + $0x8c] sm:$0xf]
      %v211 = vld [vmem:[%s166 + $0x90] sm:$0xf]
      %v212 = vld [vmem:[%s166 + $0x94] sm:$0xf]
      %v213 = vld [vmem:[%s166 + $0x98] sm:$0xf]
      %v214 = vld [vmem:[%s166 + $0x9c] sm:$0xf]
      %v215 = vld [vmem:[%s166 + $0xa0] sm:$0xf]
      %v216 = vld [vmem:[%s166 + $0xa4] sm:$0xf]
      %v217 = vld [vmem:[%s166 + $0xa8] sm:$0xf]
      %v218 = vld [vmem:[%s166 + $0xac] sm:$0xf]
      %v219 = vld [vmem:[%s166 + $0xb0] sm:$0xf]
      %v220 = vld [vmem:[%s166 + $0xb4] sm:$0xf]
      %v221 = vld [vmem:[%s166 + $0xb8] sm:$0xf]
      %v222 = vld [vmem:[%s166 + $0xbc] sm:$0xf]
      %v223 = vld [vmem:[%s166 + $0xc0] sm:$0xf]
      %v224 = vld [vmem:[%s166 + $0xc4] sm:$0xf]
      %v225 = vld [vmem:[%s166 + $0xc8] sm:$0xf]
      %v226 = vld [vmem:[%s166 + $0xcc] sm:$0xf]
      %v227 = vld [vmem:[%s166 + $0xd0] sm:$0xf]
      %v228 = vld [vmem:[%s166 + $0xd4] sm:$0xf]
      %v229 = vld [vmem:[%s166 + $0xd8] sm:$0xf]
      %v230 = vld [vmem:[%s166 + $0xdc] sm:$0xf]
      %v231 = vld [vmem:[%s166 + $0xe0] sm:$0xf]
      %v232 = vld [vmem:[%s166 + $0xe4] sm:$0xf]
      %v233 = vld [vmem:[%s166 + $0xe8] sm:$0xf]
      %v234 = vld [vmem:[%s166 + $0xec] sm:$0xf]
      %v235 = vld [vmem:[%s166 + $0xf0] sm:$0xf]
      %v236 = vld [vmem:[%s166 + $0xf4] sm:$0xf]
      %v237 = vld [vmem:[%s166 + $0xf8] sm:$0xf]
      %v238 = vld [vmem:[%s166 + $0xfc] sm:$0xf]
      %v239 = vld [vmem:[%s1] sm:$0xf]
      %v240 = vld [vmem:[%s1 + $0x4] sm:$0xf]
      %v241 = vld [vmem:[%s1 + $0x8] sm:$0xf]
      %v242 = vld [vmem:[%s1 + $0xc] sm:$0xf]
      %v243 = vld [vmem:[%s2] sm:$0x1]
      %v245 = vlaneseq
      %v246 = vshrl.u32 %v245, 7
      %v247 = vsub.s32 0, %v246
      %v248 = vrot.slane %v243, %v247
      %v314 = vunpack.c.l.b16 %v175
      %v315 = vunpack.c.l.b16 %v176
      %v316 = vunpack.c.l.b16 %v177
      %v317 = vunpack.c.l.b16 %v178
      %v318 = vunpack.c.l.b16 %v179
      %v319 = vunpack.c.l.b16 %v180
      %v320 = vunpack.c.l.b16 %v181
      %v321 = vunpack.c.l.b16 %v182
      %v322 = vunpack.c.l.b16 %v183
      %v323 = vunpack.c.l.b16 %v184
      %v324 = vunpack.c.l.b16 %v185
      %v325 = vunpack.c.l.b16 %v186
      %v326 = vunpack.c.l.b16 %v187
      %v327 = vunpack.c.l.b16 %v188
      %v328 = vunpack.c.l.b16 %v189
      %v329 = vunpack.c.l.b16 %v190
      %v330 = vunpack.c.l.b16 %v191
      %v331 = vunpack.c.l.b16 %v192
      %v332 = vunpack.c.l.b16 %v193
      %v333 = vunpack.c.l.b16 %v194
      %v334 = vunpack.c.l.b16 %v195
      %v335 = vunpack.c.l.b16 %v196
      %v336 = vunpack.c.l.b16 %v197
      %v337 = vunpack.c.l.b16 %v198
      %v338 = vunpack.c.l.b16 %v199
      %v339 = vunpack.c.l.b16 %v200
      %v340 = vunpack.c.l.b16 %v201
      %v341 = vunpack.c.l.b16 %v202
      %v342 = vunpack.c.l.b16 %v203
      %v343 = vunpack.c.l.b16 %v204
      %v344 = vunpack.c.l.b16 %v205
      %v345 = vunpack.c.l.b16 %v206
      %v346 = vunpack.c.l.b16 %v207
      %v347 = vunpack.c.l.b16 %v208
      %v348 = vunpack.c.l.b16 %v209
      %v349 = vunpack.c.l.b16 %v210
      %v350 = vunpack.c.l.b16 %v211
      %v351 = vunpack.c.l.b16 %v212
      %v352 = vunpack.c.l.b16 %v213
      %v353 = vunpack.c.l.b16 %v214
      %v354 = vunpack.c.l.b16 %v215
      %v355 = vunpack.c.l.b16 %v216
      %v356 = vunpack.c.l.b16 %v217
      %v357 = vunpack.c.l.b16 %v218
      %v358 = vunpack.c.l.b16 %v219
      %v359 = vunpack.c.l.b16 %v220
      %v360 = vunpack.c.l.b16 %v221
      %v361 = vunpack.c.l.b16 %v222
      %v362 = vunpack.c.l.b16 %v223
      %v363 = vunpack.c.l.b16 %v224
      %v364 = vunpack.c.l.b16 %v225
      %v365 = vunpack.c.l.b16 %v226
      %v366 = vunpack.c.l.b16 %v227
      %v367 = vunpack.c.l.b16 %v228
      %v368 = vunpack.c.l.b16 %v229
      %v369 = vunpack.c.l.b16 %v230
      %v370 = vunpack.c.l.b16 %v231
      %v371 = vunpack.c.l.b16 %v232
      %v372 = vunpack.c.l.b16 %v233
      %v373 = vunpack.c.l.b16 %v234
      %v374 = vunpack.c.l.b16 %v235
      %v375 = vunpack.c.l.b16 %v236
      %v376 = vunpack.c.l.b16 %v237
      %v377 = vunpack.c.l.b16 %v238
      %v378 = vpack.c.b16 %v315, %v314
      %v379 = vpack.c.b16 %v317, %v316
      %v380 = vpack.c.b16 %v319, %v318
      %v381 = vpack.c.b16 %v321, %v320
      %v382 = vpack.c.b16 %v323, %v322
      %v383 = vpack.c.b16 %v325, %v324
      %v384 = vpack.c.b16 %v327, %v326
      %v385 = vpack.c.b16 %v329, %v328
      %v386 = vpack.c.b16 %v331, %v330
      %v387 = vpack.c.b16 %v333, %v332
      %v388 = vpack.c.b16 %v335, %v334
      %v389 = vpack.c.b16 %v337, %v336
      %v390 = vpack.c.b16 %v339, %v338
      %v391 = vpack.c.b16 %v341, %v340
      %v392 = vpack.c.b16 %v343, %v342
      %v393 = vpack.c.b16 %v345, %v344
      %v394 = vpack.c.b16 %v347, %v346
      %v395 = vpack.c.b16 %v349, %v348
      %v396 = vpack.c.b16 %v351, %v350
      %v397 = vpack.c.b16 %v353, %v352
      %v398 = vpack.c.b16 %v355, %v354
      %v399 = vpack.c.b16 %v357, %v356
      %v400 = vpack.c.b16 %v359, %v358
      %v401 = vpack.c.b16 %v361, %v360
      %v402 = vpack.c.b16 %v363, %v362
      %v403 = vpack.c.b16 %v365, %v364
      %v404 = vpack.c.b16 %v367, %v366
      %v405 = vpack.c.b16 %v369, %v368
      %v406 = vpack.c.b16 %v371, %v370
      %v407 = vpack.c.b16 %v373, %v372
      %v408 = vpack.c.b16 %v375, %v374
      %v409 = vpack.c.b16 %v377, %v376
      %v414 = vunpack.c.l.b16 %v239
      %v415 = vunpack.c.l.b16 %v240
      %v416 = vunpack.c.l.b16 %v241
      %v417 = vunpack.c.l.b16 %v242
      %v418 = vpack.c.b16 %v415, %v414
      %v419 = vpack.c.b16 %v417, %v416
      %vm422 = vcmask 261120
      %v424 = vsel %vm422, %v378, 0
      %v427 = vsel %vm422, %v379, 0
      %v430 = vsel %vm422, %v380, 0
      %v433 = vsel %vm422, %v381, 0
      %v436 = vsel %vm422, %v382, 0
      %v439 = vsel %vm422, %v383, 0
      %v442 = vsel %vm422, %v384, 0
      %v445 = vsel %vm422, %v385, 0
      %v448 = vsel %vm422, %v386, 0
      %v451 = vsel %vm422, %v387, 0
      %v454 = vsel %vm422, %v388, 0
      %v457 = vsel %vm422, %v389, 0
      %v460 = vsel %vm422, %v390, 0
      %v463 = vsel %vm422, %v391, 0
      %v466 = vsel %vm422, %v392, 0
      %v469 = vsel %vm422, %v393, 0
      %v472 = vsel %vm422, %v394, 0
      %v475 = vsel %vm422, %v395, 0
      %v478 = vsel %vm422, %v396, 0
      %v481 = vsel %vm422, %v397, 0
      %v484 = vsel %vm422, %v398, 0
      %v487 = vsel %vm422, %v399, 0
      %v490 = vsel %vm422, %v400, 0
      %v493 = vsel %vm422, %v401, 0
      %v496 = vsel %vm422, %v402, 0
      %v499 = vsel %vm422, %v403, 0
      %v502 = vsel %vm422, %v404, 0
      %v505 = vsel %vm422, %v405, 0
      %v508 = vsel %vm422, %v406, 0
      %v511 = vsel %vm422, %v407, 0
      %v514 = vsel %vm422, %v408, 0
      %v517 = vsel %vm422, %v409, 0
      %519 = vmatprep.subr.bf16.mxu0 0
      %520 = vmatpush1.bf16.msra.mxu0 %v418
      %521 = vmatprep.subr.bf16.mxu0 0
      %522 = vmatpush1.bf16.msra.mxu0 %v419
      %523 = vmatprep.subr.bf16.mxu0 0
      %524 = vmatpush1.bf16.msra.mxu0 0
      %525 = vmatprep.subr.bf16.mxu0 0
      %526 = vmatpush1.bf16.msra.mxu0 0
      %527 = vmatprep.subr.bf16.mxu0 0
      %528 = vmatpush1.bf16.msra.mxu0 0
      %529 = vmatprep.subr.bf16.mxu0 0
      %530 = vmatpush1.bf16.msra.mxu0 0
      %531 = vmatprep.subr.bf16.mxu0 0
      %532 = vmatpush1.bf16.msra.mxu0 0
      %533 = vmatprep.subr.bf16.mxu0 0
      %534 = vmatpush1.bf16.msra.mxu0 0
      %535 = vmatprep.subr.bf16.mxu0 0
      %536 = vmatpush1.bf16.msra.mxu0 0
      %537 = vmatprep.subr.bf16.mxu0 0
      %538 = vmatpush1.bf16.msra.mxu0 0
      %539 = vmatprep.subr.bf16.mxu0 0
      %540 = vmatpush1.bf16.msra.mxu0 0
      %541 = vmatprep.subr.bf16.mxu0 0
      %542 = vmatpush1.bf16.msra.mxu0 0
      %543 = vmatprep.subr.bf16.mxu0 0
      %544 = vmatpush1.bf16.msra.mxu0 0
      %545 = vmatprep.subr.bf16.mxu0 0
      %546 = vmatpush1.bf16.msra.mxu0 0
      %547 = vmatprep.subr.bf16.mxu0 0
      %548 = vmatpush1.bf16.msra.mxu0 0
      %549 = vmatprep.subr.bf16.mxu0 0
      %550 = vmatpush1.bf16.msra.mxu0 0
      %551 = vmatprep.mubr.bf16.mxu0 0
      %552 = vmatmul.mubr.bf16.gmra.mrb[0].mxu0 %v424
      %v553 = vpop.f32.mrb[0].mxu0
      %v554 = vadd.f32 %v248, %v553
      %v555 = vpop.f32.mrb[0].mxu0
      %v556 = vpop.f32.mrb[0].mxu0
      %v557 = vadd.f32 %v248, %v556
      %v558 = vpop.f32.mrb[0].mxu0
      %559 = vmatprep.mubr.bf16.mxu0 0
      %560 = vmatmul.mubr.bf16.gmra.mrb[0].mxu0 %v427
      %v561 = vpop.f32.mrb[0].mxu0
      %v562 = vadd.f32 %v248, %v561
      %v563 = vpop.f32.mrb[0].mxu0
      %v564 = vpop.f32.mrb[0].mxu0
      %v565 = vadd.f32 %v248, %v564
      %v566 = vpop.f32.mrb[0].mxu0
      %567 = vmatprep.mubr.bf16.mxu0 0
      %568 = vmatmul.mubr.bf16.gmra.mrb[0].mxu0 %v430
      %v569 = vpop.f32.mrb[0].mxu0
      %v570 = vadd.f32 %v248, %v569
      %v571 = vpop.f32.mrb[0].mxu0
      %v572 = vpop.f32.mrb[0].mxu0
      %v573 = vadd.f32 %v248, %v572
      %v574 = vpop.f32.mrb[0].mxu0
      %575 = vmatprep.mubr.bf16.mxu0 0
      %576 = vmatmul.mubr.bf16.gmra.mrb[0].mxu0 %v433
      %v577 = vpop.f32.mrb[0].mxu0
      %v578 = vadd.f32 %v248, %v577
      %v579 = vpop.f32.mrb[0].mxu0
      %v580 = vpop.f32.mrb[0].mxu0
      %v581 = vadd.f32 %v248, %v580
      %v582 = vpop.f32.mrb[0].mxu0
      %583 = vmatprep.mubr.bf16.mxu0 0
      %584 = vmatmul.mubr.bf16.gmra.mrb[0].mxu0 %v436
      %v585 = vpop.f32.mrb[0].mxu0
      %v586 = vadd.f32 %v248, %v585
      %v587 = vpop.f32.mrb[0].mxu0
      %v588 = vpop.f32.mrb[0].mxu0
      %v589 = vadd.f32 %v248, %v588
      %v590 = vpop.f32.mrb[0].mxu0
      %591 = vmatprep.mubr.bf16.mxu0 0
      %592 = vmatmul.mubr.bf16.gmra.mrb[0].mxu0 %v439
      %v593 = vpop.f32.mrb[0].mxu0
      %v594 = vadd.f32 %v248, %v593
      %v595 = vpop.f32.mrb[0].mxu0
      %v596 = vpop.f32.mrb[0].mxu0
      %v597 = vadd.f32 %v248, %v596
      %v598 = vpop.f32.mrb[0].mxu0
      %599 = vmatprep.mubr.bf16.mxu0 0
      %600 = vmatmul.mubr.bf16.gmra.mrb[0].mxu0 %v442
      %v601 = vpop.f32.mrb[0].mxu0
      %v602 = vadd.f32 %v248, %v601
      %v603 = vpop.f32.mrb[0].mxu0
      %v604 = vpop.f32.mrb[0].mxu0
      %v605 = vadd.f32 %v248, %v604
      %v606 = vpop.f32.mrb[0].mxu0
      %607 = vmatprep.mubr.bf16.mxu0 0
      %608 = vmatmul.mubr.bf16.gmra.mrb[0].mxu0 %v445
      %v609 = vpop.f32.mrb[0].mxu0
      %v610 = vadd.f32 %v248, %v609
      %v611 = vpop.f32.mrb[0].mxu0
      %v612 = vpop.f32.mrb[0].mxu0
      %v613 = vadd.f32 %v248, %v612
      %v614 = vpop.f32.mrb[0].mxu0
      %615 = vmatprep.mubr.bf16.mxu0 0
      %616 = vmatmul.mubr.bf16.gmra.mrb[0].mxu0 %v448
      %v617 = vpop.f32.mrb[0].mxu0
      %v618 = vadd.f32 %v248, %v617
      %v619 = vpop.f32.mrb[0].mxu0
      %v620 = vpop.f32.mrb[0].mxu0
      %v621 = vadd.f32 %v248, %v620
      %v622 = vpop.f32.mrb[0].mxu0
      %623 = vmatprep.mubr.bf16.mxu0 0
      %624 = vmatmul.mubr.bf16.gmra.mrb[0].mxu0 %v451
      %v625 = vpop.f32.mrb[0].mxu0
      %v626 = vadd.f32 %v248, %v625
      %v627 = vpop.f32.mrb[0].mxu0
      %v628 = vpop.f32.mrb[0].mxu0
      %v629 = vadd.f32 %v248, %v628
      %v630 = vpop.f32.mrb[0].mxu0
      %631 = vmatprep.mubr.bf16.mxu0 0
      %632 = vmatmul.mubr.bf16.gmra.mrb[0].mxu0 %v454
      %v633 = vpop.f32.mrb[0].mxu0
      %v634 = vadd.f32 %v248, %v633
      %v635 = vpop.f32.mrb[0].mxu0
      %v636 = vpop.f32.mrb[0].mxu0
      %v637 = vadd.f32 %v248, %v636
      %v638 = vpop.f32.mrb[0].mxu0
      %639 = vmatprep.mubr.bf16.mxu0 0
      %640 = vmatmul.mubr.bf16.gmra.mrb[0].mxu0 %v457
      %v641 = vpop.f32.mrb[0].mxu0
      %v642 = vadd.f32 %v248, %v641
      %v643 = vpop.f32.mrb[0].mxu0
      %v644 = vpop.f32.mrb[0].mxu0
      %v645 = vadd.f32 %v248, %v644
      %v646 = vpop.f32.mrb[0].mxu0
      %647 = vmatprep.mubr.bf16.mxu0 0
      %648 = vmatmul.mubr.bf16.gmra.mrb[0].mxu0 %v460
      %v649 = vpop.f32.mrb[0].mxu0
      %v650 = vadd.f32 %v248, %v649
      %v651 = vpop.f32.mrb[0].mxu0
      %v652 = vpop.f32.mrb[0].mxu0
      %v653 = vadd.f32 %v248, %v652
      %v654 = vpop.f32.mrb[0].mxu0
      %655 = vmatprep.mubr.bf16.mxu0 0
      %656 = vmatmul.mubr.bf16.gmra.mrb[0].mxu0 %v463
      %v657 = vpop.f32.mrb[0].mxu0
      %v658 = vadd.f32 %v248, %v657
      %v659 = vpop.f32.mrb[0].mxu0
      %v660 = vpop.f32.mrb[0].mxu0
      %v661 = vadd.f32 %v248, %v660
      %v662 = vpop.f32.mrb[0].mxu0
      %663 = vmatprep.mubr.bf16.mxu0 0
      %664 = vmatmul.mubr.bf16.gmra.mrb[0].mxu0 %v466
      %v665 = vpop.f32.mrb[0].mxu0
      %v666 = vadd.f32 %v248, %v665
      %v667 = vpop.f32.mrb[0].mxu0
      %v668 = vpop.f32.mrb[0].mxu0
      %v669 = vadd.f32 %v248, %v668
      %v670 = vpop.f32.mrb[0].mxu0
      %671 = vmatprep.mubr.bf16.mxu0 0
      %672 = vmatmul.mubr.bf16.gmra.mrb[0].mxu0 %v469
      %v673 = vpop.f32.mrb[0].mxu0
      %v674 = vadd.f32 %v248, %v673
      %v675 = vpop.f32.mrb[0].mxu0
      %v676 = vpop.f32.mrb[0].mxu0
      %v677 = vadd.f32 %v248, %v676
      %v678 = vpop.f32.mrb[0].mxu0
      %679 = vmatprep.mubr.bf16.mxu0 0
      %680 = vmatmul.mubr.bf16.gmra.mrb[0].mxu0 %v472
      %v681 = vpop.f32.mrb[0].mxu0
      %v682 = vadd.f32 %v248, %v681
      %v683 = vpop.f32.mrb[0].mxu0
      %v684 = vpop.f32.mrb[0].mxu0
      %v685 = vadd.f32 %v248, %v684
      %v686 = vpop.f32.mrb[0].mxu0
      %687 = vmatprep.mubr.bf16.mxu0 0
      %688 = vmatmul.mubr.bf16.gmra.mrb[0].mxu0 %v475
      %v689 = vpop.f32.mrb[0].mxu0
      %v690 = vadd.f32 %v248, %v689
      %v691 = vpop.f32.mrb[0].mxu0
      %v692 = vpop.f32.mrb[0].mxu0
      %v693 = vadd.f32 %v248, %v692
      %v694 = vpop.f32.mrb[0].mxu0
      %695 = vmatprep.mubr.bf16.mxu0 0
      %696 = vmatmul.mubr.bf16.gmra.mrb[0].mxu0 %v478
      %v697 = vpop.f32.mrb[0].mxu0
      %v698 = vadd.f32 %v248, %v697
      %v699 = vpop.f32.mrb[0].mxu0
      %v700 = vpop.f32.mrb[0].mxu0
      %v701 = vadd.f32 %v248, %v700
      %v702 = vpop.f32.mrb[0].mxu0
      %703 = vmatprep.mubr.bf16.mxu0 0
      %704 = vmatmul.mubr.bf16.gmra.mrb[0].mxu0 %v481
      %v705 = vpop.f32.mrb[0].mxu0
      %v706 = vadd.f32 %v248, %v705
      %v707 = vpop.f32.mrb[0].mxu0
      %v708 = vpop.f32.mrb[0].mxu0
      %v709 = vadd.f32 %v248, %v708
      %v710 = vpop.f32.mrb[0].mxu0
      %711 = vmatprep.mubr.bf16.mxu0 0
      %712 = vmatmul.mubr.bf16.gmra.mrb[0].mxu0 %v484
      %v713 = vpop.f32.mrb[0].mxu0
      %v714 = vadd.f32 %v248, %v713
      %v715 = vpop.f32.mrb[0].mxu0
      %v716 = vpop.f32.mrb[0].mxu0
      %v717 = vadd.f32 %v248, %v716
      %v718 = vpop.f32.mrb[0].mxu0
      %719 = vmatprep.mubr.bf16.mxu0 0
      %720 = vmatmul.mubr.bf16.gmra.mrb[0].mxu0 %v487
      %v721 = vpop.f32.mrb[0].mxu0
      %v722 = vadd.f32 %v248, %v721
      %v723 = vpop.f32.mrb[0].mxu0
      %v724 = vpop.f32.mrb[0].mxu0
      %v725 = vadd.f32 %v248, %v724
      %v726 = vpop.f32.mrb[0].mxu0
      %727 = vmatprep.mubr.bf16.mxu0 0
      %728 = vmatmul.mubr.bf16.gmra.mrb[0].mxu0 %v490
      %v729 = vpop.f32.mrb[0].mxu0
      %v730 = vadd.f32 %v248, %v729
      %v731 = vpop.f32.mrb[0].mxu0
      %v732 = vpop.f32.mrb[0].mxu0
      %v733 = vadd.f32 %v248, %v732
      %v734 = vpop.f32.mrb[0].mxu0
      %735 = vmatprep.mubr.bf16.mxu0 0
      %736 = vmatmul.mubr.bf16.gmra.mrb[0].mxu0 %v493
      %v737 = vpop.f32.mrb[0].mxu0
      %v738 = vadd.f32 %v248, %v737
      %v739 = vpop.f32.mrb[0].mxu0
      %v740 = vpop.f32.mrb[0].mxu0
      %v741 = vadd.f32 %v248, %v740
      %v742 = vpop.f32.mrb[0].mxu0
      %743 = vmatprep.mubr.bf16.mxu0 0
      %744 = vmatmul.mubr.bf16.gmra.mrb[0].mxu0 %v496
      %v745 = vpop.f32.mrb[0].mxu0
      %v746 = vadd.f32 %v248, %v745
      %v747 = vpop.f32.mrb[0].mxu0
      %v748 = vpop.f32.mrb[0].mxu0
      %v749 = vadd.f32 %v248, %v748
      %v750 = vpop.f32.mrb[0].mxu0
      %751 = vmatprep.mubr.bf16.mxu0 0
      %752 = vmatmul.mubr.bf16.gmra.mrb[0].mxu0 %v499
      %v753 = vpop.f32.mrb[0].mxu0
      %v754 = vadd.f32 %v248, %v753
      %v755 = vpop.f32.mrb[0].mxu0
      %v756 = vpop.f32.mrb[0].mxu0
      %v757 = vadd.f32 %v248, %v756
      %v758 = vpop.f32.mrb[0].mxu0
      %759 = vmatprep.mubr.bf16.mxu0 0
      %760 = vmatmul.mubr.bf16.gmra.mrb[0].mxu0 %v502
      %v761 = vpop.f32.mrb[0].mxu0
      %v762 = vadd.f32 %v248, %v761
      %v763 = vpop.f32.mrb[0].mxu0
      %v764 = vpop.f32.mrb[0].mxu0
      %v765 = vadd.f32 %v248, %v764
      %v766 = vpop.f32.mrb[0].mxu0
      %767 = vmatprep.mubr.bf16.mxu0 0
      %768 = vmatmul.mubr.bf16.gmra.mrb[0].mxu0 %v505
      %v769 = vpop.f32.mrb[0].mxu0
      %v770 = vadd.f32 %v248, %v769
      %v771 = vpop.f32.mrb[0].mxu0
      %v772 = vpop.f32.mrb[0].mxu0
      %v773 = vadd.f32 %v248, %v772
      %v774 = vpop.f32.mrb[0].mxu0
      %775 = vmatprep.mubr.bf16.mxu0 0
      %776 = vmatmul.mubr.bf16.gmra.mrb[0].mxu0 %v508
      %v777 = vpop.f32.mrb[0].mxu0
      %v778 = vadd.f32 %v248, %v777
      %v779 = vpop.f32.mrb[0].mxu0
      %v780 = vpop.f32.mrb[0].mxu0
      %v781 = vadd.f32 %v248, %v780
      %v782 = vpop.f32.mrb[0].mxu0
      %783 = vmatprep.mubr.bf16.mxu0 0
      %784 = vmatmul.mubr.bf16.gmra.mrb[0].mxu0 %v511
      %v785 = vpop.f32.mrb[0].mxu0
      %v786 = vadd.f32 %v248, %v785
      %v787 = vpop.f32.mrb[0].mxu0
      %v788 = vpop.f32.mrb[0].mxu0
      %v789 = vadd.f32 %v248, %v788
      %v790 = vpop.f32.mrb[0].mxu0
      %791 = vmatprep.mubr.bf16.mxu0 0
      %792 = vmatmul.mubr.bf16.gmra.mrb[0].mxu0 %v514
      %v793 = vpop.f32.mrb[0].mxu0
      %v794 = vadd.f32 %v248, %v793
      %v795 = vpop.f32.mrb[0].mxu0
      %v796 = vpop.f32.mrb[0].mxu0
      %v797 = vadd.f32 %v248, %v796
      %v798 = vpop.f32.mrb[0].mxu0
      %799 = vmatprep.mubr.bf16.mxu0 0
      %800 = vmatmul.mubr.bf16.gmra.mrb[0].mxu0 %v517
      %v801 = vpop.f32.mrb[0].mxu0
      %v802 = vadd.f32 %v248, %v801
      %v803 = vpop.f32.mrb[0].mxu0
      %v804 = vpop.f32.mrb[0].mxu0
      %v805 = vadd.f32 %v248, %v804
      %v806 = vpop.f32.mrb[0].mxu0
      %807 = vdwg.mxu0
      %v808 = vmax.f32 %v554, 0.0
      %v809 = vmax.f32 %v557, 0.0
      %v810 = vmax.f32 %v562, 0.0
      %v811 = vmax.f32 %v565, 0.0
      %v812 = vmax.f32 %v570, 0.0
      %v813 = vmax.f32 %v573, 0.0
      %v814 = vmax.f32 %v578, 0.0
      %v815 = vmax.f32 %v581, 0.0
      %v816 = vmax.f32 %v586, 0.0
      %v817 = vmax.f32 %v589, 0.0
      %v818 = vmax.f32 %v594, 0.0
      %v819 = vmax.f32 %v597, 0.0
      %v820 = vmax.f32 %v602, 0.0
      %v821 = vmax.f32 %v605, 0.0
      %v822 = vmax.f32 %v610, 0.0
      %v823 = vmax.f32 %v613, 0.0
      %v824 = vmax.f32 %v618, 0.0
      %v825 = vmax.f32 %v621, 0.0
      %v826 = vmax.f32 %v626, 0.0
      %v827 = vmax.f32 %v629, 0.0
      %v828 = vmax.f32 %v634, 0.0
      %v829 = vmax.f32 %v637, 0.0
      %v830 = vmax.f32 %v642, 0.0
      %v831 = vmax.f32 %v645, 0.0
      %v832 = vmax.f32 %v650, 0.0
      %v833 = vmax.f32 %v653, 0.0
      %v834 = vmax.f32 %v658, 0.0
      %v835 = vmax.f32 %v661, 0.0
      %v836 = vmax.f32 %v666, 0.0
      %v837 = vmax.f32 %v669, 0.0
      %v838 = vmax.f32 %v674, 0.0
      %v839 = vmax.f32 %v677, 0.0
      %v840 = vmax.f32 %v682, 0.0
      %v841 = vmax.f32 %v685, 0.0
      %v842 = vmax.f32 %v690, 0.0
      %v843 = vmax.f32 %v693, 0.0
      %v844 = vmax.f32 %v698, 0.0
      %v845 = vmax.f32 %v701, 0.0
      %v846 = vmax.f32 %v706, 0.0
      %v847 = vmax.f32 %v709, 0.0
      %v848 = vmax.f32 %v714, 0.0
      %v849 = vmax.f32 %v717, 0.0
      %v850 = vmax.f32 %v722, 0.0
      %v851 = vmax.f32 %v725, 0.0
      %v852 = vmax.f32 %v730, 0.0
      %v853 = vmax.f32 %v733, 0.0
      %v854 = vmax.f32 %v738, 0.0
      %v855 = vmax.f32 %v741, 0.0
      %v856 = vmax.f32 %v746, 0.0
      %v857 = vmax.f32 %v749, 0.0
      %v858 = vmax.f32 %v754, 0.0
      %v859 = vmax.f32 %v757, 0.0
      %v860 = vmax.f32 %v762, 0.0
      %v861 = vmax.f32 %v765, 0.0
      %v862 = vmax.f32 %v770, 0.0
      %v863 = vmax.f32 %v773, 0.0
      %v864 = vmax.f32 %v778, 0.0
      %v865 = vmax.f32 %v781, 0.0
      %v866 = vmax.f32 %v786, 0.0
      %v867 = vmax.f32 %v789, 0.0
      %v868 = vmax.f32 %v794, 0.0
      %v869 = vmax.f32 %v797, 0.0
      %v870 = vmax.f32 %v802, 0.0
      %v871 = vmax.f32 %v805, 0.0
      %v872 = vpack.c.bf16 %v809, %v808
      %v873 = vpack.c.bf16 %v811, %v810
      %v874 = vpack.c.bf16 %v813, %v812
      %v875 = vpack.c.bf16 %v815, %v814
      %v876 = vpack.c.bf16 %v817, %v816
      %v877 = vpack.c.bf16 %v819, %v818
      %v878 = vpack.c.bf16 %v821, %v820
      %v879 = vpack.c.bf16 %v823, %v822
      %v880 = vpack.c.bf16 %v825, %v824
      %v881 = vpack.c.bf16 %v827, %v826
      %v882 = vpack.c.bf16 %v829, %v828
      %v883 = vpack.c.bf16 %v831, %v830
      %v884 = vpack.c.bf16 %v833, %v832
      %v885 = vpack.c.bf16 %v835, %v834
      %v886 = vpack.c.bf16 %v837, %v836
      %v887 = vpack.c.bf16 %v839, %v838
      %v888 = vpack.c.bf16 %v841, %v840
      %v889 = vpack.c.bf16 %v843, %v842
      %v890 = vpack.c.bf16 %v845, %v844
      %v891 = vpack.c.bf16 %v847, %v846
      %v892 = vpack.c.bf16 %v849, %v848
      %v893 = vpack.c.bf16 %v851, %v850
      %v894 = vpack.c.bf16 %v853, %v852
      %v895 = vpack.c.bf16 %v855, %v854
      %v896 = vpack.c.bf16 %v857, %v856
      %v897 = vpack.c.bf16 %v859, %v858
      %v898 = vpack.c.bf16 %v861, %v860
      %v899 = vpack.c.bf16 %v863, %v862
      %v900 = vpack.c.bf16 %v865, %v864
      %v901 = vpack.c.bf16 %v867, %v866
      %v902 = vpack.c.bf16 %v869, %v868
      %v903 = vpack.c.bf16 %v871, %v870
      %v936 = vunpack.c.l.b16 %v872
      %v937 = vunpack.c.h.b16 %v872
      %v938 = vunpack.c.l.b16 %v873
      %v939 = vunpack.c.h.b16 %v873
      %v940 = vunpack.c.l.b16 %v874
      %v941 = vunpack.c.h.b16 %v874
      %v942 = vunpack.c.l.b16 %v875
      %v943 = vunpack.c.h.b16 %v875
      %v944 = vunpack.c.l.b16 %v876
      %v945 = vunpack.c.h.b16 %v876
      %v946 = vunpack.c.l.b16 %v877
      %v947 = vunpack.c.h.b16 %v877
      %v948 = vunpack.c.l.b16 %v878
      %v949 = vunpack.c.h.b16 %v878
      %v950 = vunpack.c.l.b16 %v879
      %v951 = vunpack.c.h.b16 %v879
      %v952 = vunpack.c.l.b16 %v880
      %v953 = vunpack.c.h.b16 %v880
      %v954 = vunpack.c.l.b16 %v881
      %v955 = vunpack.c.h.b16 %v881
      %v956 = vunpack.c.l.b16 %v882
      %v957 = vunpack.c.h.b16 %v882
      %v958 = vunpack.c.l.b16 %v883
      %v959 = vunpack.c.h.b16 %v883
      %v960 = vunpack.c.l.b16 %v884
      %v961 = vunpack.c.h.b16 %v884
      %v962 = vunpack.c.l.b16 %v885
      %v963 = vunpack.c.h.b16 %v885
      %v964 = vunpack.c.l.b16 %v886
      %v965 = vunpack.c.h.b16 %v886
      %v966 = vunpack.c.l.b16 %v887
      %v967 = vunpack.c.h.b16 %v887
      %v968 = vunpack.c.l.b16 %v888
      %v969 = vunpack.c.h.b16 %v888
      %v970 = vunpack.c.l.b16 %v889
      %v971 = vunpack.c.h.b16 %v889
      %v972 = vunpack.c.l.b16 %v890
      %v973 = vunpack.c.h.b16 %v890
      %v974 = vunpack.c.l.b16 %v891
      %v975 = vunpack.c.h.b16 %v891
      %v976 = vunpack.c.l.b16 %v892
      %v977 = vunpack.c.h.b16 %v892
      %v978 = vunpack.c.l.b16 %v893
      %v979 = vunpack.c.h.b16 %v893
      %v980 = vunpack.c.l.b16 %v894
      %v981 = vunpack.c.h.b16 %v894
      %v982 = vunpack.c.l.b16 %v895
      %v983 = vunpack.c.h.b16 %v895
      %v984 = vunpack.c.l.b16 %v896
      %v985 = vunpack.c.h.b16 %v896
      %v986 = vunpack.c.l.b16 %v897
      %v987 = vunpack.c.h.b16 %v897
      %v988 = vunpack.c.l.b16 %v898
      %v989 = vunpack.c.h.b16 %v898
      %v990 = vunpack.c.l.b16 %v899
      %v991 = vunpack.c.h.b16 %v899
      %v992 = vunpack.c.l.b16 %v900
      %v993 = vunpack.c.h.b16 %v900
      %v994 = vunpack.c.l.b16 %v901
      %v995 = vunpack.c.h.b16 %v901
      %v996 = vunpack.c.l.b16 %v902
      %v997 = vunpack.c.h.b16 %v902
      %v998 = vunpack.c.l.b16 %v903
      %v999 = vunpack.c.h.b16 %v903
      %v1000 = vpack.c.b16 %v936, %v936
      %v1001 = vpack.c.b16 %v937, %v937
      %v1002 = vpack.c.b16 %v938, %v938
      %v1003 = vpack.c.b16 %v939, %v939
      %v1004 = vpack.c.b16 %v940, %v940
      %v1005 = vpack.c.b16 %v941, %v941
      %v1006 = vpack.c.b16 %v942, %v942
      %v1007 = vpack.c.b16 %v943, %v943
      %v1008 = vpack.c.b16 %v944, %v944
      %v1009 = vpack.c.b16 %v945, %v945
      %v1010 = vpack.c.b16 %v946, %v946
      %v1011 = vpack.c.b16 %v947, %v947
      %v1012 = vpack.c.b16 %v948, %v948
      %v1013 = vpack.c.b16 %v949, %v949
      %v1014 = vpack.c.b16 %v950, %v950
      %v1015 = vpack.c.b16 %v951, %v951
      %v1016 = vpack.c.b16 %v952, %v952
      %v1017 = vpack.c.b16 %v953, %v953
      %v1018 = vpack.c.b16 %v954, %v954
      %v1019 = vpack.c.b16 %v955, %v955
      %v1020 = vpack.c.b16 %v956, %v956
      %v1021 = vpack.c.b16 %v957, %v957
      %v1022 = vpack.c.b16 %v958, %v958
      %v1023 = vpack.c.b16 %v959, %v959
      %v1024 = vpack.c.b16 %v960, %v960
      %v1025 = vpack.c.b16 %v961, %v961
      %v1026 = vpack.c.b16 %v962, %v962
      %v1027 = vpack.c.b16 %v963, %v963
      %v1028 = vpack.c.b16 %v964, %v964
      %v1029 = vpack.c.b16 %v965, %v965
      %v1030 = vpack.c.b16 %v966, %v966
      %v1031 = vpack.c.b16 %v967, %v967
      %v1032 = vpack.c.b16 %v968, %v968
      %v1033 = vpack.c.b16 %v969, %v969
      %v1034 = vpack.c.b16 %v970, %v970
      %v1035 = vpack.c.b16 %v971, %v971
      %v1036 = vpack.c.b16 %v972, %v972
      %v1037 = vpack.c.b16 %v973, %v973
      %v1038 = vpack.c.b16 %v974, %v974
      %v1039 = vpack.c.b16 %v975, %v975
      %v1040 = vpack.c.b16 %v976, %v976
      %v1041 = vpack.c.b16 %v977, %v977
      %v1042 = vpack.c.b16 %v978, %v978
      %v1043 = vpack.c.b16 %v979, %v979
      %v1044 = vpack.c.b16 %v980, %v980
      %v1045 = vpack.c.b16 %v981, %v981
      %v1046 = vpack.c.b16 %v982, %v982
      %v1047 = vpack.c.b16 %v983, %v983
      %v1048 = vpack.c.b16 %v984, %v984
      %v1049 = vpack.c.b16 %v985, %v985
      %v1050 = vpack.c.b16 %v986, %v986
      %v1051 = vpack.c.b16 %v987, %v987
      %v1052 = vpack.c.b16 %v988, %v988
      %v1053 = vpack.c.b16 %v989, %v989
      %v1054 = vpack.c.b16 %v990, %v990
      %v1055 = vpack.c.b16 %v991, %v991
      %v1056 = vpack.c.b16 %v992, %v992
      %v1057 = vpack.c.b16 %v993, %v993
      %v1058 = vpack.c.b16 %v994, %v994
      %v1059 = vpack.c.b16 %v995, %v995
      %v1060 = vpack.c.b16 %v996, %v996
      %v1061 = vpack.c.b16 %v997, %v997
      %v1062 = vpack.c.b16 %v998, %v998
      %v1063 = vpack.c.b16 %v999, %v999
      %1128 = vst [vmem:[%s172] sm:$0xf] %v1000
      %1129 = vst [vmem:[%s172 + $0x4] sm:$0xf] %v1001
      %1130 = vst [vmem:[%s172 + $0x8] sm:$0xf] %v1002
      %1131 = vst [vmem:[%s172 + $0xc] sm:$0xf] %v1003
      %1132 = vst [vmem:[%s172 + $0x10] sm:$0xf] %v1004
      %1133 = vst [vmem:[%s172 + $0x14] sm:$0xf] %v1005
      %1134 = vst [vmem:[%s172 + $0x18] sm:$0xf] %v1006
      %1135 = vst [vmem:[%s172 + $0x1c] sm:$0xf] %v1007
      %1136 = vst [vmem:[%s172 + $0x20] sm:$0xf] %v1008
      %1137 = vst [vmem:[%s172 + $0x24] sm:$0xf] %v1009
      %1138 = vst [vmem:[%s172 + $0x28] sm:$0xf] %v1010
      %1139 = vst [vmem:[%s172 + $0x2c] sm:$0xf] %v1011
      %1140 = vst [vmem:[%s172 + $0x30] sm:$0xf] %v1012
      %1141 = vst [vmem:[%s172 + $0x34] sm:$0xf] %v1013
      %1142 = vst [vmem:[%s172 + $0x38] sm:$0xf] %v1014
      %1143 = vst [vmem:[%s172 + $0x3c] sm:$0xf] %v1015
      %1144 = vst [vmem:[%s172 + $0x40] sm:$0xf] %v1016
      %1145 = vst [vmem:[%s172 + $0x44] sm:$0xf] %v1017
      %1146 = vst [vmem:[%s172 + $0x48] sm:$0xf] %v1018
      %1147 = vst [vmem:[%s172 + $0x4c] sm:$0xf] %v1019
      %1148 = vst [vmem:[%s172 + $0x50] sm:$0xf] %v1020
      %1149 = vst [vmem:[%s172 + $0x54] sm:$0xf] %v1021
      %1150 = vst [vmem:[%s172 + $0x58] sm:$0xf] %v1022
      %1151 = vst [vmem:[%s172 + $0x5c] sm:$0xf] %v1023
      %1152 = vst [vmem:[%s172 + $0x60] sm:$0xf] %v1024
      %1153 = vst [vmem:[%s172 + $0x64] sm:$0xf] %v1025
      %1154 = vst [vmem:[%s172 + $0x68] sm:$0xf] %v1026
      %1155 = vst [vmem:[%s172 + $0x6c] sm:$0xf] %v1027
      %1156 = vst [vmem:[%s172 + $0x70] sm:$0xf] %v1028
      %1157 = vst [vmem:[%s172 + $0x74] sm:$0xf] %v1029
      %1158 = vst [vmem:[%s172 + $0x78] sm:$0xf] %v1030
      %1159 = vst [vmem:[%s172 + $0x7c] sm:$0xf] %v1031
      %1160 = vst [vmem:[%s172 + $0x80] sm:$0xf] %v1032
      %1161 = vst [vmem:[%s172 + $0x84] sm:$0xf] %v1033
      %1162 = vst [vmem:[%s172 + $0x88] sm:$0xf] %v1034
      %1163 = vst [vmem:[%s172 + $0x8c] sm:$0xf] %v1035
      %1164 = vst [vmem:[%s172 + $0x90] sm:$0xf] %v1036
      %1165 = vst [vmem:[%s172 + $0x94] sm:$0xf] %v1037
      %1166 = vst [vmem:[%s172 + $0x98] sm:$0xf] %v1038
      %1167 = vst [vmem:[%s172 + $0x9c] sm:$0xf] %v1039
      %1168 = vst [vmem:[%s172 + $0xa0] sm:$0xf] %v1040
      %1169 = vst [vmem:[%s172 + $0xa4] sm:$0xf] %v1041
      %1170 = vst [vmem:[%s172 + $0xa8] sm:$0xf] %v1042
      %1171 = vst [vmem:[%s172 + $0xac] sm:$0xf] %v1043
      %1172 = vst [vmem:[%s172 + $0xb0] sm:$0xf] %v1044
      %1173 = vst [vmem:[%s172 + $0xb4] sm:$0xf] %v1045
      %1174 = vst [vmem:[%s172 + $0xb8] sm:$0xf] %v1046
      %1175 = vst [vmem:[%s172 + $0xbc] sm:$0xf] %v1047
      %1176 = vst [vmem:[%s172 + $0xc0] sm:$0xf] %v1048
      %1177 = vst [vmem:[%s172 + $0xc4] sm:$0xf] %v1049
      %1178 = vst [vmem:[%s172 + $0xc8] sm:$0xf] %v1050
      %1179 = vst [vmem:[%s172 + $0xcc] sm:$0xf] %v1051
      %1180 = vst [vmem:[%s172 + $0xd0] sm:$0xf] %v1052
      %1181 = vst [vmem:[%s172 + $0xd4] sm:$0xf] %v1053
      %1182 = vst [vmem:[%s172 + $0xd8] sm:$0xf] %v1054
      %1183 = vst [vmem:[%s172 + $0xdc] sm:$0xf] %v1055
      %1184 = vst [vmem:[%s172 + $0xe0] sm:$0xf] %v1056
      %1185 = vst [vmem:[%s172 + $0xe4] sm:$0xf] %v1057
      %1186 = vst [vmem:[%s172 + $0xe8] sm:$0xf] %v1058
      %1187 = vst [vmem:[%s172 + $0xec] sm:$0xf] %v1059
      %1188 = vst [vmem:[%s172 + $0xf0] sm:$0xf] %v1060
      %1189 = vst [vmem:[%s172 + $0xf4] sm:$0xf] %v1061
      %1190 = vst [vmem:[%s172 + $0xf8] sm:$0xf] %v1062
      %1191 = vst [vmem:[%s172 + $0xfc] sm:$0xf] %v1063
      %s1192 = smul.u32 64, %s14
      %p1193 = scmp.lt.s32.totalorder %s1192, 255
      %s1194 = scalar_select %p1193, %s1192, 255
      %s1195 = smul.addr %s1194, 4
      %s1196 = scalar_lea.vmem %s3, %s1195
      // Predicated region
      $region33: #{faster_rcnn_forward.9} parent=31 // pred_check
        %p1197 = pneg %p100
      $region34: #{faster_rcnn_forward.9} parent=31 // pred_check_branch
        %1199 = sbr.rel (%p1197) target = $region36
      $region35: #{faster_rcnn_forward.9} parent=31 // pred_region
        %s1200 = smul.u32 64, %s14
      $region36: #{faster_rcnn_forward.9} parent=31 // pred_fallthru
        _
    $region32: #{faster_rcnn_forward.9} parent=5 // pred_fallthru
      _
    %p1201 = scmp.le.s32.totalorder 2, %s9
    // Predicated region
    $region37: #{faster_rcnn_forward.9} parent=5 // pred_check
      %p1202 = pneg %p1201
    $region38: #{faster_rcnn_forward.9} parent=5 // pred_check_branch
      %1204 = sbr.rel (%p1202) target = $region40
    $region39: #{faster_rcnn_forward.9} parent=5 // pred_region
      %s1205 = ssub.s32 %s9, 2
      // Predicated region
      $region41: #{faster_rcnn_forward.9} parent=39 // pred_check
        %p1206 = pneg %p106
      $region42: #{faster_rcnn_forward.9} parent=39 // pred_check_branch
        %1208 = sbr.rel (%p1206) target = $region44
      $region43: #{faster_rcnn_forward.9} parent=39 // pred_region
        %s1209 = smul.u32 64, %s15
        %p1210 = scmp.lt.s32.totalorder %s1209, 255
        %s1211 = scalar_select %p1210, %s1209, 255
        %s1212 = smul.addr %s1211, 4
        %s1213 = scalar_lea.vmem %s3, %s1212
      $region44: #{faster_rcnn_forward.9} parent=39 // pred_fallthru
        _
    $region40: #{faster_rcnn_forward.9} parent=5 // pred_fallthru
      _
  $region6: #{faster_rcnn_forward.9} parent=0 // loop_footer
    %s13 = sadd.s32 1, %s9
  $region7: #{faster_rcnn_forward.9} parent=0 // loop_footer_branch
    %8 = sbr.rel target = $region3
  $region8: #{faster_rcnn_forward.9} parent=0 // loop_exit
    _

// kernel: faster_rcnn_forward.10
$region0: #{faster_rcnn_forward.10}
  #allocation0 [shape = 'u32[]', space=smem, size = 0x4, offset = 0x4, fixed_abs, tag = 'smem constant byte address 0x4 - core index']
  #allocation1 [shape = 'u32[144,128]{1,0:T(1,128)}', space=vmem, size = 0x12000, scoped, tag = 'internal scratch']
  %s0 = inlined_call_operand.vmem [shape: bf16[512,144], index: 0, kind: input, shape index: {}]
  %s1 = inlined_call_operand.vmem [shape: bf16[144,128], index: 1, kind: input, shape index: {}]
  %s2 = inlined_call_operand.vmem [shape: f32[1,128], index: 2, kind: input, shape index: {}]
  %s3 = inlined_call_operand.vmem [shape: bf16[512,128], index: 3, kind: output, shape index: {}]
  %s4 = sld [smem:[#allocation0]]
  $region22: #{faster_rcnn_forward.10} parent=0
    _
  %s6 = ssub.s32 1, %s4
  %s7 = scalar_select 0, %s6, %s4
  // Predicated region
  $region2: #{faster_rcnn_forward.10} parent=0 // pred_check
    _
  $region3: #{faster_rcnn_forward.10} parent=0 // pred_check_branch
    %9 = sbr.rel (0) target = $region5
  $region4: #{faster_rcnn_forward.10} parent=0 // pred_region
    _
  $region5: #{faster_rcnn_forward.10} parent=0 // pred_fallthru
    _
  // Predicated region
  $region6: #{faster_rcnn_forward.10} parent=0 // pred_check
    _
  $region7: #{faster_rcnn_forward.10} parent=0 // pred_check_branch
    %11 = sbr.rel (0) target = $region9
  $region8: #{faster_rcnn_forward.10} parent=0 // pred_region
    _
  $region9: #{faster_rcnn_forward.10} parent=0 // pred_fallthru
    _
  // Predicated region
  $region10: #{faster_rcnn_forward.10} parent=0 // pred_check
    _
  $region11: #{faster_rcnn_forward.10} parent=0 // pred_check_branch
    %13 = sbr.rel (0) target = $region13
  $region12: #{faster_rcnn_forward.10} parent=0 // pred_region
    _
  $region13: #{faster_rcnn_forward.10} parent=0 // pred_fallthru
    _
  %v15 = vld [vmem:[%s0] sm:$0xff]
  %v16 = vld [vmem:[%s0 + $0x8] sm:$0xff]
  %v17 = vld [vmem:[%s0 + $0x10] sm:$0xff]
  %v18 = vld [vmem:[%s0 + $0x18] sm:$0xff]
  %v19 = vld [vmem:[%s0 + $0x20] sm:$0xff]
  %v20 = vld [vmem:[%s0 + $0x28] sm:$0xff]
  %v21 = vld [vmem:[%s0 + $0x30] sm:$0xff]
  %v22 = vld [vmem:[%s0 + $0x38] sm:$0xff]
  %v23 = vld [vmem:[%s0 + $0x40] sm:$0xff]
  %v24 = vld [vmem:[%s0 + $0x48] sm:$0xff]
  %v25 = vld [vmem:[%s0 + $0x50] sm:$0xff]
  %v26 = vld [vmem:[%s0 + $0x58] sm:$0xff]
  %v27 = vld [vmem:[%s0 + $0x60] sm:$0xff]
  %v28 = vld [vmem:[%s0 + $0x68] sm:$0xff]
  %v29 = vld [vmem:[%s0 + $0x70] sm:$0xff]
  %v30 = vld [vmem:[%s0 + $0x78] sm:$0xff]
  %v31 = vld [vmem:[%s0 + $0x80] sm:$0xff]
  %v32 = vld [vmem:[%s0 + $0x88] sm:$0xff]
  %v33 = vld [vmem:[%s0 + $0x90] sm:$0xff]
  %v34 = vld [vmem:[%s0 + $0x98] sm:$0xff]
  %v35 = vld [vmem:[%s0 + $0xa0] sm:$0xff]
  %v36 = vld [vmem:[%s0 + $0xa8] sm:$0xff]
  %v37 = vld [vmem:[%s0 + $0xb0] sm:$0xff]
  %v38 = vld [vmem:[%s0 + $0xb8] sm:$0xff]
  %v39 = vld [vmem:[%s0 + $0xc0] sm:$0xff]
  %v40 = vld [vmem:[%s0 + $0xc8] sm:$0xff]
  %v41 = vld [vmem:[%s0 + $0xd0] sm:$0xff]
  %v42 = vld [vmem:[%s0 + $0xd8] sm:$0xff]
  %v43 = vld [vmem:[%s0 + $0xe0] sm:$0xff]
  %v44 = vld [vmem:[%s0 + $0xe8] sm:$0xff]
  %v45 = vld [vmem:[%s0 + $0xf0] sm:$0xff]
  %v46 = vld [vmem:[%s0 + $0xf8] sm:$0xff]
  %v47 = vld [vmem:[%s0 + $0x100] sm:$0xff]
  %v48 = vld [vmem:[%s0 + $0x108] sm:$0xff]
  %v49 = vld [vmem:[%s0 + $0x110] sm:$0xff]
  %v50 = vld [vmem:[%s0 + $0x118] sm:$0xff]
  %v51 = vld [vmem:[%s0 + $0x120] sm:$0xff]
  %v52 = vld [vmem:[%s0 + $0x128] sm:$0xff]
  %v53 = vld [vmem:[%s0 + $0x130] sm:$0xff]
  %v54 = vld [vmem:[%s0 + $0x138] sm:$0xff]
  %v55 = vld [vmem:[%s0 + $0x140] sm:$0xff]
  %v56 = vld [vmem:[%s0 + $0x148] sm:$0xff]
  %v57 = vld [vmem:[%s0 + $0x150] sm:$0xff]
  %v58 = vld [vmem:[%s0 + $0x158] sm:$0xff]
  %v59 = vld [vmem:[%s0 + $0x160] sm:$0xff]
  %v60 = vld [vmem:[%s0 + $0x168] sm:$0xff]
  %v61 = vld [vmem:[%s0 + $0x170] sm:$0xff]
  %v62 = vld [vmem:[%s0 + $0x178] sm:$0xff]
  %v63 = vld [vmem:[%s0 + $0x180] sm:$0xff]
  %v64 = vld [vmem:[%s0 + $0x188] sm:$0xff]
  %v65 = vld [vmem:[%s0 + $0x190] sm:$0xff]
  %v66 = vld [vmem:[%s0 + $0x198] sm:$0xff]
  %v67 = vld [vmem:[%s0 + $0x1a0] sm:$0xff]
  %v68 = vld [vmem:[%s0 + $0x1a8] sm:$0xff]
  %v69 = vld [vmem:[%s0 + $0x1b0] sm:$0xff]
  %v70 = vld [vmem:[%s0 + $0x1b8] sm:$0xff]
  %v71 = vld [vmem:[%s0 + $0x1c0] sm:$0xff]
  %v72 = vld [vmem:[%s0 + $0x1c8] sm:$0xff]
  %v73 = vld [vmem:[%s0 + $0x1d0] sm:$0xff]
  %v74 = vld [vmem:[%s0 + $0x1d8] sm:$0xff]
  %v75 = vld [vmem:[%s0 + $0x1e0] sm:$0xff]
  %v76 = vld [vmem:[%s0 + $0x1e8] sm:$0xff]
  %v77 = vld [vmem:[%s0 + $0x1f0] sm:$0xff]
  %v78 = vld [vmem:[%s0 + $0x1f8] sm:$0xff]
  %v79 = vld [vmem:[%s1] sm:$0xf]
  %v80 = vld [vmem:[%s1 + $0x4] sm:$0xf]
  %v81 = vld [vmem:[%s1 + $0x8] sm:$0xf]
  %v82 = vld [vmem:[%s1 + $0xc] sm:$0xf]
  %v83 = vld [vmem:[%s1 + $0x10] sm:$0xf]
  %v84 = vld [vmem:[%s1 + $0x14] sm:$0xf]
  %v85 = vld [vmem:[%s1 + $0x18] sm:$0xf]
  %v86 = vld [vmem:[%s1 + $0x1c] sm:$0xf]
  %v87 = vld [vmem:[%s1 + $0x20] sm:$0xf]
  %v88 = vld [vmem:[%s1 + $0x24] sm:$0xf]
  %v89 = vld [vmem:[%s1 + $0x28] sm:$0xf]
  %v90 = vld [vmem:[%s1 + $0x2c] sm:$0xf]
  %v91 = vld [vmem:[%s1 + $0x30] sm:$0xf]
  %v92 = vld [vmem:[%s1 + $0x34] sm:$0xf]
  %v93 = vld [vmem:[%s1 + $0x38] sm:$0xf]
  %v94 = vld [vmem:[%s1 + $0x3c] sm:$0xf]
  %v95 = vld [vmem:[%s1 + $0x40] sm:$0xf]
  %v96 = vld [vmem:[%s1 + $0x44] sm:$0xf]
  %v97 = vld [vmem:[%s2] sm:$0x1]
  %v99 = vlaneseq
  %v100 = vshrl.u32 %v99, 7
  %v101 = vsub.s32 0, %v100
  %v102 = vrot.slane %v97, %v101
  %v168 = vunpack.c.l.b16 %v15
  %v169 = vunpack.c.h.b16 %v15
  %v170 = vunpack.c.l.b16 %v16
  %v171 = vunpack.c.h.b16 %v16
  %v172 = vunpack.c.l.b16 %v17
  %v173 = vunpack.c.h.b16 %v17
  %v174 = vunpack.c.l.b16 %v18
  %v175 = vunpack.c.h.b16 %v18
  %v176 = vunpack.c.l.b16 %v19
  %v177 = vunpack.c.h.b16 %v19
  %v178 = vunpack.c.l.b16 %v20
  %v179 = vunpack.c.h.b16 %v20
  %v180 = vunpack.c.l.b16 %v21
  %v181 = vunpack.c.h.b16 %v21
  %v182 = vunpack.c.l.b16 %v22
  %v183 = vunpack.c.h.b16 %v22
  %v184 = vunpack.c.l.b16 %v23
  %v185 = vunpack.c.h.b16 %v23
  %v186 = vunpack.c.l.b16 %v24
  %v187 = vunpack.c.h.b16 %v24
  %v188 = vunpack.c.l.b16 %v25
  %v189 = vunpack.c.h.b16 %v25
  %v190 = vunpack.c.l.b16 %v26
  %v191 = vunpack.c.h.b16 %v26
  %v192 = vunpack.c.l.b16 %v27
  %v193 = vunpack.c.h.b16 %v27
  %v194 = vunpack.c.l.b16 %v28
  %v195 = vunpack.c.h.b16 %v28
  %v196 = vunpack.c.l.b16 %v29
  %v197 = vunpack.c.h.b16 %v29
  %v198 = vunpack.c.l.b16 %v30
  %v199 = vunpack.c.h.b16 %v30
  %v200 = vunpack.c.l.b16 %v31
  %v201 = vunpack.c.h.b16 %v31
  %v202 = vunpack.c.l.b16 %v32
  %v203 = vunpack.c.h.b16 %v32
  %v204 = vunpack.c.l.b16 %v33
  %v205 = vunpack.c.h.b16 %v33
  %v206 = vunpack.c.l.b16 %v34
  %v207 = vunpack.c.h.b16 %v34
  %v208 = vunpack.c.l.b16 %v35
  %v209 = vunpack.c.h.b16 %v35
  %v210 = vunpack.c.l.b16 %v36
  %v211 = vunpack.c.h.b16 %v36
  %v212 = vunpack.c.l.b16 %v37
  %v213 = vunpack.c.h.b16 %v37
  %v214 = vunpack.c.l.b16 %v38
  %v215 = vunpack.c.h.b16 %v38
  %v216 = vunpack.c.l.b16 %v39
  %v217 = vunpack.c.h.b16 %v39
  %v218 = vunpack.c.l.b16 %v40
  %v219 = vunpack.c.h.b16 %v40
  %v220 = vunpack.c.l.b16 %v41
  %v221 = vunpack.c.h.b16 %v41
  %v222 = vunpack.c.l.b16 %v42
  %v223 = vunpack.c.h.b16 %v42
  %v224 = vunpack.c.l.b16 %v43
  %v225 = vunpack.c.h.b16 %v43
  %v226 = vunpack.c.l.b16 %v44
  %v227 = vunpack.c.h.b16 %v44
  %v228 = vunpack.c.l.b16 %v45
  %v229 = vunpack.c.h.b16 %v45
  %v230 = vunpack.c.l.b16 %v46
  %v231 = vunpack.c.h.b16 %v46
  %v232 = vunpack.c.l.b16 %v47
  %v233 = vunpack.c.h.b16 %v47
  %v234 = vunpack.c.l.b16 %v48
  %v235 = vunpack.c.h.b16 %v48
  %v236 = vunpack.c.l.b16 %v49
  %v237 = vunpack.c.h.b16 %v49
  %v238 = vunpack.c.l.b16 %v50
  %v239 = vunpack.c.h.b16 %v50
  %v240 = vunpack.c.l.b16 %v51
  %v241 = vunpack.c.h.b16 %v51
  %v242 = vunpack.c.l.b16 %v52
  %v243 = vunpack.c.h.b16 %v52
  %v244 = vunpack.c.l.b16 %v53
  %v245 = vunpack.c.h.b16 %v53
  %v246 = vunpack.c.l.b16 %v54
  %v247 = vunpack.c.h.b16 %v54
  %v248 = vunpack.c.l.b16 %v55
  %v249 = vunpack.c.h.b16 %v55
  %v250 = vunpack.c.l.b16 %v56
  %v251 = vunpack.c.h.b16 %v56
  %v252 = vunpack.c.l.b16 %v57
  %v253 = vunpack.c.h.b16 %v57
  %v254 = vunpack.c.l.b16 %v58
  %v255 = vunpack.c.h.b16 %v58
  %v256 = vunpack.c.l.b16 %v59
  %v257 = vunpack.c.h.b16 %v59
  %v258 = vunpack.c.l.b16 %v60
  %v259 = vunpack.c.h.b16 %v60
  %v260 = vunpack.c.l.b16 %v61
  %v261 = vunpack.c.h.b16 %v61
  %v262 = vunpack.c.l.b16 %v62
  %v263 = vunpack.c.h.b16 %v62
  %v264 = vunpack.c.l.b16 %v63
  %v265 = vunpack.c.h.b16 %v63
  %v266 = vunpack.c.l.b16 %v64
  %v267 = vunpack.c.h.b16 %v64
  %v268 = vunpack.c.l.b16 %v65
  %v269 = vunpack.c.h.b16 %v65
  %v270 = vunpack.c.l.b16 %v66
  %v271 = vunpack.c.h.b16 %v66
  %v272 = vunpack.c.l.b16 %v67
  %v273 = vunpack.c.h.b16 %v67
  %v274 = vunpack.c.l.b16 %v68
  %v275 = vunpack.c.h.b16 %v68
  %v276 = vunpack.c.l.b16 %v69
  %v277 = vunpack.c.h.b16 %v69
  %v278 = vunpack.c.l.b16 %v70
  %v279 = vunpack.c.h.b16 %v70
  %v280 = vunpack.c.l.b16 %v71
  %v281 = vunpack.c.h.b16 %v71
  %v282 = vunpack.c.l.b16 %v72
  %v283 = vunpack.c.h.b16 %v72
  %v284 = vunpack.c.l.b16 %v73
  %v285 = vunpack.c.h.b16 %v73
  %v286 = vunpack.c.l.b16 %v74
  %v287 = vunpack.c.h.b16 %v74
  %v288 = vunpack.c.l.b16 %v75
  %v289 = vunpack.c.h.b16 %v75
  %v290 = vunpack.c.l.b16 %v76
  %v291 = vunpack.c.h.b16 %v76
  %v292 = vunpack.c.l.b16 %v77
  %v293 = vunpack.c.h.b16 %v77
  %v294 = vunpack.c.l.b16 %v78
  %v295 = vunpack.c.h.b16 %v78
  %v296 = vpack.c.b16 %v170, %v168
  %v297 = vpack.c.b16 %v171, %v169
  %v298 = vpack.c.b16 %v174, %v172
  %v299 = vpack.c.b16 %v175, %v173
  %v300 = vpack.c.b16 %v178, %v176
  %v301 = vpack.c.b16 %v179, %v177
  %v302 = vpack.c.b16 %v182, %v180
  %v303 = vpack.c.b16 %v183, %v181
  %v304 = vpack.c.b16 %v186, %v184
  %v305 = vpack.c.b16 %v187, %v185
  %v306 = vpack.c.b16 %v190, %v188
  %v307 = vpack.c.b16 %v191, %v189
  %v308 = vpack.c.b16 %v194, %v192
  %v309 = vpack.c.b16 %v195, %v193
  %v310 = vpack.c.b16 %v198, %v196
  %v311 = vpack.c.b16 %v199, %v197
  %v312 = vpack.c.b16 %v202, %v200
  %v313 = vpack.c.b16 %v203, %v201
  %v314 = vpack.c.b16 %v206, %v204
  %v315 = vpack.c.b16 %v207, %v205
  %v316 = vpack.c.b16 %v210, %v208
  %v317 = vpack.c.b16 %v211, %v209
  %v318 = vpack.c.b16 %v214, %v212
  %v319 = vpack.c.b16 %v215, %v213
  %v320 = vpack.c.b16 %v218, %v216
  %v321 = vpack.c.b16 %v219, %v217
  %v322 = vpack.c.b16 %v222, %v220
  %v323 = vpack.c.b16 %v223, %v221
  %v324 = vpack.c.b16 %v226, %v224
  %v325 = vpack.c.b16 %v227, %v225
  %v326 = vpack.c.b16 %v230, %v228
  %v327 = vpack.c.b16 %v231, %v229
  %v328 = vpack.c.b16 %v234, %v232
  %v329 = vpack.c.b16 %v235, %v233
  %v330 = vpack.c.b16 %v238, %v236
  %v331 = vpack.c.b16 %v239, %v237
  %v332 = vpack.c.b16 %v242, %v240
  %v333 = vpack.c.b16 %v243, %v241
  %v334 = vpack.c.b16 %v246, %v244
  %v335 = vpack.c.b16 %v247, %v245
  %v336 = vpack.c.b16 %v250, %v248
  %v337 = vpack.c.b16 %v251, %v249
  %v338 = vpack.c.b16 %v254, %v252
  %v339 = vpack.c.b16 %v255, %v253
  %v340 = vpack.c.b16 %v258, %v256
  %v341 = vpack.c.b16 %v259, %v257
  %v342 = vpack.c.b16 %v262, %v260
  %v343 = vpack.c.b16 %v263, %v261
  %v344 = vpack.c.b16 %v266, %v264
  %v345 = vpack.c.b16 %v267, %v265
  %v346 = vpack.c.b16 %v270, %v268
  %v347 = vpack.c.b16 %v271, %v269
  %v348 = vpack.c.b16 %v274, %v272
  %v349 = vpack.c.b16 %v275, %v273
  %v350 = vpack.c.b16 %v278, %v276
  %v351 = vpack.c.b16 %v279, %v277
  %v352 = vpack.c.b16 %v282, %v280
  %v353 = vpack.c.b16 %v283, %v281
  %v354 = vpack.c.b16 %v286, %v284
  %v355 = vpack.c.b16 %v287, %v285
  %v356 = vpack.c.b16 %v290, %v288
  %v357 = vpack.c.b16 %v291, %v289
  %v358 = vpack.c.b16 %v294, %v292
  %v359 = vpack.c.b16 %v295, %v293
  %v410 = vunpack.c.l.b16 %v79
  %v411 = vunpack.c.l.b16 %v80
  %v412 = vunpack.c.l.b16 %v81
  %v413 = vunpack.c.l.b16 %v82
  %v414 = vunpack.c.l.b16 %v83
  %v415 = vunpack.c.l.b16 %v84
  %v416 = vunpack.c.l.b16 %v85
  %v417 = vunpack.c.l.b16 %v86
  %v418 = vunpack.c.l.b16 %v87
  %v419 = vunpack.c.l.b16 %v88
  %v420 = vunpack.c.l.b16 %v89
  %v421 = vunpack.c.l.b16 %v90
  %v422 = vunpack.c.l.b16 %v91
  %v423 = vunpack.c.l.b16 %v92
  %v424 = vunpack.c.l.b16 %v93
  %v425 = vunpack.c.l.b16 %v94
  %v426 = vunpack.c.l.b16 %v95
  %v427 = vunpack.c.l.b16 %v96
  %v428 = vpack.c.b16 %v411, %v410
  %v429 = vpack.c.b16 %v413, %v412
  %v430 = vpack.c.b16 %v415, %v414
  %v431 = vpack.c.b16 %v417, %v416
  %v432 = vpack.c.b16 %v419, %v418
  %v433 = vpack.c.b16 %v421, %v420
  %v434 = vpack.c.b16 %v423, %v422
  %v435 = vpack.c.b16 %v425, %v424
  %v436 = vpack.c.b16 %v427, %v426
  %vm446 = vcmask 130048
  %v448 = vsel %vm446, %v297, 0
  %v451 = vsel %vm446, %v299, 0
  %v454 = vsel %vm446, %v301, 0
  %v457 = vsel %vm446, %v303, 0
  %v460 = vsel %vm446, %v305, 0
  %v463 = vsel %vm446, %v307, 0
  %v466 = vsel %vm446, %v309, 0
  %v469 = vsel %vm446, %v311, 0
  %v472 = vsel %vm446, %v313, 0
  %v475 = vsel %vm446, %v315, 0
  %v478 = vsel %vm446, %v317, 0
  %v481 = vsel %vm446, %v319, 0
  %v484 = vsel %vm446, %v321, 0
  %v487 = vsel %vm446, %v323, 0
  %v490 = vsel %vm446, %v325, 0
  %v493 = vsel %vm446, %v327, 0
  %v496 = vsel %vm446, %v329, 0
  %v499 = vsel %vm446, %v331, 0
  %v502 = vsel %vm446, %v333, 0
  %v505 = vsel %vm446, %v335, 0
  %v508 = vsel %vm446, %v337, 0
  %v511 = vsel %vm446, %v339, 0
  %v514 = vsel %vm446, %v341, 0
  %v517 = vsel %vm446, %v343, 0
  %v520 = vsel %vm446, %v345, 0
  %v523 = vsel %vm446, %v347, 0
  %v526 = vsel %vm446, %v349, 0
  %v529 = vsel %vm446, %v351, 0
  %v532 = vsel %vm446, %v353, 0
  %v535 = vsel %vm446, %v355, 0
  %v538 = vsel %vm446, %v357, 0
  %v541 = vsel %vm446, %v359, 0
  %543 = vmatprep.subr.bf16.mxu0 0
  %544 = vmatpush1.bf16.msra.mxu0 %v428
  %545 = vmatprep.subr.bf16.mxu0 0
  %546 = vmatpush1.bf16.msra.mxu0 %v429
  %547 = vmatprep.subr.bf16.mxu0 0
  %548 = vmatpush1.bf16.msra.mxu0 %v430
  %549 = vmatprep.subr.bf16.mxu0 0
  %550 = vmatpush1.bf16.msra.mxu0 %v431
  %551 = vmatprep.subr.bf16.mxu0 0
  %552 = vmatpush1.bf16.msra.mxu0 %v432
  %553 = vmatprep.subr.bf16.mxu0 0
  %554 = vmatpush1.bf16.msra.mxu0 %v433
  %555 = vmatprep.subr.bf16.mxu0 0
  %556 = vmatpush1.bf16.msra.mxu0 %v434
  %557 = vmatprep.subr.bf16.mxu0 0
  %558 = vmatpush1.bf16.msra.mxu0 %v435
  %559 = vmatprep.subr.bf16.mxu0 0
  %560 = vmatpush1.bf16.msra.mxu0 %v436
  %561 = vmatprep.subr.bf16.mxu0 0
  %562 = vmatpush1.bf16.msra.mxu0 0
  %563 = vmatprep.subr.bf16.mxu0 0
  %564 = vmatpush1.bf16.msra.mxu0 0
  %565 = vmatprep.subr.bf16.mxu0 0
  %566 = vmatpush1.bf16.msra.mxu0 0
  %567 = vmatprep.subr.bf16.mxu0 0
  %568 = vmatpush1.bf16.msra.mxu0 0
  %569 = vmatprep.subr.bf16.mxu0 0
  %570 = vmatpush1.bf16.msra.mxu0 0
  %571 = vmatprep.subr.bf16.mxu0 0
  %572 = vmatpush1.bf16.msra.mxu0 0
  %573 = vmatprep.subr.bf16.mxu0 0
  %574 = vmatpush1.bf16.msra.mxu0 0
  %575 = vmatprep.mubr.bf16.mxu0 %v448
  %576 = vmatmul.mubr.bf16.gmra.mrb[0].mxu0 %v296
  %v577 = vpop.f32.mrb[0].mxu0
  %v578 = vadd.f32 %v102, %v577
  %v579 = vpop.f32.mrb[0].mxu0
  %v580 = vpop.f32.mrb[0].mxu0
  %v581 = vadd.f32 %v102, %v580
  %v582 = vpop.f32.mrb[0].mxu0
  %583 = vmatprep.mubr.bf16.mxu0 %v451
  %584 = vmatmul.mubr.bf16.gmra.mrb[0].mxu0 %v298
  %v585 = vpop.f32.mrb[0].mxu0
  %v586 = vadd.f32 %v102, %v585
  %v587 = vpop.f32.mrb[0].mxu0
  %v588 = vpop.f32.mrb[0].mxu0
  %v589 = vadd.f32 %v102, %v588
  %v590 = vpop.f32.mrb[0].mxu0
  %591 = vmatprep.mubr.bf16.mxu0 %v454
  %592 = vmatmul.mubr.bf16.gmra.mrb[0].mxu0 %v300
  %v593 = vpop.f32.mrb[0].mxu0
  %v594 = vadd.f32 %v102, %v593
  %v595 = vpop.f32.mrb[0].mxu0
  %v596 = vpop.f32.mrb[0].mxu0
  %v597 = vadd.f32 %v102, %v596
  %v598 = vpop.f32.mrb[0].mxu0
  %599 = vmatprep.mubr.bf16.mxu0 %v457
  %600 = vmatmul.mubr.bf16.gmra.mrb[0].mxu0 %v302
  %v601 = vpop.f32.mrb[0].mxu0
  %v602 = vadd.f32 %v102, %v601
  %v603 = vpop.f32.mrb[0].mxu0
  %v604 = vpop.f32.mrb[0].mxu0
  %v605 = vadd.f32 %v102, %v604
  %v606 = vpop.f32.mrb[0].mxu0
  %607 = vmatprep.mubr.bf16.mxu0 %v460
  %608 = vmatmul.mubr.bf16.gmra.mrb[0].mxu0 %v304
  %v609 = vpop.f32.mrb[0].mxu0
  %v610 = vadd.f32 %v102, %v609
  %v611 = vpop.f32.mrb[0].mxu0
  %v612 = vpop.f32.mrb[0].mxu0
  %v613 = vadd.f32 %v102, %v612
  %v614 = vpop.f32.mrb[0].mxu0
  %615 = vmatprep.mubr.bf16.mxu0 %v463
  %616 = vmatmul.mubr.bf16.gmra.mrb[0].mxu0 %v306
  %v617 = vpop.f32.mrb[0].mxu0
  %v618 = vadd.f32 %v102, %v617
  %v619 = vpop.f32.mrb[0].mxu0
  %v620 = vpop.f32.mrb[0].mxu0
  %v621 = vadd.f32 %v102, %v620
  %v622 = vpop.f32.mrb[0].mxu0
  %623 = vmatprep.mubr.bf16.mxu0 %v466
  %624 = vmatmul.mubr.bf16.gmra.mrb[0].mxu0 %v308
  %v625 = vpop.f32.mrb[0].mxu0
  %v626 = vadd.f32 %v102, %v625
  %v627 = vpop.f32.mrb[0].mxu0
  %v628 = vpop.f32.mrb[0].mxu0
  %v629 = vadd.f32 %v102, %v628
  %v630 = vpop.f32.mrb[0].mxu0
  %631 = vmatprep.mubr.bf16.mxu0 %v469
  %632 = vmatmul.mubr.bf16.gmra.mrb[0].mxu0 %v310
  %v633 = vpop.f32.mrb[0].mxu0
  %v634 = vadd.f32 %v102, %v633
  %v635 = vpop.f32.mrb[0].mxu0
  %v636 = vpop.f32.mrb[0].mxu0
  %v637 = vadd.f32 %v102, %v636
  %v638 = vpop.f32.mrb[0].mxu0
  %639 = vmatprep.mubr.bf16.mxu0 %v472
  %640 = vmatmul.mubr.bf16.gmra.mrb[0].mxu0 %v312
  %v641 = vpop.f32.mrb[0].mxu0
  %v642 = vadd.f32 %v102, %v641
  %v643 = vpop.f32.mrb[0].mxu0
  %v644 = vpop.f32.mrb[0].mxu0
  %v645 = vadd.f32 %v102, %v644
  %v646 = vpop.f32.mrb[0].mxu0
  %647 = vmatprep.mubr.bf16.mxu0 %v475
  %648 = vmatmul.mubr.bf16.gmra.mrb[0].mxu0 %v314
  %v649 = vpop.f32.mrb[0].mxu0
  %v650 = vadd.f32 %v102, %v649
  %v651 = vpop.f32.mrb[0].mxu0
  %v652 = vpop.f32.mrb[0].mxu0
  %v653 = vadd.f32 %v102, %v652
  %v654 = vpop.f32.mrb[0].mxu0
  %655 = vmatprep.mubr.bf16.mxu0 %v478
  %656 = vmatmul.mubr.bf16.gmra.mrb[0].mxu0 %v316
  %v657 = vpop.f32.mrb[0].mxu0
  %v658 = vadd.f32 %v102, %v657
  %v659 = vpop.f32.mrb[0].mxu0
  %v660 = vpop.f32.mrb[0].mxu0
  %v661 = vadd.f32 %v102, %v660
  %v662 = vpop.f32.mrb[0].mxu0
  %663 = vmatprep.mubr.bf16.mxu0 %v481
  %664 = vmatmul.mubr.bf16.gmra.mrb[0].mxu0 %v318
  %v665 = vpop.f32.mrb[0].mxu0
  %v666 = vadd.f32 %v102, %v665
  %v667 = vpop.f32.mrb[0].mxu0
  %v668 = vpop.f32.mrb[0].mxu0
  %v669 = vadd.f32 %v102, %v668
  %v670 = vpop.f32.mrb[0].mxu0
  %671 = vmatprep.mubr.bf16.mxu0 %v484
  %672 = vmatmul.mubr.bf16.gmra.mrb[0].mxu0 %v320
  %v673 = vpop.f32.mrb[0].mxu0
  %v674 = vadd.f32 %v102, %v673
  %v675 = vpop.f32.mrb[0].mxu0
  %v676 = vpop.f32.mrb[0].mxu0
  %v677 = vadd.f32 %v102, %v676
  %v678 = vpop.f32.mrb[0].mxu0
  %679 = vmatprep.mubr.bf16.mxu0 %v487
  %680 = vmatmul.mubr.bf16.gmra.mrb[0].mxu0 %v322
  %v681 = vpop.f32.mrb[0].mxu0
  %v682 = vadd.f32 %v102, %v681
  %v683 = vpop.f32.mrb[0].mxu0
  %v684 = vpop.f32.mrb[0].mxu0
  %v685 = vadd.f32 %v102, %v684
  %v686 = vpop.f32.mrb[0].mxu0
  %687 = vmatprep.mubr.bf16.mxu0 %v490
  %688 = vmatmul.mubr.bf16.gmra.mrb[0].mxu0 %v324
  %v689 = vpop.f32.mrb[0].mxu0
  %v690 = vadd.f32 %v102, %v689
  %v691 = vpop.f32.mrb[0].mxu0
  %v692 = vpop.f32.mrb[0].mxu0
  %v693 = vadd.f32 %v102, %v692
  %v694 = vpop.f32.mrb[0].mxu0
  %695 = vmatprep.mubr.bf16.mxu0 %v493
  %696 = vmatmul.mubr.bf16.gmra.mrb[0].mxu0 %v326
  %v697 = vpop.f32.mrb[0].mxu0
  %v698 = vadd.f32 %v102, %v697
  %v699 = vpop.f32.mrb[0].mxu0
  %v700 = vpop.f32.mrb[0].mxu0
  %v701 = vadd.f32 %v102, %v700
  %v702 = vpop.f32.mrb[0].mxu0
  %703 = vmatprep.mubr.bf16.mxu0 %v496
  %704 = vmatmul.mubr.bf16.gmra.mrb[0].mxu0 %v328
  %v705 = vpop.f32.mrb[0].mxu0
  %v706 = vadd.f32 %v102, %v705
  %v707 = vpop.f32.mrb[0].mxu0
  %v708 = vpop.f32.mrb[0].mxu0
  %v709 = vadd.f32 %v102, %v708
  %v710 = vpop.f32.mrb[0].mxu0
  %711 = vmatprep.mubr.bf16.mxu0 %v499
  %712 = vmatmul.mubr.bf16.gmra.mrb[0].mxu0 %v330
  %v713 = vpop.f32.mrb[0].mxu0
  %v714 = vadd.f32 %v102, %v713
  %v715 = vpop.f32.mrb[0].mxu0
  %v716 = vpop.f32.mrb[0].mxu0
  %v717 = vadd.f32 %v102, %v716
  %v718 = vpop.f32.mrb[0].mxu0
  %719 = vmatprep.mubr.bf16.mxu0 %v502
  %720 = vmatmul.mubr.bf16.gmra.mrb[0].mxu0 %v332
  %v721 = vpop.f32.mrb[0].mxu0
  %v722 = vadd.f32 %v102, %v721
  %v723 = vpop.f32.mrb[0].mxu0
  %v724 = vpop.f32.mrb[0].mxu0
  %v725 = vadd.f32 %v102, %v724
  %v726 = vpop.f32.mrb[0].mxu0
  %727 = vmatprep.mubr.bf16.mxu0 %v505
  %728 = vmatmul.mubr.bf16.gmra.mrb[0].mxu0 %v334
  %v729 = vpop.f32.mrb[0].mxu0
  %v730 = vadd.f32 %v102, %v729
  %v731 = vpop.f32.mrb[0].mxu0
  %v732 = vpop.f32.mrb[0].mxu0
  %v733 = vadd.f32 %v102, %v732
  %v734 = vpop.f32.mrb[0].mxu0
  %735 = vmatprep.mubr.bf16.mxu0 %v508
  %736 = vmatmul.mubr.bf16.gmra.mrb[0].mxu0 %v336
  %v737 = vpop.f32.mrb[0].mxu0
  %v738 = vadd.f32 %v102, %v737
  %v739 = vpop.f32.mrb[0].mxu0
  %v740 = vpop.f32.mrb[0].mxu0
  %v741 = vadd.f32 %v102, %v740
  %v742 = vpop.f32.mrb[0].mxu0
  %743 = vmatprep.mubr.bf16.mxu0 %v511
  %744 = vmatmul.mubr.bf16.gmra.mrb[0].mxu0 %v338
  %v745 = vpop.f32.mrb[0].mxu0
  %v746 = vadd.f32 %v102, %v745
  %v747 = vpop.f32.mrb[0].mxu0
  %v748 = vpop.f32.mrb[0].mxu0
  %v749 = vadd.f32 %v102, %v748
  %v750 = vpop.f32.mrb[0].mxu0
  %751 = vmatprep.mubr.bf16.mxu0 %v514
  %752 = vmatmul.mubr.bf16.gmra.mrb[0].mxu0 %v340
  %v753 = vpop.f32.mrb[0].mxu0
  %v754 = vadd.f32 %v102, %v753
  %v755 = vpop.f32.mrb[0].mxu0
  %v756 = vpop.f32.mrb[0].mxu0
  %v757 = vadd.f32 %v102, %v756
  %v758 = vpop.f32.mrb[0].mxu0
  %759 = vmatprep.mubr.bf16.mxu0 %v517
  %760 = vmatmul.mubr.bf16.gmra.mrb[0].mxu0 %v342
  %v761 = vpop.f32.mrb[0].mxu0
  %v762 = vadd.f32 %v102, %v761
  %v763 = vpop.f32.mrb[0].mxu0
  %v764 = vpop.f32.mrb[0].mxu0
  %v765 = vadd.f32 %v102, %v764
  %v766 = vpop.f32.mrb[0].mxu0
  %767 = vmatprep.mubr.bf16.mxu0 %v520
  %768 = vmatmul.mubr.bf16.gmra.mrb[0].mxu0 %v344
  %v769 = vpop.f32.mrb[0].mxu0
  %v770 = vadd.f32 %v102, %v769
  %v771 = vpop.f32.mrb[0].mxu0
  %v772 = vpop.f32.mrb[0].mxu0
  %v773 = vadd.f32 %v102, %v772
  %v774 = vpop.f32.mrb[0].mxu0
  %775 = vmatprep.mubr.bf16.mxu0 %v523
  %776 = vmatmul.mubr.bf16.gmra.mrb[0].mxu0 %v346
  %v777 = vpop.f32.mrb[0].mxu0
  %v778 = vadd.f32 %v102, %v777
  %v779 = vpop.f32.mrb[0].mxu0
  %v780 = vpop.f32.mrb[0].mxu0
  %v781 = vadd.f32 %v102, %v780
  %v782 = vpop.f32.mrb[0].mxu0
  %783 = vmatprep.mubr.bf16.mxu0 %v526
  %784 = vmatmul.mubr.bf16.gmra.mrb[0].mxu0 %v348
  %v785 = vpop.f32.mrb[0].mxu0
  %v786 = vadd.f32 %v102, %v785
  %v787 = vpop.f32.mrb[0].mxu0
  %v788 = vpop.f32.mrb[0].mxu0
  %v789 = vadd.f32 %v102, %v788
  %v790 = vpop.f32.mrb[0].mxu0
  %791 = vmatprep.mubr.bf16.mxu0 %v529
  %792 = vmatmul.mubr.bf16.gmra.mrb[0].mxu0 %v350
  %v793 = vpop.f32.mrb[0].mxu0
  %v794 = vadd.f32 %v102, %v793
  %v795 = vpop.f32.mrb[0].mxu0
  %v796 = vpop.f32.mrb[0].mxu0
  %v797 = vadd.f32 %v102, %v796
  %v798 = vpop.f32.mrb[0].mxu0
  %799 = vmatprep.mubr.bf16.mxu0 %v532
  %800 = vmatmul.mubr.bf16.gmra.mrb[0].mxu0 %v352
  %v801 = vpop.f32.mrb[0].mxu0
  %v802 = vadd.f32 %v102, %v801
  %v803 = vpop.f32.mrb[0].mxu0
  %v804 = vpop.f32.mrb[0].mxu0
  %v805 = vadd.f32 %v102, %v804
  %v806 = vpop.f32.mrb[0].mxu0
  %807 = vmatprep.mubr.bf16.mxu0 %v535
  %808 = vmatmul.mubr.bf16.gmra.mrb[0].mxu0 %v354
  %v809 = vpop.f32.mrb[0].mxu0
  %v810 = vadd.f32 %v102, %v809
  %v811 = vpop.f32.mrb[0].mxu0
  %v812 = vpop.f32.mrb[0].mxu0
  %v813 = vadd.f32 %v102, %v812
  %v814 = vpop.f32.mrb[0].mxu0
  %815 = vmatprep.mubr.bf16.mxu0 %v538
  %816 = vmatmul.mubr.bf16.gmra.mrb[0].mxu0 %v356
  %v817 = vpop.f32.mrb[0].mxu0
  %v818 = vadd.f32 %v102, %v817
  %v819 = vpop.f32.mrb[0].mxu0
  %v820 = vpop.f32.mrb[0].mxu0
  %v821 = vadd.f32 %v102, %v820
  %v822 = vpop.f32.mrb[0].mxu0
  %823 = vmatprep.mubr.bf16.mxu0 %v541
  %824 = vmatmul.mubr.bf16.gmra.mrb[0].mxu0 %v358
  %v825 = vpop.f32.mrb[0].mxu0
  %v826 = vadd.f32 %v102, %v825
  %v827 = vpop.f32.mrb[0].mxu0
  %v828 = vpop.f32.mrb[0].mxu0
  %v829 = vadd.f32 %v102, %v828
  %v830 = vpop.f32.mrb[0].mxu0
  %831 = vdwg.mxu0
  %v832 = vmax.f32 %v578, 0.0
  %v833 = vmax.f32 %v581, 0.0
  %v834 = vmax.f32 %v586, 0.0
  %v835 = vmax.f32 %v589, 0.0
  %v836 = vmax.f32 %v594, 0.0
  %v837 = vmax.f32 %v597, 0.0
  %v838 = vmax.f32 %v602, 0.0
  %v839 = vmax.f32 %v605, 0.0
  %v840 = vmax.f32 %v610, 0.0
  %v841 = vmax.f32 %v613, 0.0
  %v842 = vmax.f32 %v618, 0.0
  %v843 = vmax.f32 %v621, 0.0
  %v844 = vmax.f32 %v626, 0.0
  %v845 = vmax.f32 %v629, 0.0
  %v846 = vmax.f32 %v634, 0.0
  %v847 = vmax.f32 %v637, 0.0
  %v848 = vmax.f32 %v642, 0.0
  %v849 = vmax.f32 %v645, 0.0
  %v850 = vmax.f32 %v650, 0.0
  %v851 = vmax.f32 %v653, 0.0
  %v852 = vmax.f32 %v658, 0.0
  %v853 = vmax.f32 %v661, 0.0
  %v854 = vmax.f32 %v666, 0.0
  %v855 = vmax.f32 %v669, 0.0
  %v856 = vmax.f32 %v674, 0.0
  %v857 = vmax.f32 %v677, 0.0
  %v858 = vmax.f32 %v682, 0.0
  %v859 = vmax.f32 %v685, 0.0
  %v860 = vmax.f32 %v690, 0.0
  %v861 = vmax.f32 %v693, 0.0
  %v862 = vmax.f32 %v698, 0.0
  %v863 = vmax.f32 %v701, 0.0
  %v864 = vmax.f32 %v706, 0.0
  %v865 = vmax.f32 %v709, 0.0
  %v866 = vmax.f32 %v714, 0.0
  %v867 = vmax.f32 %v717, 0.0
  %v868 = vmax.f32 %v722, 0.0
  %v869 = vmax.f32 %v725, 0.0
  %v870 = vmax.f32 %v730, 0.0
  %v871 = vmax.f32 %v733, 0.0
  %v872 = vmax.f32 %v738, 0.0
  %v873 = vmax.f32 %v741, 0.0
  %v874 = vmax.f32 %v746, 0.0
  %v875 = vmax.f32 %v749, 0.0
  %v876 = vmax.f32 %v754, 0.0
  %v877 = vmax.f32 %v757, 0.0
  %v878 = vmax.f32 %v762, 0.0
  %v879 = vmax.f32 %v765, 0.0
  %v880 = vmax.f32 %v770, 0.0
  %v881 = vmax.f32 %v773, 0.0
  %v882 = vmax.f32 %v778, 0.0
  %v883 = vmax.f32 %v781, 0.0
  %v884 = vmax.f32 %v786, 0.0
  %v885 = vmax.f32 %v789, 0.0
  %v886 = vmax.f32 %v794, 0.0
  %v887 = vmax.f32 %v797, 0.0
  %v888 = vmax.f32 %v802, 0.0
  %v889 = vmax.f32 %v805, 0.0
  %v890 = vmax.f32 %v810, 0.0
  %v891 = vmax.f32 %v813, 0.0
  %v892 = vmax.f32 %v818, 0.0
  %v893 = vmax.f32 %v821, 0.0
  %v894 = vmax.f32 %v826, 0.0
  %v895 = vmax.f32 %v829, 0.0
  %v896 = vpack.c.bf16 %v833, %v832
  %v897 = vpack.c.bf16 %v835, %v834
  %v898 = vpack.c.bf16 %v837, %v836
  %v899 = vpack.c.bf16 %v839, %v838
  %v900 = vpack.c.bf16 %v841, %v840
  %v901 = vpack.c.bf16 %v843, %v842
  %v902 = vpack.c.bf16 %v845, %v844
  %v903 = vpack.c.bf16 %v847, %v846
  %v904 = vpack.c.bf16 %v849, %v848
  %v905 = vpack.c.bf16 %v851, %v850
  %v906 = vpack.c.bf16 %v853, %v852
  %v907 = vpack.c.bf16 %v855, %v854
  %v908 = vpack.c.bf16 %v857, %v856
  %v909 = vpack.c.bf16 %v859, %v858
  %v910 = vpack.c.bf16 %v861, %v860
  %v911 = vpack.c.bf16 %v863, %v862
  %v912 = vpack.c.bf16 %v865, %v864
  %v913 = vpack.c.bf16 %v867, %v866
  %v914 = vpack.c.bf16 %v869, %v868
  %v915 = vpack.c.bf16 %v871, %v870
  %v916 = vpack.c.bf16 %v873, %v872
  %v917 = vpack.c.bf16 %v875, %v874
  %v918 = vpack.c.bf16 %v877, %v876
  %v919 = vpack.c.bf16 %v879, %v878
  %v920 = vpack.c.bf16 %v881, %v880
  %v921 = vpack.c.bf16 %v883, %v882
  %v922 = vpack.c.bf16 %v885, %v884
  %v923 = vpack.c.bf16 %v887, %v886
  %v924 = vpack.c.bf16 %v889, %v888
  %v925 = vpack.c.bf16 %v891, %v890
  %v926 = vpack.c.bf16 %v893, %v892
  %v927 = vpack.c.bf16 %v895, %v894
  %v960 = vunpack.c.l.b16 %v896
  %v961 = vunpack.c.h.b16 %v896
  %v962 = vunpack.c.l.b16 %v897
  %v963 = vunpack.c.h.b16 %v897
  %v964 = vunpack.c.l.b16 %v898
  %v965 = vunpack.c.h.b16 %v898
  %v966 = vunpack.c.l.b16 %v899
  %v967 = vunpack.c.h.b16 %v899
  %v968 = vunpack.c.l.b16 %v900
  %v969 = vunpack.c.h.b16 %v900
  %v970 = vunpack.c.l.b16 %v901
  %v971 = vunpack.c.h.b16 %v901
  %v972 = vunpack.c.l.b16 %v902
  %v973 = vunpack.c.h.b16 %v902
  %v974 = vunpack.c.l.b16 %v903
  %v975 = vunpack.c.h.b16 %v903
  %v976 = vunpack.c.l.b16 %v904
  %v977 = vunpack.c.h.b16 %v904
  %v978 = vunpack.c.l.b16 %v905
  %v979 = vunpack.c.h.b16 %v905
  %v980 = vunpack.c.l.b16 %v906
  %v981 = vunpack.c.h.b16 %v906
  %v982 = vunpack.c.l.b16 %v907
  %v983 = vunpack.c.h.b16 %v907
  %v984 = vunpack.c.l.b16 %v908
  %v985 = vunpack.c.h.b16 %v908
  %v986 = vunpack.c.l.b16 %v909
  %v987 = vunpack.c.h.b16 %v909
  %v988 = vunpack.c.l.b16 %v910
  %v989 = vunpack.c.h.b16 %v910
  %v990 = vunpack.c.l.b16 %v911
  %v991 = vunpack.c.h.b16 %v911
  %v992 = vunpack.c.l.b16 %v912
  %v993 = vunpack.c.h.b16 %v912
  %v994 = vunpack.c.l.b16 %v913
  %v995 = vunpack.c.h.b16 %v913
  %v996 = vunpack.c.l.b16 %v914
  %v997 = vunpack.c.h.b16 %v914
  %v998 = vunpack.c.l.b16 %v915
  %v999 = vunpack.c.h.b16 %v915
  %v1000 = vunpack.c.l.b16 %v916
  %v1001 = vunpack.c.h.b16 %v916
  %v1002 = vunpack.c.l.b16 %v917
  %v1003 = vunpack.c.h.b16 %v917
  %v1004 = vunpack.c.l.b16 %v918
  %v1005 = vunpack.c.h.b16 %v918
  %v1006 = vunpack.c.l.b16 %v919
  %v1007 = vunpack.c.h.b16 %v919
  %v1008 = vunpack.c.l.b16 %v920
  %v1009 = vunpack.c.h.b16 %v920
  %v1010 = vunpack.c.l.b16 %v921
  %v1011 = vunpack.c.h.b16 %v921
  %v1012 = vunpack.c.l.b16 %v922
  %v1013 = vunpack.c.h.b16 %v922
  %v1014 = vunpack.c.l.b16 %v923
  %v1015 = vunpack.c.h.b16 %v923
  %v1016 = vunpack.c.l.b16 %v924
  %v1017 = vunpack.c.h.b16 %v924
  %v1018 = vunpack.c.l.b16 %v925
  %v1019 = vunpack.c.h.b16 %v925
  %v1020 = vunpack.c.l.b16 %v926
  %v1021 = vunpack.c.h.b16 %v926
  %v1022 = vunpack.c.l.b16 %v927
  %v1023 = vunpack.c.h.b16 %v927
  %v1024 = vpack.c.b16 %v960, %v960
  %v1025 = vpack.c.b16 %v961, %v961
  %v1026 = vpack.c.b16 %v962, %v962
  %v1027 = vpack.c.b16 %v963, %v963
  %v1028 = vpack.c.b16 %v964, %v964
  %v1029 = vpack.c.b16 %v965, %v965
  %v1030 = vpack.c.b16 %v966, %v966
  %v1031 = vpack.c.b16 %v967, %v967
  %v1032 = vpack.c.b16 %v968, %v968
  %v1033 = vpack.c.b16 %v969, %v969
  %v1034 = vpack.c.b16 %v970, %v970
  %v1035 = vpack.c.b16 %v971, %v971
  %v1036 = vpack.c.b16 %v972, %v972
  %v1037 = vpack.c.b16 %v973, %v973
  %v1038 = vpack.c.b16 %v974, %v974
  %v1039 = vpack.c.b16 %v975, %v975
  %v1040 = vpack.c.b16 %v976, %v976
  %v1041 = vpack.c.b16 %v977, %v977
  %v1042 = vpack.c.b16 %v978, %v978
  %v1043 = vpack.c.b16 %v979, %v979
  %v1044 = vpack.c.b16 %v980, %v980
  %v1045 = vpack.c.b16 %v981, %v981
  %v1046 = vpack.c.b16 %v982, %v982
  %v1047 = vpack.c.b16 %v983, %v983
  %v1048 = vpack.c.b16 %v984, %v984
  %v1049 = vpack.c.b16 %v985, %v985
  %v1050 = vpack.c.b16 %v986, %v986
  %v1051 = vpack.c.b16 %v987, %v987
  %v1052 = vpack.c.b16 %v988, %v988
  %v1053 = vpack.c.b16 %v989, %v989
  %v1054 = vpack.c.b16 %v990, %v990
  %v1055 = vpack.c.b16 %v991, %v991
  %v1056 = vpack.c.b16 %v992, %v992
  %v1057 = vpack.c.b16 %v993, %v993
  %v1058 = vpack.c.b16 %v994, %v994
  %v1059 = vpack.c.b16 %v995, %v995
  %v1060 = vpack.c.b16 %v996, %v996
  %v1061 = vpack.c.b16 %v997, %v997
  %v1062 = vpack.c.b16 %v998, %v998
  %v1063 = vpack.c.b16 %v999, %v999
  %v1064 = vpack.c.b16 %v1000, %v1000
  %v1065 = vpack.c.b16 %v1001, %v1001
  %v1066 = vpack.c.b16 %v1002, %v1002
  %v1067 = vpack.c.b16 %v1003, %v1003
  %v1068 = vpack.c.b16 %v1004, %v1004
  %v1069 = vpack.c.b16 %v1005, %v1005
  %v1070 = vpack.c.b16 %v1006, %v1006
  %v1071 = vpack.c.b16 %v1007, %v1007
  %v1072 = vpack.c.b16 %v1008, %v1008
  %v1073 = vpack.c.b16 %v1009, %v1009
  %v1074 = vpack.c.b16 %v1010, %v1010
  %v1075 = vpack.c.b16 %v1011, %v1011
  %v1076 = vpack.c.b16 %v1012, %v1012
  %v1077 = vpack.c.b16 %v1013, %v1013
  %v1078 = vpack.c.b16 %v1014, %v1014
  %v1079 = vpack.c.b16 %v1015, %v1015
  %v1080 = vpack.c.b16 %v1016, %v1016
  %v1081 = vpack.c.b16 %v1017, %v1017
  %v1082 = vpack.c.b16 %v1018, %v1018
  %v1083 = vpack.c.b16 %v1019, %v1019
  %v1084 = vpack.c.b16 %v1020, %v1020
  %v1085 = vpack.c.b16 %v1021, %v1021
  %v1086 = vpack.c.b16 %v1022, %v1022
  %v1087 = vpack.c.b16 %v1023, %v1023
  %1152 = vst [vmem:[%s3] sm:$0xf] %v1024
  %1153 = vst [vmem:[%s3 + $0x4] sm:$0xf] %v1025
  %1154 = vst [vmem:[%s3 + $0x8] sm:$0xf] %v1026
  %1155 = vst [vmem:[%s3 + $0xc] sm:$0xf] %v1027
  %1156 = vst [vmem:[%s3 + $0x10] sm:$0xf] %v1028
  %1157 = vst [vmem:[%s3 + $0x14] sm:$0xf] %v1029
  %1158 = vst [vmem:[%s3 + $0x18] sm:$0xf] %v1030
  %1159 = vst [vmem:[%s3 + $0x1c] sm:$0xf] %v1031
  %1160 = vst [vmem:[%s3 + $0x20] sm:$0xf] %v1032
  %1161 = vst [vmem:[%s3 + $0x24] sm:$0xf] %v1033
  %1162 = vst [vmem:[%s3 + $0x28] sm:$0xf] %v1034
  %1163 = vst [vmem:[%s3 + $0x2c] sm:$0xf] %v1035
  %1164 = vst [vmem:[%s3 + $0x30] sm:$0xf] %v1036
  %1165 = vst [vmem:[%s3 + $0x34] sm:$0xf] %v1037
  %1166 = vst [vmem:[%s3 + $0x38] sm:$0xf] %v1038
  %1167 = vst [vmem:[%s3 + $0x3c] sm:$0xf] %v1039
  %1168 = vst [vmem:[%s3 + $0x40] sm:$0xf] %v1040
  %1169 = vst [vmem:[%s3 + $0x44] sm:$0xf] %v1041
  %1170 = vst [vmem:[%s3 + $0x48] sm:$0xf] %v1042
  %1171 = vst [vmem:[%s3 + $0x4c] sm:$0xf] %v1043
  %1172 = vst [vmem:[%s3 + $0x50] sm:$0xf] %v1044
  %1173 = vst [vmem:[%s3 + $0x54] sm:$0xf] %v1045
  %1174 = vst [vmem:[%s3 + $0x58] sm:$0xf] %v1046
  %1175 = vst [vmem:[%s3 + $0x5c] sm:$0xf] %v1047
  %1176 = vst [vmem:[%s3 + $0x60] sm:$0xf] %v1048
  %1177 = vst [vmem:[%s3 + $0x64] sm:$0xf] %v1049
  %1178 = vst [vmem:[%s3 + $0x68] sm:$0xf] %v1050
  %1179 = vst [vmem:[%s3 + $0x6c] sm:$0xf] %v1051
  %1180 = vst [vmem:[%s3 + $0x70] sm:$0xf] %v1052
  %1181 = vst [vmem:[%s3 + $0x74] sm:$0xf] %v1053
  %1182 = vst [vmem:[%s3 + $0x78] sm:$0xf] %v1054
  %1183 = vst [vmem:[%s3 + $0x7c] sm:$0xf] %v1055
  %1184 = vst [vmem:[%s3 + $0x80] sm:$0xf] %v1056
  %1185 = vst [vmem:[%s3 + $0x84] sm:$0xf] %v1057
  %1186 = vst [vmem:[%s3 + $0x88] sm:$0xf] %v1058
  %1187 = vst [vmem:[%s3 + $0x8c] sm:$0xf] %v1059
  %1188 = vst [vmem:[%s3 + $0x90] sm:$0xf] %v1060
  %1189 = vst [vmem:[%s3 + $0x94] sm:$0xf] %v1061
  %1190 = vst [vmem:[%s3 + $0x98] sm:$0xf] %v1062
  %1191 = vst [vmem:[%s3 + $0x9c] sm:$0xf] %v1063
  %1192 = vst [vmem:[%s3 + $0xa0] sm:$0xf] %v1064
  %1193 = vst [vmem:[%s3 + $0xa4] sm:$0xf] %v1065
  %1194 = vst [vmem:[%s3 + $0xa8] sm:$0xf] %v1066
  %1195 = vst [vmem:[%s3 + $0xac] sm:$0xf] %v1067
  %1196 = vst [vmem:[%s3 + $0xb0] sm:$0xf] %v1068
  %1197 = vst [vmem:[%s3 + $0xb4] sm:$0xf] %v1069
  %1198 = vst [vmem:[%s3 + $0xb8] sm:$0xf] %v1070
  %1199 = vst [vmem:[%s3 + $0xbc] sm:$0xf] %v1071
  %1200 = vst [vmem:[%s3 + $0xc0] sm:$0xf] %v1072
  %1201 = vst [vmem:[%s3 + $0xc4] sm:$0xf] %v1073
  %1202 = vst [vmem:[%s3 + $0xc8] sm:$0xf] %v1074
  %1203 = vst [vmem:[%s3 + $0xcc] sm:$0xf] %v1075
  %1204 = vst [vmem:[%s3 + $0xd0] sm:$0xf] %v1076
  %1205 = vst [vmem:[%s3 + $0xd4] sm:$0xf] %v1077
  %1206 = vst [vmem:[%s3 + $0xd8] sm:$0xf] %v1078
  %1207 = vst [vmem:[%s3 + $0xdc] sm:$0xf] %v1079
  %1208 = vst [vmem:[%s3 + $0xe0] sm:$0xf] %v1080
  %1209 = vst [vmem:[%s3 + $0xe4] sm:$0xf] %v1081
  %1210 = vst [vmem:[%s3 + $0xe8] sm:$0xf] %v1082
  %1211 = vst [vmem:[%s3 + $0xec] sm:$0xf] %v1083
  %1212 = vst [vmem:[%s3 + $0xf0] sm:$0xf] %v1084
  %1213 = vst [vmem:[%s3 + $0xf4] sm:$0xf] %v1085
  %1214 = vst [vmem:[%s3 + $0xf8] sm:$0xf] %v1086
  %1215 = vst [vmem:[%s3 + $0xfc] sm:$0xf] %v1087
  // Predicated region
  $region14: #{faster_rcnn_forward.10} parent=0 // pred_check
    _
  $region15: #{faster_rcnn_forward.10} parent=0 // pred_check_branch
    %1217 = sbr.rel (0) target = $region17
  $region16: #{faster_rcnn_forward.10} parent=0 // pred_region
    _
  $region17: #{faster_rcnn_forward.10} parent=0 // pred_fallthru
    _
  // Predicated region
  $region18: #{faster_rcnn_forward.10} parent=0 // pred_check
    _
  $region19: #{faster_rcnn_forward.10} parent=0 // pred_check_branch
    %1219 = sbr.rel (0) target = $region21
  $region20: #{faster_rcnn_forward.10} parent=0 // pred_region
    _
  $region21: #{faster_rcnn_forward.10} parent=0 // pred_fallthru
    _

// kernel: faster_rcnn_forward.11
$region0: #{faster_rcnn_forward.11}
  #allocation0 [shape = 'u32[]', space=smem, size = 0x4, offset = 0x4, fixed_abs, tag = 'smem constant byte address 0x4 - core index']
  #allocation1 [shape = 'u32[144,128]{1,0:T(1,128)}', space=vmem, size = 0x12000, scoped, tag = 'internal scratch']
  %s0 = inlined_call_operand.vmem [shape: bf16[128,288], index: 0, kind: input, shape index: {}]
  %s1 = inlined_call_operand.vmem [shape: bf16[288,128], index: 1, kind: input, shape index: {}]
  %s2 = inlined_call_operand.vmem [shape: f32[1,128], index: 2, kind: input, shape index: {}]
  %s3 = inlined_call_operand.vmem [shape: bf16[128,128], index: 3, kind: output, shape index: {}]
  %s4 = sld [smem:[#allocation0]]
  $region22: #{faster_rcnn_forward.11} parent=0
    _
  %s6 = ssub.s32 1, %s4
  %s7 = scalar_select 0, %s6, %s4
  // Predicated region
  $region2: #{faster_rcnn_forward.11} parent=0 // pred_check
    _
  $region3: #{faster_rcnn_forward.11} parent=0 // pred_check_branch
    %9 = sbr.rel (0) target = $region5
  $region4: #{faster_rcnn_forward.11} parent=0 // pred_region
    _
  $region5: #{faster_rcnn_forward.11} parent=0 // pred_fallthru
    _
  // Predicated region
  $region6: #{faster_rcnn_forward.11} parent=0 // pred_check
    _
  $region7: #{faster_rcnn_forward.11} parent=0 // pred_check_branch
    %11 = sbr.rel (0) target = $region9
  $region8: #{faster_rcnn_forward.11} parent=0 // pred_region
    _
  $region9: #{faster_rcnn_forward.11} parent=0 // pred_fallthru
    _
  // Predicated region
  $region10: #{faster_rcnn_forward.11} parent=0 // pred_check
    _
  $region11: #{faster_rcnn_forward.11} parent=0 // pred_check_branch
    %13 = sbr.rel (0) target = $region13
  $region12: #{faster_rcnn_forward.11} parent=0 // pred_region
    _
  $region13: #{faster_rcnn_forward.11} parent=0 // pred_fallthru
    _
  %v15 = vld [vmem:[%s0] sm:$0xff]
  %v16 = vld [vmem:[%s0 + $0x8] sm:$0xf]
  %v17 = vld [vmem:[%s0 + $0xc] sm:$0xff]
  %v18 = vld [vmem:[%s0 + $0x14] sm:$0xf]
  %v19 = vld [vmem:[%s0 + $0x18] sm:$0xff]
  %v20 = vld [vmem:[%s0 + $0x20] sm:$0xf]
  %v21 = vld [vmem:[%s0 + $0x24] sm:$0xff]
  %v22 = vld [vmem:[%s0 + $0x2c] sm:$0xf]
  %v23 = vld [vmem:[%s0 + $0x30] sm:$0xff]
  %v24 = vld [vmem:[%s0 + $0x38] sm:$0xf]
  %v25 = vld [vmem:[%s0 + $0x3c] sm:$0xff]
  %v26 = vld [vmem:[%s0 + $0x44] sm:$0xf]
  %v27 = vld [vmem:[%s0 + $0x48] sm:$0xff]
  %v28 = vld [vmem:[%s0 + $0x50] sm:$0xf]
  %v29 = vld [vmem:[%s0 + $0x54] sm:$0xff]
  %v30 = vld [vmem:[%s0 + $0x5c] sm:$0xf]
  %v31 = vld [vmem:[%s0 + $0x60] sm:$0xff]
  %v32 = vld [vmem:[%s0 + $0x68] sm:$0xf]
  %v33 = vld [vmem:[%s0 + $0x6c] sm:$0xff]
  %v34 = vld [vmem:[%s0 + $0x74] sm:$0xf]
  %v35 = vld [vmem:[%s0 + $0x78] sm:$0xff]
  %v36 = vld [vmem:[%s0 + $0x80] sm:$0xf]
  %v37 = vld [vmem:[%s0 + $0x84] sm:$0xff]
  %v38 = vld [vmem:[%s0 + $0x8c] sm:$0xf]
  %v39 = vld [vmem:[%s0 + $0x90] sm:$0xff]
  %v40 = vld [vmem:[%s0 + $0x98] sm:$0xf]
  %v41 = vld [vmem:[%s0 + $0x9c] sm:$0xff]
  %v42 = vld [vmem:[%s0 + $0xa4] sm:$0xf]
  %v43 = vld [vmem:[%s0 + $0xa8] sm:$0xff]
  %v44 = vld [vmem:[%s0 + $0xb0] sm:$0xf]
  %v45 = vld [vmem:[%s0 + $0xb4] sm:$0xff]
  %v46 = vld [vmem:[%s0 + $0xbc] sm:$0xf]
  %v47 = vld [vmem:[%s1] sm:$0xf]
  %v48 = vld [vmem:[%s1 + $0x4] sm:$0xf]
  %v49 = vld [vmem:[%s1 + $0x8] sm:$0xf]
  %v50 = vld [vmem:[%s1 + $0xc] sm:$0xf]
  %v51 = vld [vmem:[%s1 + $0x10] sm:$0xf]
  %v52 = vld [vmem:[%s1 + $0x14] sm:$0xf]
  %v53 = vld [vmem:[%s1 + $0x18] sm:$0xf]
  %v54 = vld [vmem:[%s1 + $0x1c] sm:$0xf]
  %v55 = vld [vmem:[%s1 + $0x20] sm:$0xf]
  %v56 = vld [vmem:[%s1 + $0x24] sm:$0xf]
  %v57 = vld [vmem:[%s1 + $0x28] sm:$0xf]
  %v58 = vld [vmem:[%s1 + $0x2c] sm:$0xf]
  %v59 = vld [vmem:[%s1 + $0x30] sm:$0xf]
  %v60 = vld [vmem:[%s1 + $0x34] sm:$0xf]
  %v61 = vld [vmem:[%s1 + $0x38] sm:$0xf]
  %v62 = vld [vmem:[%s1 + $0x3c] sm:$0xf]
  %v63 = vld [vmem:[%s1 + $0x40] sm:$0xf]
  %v64 = vld [vmem:[%s1 + $0x44] sm:$0xf]
  %v65 = vld [vmem:[%s1 + $0x48] sm:$0xf]
  %v66 = vld [vmem:[%s1 + $0x4c] sm:$0xf]
  %v67 = vld [vmem:[%s1 + $0x50] sm:$0xf]
  %v68 = vld [vmem:[%s1 + $0x54] sm:$0xf]
  %v69 = vld [vmem:[%s1 + $0x58] sm:$0xf]
  %v70 = vld [vmem:[%s1 + $0x5c] sm:$0xf]
  %v71 = vld [vmem:[%s1 + $0x60] sm:$0xf]
  %v72 = vld [vmem:[%s1 + $0x64] sm:$0xf]
  %v73 = vld [vmem:[%s1 + $0x68] sm:$0xf]
  %v74 = vld [vmem:[%s1 + $0x6c] sm:$0xf]
  %v75 = vld [vmem:[%s1 + $0x70] sm:$0xf]
  %v76 = vld [vmem:[%s1 + $0x74] sm:$0xf]
  %v77 = vld [vmem:[%s1 + $0x78] sm:$0xf]
  %v78 = vld [vmem:[%s1 + $0x7c] sm:$0xf]
  %v79 = vld [vmem:[%s1 + $0x80] sm:$0xf]
  %v80 = vld [vmem:[%s1 + $0x84] sm:$0xf]
  %v81 = vld [vmem:[%s1 + $0x88] sm:$0xf]
  %v82 = vld [vmem:[%s1 + $0x8c] sm:$0xf]
  %v83 = vld [vmem:[%s2] sm:$0x1]
  %v85 = vlaneseq
  %v86 = vshrl.u32 %v85, 7
  %v87 = vsub.s32 0, %v86
  %v88 = vrot.slane %v83, %v87
  %v122 = vunpack.c.l.b16 %v15
  %v123 = vunpack.c.h.b16 %v15
  %v124 = vunpack.c.l.b16 %v16
  %v125 = vunpack.c.l.b16 %v17
  %v126 = vunpack.c.h.b16 %v17
  %v127 = vunpack.c.l.b16 %v18
  %v128 = vunpack.c.l.b16 %v19
  %v129 = vunpack.c.h.b16 %v19
  %v130 = vunpack.c.l.b16 %v20
  %v131 = vunpack.c.l.b16 %v21
  %v132 = vunpack.c.h.b16 %v21
  %v133 = vunpack.c.l.b16 %v22
  %v134 = vunpack.c.l.b16 %v23
  %v135 = vunpack.c.h.b16 %v23
  %v136 = vunpack.c.l.b16 %v24
  %v137 = vunpack.c.l.b16 %v25
  %v138 = vunpack.c.h.b16 %v25
  %v139 = vunpack.c.l.b16 %v26
  %v140 = vunpack.c.l.b16 %v27
  %v141 = vunpack.c.h.b16 %v27
  %v142 = vunpack.c.l.b16 %v28
  %v143 = vunpack.c.l.b16 %v29
  %v144 = vunpack.c.h.b16 %v29
  %v145 = vunpack.c.l.b16 %v30
  %v146 = vunpack.c.l.b16 %v31
  %v147 = vunpack.c.h.b16 %v31
  %v148 = vunpack.c.l.b16 %v32
  %v149 = vunpack.c.l.b16 %v33
  %v150 = vunpack.c.h.b16 %v33
  %v151 = vunpack.c.l.b16 %v34
  %v152 = vunpack.c.l.b16 %v35
  %v153 = vunpack.c.h.b16 %v35
  %v154 = vunpack.c.l.b16 %v36
  %v155 = vunpack.c.l.b16 %v37
  %v156 = vunpack.c.h.b16 %v37
  %v157 = vunpack.c.l.b16 %v38
  %v158 = vunpack.c.l.b16 %v39
  %v159 = vunpack.c.h.b16 %v39
  %v160 = vunpack.c.l.b16 %v40
  %v161 = vunpack.c.l.b16 %v41
  %v162 = vunpack.c.h.b16 %v41
  %v163 = vunpack.c.l.b16 %v42
  %v164 = vunpack.c.l.b16 %v43
  %v165 = vunpack.c.h.b16 %v43
  %v166 = vunpack.c.l.b16 %v44
  %v167 = vunpack.c.l.b16 %v45
  %v168 = vunpack.c.h.b16 %v45
  %v169 = vunpack.c.l.b16 %v46
  %v170 = vpack.c.b16 %v125, %v122
  %v171 = vpack.c.b16 %v126, %v123
  %v172 = vpack.c.b16 %v127, %v124
  %v173 = vpack.c.b16 %v131, %v128
  %v174 = vpack.c.b16 %v132, %v129
  %v175 = vpack.c.b16 %v133, %v130
  %v176 = vpack.c.b16 %v137, %v134
  %v177 = vpack.c.b16 %v138, %v135
  %v178 = vpack.c.b16 %v139, %v136
  %v179 = vpack.c.b16 %v143, %v140
  %v180 = vpack.c.b16 %v144, %v141
  %v181 = vpack.c.b16 %v145, %v142
  %v182 = vpack.c.b16 %v149, %v146
  %v183 = vpack.c.b16 %v150, %v147
  %v184 = vpack.c.b16 %v151, %v148
  %v185 = vpack.c.b16 %v155, %v152
  %v186 = vpack.c.b16 %v156, %v153
  %v187 = vpack.c.b16 %v157, %v154
  %v188 = vpack.c.b16 %v161, %v158
  %v189 = vpack.c.b16 %v162, %v159
  %v190 = vpack.c.b16 %v163, %v160
  %v191 = vpack.c.b16 %v167, %v164
  %v192 = vpack.c.b16 %v168, %v165
  %v193 = vpack.c.b16 %v169, %v166
  %v246 = vunpack.c.l.b16 %v47
  %v247 = vunpack.c.l.b16 %v48
  %v248 = vunpack.c.l.b16 %v49
  %v249 = vunpack.c.l.b16 %v50
  %v250 = vunpack.c.l.b16 %v51
  %v251 = vunpack.c.l.b16 %v52
  %v252 = vunpack.c.l.b16 %v53
  %v253 = vunpack.c.l.b16 %v54
  %v254 = vunpack.c.l.b16 %v55
  %v255 = vunpack.c.l.b16 %v56
  %v256 = vunpack.c.l.b16 %v57
  %v257 = vunpack.c.l.b16 %v58
  %v258 = vunpack.c.l.b16 %v59
  %v259 = vunpack.c.l.b16 %v60
  %v260 = vunpack.c.l.b16 %v61
  %v261 = vunpack.c.l.b16 %v62
  %v262 = vunpack.c.l.b16 %v63
  %v263 = vunpack.c.l.b16 %v64
  %v264 = vunpack.c.l.b16 %v65
  %v265 = vunpack.c.l.b16 %v66
  %v266 = vunpack.c.l.b16 %v67
  %v267 = vunpack.c.l.b16 %v68
  %v268 = vunpack.c.l.b16 %v69
  %v269 = vunpack.c.l.b16 %v70
  %v270 = vunpack.c.l.b16 %v71
  %v271 = vunpack.c.l.b16 %v72
  %v272 = vunpack.c.l.b16 %v73
  %v273 = vunpack.c.l.b16 %v74
  %v274 = vunpack.c.l.b16 %v75
  %v275 = vunpack.c.l.b16 %v76
  %v276 = vunpack.c.l.b16 %v77
  %v277 = vunpack.c.l.b16 %v78
  %v278 = vunpack.c.l.b16 %v79
  %v279 = vunpack.c.l.b16 %v80
  %v280 = vunpack.c.l.b16 %v81
  %v281 = vunpack.c.l.b16 %v82
  %v282 = vpack.c.b16 %v247, %v246
  %v283 = vpack.c.b16 %v249, %v248
  %v284 = vpack.c.b16 %v251, %v250
  %v285 = vpack.c.b16 %v253, %v252
  %v286 = vpack.c.b16 %v255, %v254
  %v287 = vpack.c.b16 %v257, %v256
  %v288 = vpack.c.b16 %v259, %v258
  %v289 = vpack.c.b16 %v261, %v260
  %v290 = vpack.c.b16 %v263, %v262
  %v291 = vpack.c.b16 %v265, %v264
  %v292 = vpack.c.b16 %v267, %v266
  %v293 = vpack.c.b16 %v269, %v268
  %v294 = vpack.c.b16 %v271, %v270
  %v295 = vpack.c.b16 %v273, %v272
  %v296 = vpack.c.b16 %v275, %v274
  %v297 = vpack.c.b16 %v277, %v276
  %v298 = vpack.c.b16 %v279, %v278
  %v299 = vpack.c.b16 %v281, %v280
  %vm318 = vcmask 261120
  %v320 = vsel %vm318, %v172, 0
  %v323 = vsel %vm318, %v175, 0
  %v326 = vsel %vm318, %v178, 0
  %v329 = vsel %vm318, %v181, 0
  %v332 = vsel %vm318, %v184, 0
  %v335 = vsel %vm318, %v187, 0
  %v338 = vsel %vm318, %v190, 0
  %v341 = vsel %vm318, %v193, 0
  %343 = vmatprep.subr.bf16.mxu0 0
  %344 = vmatpush1.bf16.msra.mxu0 %v282
  %345 = vmatprep.subr.bf16.mxu0 0
  %346 = vmatpush1.bf16.msra.mxu0 %v283
  %347 = vmatprep.subr.bf16.mxu0 0
  %348 = vmatpush1.bf16.msra.mxu0 %v284
  %349 = vmatprep.subr.bf16.mxu0 0
  %350 = vmatpush1.bf16.msra.mxu0 %v285
  %351 = vmatprep.subr.bf16.mxu0 0
  %352 = vmatpush1.bf16.msra.mxu0 %v286
  %353 = vmatprep.subr.bf16.mxu0 0
  %354 = vmatpush1.bf16.msra.mxu0 %v287
  %355 = vmatprep.subr.bf16.mxu0 0
  %356 = vmatpush1.bf16.msra.mxu0 %v288
  %357 = vmatprep.subr.bf16.mxu0 0
  %358 = vmatpush1.bf16.msra.mxu0 %v289
  %359 = vmatprep.subr.bf16.mxu0 0
  %360 = vmatpush1.bf16.msra.mxu0 %v290
  %361 = vmatprep.subr.bf16.mxu0 0
  %362 = vmatpush1.bf16.msra.mxu0 %v291
  %363 = vmatprep.subr.bf16.mxu0 0
  %364 = vmatpush1.bf16.msra.mxu0 %v292
  %365 = vmatprep.subr.bf16.mxu0 0
  %366 = vmatpush1.bf16.msra.mxu0 %v293
  %367 = vmatprep.subr.bf16.mxu0 0
  %368 = vmatpush1.bf16.msra.mxu0 %v294
  %369 = vmatprep.subr.bf16.mxu0 0
  %370 = vmatpush1.bf16.msra.mxu0 %v295
  %371 = vmatprep.subr.bf16.mxu0 0
  %372 = vmatpush1.bf16.msra.mxu0 %v296
  %373 = vmatprep.subr.bf16.mxu0 0
  %374 = vmatpush1.bf16.msra.mxu0 %v297
  %375 = vmatprep.mubr.bf16.mxu0 %v171
  %376 = vmatmul.mubr.bf16.gmra.mrb[0].mxu0 %v170
  %v377 = vpop.f32.mrb[0].mxu0
  %v378 = vadd.f32 %v88, %v377
  %v379 = vpop.f32.mrb[0].mxu0
  %v380 = vpop.f32.mrb[0].mxu0
  %v381 = vadd.f32 %v88, %v380
  %v382 = vpop.f32.mrb[0].mxu0
  %383 = vmatprep.mubr.bf16.mxu0 %v174
  %384 = vmatmul.mubr.bf16.gmra.mrb[0].mxu0 %v173
  %v385 = vpop.f32.mrb[0].mxu0
  %v386 = vadd.f32 %v88, %v385
  %v387 = vpop.f32.mrb[0].mxu0
  %v388 = vpop.f32.mrb[0].mxu0
  %v389 = vadd.f32 %v88, %v388
  %v390 = vpop.f32.mrb[0].mxu0
  %391 = vmatprep.mubr.bf16.mxu0 %v177
  %392 = vmatmul.mubr.bf16.gmra.mrb[0].mxu0 %v176
  %v393 = vpop.f32.mrb[0].mxu0
  %v394 = vadd.f32 %v88, %v393
  %v395 = vpop.f32.mrb[0].mxu0
  %v396 = vpop.f32.mrb[0].mxu0
  %v397 = vadd.f32 %v88, %v396
  %v398 = vpop.f32.mrb[0].mxu0
  %399 = vmatprep.mubr.bf16.mxu0 %v180
  %400 = vmatmul.mubr.bf16.gmra.mrb[0].mxu0 %v179
  %v401 = vpop.f32.mrb[0].mxu0
  %v402 = vadd.f32 %v88, %v401
  %v403 = vpop.f32.mrb[0].mxu0
  %v404 = vpop.f32.mrb[0].mxu0
  %v405 = vadd.f32 %v88, %v404
  %v406 = vpop.f32.mrb[0].mxu0
  %407 = vmatprep.mubr.bf16.mxu0 %v183
  %408 = vmatmul.mubr.bf16.gmra.mrb[0].mxu0 %v182
  %v409 = vpop.f32.mrb[0].mxu0
  %v410 = vadd.f32 %v88, %v409
  %v411 = vpop.f32.mrb[0].mxu0
  %v412 = vpop.f32.mrb[0].mxu0
  %v413 = vadd.f32 %v88, %v412
  %v414 = vpop.f32.mrb[0].mxu0
  %415 = vmatprep.mubr.bf16.mxu0 %v186
  %416 = vmatmul.mubr.bf16.gmra.mrb[0].mxu0 %v185
  %v417 = vpop.f32.mrb[0].mxu0
  %v418 = vadd.f32 %v88, %v417
  %v419 = vpop.f32.mrb[0].mxu0
  %v420 = vpop.f32.mrb[0].mxu0
  %v421 = vadd.f32 %v88, %v420
  %v422 = vpop.f32.mrb[0].mxu0
  %423 = vmatprep.mubr.bf16.mxu0 %v189
  %424 = vmatmul.mubr.bf16.gmra.mrb[0].mxu0 %v188
  %v425 = vpop.f32.mrb[0].mxu0
  %v426 = vadd.f32 %v88, %v425
  %v427 = vpop.f32.mrb[0].mxu0
  %v428 = vpop.f32.mrb[0].mxu0
  %v429 = vadd.f32 %v88, %v428
  %v430 = vpop.f32.mrb[0].mxu0
  %431 = vmatprep.mubr.bf16.mxu0 %v192
  %432 = vmatmul.mubr.bf16.gmra.mrb[0].mxu0 %v191
  %v433 = vpop.f32.mrb[0].mxu0
  %v434 = vadd.f32 %v88, %v433
  %v435 = vpop.f32.mrb[0].mxu0
  %v436 = vpop.f32.mrb[0].mxu0
  %v437 = vadd.f32 %v88, %v436
  %v438 = vpop.f32.mrb[0].mxu0
  %439 = vdwg.mxu0
  %440 = vmatprep.subr.bf16.mxu0 0
  %441 = vmatpush1.bf16.msra.mxu0 %v298
  %442 = vmatprep.subr.bf16.mxu0 0
  %443 = vmatpush1.bf16.msra.mxu0 %v299
  %444 = vmatprep.subr.bf16.mxu0 0
  %445 = vmatpush1.bf16.msra.mxu0 0
  %446 = vmatprep.subr.bf16.mxu0 0
  %447 = vmatpush1.bf16.msra.mxu0 0
  %448 = vmatprep.subr.bf16.mxu0 0
  %449 = vmatpush1.bf16.msra.mxu0 0
  %450 = vmatprep.subr.bf16.mxu0 0
  %451 = vmatpush1.bf16.msra.mxu0 0
  %452 = vmatprep.subr.bf16.mxu0 0
  %453 = vmatpush1.bf16.msra.mxu0 0
  %454 = vmatprep.subr.bf16.mxu0 0
  %455 = vmatpush1.bf16.msra.mxu0 0
  %456 = vmatprep.subr.bf16.mxu0 0
  %457 = vmatpush1.bf16.msra.mxu0 0
  %458 = vmatprep.subr.bf16.mxu0 0
  %459 = vmatpush1.bf16.msra.mxu0 0
  %460 = vmatprep.subr.bf16.mxu0 0
  %461 = vmatpush1.bf16.msra.mxu0 0
  %462 = vmatprep.subr.bf16.mxu0 0
  %463 = vmatpush1.bf16.msra.mxu0 0
  %464 = vmatprep.subr.bf16.mxu0 0
  %465 = vmatpush1.bf16.msra.mxu0 0
  %466 = vmatprep.subr.bf16.mxu0 0
  %467 = vmatpush1.bf16.msra.mxu0 0
  %468 = vmatprep.subr.bf16.mxu0 0
  %469 = vmatpush1.bf16.msra.mxu0 0
  %470 = vmatprep.subr.bf16.mxu0 0
  %471 = vmatpush1.bf16.msra.mxu0 0
  %472 = vmatprep.mubr.bf16.mxu0 0
  %473 = vmatmul.mubr.bf16.gmra.mrb[0].mxu0 %v320
  %v474 = vpop.f32.mrb[0].mxu0
  %v475 = vadd.f32 %v378, %v474
  %v476 = vpop.f32.mrb[0].mxu0
  %v477 = vpop.f32.mrb[0].mxu0
  %v478 = vadd.f32 %v381, %v477
  %v479 = vpop.f32.mrb[0].mxu0
  %480 = vmatprep.mubr.bf16.mxu0 0
  %481 = vmatmul.mubr.bf16.gmra.mrb[0].mxu0 %v323
  %v482 = vpop.f32.mrb[0].mxu0
  %v483 = vadd.f32 %v386, %v482
  %v484 = vpop.f32.mrb[0].mxu0
  %v485 = vpop.f32.mrb[0].mxu0
  %v486 = vadd.f32 %v389, %v485
  %v487 = vpop.f32.mrb[0].mxu0
  %488 = vmatprep.mubr.bf16.mxu0 0
  %489 = vmatmul.mubr.bf16.gmra.mrb[0].mxu0 %v326
  %v490 = vpop.f32.mrb[0].mxu0
  %v491 = vadd.f32 %v394, %v490
  %v492 = vpop.f32.mrb[0].mxu0
  %v493 = vpop.f32.mrb[0].mxu0
  %v494 = vadd.f32 %v397, %v493
  %v495 = vpop.f32.mrb[0].mxu0
  %496 = vmatprep.mubr.bf16.mxu0 0
  %497 = vmatmul.mubr.bf16.gmra.mrb[0].mxu0 %v329
  %v498 = vpop.f32.mrb[0].mxu0
  %v499 = vadd.f32 %v402, %v498
  %v500 = vpop.f32.mrb[0].mxu0
  %v501 = vpop.f32.mrb[0].mxu0
  %v502 = vadd.f32 %v405, %v501
  %v503 = vpop.f32.mrb[0].mxu0
  %504 = vmatprep.mubr.bf16.mxu0 0
  %505 = vmatmul.mubr.bf16.gmra.mrb[0].mxu0 %v332
  %v506 = vpop.f32.mrb[0].mxu0
  %v507 = vadd.f32 %v410, %v506
  %v508 = vpop.f32.mrb[0].mxu0
  %v509 = vpop.f32.mrb[0].mxu0
  %v510 = vadd.f32 %v413, %v509
  %v511 = vpop.f32.mrb[0].mxu0
  %512 = vmatprep.mubr.bf16.mxu0 0
  %513 = vmatmul.mubr.bf16.gmra.mrb[0].mxu0 %v335
  %v514 = vpop.f32.mrb[0].mxu0
  %v515 = vadd.f32 %v418, %v514
  %v516 = vpop.f32.mrb[0].mxu0
  %v517 = vpop.f32.mrb[0].mxu0
  %v518 = vadd.f32 %v421, %v517
  %v519 = vpop.f32.mrb[0].mxu0
  %520 = vmatprep.mubr.bf16.mxu0 0
  %521 = vmatmul.mubr.bf16.gmra.mrb[0].mxu0 %v338
  %v522 = vpop.f32.mrb[0].mxu0
  %v523 = vadd.f32 %v426, %v522
  %v524 = vpop.f32.mrb[0].mxu0
  %v525 = vpop.f32.mrb[0].mxu0
  %v526 = vadd.f32 %v429, %v525
  %v527 = vpop.f32.mrb[0].mxu0
  %528 = vmatprep.mubr.bf16.mxu0 0
  %529 = vmatmul.mubr.bf16.gmra.mrb[0].mxu0 %v341
  %v530 = vpop.f32.mrb[0].mxu0
  %v531 = vadd.f32 %v434, %v530
  %v532 = vpop.f32.mrb[0].mxu0
  %v533 = vpop.f32.mrb[0].mxu0
  %v534 = vadd.f32 %v437, %v533
  %v535 = vpop.f32.mrb[0].mxu0
  %536 = vdwg.mxu0
  %v537 = vmax.f32 %v475, 0.0
  %v538 = vmax.f32 %v478, 0.0
  %v539 = vmax.f32 %v483, 0.0
  %v540 = vmax.f32 %v486, 0.0
  %v541 = vmax.f32 %v491, 0.0
  %v542 = vmax.f32 %v494, 0.0
  %v543 = vmax.f32 %v499, 0.0
  %v544 = vmax.f32 %v502, 0.0
  %v545 = vmax.f32 %v507, 0.0
  %v546 = vmax.f32 %v510, 0.0
  %v547 = vmax.f32 %v515, 0.0
  %v548 = vmax.f32 %v518, 0.0
  %v549 = vmax.f32 %v523, 0.0
  %v550 = vmax.f32 %v526, 0.0
  %v551 = vmax.f32 %v531, 0.0
  %v552 = vmax.f32 %v534, 0.0
  %v553 = vpack.c.bf16 %v538, %v537
  %v554 = vpack.c.bf16 %v540, %v539
  %v555 = vpack.c.bf16 %v542, %v541
  %v556 = vpack.c.bf16 %v544, %v543
  %v557 = vpack.c.bf16 %v546, %v545
  %v558 = vpack.c.bf16 %v548, %v547
  %v559 = vpack.c.bf16 %v550, %v549
  %v560 = vpack.c.bf16 %v552, %v551
  %v569 = vunpack.c.l.b16 %v553
  %v570 = vunpack.c.h.b16 %v553
  %v571 = vunpack.c.l.b16 %v554
  %v572 = vunpack.c.h.b16 %v554
  %v573 = vunpack.c.l.b16 %v555
  %v574 = vunpack.c.h.b16 %v555
  %v575 = vunpack.c.l.b16 %v556
  %v576 = vunpack.c.h.b16 %v556
  %v577 = vunpack.c.l.b16 %v557
  %v578 = vunpack.c.h.b16 %v557
  %v579 = vunpack.c.l.b16 %v558
  %v580 = vunpack.c.h.b16 %v558
  %v581 = vunpack.c.l.b16 %v559
  %v582 = vunpack.c.h.b16 %v559
  %v583 = vunpack.c.l.b16 %v560
  %v584 = vunpack.c.h.b16 %v560
  %v585 = vpack.c.b16 %v569, %v569
  %v586 = vpack.c.b16 %v570, %v570
  %v587 = vpack.c.b16 %v571, %v571
  %v588 = vpack.c.b16 %v572, %v572
  %v589 = vpack.c.b16 %v573, %v573
  %v590 = vpack.c.b16 %v574, %v574
  %v591 = vpack.c.b16 %v575, %v575
  %v592 = vpack.c.b16 %v576, %v576
  %v593 = vpack.c.b16 %v577, %v577
  %v594 = vpack.c.b16 %v578, %v578
  %v595 = vpack.c.b16 %v579, %v579
  %v596 = vpack.c.b16 %v580, %v580
  %v597 = vpack.c.b16 %v581, %v581
  %v598 = vpack.c.b16 %v582, %v582
  %v599 = vpack.c.b16 %v583, %v583
  %v600 = vpack.c.b16 %v584, %v584
  %617 = vst [vmem:[%s3] sm:$0xf] %v585
  %618 = vst [vmem:[%s3 + $0x4] sm:$0xf] %v586
  %619 = vst [vmem:[%s3 + $0x8] sm:$0xf] %v587
  %620 = vst [vmem:[%s3 + $0xc] sm:$0xf] %v588
  %621 = vst [vmem:[%s3 + $0x10] sm:$0xf] %v589
  %622 = vst [vmem:[%s3 + $0x14] sm:$0xf] %v590
  %623 = vst [vmem:[%s3 + $0x18] sm:$0xf] %v591
  %624 = vst [vmem:[%s3 + $0x1c] sm:$0xf] %v592
  %625 = vst [vmem:[%s3 + $0x20] sm:$0xf] %v593
  %626 = vst [vmem:[%s3 + $0x24] sm:$0xf] %v594
  %627 = vst [vmem:[%s3 + $0x28] sm:$0xf] %v595
  %628 = vst [vmem:[%s3 + $0x2c] sm:$0xf] %v596
  %629 = vst [vmem:[%s3 + $0x30] sm:$0xf] %v597
  %630 = vst [vmem:[%s3 + $0x34] sm:$0xf] %v598
  %631 = vst [vmem:[%s3 + $0x38] sm:$0xf] %v599
  %632 = vst [vmem:[%s3 + $0x3c] sm:$0xf] %v600
  // Predicated region
  $region14: #{faster_rcnn_forward.11} parent=0 // pred_check
    _
  $region15: #{faster_rcnn_forward.11} parent=0 // pred_check_branch
    %634 = sbr.rel (0) target = $region17
  $region16: #{faster_rcnn_forward.11} parent=0 // pred_region
    _
  $region17: #{faster_rcnn_forward.11} parent=0 // pred_fallthru
    _
  // Predicated region
  $region18: #{faster_rcnn_forward.11} parent=0 // pred_check
    _
  $region19: #{faster_rcnn_forward.11} parent=0 // pred_check_branch
    %636 = sbr.rel (0) target = $region21
  $region20: #{faster_rcnn_forward.11} parent=0 // pred_region
    _
  $region21: #{faster_rcnn_forward.11} parent=0 // pred_fallthru
    _

// kernel: faster_rcnn_forward.12
$region0: #{faster_rcnn_forward.12}
  #allocation0 [shape = 'u32[]', space=smem, size = 0x4, offset = 0x4, fixed_abs, tag = 'smem constant byte address 0x4 - core index']
  #allocation1 [shape = 'u32[144,128]{1,0:T(1,128)}', space=vmem, size = 0x12000, scoped, tag = 'internal scratch']
  %s0 = inlined_call_operand.vmem [shape: bf16[32,432], index: 0, kind: input, shape index: {}]
  %s1 = inlined_call_operand.vmem [shape: bf16[432,128], index: 1, kind: input, shape index: {}]
  %s2 = inlined_call_operand.vmem [shape: f32[1,128], index: 2, kind: input, shape index: {}]
  %s3 = inlined_call_operand.vmem [shape: bf16[32,128], index: 3, kind: output, shape index: {}]
  %s4 = sld [smem:[#allocation0]]
  $region22: #{faster_rcnn_forward.12} parent=0
    _
  %s6 = ssub.s32 1, %s4
  %s7 = scalar_select 0, %s6, %s4
  // Predicated region
  $region2: #{faster_rcnn_forward.12} parent=0 // pred_check
    _
  $region3: #{faster_rcnn_forward.12} parent=0 // pred_check_branch
    %9 = sbr.rel (0) target = $region5
  $region4: #{faster_rcnn_forward.12} parent=0 // pred_region
    _
  $region5: #{faster_rcnn_forward.12} parent=0 // pred_fallthru
    _
  // Predicated region
  $region6: #{faster_rcnn_forward.12} parent=0 // pred_check
    _
  $region7: #{faster_rcnn_forward.12} parent=0 // pred_check_branch
    %11 = sbr.rel (0) target = $region9
  $region8: #{faster_rcnn_forward.12} parent=0 // pred_region
    _
  $region9: #{faster_rcnn_forward.12} parent=0 // pred_fallthru
    _
  // Predicated region
  $region10: #{faster_rcnn_forward.12} parent=0 // pred_check
    _
  $region11: #{faster_rcnn_forward.12} parent=0 // pred_check_branch
    %13 = sbr.rel (0) target = $region13
  $region12: #{faster_rcnn_forward.12} parent=0 // pred_region
    _
  $region13: #{faster_rcnn_forward.12} parent=0 // pred_fallthru
    _
  %v15 = vld [vmem:[%s0] sm:$0xff]
  %v16 = vld [vmem:[%s0 + $0x8] sm:$0xff]
  %v17 = vld [vmem:[%s0 + $0x10] sm:$0xff]
  %v18 = vld [vmem:[%s0 + $0x18] sm:$0xff]
  %v19 = vld [vmem:[%s0 + $0x20] sm:$0xff]
  %v20 = vld [vmem:[%s0 + $0x28] sm:$0xff]
  %v21 = vld [vmem:[%s0 + $0x30] sm:$0xff]
  %v22 = vld [vmem:[%s0 + $0x38] sm:$0xff]
  %v23 = vld [vmem:[%s1] sm:$0xf]
  %v24 = vld [vmem:[%s1 + $0x4] sm:$0xf]
  %v25 = vld [vmem:[%s1 + $0x8] sm:$0xf]
  %v26 = vld [vmem:[%s1 + $0xc] sm:$0xf]
  %v27 = vld [vmem:[%s1 + $0x10] sm:$0xf]
  %v28 = vld [vmem:[%s1 + $0x14] sm:$0xf]
  %v29 = vld [vmem:[%s1 + $0x18] sm:$0xf]
  %v30 = vld [vmem:[%s1 + $0x1c] sm:$0xf]
  %v31 = vld [vmem:[%s1 + $0x20] sm:$0xf]
  %v32 = vld [vmem:[%s1 + $0x24] sm:$0xf]
  %v33 = vld [vmem:[%s1 + $0x28] sm:$0xf]
  %v34 = vld [vmem:[%s1 + $0x2c] sm:$0xf]
  %v35 = vld [vmem:[%s1 + $0x30] sm:$0xf]
  %v36 = vld [vmem:[%s1 + $0x34] sm:$0xf]
  %v37 = vld [vmem:[%s1 + $0x38] sm:$0xf]
  %v38 = vld [vmem:[%s1 + $0x3c] sm:$0xf]
  %v39 = vld [vmem:[%s1 + $0x40] sm:$0xf]
  %v40 = vld [vmem:[%s1 + $0x44] sm:$0xf]
  %v41 = vld [vmem:[%s1 + $0x48] sm:$0xf]
  %v42 = vld [vmem:[%s1 + $0x4c] sm:$0xf]
  %v43 = vld [vmem:[%s1 + $0x50] sm:$0xf]
  %v44 = vld [vmem:[%s1 + $0x54] sm:$0xf]
  %v45 = vld [vmem:[%s1 + $0x58] sm:$0xf]
  %v46 = vld [vmem:[%s1 + $0x5c] sm:$0xf]
  %v47 = vld [vmem:[%s1 + $0x60] sm:$0xf]
  %v48 = vld [vmem:[%s1 + $0x64] sm:$0xf]
  %v49 = vld [vmem:[%s1 + $0x68] sm:$0xf]
  %v50 = vld [vmem:[%s1 + $0x6c] sm:$0xf]
  %v51 = vld [vmem:[%s1 + $0x70] sm:$0xf]
  %v52 = vld [vmem:[%s1 + $0x74] sm:$0xf]
  %v53 = vld [vmem:[%s1 + $0x78] sm:$0xf]
  %v54 = vld [vmem:[%s1 + $0x7c] sm:$0xf]
  %v55 = vld [vmem:[%s1 + $0x80] sm:$0xf]
  %v56 = vld [vmem:[%s1 + $0x84] sm:$0xf]
  %v57 = vld [vmem:[%s1 + $0x88] sm:$0xf]
  %v58 = vld [vmem:[%s1 + $0x8c] sm:$0xf]
  %v59 = vld [vmem:[%s1 + $0x90] sm:$0xf]
  %v60 = vld [vmem:[%s1 + $0x94] sm:$0xf]
  %v61 = vld [vmem:[%s1 + $0x98] sm:$0xf]
  %v62 = vld [vmem:[%s1 + $0x9c] sm:$0xf]
  %v63 = vld [vmem:[%s1 + $0xa0] sm:$0xf]
  %v64 = vld [vmem:[%s1 + $0xa4] sm:$0xf]
  %v65 = vld [vmem:[%s1 + $0xa8] sm:$0xf]
  %v66 = vld [vmem:[%s1 + $0xac] sm:$0xf]
  %v67 = vld [vmem:[%s1 + $0xb0] sm:$0xf]
  %v68 = vld [vmem:[%s1 + $0xb4] sm:$0xf]
  %v69 = vld [vmem:[%s1 + $0xb8] sm:$0xf]
  %v70 = vld [vmem:[%s1 + $0xbc] sm:$0xf]
  %v71 = vld [vmem:[%s1 + $0xc0] sm:$0xf]
  %v72 = vld [vmem:[%s1 + $0xc4] sm:$0xf]
  %v73 = vld [vmem:[%s1 + $0xc8] sm:$0xf]
  %v74 = vld [vmem:[%s1 + $0xcc] sm:$0xf]
  %v75 = vld [vmem:[%s1 + $0xd0] sm:$0xf]
  %v76 = vld [vmem:[%s1 + $0xd4] sm:$0xf]
  %v77 = vld [vmem:[%s2] sm:$0x1]
  %v79 = vlaneseq
  %v80 = vshrl.u32 %v79, 7
  %v81 = vsub.s32 0, %v80
  %v82 = vrot.slane %v77, %v81
  %v92 = vunpack.c.l.b16 %v15
  %v93 = vunpack.c.h.b16 %v15
  %v94 = vunpack.c.l.b16 %v16
  %v95 = vunpack.c.h.b16 %v16
  %v96 = vunpack.c.l.b16 %v17
  %v97 = vunpack.c.h.b16 %v17
  %v98 = vunpack.c.l.b16 %v18
  %v99 = vunpack.c.h.b16 %v18
  %v100 = vunpack.c.l.b16 %v19
  %v101 = vunpack.c.h.b16 %v19
  %v102 = vunpack.c.l.b16 %v20
  %v103 = vunpack.c.h.b16 %v20
  %v104 = vunpack.c.l.b16 %v21
  %v105 = vunpack.c.h.b16 %v21
  %v106 = vunpack.c.l.b16 %v22
  %v107 = vunpack.c.h.b16 %v22
  %v108 = vpack.c.b16 %v96, %v92
  %v109 = vpack.c.b16 %v97, %v93
  %v110 = vpack.c.b16 %v98, %v94
  %v111 = vpack.c.b16 %v99, %v95
  %v112 = vpack.c.b16 %v104, %v100
  %v113 = vpack.c.b16 %v105, %v101
  %v114 = vpack.c.b16 %v106, %v102
  %v115 = vpack.c.b16 %v107, %v103
  %v176 = vunpack.c.l.b16 %v23
  %v177 = vunpack.c.l.b16 %v24
  %v178 = vunpack.c.l.b16 %v25
  %v179 = vunpack.c.l.b16 %v26
  %v180 = vunpack.c.l.b16 %v27
  %v181 = vunpack.c.l.b16 %v28
  %v182 = vunpack.c.l.b16 %v29
  %v183 = vunpack.c.l.b16 %v30
  %v184 = vunpack.c.l.b16 %v31
  %v185 = vunpack.c.l.b16 %v32
  %v186 = vunpack.c.l.b16 %v33
  %v187 = vunpack.c.l.b16 %v34
  %v188 = vunpack.c.l.b16 %v35
  %v189 = vunpack.c.l.b16 %v36
  %v190 = vunpack.c.l.b16 %v37
  %v191 = vunpack.c.l.b16 %v38
  %v192 = vunpack.c.l.b16 %v39
  %v193 = vunpack.c.l.b16 %v40
  %v194 = vunpack.c.l.b16 %v41
  %v195 = vunpack.c.l.b16 %v42
  %v196 = vunpack.c.l.b16 %v43
  %v197 = vunpack.c.l.b16 %v44
  %v198 = vunpack.c.l.b16 %v45
  %v199 = vunpack.c.l.b16 %v46
  %v200 = vunpack.c.l.b16 %v47
  %v201 = vunpack.c.l.b16 %v48
  %v202 = vunpack.c.l.b16 %v49
  %v203 = vunpack.c.l.b16 %v50
  %v204 = vunpack.c.l.b16 %v51
  %v205 = vunpack.c.l.b16 %v52
  %v206 = vunpack.c.l.b16 %v53
  %v207 = vunpack.c.l.b16 %v54
  %v208 = vunpack.c.l.b16 %v55
  %v209 = vunpack.c.l.b16 %v56
  %v210 = vunpack.c.l.b16 %v57
  %v211 = vunpack.c.l.b16 %v58
  %v212 = vunpack.c.l.b16 %v59
  %v213 = vunpack.c.l.b16 %v60
  %v214 = vunpack.c.l.b16 %v61
  %v215 = vunpack.c.l.b16 %v62
  %v216 = vunpack.c.l.b16 %v63
  %v217 = vunpack.c.l.b16 %v64
  %v218 = vunpack.c.l.b16 %v65
  %v219 = vunpack.c.l.b16 %v66
  %v220 = vunpack.c.l.b16 %v67
  %v221 = vunpack.c.l.b16 %v68
  %v222 = vunpack.c.l.b16 %v69
  %v223 = vunpack.c.l.b16 %v70
  %v224 = vunpack.c.l.b16 %v71
  %v225 = vunpack.c.l.b16 %v72
  %v226 = vunpack.c.l.b16 %v73
  %v227 = vunpack.c.l.b16 %v74
  %v228 = vunpack.c.l.b16 %v75
  %v229 = vunpack.c.l.b16 %v76
  %v230 = vpack.c.b16 %v177, %v176
  %v231 = vpack.c.b16 %v179, %v178
  %v232 = vpack.c.b16 %v181, %v180
  %v233 = vpack.c.b16 %v183, %v182
  %v234 = vpack.c.b16 %v185, %v184
  %v235 = vpack.c.b16 %v187, %v186
  %v236 = vpack.c.b16 %v189, %v188
  %v237 = vpack.c.b16 %v191, %v190
  %v238 = vpack.c.b16 %v193, %v192
  %v239 = vpack.c.b16 %v195, %v194
  %v240 = vpack.c.b16 %v197, %v196
  %v241 = vpack.c.b16 %v199, %v198
  %v242 = vpack.c.b16 %v201, %v200
  %v243 = vpack.c.b16 %v203, %v202
  %v244 = vpack.c.b16 %v205, %v204
  %v245 = vpack.c.b16 %v207, %v206
  %v246 = vpack.c.b16 %v209, %v208
  %v247 = vpack.c.b16 %v211, %v210
  %v248 = vpack.c.b16 %v213, %v212
  %v249 = vpack.c.b16 %v215, %v214
  %v250 = vpack.c.b16 %v217, %v216
  %v251 = vpack.c.b16 %v219, %v218
  %v252 = vpack.c.b16 %v221, %v220
  %v253 = vpack.c.b16 %v223, %v222
  %v254 = vpack.c.b16 %v225, %v224
  %v255 = vpack.c.b16 %v227, %v226
  %v256 = vpack.c.b16 %v229, %v228
  %vm284 = vcmask 392192
  %v286 = vsel %vm284, %v111, 0
  %v289 = vsel %vm284, %v115, 0
  %291 = vmatprep.subr.bf16.mxu0 0
  %292 = vmatpush1.bf16.msra.mxu0 %v230
  %293 = vmatprep.subr.bf16.mxu0 0
  %294 = vmatpush1.bf16.msra.mxu0 %v231
  %295 = vmatprep.subr.bf16.mxu0 0
  %296 = vmatpush1.bf16.msra.mxu0 %v232
  %297 = vmatprep.subr.bf16.mxu0 0
  %298 = vmatpush1.bf16.msra.mxu0 %v233
  %299 = vmatprep.subr.bf16.mxu0 0
  %300 = vmatpush1.bf16.msra.mxu0 %v234
  %301 = vmatprep.subr.bf16.mxu0 0
  %302 = vmatpush1.bf16.msra.mxu0 %v235
  %303 = vmatprep.subr.bf16.mxu0 0
  %304 = vmatpush1.bf16.msra.mxu0 %v236
  %305 = vmatprep.subr.bf16.mxu0 0
  %306 = vmatpush1.bf16.msra.mxu0 %v237
  %307 = vmatprep.subr.bf16.mxu0 0
  %308 = vmatpush1.bf16.msra.mxu0 %v238
  %309 = vmatprep.subr.bf16.mxu0 0
  %310 = vmatpush1.bf16.msra.mxu0 %v239
  %311 = vmatprep.subr.bf16.mxu0 0
  %312 = vmatpush1.bf16.msra.mxu0 %v240
  %313 = vmatprep.subr.bf16.mxu0 0
  %314 = vmatpush1.bf16.msra.mxu0 %v241
  %315 = vmatprep.subr.bf16.mxu0 0
  %316 = vmatpush1.bf16.msra.mxu0 %v242
  %317 = vmatprep.subr.bf16.mxu0 0
  %318 = vmatpush1.bf16.msra.mxu0 %v243
  %319 = vmatprep.subr.bf16.mxu0 0
  %320 = vmatpush1.bf16.msra.mxu0 %v244
  %321 = vmatprep.subr.bf16.mxu0 0
  %322 = vmatpush1.bf16.msra.mxu0 %v245
  %323 = vmatprep.mubr.bf16.mxu0 %v109
  %324 = vmatmul.mubr.bf16.gmra.mrb[0].mxu0 %v108
  %v325 = vpop.f32.mrb[0].mxu0
  %v326 = vadd.f32 %v82, %v325
  %v327 = vpop.f32.mrb[0].mxu0
  %v328 = vpop.f32.mrb[0].mxu0
  %v329 = vadd.f32 %v82, %v328
  %v330 = vpop.f32.mrb[0].mxu0
  %331 = vmatprep.mubr.bf16.mxu0 %v113
  %332 = vmatmul.mubr.bf16.gmra.mrb[0].mxu0 %v112
  %v333 = vpop.f32.mrb[0].mxu0
  %v334 = vadd.f32 %v82, %v333
  %v335 = vpop.f32.mrb[0].mxu0
  %v336 = vpop.f32.mrb[0].mxu0
  %v337 = vadd.f32 %v82, %v336
  %v338 = vpop.f32.mrb[0].mxu0
  %339 = vdwg.mxu0
  %340 = vmatprep.subr.bf16.mxu0 0
  %341 = vmatpush1.bf16.msra.mxu0 %v246
  %342 = vmatprep.subr.bf16.mxu0 0
  %343 = vmatpush1.bf16.msra.mxu0 %v247
  %344 = vmatprep.subr.bf16.mxu0 0
  %345 = vmatpush1.bf16.msra.mxu0 %v248
  %346 = vmatprep.subr.bf16.mxu0 0
  %347 = vmatpush1.bf16.msra.mxu0 %v249
  %348 = vmatprep.subr.bf16.mxu0 0
  %349 = vmatpush1.bf16.msra.mxu0 %v250
  %350 = vmatprep.subr.bf16.mxu0 0
  %351 = vmatpush1.bf16.msra.mxu0 %v251
  %352 = vmatprep.subr.bf16.mxu0 0
  %353 = vmatpush1.bf16.msra.mxu0 %v252
  %354 = vmatprep.subr.bf16.mxu0 0
  %355 = vmatpush1.bf16.msra.mxu0 %v253
  %356 = vmatprep.subr.bf16.mxu0 0
  %357 = vmatpush1.bf16.msra.mxu0 %v254
  %358 = vmatprep.subr.bf16.mxu0 0
  %359 = vmatpush1.bf16.msra.mxu0 %v255
  %360 = vmatprep.subr.bf16.mxu0 0
  %361 = vmatpush1.bf16.msra.mxu0 %v256
  %362 = vmatprep.subr.bf16.mxu0 0
  %363 = vmatpush1.bf16.msra.mxu0 0
  %364 = vmatprep.subr.bf16.mxu0 0
  %365 = vmatpush1.bf16.msra.mxu0 0
  %366 = vmatprep.subr.bf16.mxu0 0
  %367 = vmatpush1.bf16.msra.mxu0 0
  %368 = vmatprep.subr.bf16.mxu0 0
  %369 = vmatpush1.bf16.msra.mxu0 0
  %370 = vmatprep.subr.bf16.mxu0 0
  %371 = vmatpush1.bf16.msra.mxu0 0
  %372 = vmatprep.mubr.bf16.mxu0 %v286
  %373 = vmatmul.mubr.bf16.gmra.mrb[0].mxu0 %v110
  %v374 = vpop.f32.mrb[0].mxu0
  %v375 = vadd.f32 %v326, %v374
  %v376 = vpop.f32.mrb[0].mxu0
  %v377 = vpop.f32.mrb[0].mxu0
  %v378 = vadd.f32 %v329, %v377
  %v379 = vpop.f32.mrb[0].mxu0
  %380 = vmatprep.mubr.bf16.mxu0 %v289
  %381 = vmatmul.mubr.bf16.gmra.mrb[0].mxu0 %v114
  %v382 = vpop.f32.mrb[0].mxu0
  %v383 = vadd.f32 %v334, %v382
  %v384 = vpop.f32.mrb[0].mxu0
  %v385 = vpop.f32.mrb[0].mxu0
  %v386 = vadd.f32 %v337, %v385
  %v387 = vpop.f32.mrb[0].mxu0
  %388 = vdwg.mxu0
  %v389 = vmax.f32 %v375, 0.0
  %v390 = vmax.f32 %v378, 0.0
  %v391 = vmax.f32 %v383, 0.0
  %v392 = vmax.f32 %v386, 0.0
  %v393 = vpack.c.bf16 %v390, %v389
  %v394 = vpack.c.bf16 %v392, %v391
  %v397 = vunpack.c.l.b16 %v393
  %v398 = vunpack.c.h.b16 %v393
  %v399 = vunpack.c.l.b16 %v394
  %v400 = vunpack.c.h.b16 %v394
  %v401 = vpack.c.b16 %v397, %v397
  %v402 = vpack.c.b16 %v398, %v398
  %v403 = vpack.c.b16 %v399, %v399
  %v404 = vpack.c.b16 %v400, %v400
  %409 = vst [vmem:[%s3] sm:$0xf] %v401
  %410 = vst [vmem:[%s3 + $0x4] sm:$0xf] %v402
  %411 = vst [vmem:[%s3 + $0x8] sm:$0xf] %v403
  %412 = vst [vmem:[%s3 + $0xc] sm:$0xf] %v404
  // Predicated region
  $region14: #{faster_rcnn_forward.12} parent=0 // pred_check
    _
  $region15: #{faster_rcnn_forward.12} parent=0 // pred_check_branch
    %414 = sbr.rel (0) target = $region17
  $region16: #{faster_rcnn_forward.12} parent=0 // pred_region
    _
  $region17: #{faster_rcnn_forward.12} parent=0 // pred_fallthru
    _
  // Predicated region
  $region18: #{faster_rcnn_forward.12} parent=0 // pred_check
    _
  $region19: #{faster_rcnn_forward.12} parent=0 // pred_check_branch
    %416 = sbr.rel (0) target = $region21
  $region20: #{faster_rcnn_forward.12} parent=0 // pred_region
    _
  $region21: #{faster_rcnn_forward.12} parent=0 // pred_fallthru
    _

// kernel: squeeze.30
$region0: #{squeeze.30}
  %s0 = inlined_call_operand.vmem [shape: f32[1,4,4,36], index: 0, kind: input, shape index: {}]
  %s1 = inlined_call_operand.vmem [shape: f32[144,4], index: 1, kind: output, shape index: {}]
  $region1: #{squeeze.30} parent=0
    #allocation0 [shape = 'u8[16384]{0}', space=vmem, size = 0x4000, scoped, tag = 'scoped mem for input reshape']
    %s3 = sshllo.u32 0, 4
    %s4 = smul.addr 4, 3
    %s5 = scalar_lea.vmem %s0, %s4
    %v6 = vld [vmem:[%s5] sm:%s3]
    %s7 = scalar_lea.vmem [#allocation0], 24
    %8 = vst [vmem:[%s7] sm:%s3] %v6
    %s9 = smul.addr 4, 2
    %s10 = scalar_lea.vmem %s0, %s9
    %v11 = vld [vmem:[%s10] sm:%s3]
    %s12 = scalar_lea.vmem [#allocation0], 16
    %13 = vst [vmem:[%s12] sm:%s3] %v11
    %s14 = scalar_lea.vmem %s0, 4
    %v15 = vld [vmem:[%s14] sm:%s3]
    %s16 = scalar_lea.vmem [#allocation0], 8
    %17 = vst [vmem:[%s16] sm:%s3] %v15
    %v18 = vld [vmem:[%s0] sm:%s3]
    %19 = vst [vmem:[#allocation0] sm:%s3] %v18
    %v20 = vld [vmem:[#allocation0] sm:$0xf]
    %vm21 = vcmask 31744
    %22 = vst.msk [vmem:[%s1] ss:$9 sm:$0xf] %vm21, %v20
    %s23 = scalar_lea.vmem [#allocation0], 8
    %v24 = vld [vmem:[%s23] sm:$0xf]
    %vm25 = vcmask 31744
    %s26 = scalar_lea.vmem %s1, 36
    %27 = vst.msk [vmem:[%s26] ss:$9 sm:$0xf] %vm25, %v24
    %s28 = scalar_lea.vmem [#allocation0], 16
    %v29 = vld [vmem:[%s28] sm:$0xf]
    %vm30 = vcmask 31744
    %s31 = scalar_lea.vmem %s1, 72
    %32 = vst.msk [vmem:[%s31] ss:$9 sm:$0xf] %vm30, %v29
    %s33 = scalar_lea.vmem [#allocation0], 24
    %v34 = vld [vmem:[%s33] sm:$0xf]
    %vm35 = vcmask 31744
    %s36 = scalar_lea.vmem %s1, 108
    %37 = vst.msk [vmem:[%s36] ss:$9 sm:$0xf] %vm35, %v34
    %s38 = scalar_lea.vmem [#allocation0], 11
    %s39 = smov 3
    %v40 = vld [vmem:[%s38] ss:$-11 sm:%s39]
    %s41 = scalar_lea.vmem [#allocation0], 41
    %s42 = smov 12
    %v43 = vld [vmem:[%s41] ss:$-11 sm:%s42]
    %vm44 = vcmask 1043458
    %v45 = vsel %vm44, %v43, %v40
    %s46 = scalar_lea.vmem [#allocation0], 71
    %s47 = smov 48
    %v48 = vld [vmem:[%s46] ss:$-11 sm:%s47]
    %vm49 = vcmask 1045508
    %v50 = vsel %vm49, %v48, %v45
    %s51 = scalar_lea.vmem [#allocation0], 4294967159
    %s52 = smov 192
    %v53 = vld [vmem:[%s51] ss:$23 sm:%s52]
    %vm54 = vcmask 1047558
    %v55 = vsel %vm54, %v53, %v50
    %56 = vrot.lane.b32.xlu0 %v55, 124
    %v57 = vpop.permute.xlu0 %56
    %vm58 = vcmask 31744
    %s59 = scalar_lea.vmem %s1, 64
    %60 = vst.msk [vmem:[%s59] ss:$-63 sm:$0x3] %vm58, %v57
    %s61 = scalar_lea.vmem %s1, 226
    %62 = vst.msk [vmem:[%s61] ss:$-63 sm:$0xc] %vm58, %v57
    %s63 = scalar_lea.vmem %s1, 388
    %64 = vst.msk [vmem:[%s63] ss:$-63 sm:$0x70] %vm58, %v57
    %s65 = scalar_lea.vmem %s1, 102
    %66 = vst.msk [vmem:[%s65] sm:$0x80] %vm58, %v57
    %s67 = scalar_lea.vmem [#allocation0], 2
    %v68 = vld.sshfl [vmem:[%s67] sm:$0xff pattern:$0xf7]
    %s69 = scalar_lea.vmem [#allocation0], 10
    %v70 = vld.sshfl [vmem:[%s69] sm:$0xff pattern:$0x8880ffff]
    %vm71 = vcmask 1045507
    %v72 = vsel %vm71, %v70, %v68
    %s73 = scalar_lea.vmem [#allocation0], 4294967161
    %s74 = smov 192
    %v75 = vld [vmem:[%s73] ss:$23 sm:%s74]
    %vm76 = vcmask 1047558
    %v77 = vsel %vm76, %v75, %v72
    %78 = vrot.lane.b32.xlu0 %v77, 124
    %v79 = vpop.permute.xlu0 %78
    %vm80 = vcmask 31744
    %s81 = scalar_lea.vmem %s1, 46
    %82 = vst.msk [vmem:[%s81] ss:$36 sm:$0x3] %vm80, %v79
    %s83 = scalar_lea.vmem %s1, 4294967117
    %84 = vst.msk [vmem:[%s83] ss:$99 sm:$0xc] %vm80, %v79
    %s85 = scalar_lea.vmem %s1, 4294967207
    %86 = vst.msk [vmem:[%s85] ss:$36 sm:$0x30] %vm80, %v79
    %s87 = scalar_lea.vmem %s1, 4294966730
    %88 = vst.msk [vmem:[%s87] ss:$99 sm:$0xc0] %vm80, %v79
    %s89 = scalar_lea.vmem [#allocation0], 26
    %s90 = smov 3
    %v91 = vld [vmem:[%s89] ss:$-15 sm:%s90]
    %s92 = scalar_lea.vmem [#allocation0], 4294967258
    %s93 = smov 12
    %v94 = vld [vmem:[%s92] ss:$19 sm:%s93]
    %vm95 = vcmask 1043458
    %v96 = vsel %vm95, %v94, %v91
    %s97 = scalar_lea.vmem [#allocation0], 4294967228
    %s98 = smov 48
    %v99 = vld [vmem:[%s97] ss:$19 sm:%s98]
    %vm100 = vcmask 1045508
    %v101 = vsel %vm100, %v99, %v96
    %s102 = scalar_lea.vmem [#allocation0], 106
    %s103 = smov 192
    %v104 = vld [vmem:[%s102] ss:$-15 sm:%s103]
    %vm105 = vcmask 1047558
    %v106 = vsel %vm105, %v104, %v101
    %107 = vrot.lane.b32.xlu0 %v106, 120
    %v108 = vpop.permute.xlu0 %107
    %vm109 = vcmask 31744
    %s110 = scalar_lea.vmem %s1, 128
    %111 = vst.msk [vmem:[%s110] ss:$-63 sm:$0x7] %vm109, %v108
    %s112 = scalar_lea.vmem %s1, 290
    %113 = vst.msk [vmem:[%s112] ss:$-63 sm:$0x18] %vm109, %v108
    %s114 = scalar_lea.vmem %s1, 452
    %115 = vst.msk [vmem:[%s114] ss:$-63 sm:$0xe0] %vm109, %v108
    %s116 = scalar_lea.vmem [#allocation0], 9
    %v117 = vld.sshfl [vmem:[%s116] sm:$0xff pattern:$0x8888880f]
    %s118 = scalar_lea.vmem [#allocation0], 4294967229
    %s119 = smov 24
    %v120 = vld [vmem:[%s118] ss:$23 sm:%s119]
    %vm121 = vcmask 1044483
    %v122 = vsel %vm121, %v120, %v117
    %s123 = scalar_lea.vmem [#allocation0], 3
    %v124 = vld.sshfl [vmem:[%s123] sm:$0xff pattern:$0xf777777]
    %vm125 = vcmask 1047557
    %v126 = vsel %vm125, %v124, %v122
    %127 = vrot.lane.b32.xlu0 %v126, 120
    %v128 = vpop.permute.xlu0 %127
    %vm129 = vcmask 31744
    %s130 = scalar_lea.vmem %s1, 110
    %131 = vst.msk [vmem:[%s130] ss:$-63 sm:$0x3] %vm129, %v128
    %s132 = scalar_lea.vmem %s1, 209
    %133 = vst.msk [vmem:[%s132] ss:$-63 sm:$0xc] %vm129, %v128
    %s134 = scalar_lea.vmem %s1, 371
    %135 = vst.msk [vmem:[%s134] ss:$-63 sm:$0x30] %vm129, %v128
    %s136 = scalar_lea.vmem %s1, 470
    %137 = vst.msk [vmem:[%s136] ss:$-63 sm:$0xc0] %vm129, %v128
    %s138 = scalar_lea.vmem [#allocation0], 26
    %s139 = smov 3
    %v140 = vld [vmem:[%s138] ss:$-15 sm:%s139]
    %s141 = scalar_lea.vmem [#allocation0], 4294967258
    %s142 = smov 12
    %v143 = vld [vmem:[%s141] ss:$19 sm:%s142]
    %vm144 = vcmask 1043458
    %v145 = vsel %vm144, %v143, %v140
    %s146 = scalar_lea.vmem [#allocation0], 4294967228
    %s147 = smov 48
    %v148 = vld [vmem:[%s146] ss:$19 sm:%s147]
    %vm149 = vcmask 1045508
    %v150 = vsel %vm149, %v148, %v145
    %s151 = scalar_lea.vmem [#allocation0], 106
    %s152 = smov 192
    %v153 = vld [vmem:[%s151] ss:$-15 sm:%s152]
    %vm154 = vcmask 1047558
    %v155 = vsel %vm154, %v153, %v150
    %156 = vrot.lane.b32.xlu0 %v155, 116
    %v157 = vpop.permute.xlu0 %156
    %vm158 = vcmask 31744
    %s159 = scalar_lea.vmem %s1, 129
    %160 = vst.msk [vmem:[%s159] ss:$-63 sm:$0x7] %vm158, %v157
    %s161 = scalar_lea.vmem %s1, 291
    %162 = vst.msk [vmem:[%s161] ss:$-63 sm:$0x18] %vm158, %v157
    %s163 = scalar_lea.vmem %s1, 453
    %164 = vst.msk [vmem:[%s163] ss:$-63 sm:$0xe0] %vm158, %v157
    %s165 = scalar_lea.vmem [#allocation0], 9
    %v166 = vld.sshfl [vmem:[%s165] sm:$0xff pattern:$0x8888880f]
    %s167 = scalar_lea.vmem [#allocation0], 4294967229
    %s168 = smov 24
    %v169 = vld [vmem:[%s167] ss:$23 sm:%s168]
    %vm170 = vcmask 1044483
    %v171 = vsel %vm170, %v169, %v166
    %s172 = scalar_lea.vmem [#allocation0], 3
    %v173 = vld.sshfl [vmem:[%s172] sm:$0xff pattern:$0xf777777]
    %vm174 = vcmask 1047557
    %v175 = vsel %vm174, %v173, %v171
    %176 = vrot.lane.b32.xlu0 %v175, 116
    %v177 = vpop.permute.xlu0 %176
    %vm178 = vcmask 31744
    %s179 = scalar_lea.vmem %s1, 111
    %180 = vst.msk [vmem:[%s179] ss:$-63 sm:$0x3] %vm178, %v177
    %s181 = scalar_lea.vmem %s1, 210
    %182 = vst.msk [vmem:[%s181] ss:$-63 sm:$0xc] %vm178, %v177
    %s183 = scalar_lea.vmem %s1, 372
    %184 = vst.msk [vmem:[%s183] ss:$-63 sm:$0x30] %vm178, %v177
    %s185 = scalar_lea.vmem %s1, 471
    %186 = vst.msk [vmem:[%s185] ss:$-63 sm:$0xc0] %vm178, %v177
    %s187 = scalar_lea.vmem [#allocation0], 26
    %s188 = smov 3
    %v189 = vld [vmem:[%s187] ss:$-15 sm:%s188]
    %s190 = scalar_lea.vmem [#allocation0], 4294967258
    %s191 = smov 12
    %v192 = vld [vmem:[%s190] ss:$19 sm:%s191]
    %vm193 = vcmask 1043458
    %v194 = vsel %vm193, %v192, %v189
    %s195 = scalar_lea.vmem [#allocation0], 4294967228
    %s196 = smov 48
    %v197 = vld [vmem:[%s195] ss:$19 sm:%s196]
    %vm198 = vcmask 1045508
    %v199 = vsel %vm198, %v197, %v194
    %s200 = scalar_lea.vmem [#allocation0], 106
    %s201 = smov 192
    %v202 = vld [vmem:[%s200] ss:$-15 sm:%s201]
    %vm203 = vcmask 1047558
    %v204 = vsel %vm203, %v202, %v199
    %205 = vrot.lane.b32.xlu0 %v204, 112
    %v206 = vpop.permute.xlu0 %205
    %vm207 = vcmask 31744
    %s208 = scalar_lea.vmem %s1, 130
    %209 = vst.msk [vmem:[%s208] ss:$-63 sm:$0x7] %vm207, %v206
    %s210 = scalar_lea.vmem %s1, 292
    %211 = vst.msk [vmem:[%s210] ss:$-63 sm:$0x18] %vm207, %v206
    %s212 = scalar_lea.vmem %s1, 454
    %213 = vst.msk [vmem:[%s212] ss:$-63 sm:$0xe0] %vm207, %v206
    %s214 = scalar_lea.vmem [#allocation0], 9
    %v215 = vld.sshfl [vmem:[%s214] sm:$0xff pattern:$0x8888880f]
    %s216 = scalar_lea.vmem [#allocation0], 4294967229
    %s217 = smov 24
    %v218 = vld [vmem:[%s216] ss:$23 sm:%s217]
    %vm219 = vcmask 1044483
    %v220 = vsel %vm219, %v218, %v215
    %s221 = scalar_lea.vmem [#allocation0], 3
    %v222 = vld.sshfl [vmem:[%s221] sm:$0xff pattern:$0xf777777]
    %vm223 = vcmask 1047557
    %v224 = vsel %vm223, %v222, %v220
    %225 = vrot.lane.b32.xlu0 %v224, 112
    %v226 = vpop.permute.xlu0 %225
    %vm227 = vcmask 31744
    %s228 = scalar_lea.vmem %s1, 112
    %229 = vst.msk [vmem:[%s228] ss:$-63 sm:$0x3] %vm227, %v226
    %s230 = scalar_lea.vmem %s1, 211
    %231 = vst.msk [vmem:[%s230] ss:$-63 sm:$0xc] %vm227, %v226
    %s232 = scalar_lea.vmem %s1, 373
    %233 = vst.msk [vmem:[%s232] ss:$-63 sm:$0x30] %vm227, %v226
    %s234 = scalar_lea.vmem %s1, 472
    %235 = vst.msk [vmem:[%s234] ss:$-63 sm:$0xc0] %vm227, %v226
    %s236 = scalar_lea.vmem [#allocation0], 3
    %s237 = smov 3
    %v238 = vld [vmem:[%s236] ss:$23 sm:%s237]
    %s239 = scalar_lea.vmem [#allocation0], 33
    %s240 = smov 12
    %v241 = vld [vmem:[%s239] ss:$-11 sm:%s240]
    %vm242 = vcmask 1043458
    %v243 = vsel %vm242, %v241, %v238
    %s244 = scalar_lea.vmem [#allocation0], 63
    %s245 = smov 48
    %v246 = vld [vmem:[%s244] ss:$-11 sm:%s245]
    %vm247 = vcmask 1045508
    %v248 = vsel %vm247, %v246, %v243
    %s249 = scalar_lea.vmem [#allocation0], 93
    %s250 = smov 192
    %v251 = vld [vmem:[%s249] ss:$-11 sm:%s250]
    %vm252 = vcmask 1047558
    %v253 = vsel %vm252, %v251, %v248
    %254 = vrot.lane.b32.xlu0 %v253, 108
    %v255 = vpop.permute.xlu0 %254
    %vm256 = vcmask 31744
    %s257 = scalar_lea.vmem %s1, 32
    %258 = vst.msk [vmem:[%s257] ss:$99 sm:$0x3] %vm256, %v255
    %s259 = scalar_lea.vmem %s1, 194
    %260 = vst.msk [vmem:[%s259] ss:$-63 sm:$0xc] %vm256, %v255
    %s261 = scalar_lea.vmem %s1, 356
    %262 = vst.msk [vmem:[%s261] ss:$-63 sm:$0x30] %vm256, %v255
    %s263 = scalar_lea.vmem %s1, 518
    %264 = vst.msk [vmem:[%s263] ss:$-63 sm:$0xc0] %vm256, %v255
    %s265 = scalar_lea.vmem [#allocation0], 1
    %s266 = smov 3
    %v267 = vld [vmem:[%s265] ss:$23 sm:%s266]
    %s268 = scalar_lea.vmem [#allocation0], 2
    %v269 = vld.sshfl [vmem:[%s268] sm:$0xff pattern:$0xf777]
    %vm270 = vcmask 1044482
    %v271 = vsel %vm270, %v269, %v267
    %s272 = scalar_lea.vmem [#allocation0], 10
    %v273 = vld.sshfl [vmem:[%s272] sm:$0xff pattern:$0x80ffffff]
    %vm274 = vcmask 1047557
    %v275 = vsel %vm274, %v273, %v271
    %276 = vrot.lane.b32.xlu0 %v275, 108
    %v277 = vpop.permute.xlu0 %276
    %vm278 = vcmask 31744
    %s279 = scalar_lea.vmem %s1, 14
    %280 = vst.msk [vmem:[%s279] ss:$99 sm:$0x3] %vm278, %v277
    %s281 = scalar_lea.vmem %s1, 4294967274
    %282 = vst.msk [vmem:[%s281] ss:$36 sm:$0xc] %vm278, %v277
    %s283 = scalar_lea.vmem %s1, 4294966923
    %284 = vst.msk [vmem:[%s283] ss:$99 sm:$0x30] %vm278, %v277
    %s285 = scalar_lea.vmem %s1, 4294967139
    %286 = vst.msk [vmem:[%s285] ss:$36 sm:$0xc0] %vm278, %v277
    %s287 = scalar_lea.vmem [#allocation0], 18
    %s288 = smov 3
    %v289 = vld [vmem:[%s287] ss:$-15 sm:%s288]
    %s290 = scalar_lea.vmem [#allocation0], 56
    %s291 = smov 12
    %v292 = vld [vmem:[%s290] ss:$-15 sm:%s291]
    %vm293 = vcmask 1043458
    %v294 = vsel %vm293, %v292, %v289
    %s295 = scalar_lea.vmem [#allocation0], 4294967220
    %s296 = smov 48
    %v297 = vld [vmem:[%s295] ss:$19 sm:%s296]
    %vm298 = vcmask 1045508
    %v299 = vsel %vm298, %v297, %v294
    %s300 = scalar_lea.vmem [#allocation0], 4294967190
    %s301 = smov 192
    %v302 = vld [vmem:[%s300] ss:$19 sm:%s301]
    %vm303 = vcmask 1047558
    %v304 = vsel %vm303, %v302, %v299
    %305 = vrot.lane.b32.xlu0 %v304, 104
    %v306 = vpop.permute.xlu0 %305
    %vm307 = vcmask 31744
    %s308 = scalar_lea.vmem %s1, 96
    %309 = vst.msk [vmem:[%s308] ss:$-63 sm:$0x3] %vm307, %v306
    %s310 = scalar_lea.vmem %s1, 258
    %311 = vst.msk [vmem:[%s310] ss:$-63 sm:$0x1c] %vm307, %v306
    %s312 = scalar_lea.vmem %s1, 420
    %313 = vst.msk [vmem:[%s312] ss:$-63 sm:$0x60] %vm307, %v306
    %s314 = scalar_lea.vmem %s1, 134
    %315 = vst.msk [vmem:[%s314] sm:$0x80] %vm307, %v306
    %s316 = scalar_lea.vmem [#allocation0], 16
    %s317 = smov 3
    %v318 = vld [vmem:[%s316] ss:$-15 sm:%s317]
    %s319 = scalar_lea.vmem [#allocation0], 9
    %v320 = vld.sshfl [vmem:[%s319] sm:$0xff pattern:$0x88880fff]
    %vm321 = vcmask 1044482
    %v322 = vsel %vm321, %v320, %v318
    %s323 = scalar_lea.vmem [#allocation0], 4294967183
    %s324 = smov 96
    %v325 = vld [vmem:[%s323] ss:$23 sm:%s324]
    %vm326 = vcmask 1046533
    %v327 = vsel %vm326, %v325, %v322
    %s328 = scalar_lea.vmem [#allocation0], 3
    %v329 = vld [vmem:[%s328] sm:$0x80]
    %vm330 = vcmask 1047559
    %v331 = vsel %vm330, %v329, %v327
    %332 = vrot.lane.b32.xlu0 %v331, 104
    %v333 = vpop.permute.xlu0 %332
    %vm334 = vcmask 31744
    %s335 = scalar_lea.vmem %s1, 78
    %336 = vst.msk [vmem:[%s335] ss:$-63 sm:$0x3] %vm334, %v333
    %s337 = scalar_lea.vmem %s1, 240
    %338 = vst.msk [vmem:[%s337] ss:$-63 sm:$0xc] %vm334, %v333
    %s339 = scalar_lea.vmem %s1, 339
    %340 = vst.msk [vmem:[%s339] ss:$-63 sm:$0x30] %vm334, %v333
    %s341 = scalar_lea.vmem %s1, 501
    %342 = vst.msk [vmem:[%s341] ss:$-63 sm:$0xc0] %vm334, %v333
    %s343 = scalar_lea.vmem [#allocation0], 18
    %s344 = smov 3
    %v345 = vld [vmem:[%s343] ss:$-15 sm:%s344]
    %s346 = scalar_lea.vmem [#allocation0], 56
    %s347 = smov 12
    %v348 = vld [vmem:[%s346] ss:$-15 sm:%s347]
    %vm349 = vcmask 1043458
    %v350 = vsel %vm349, %v348, %v345
    %s351 = scalar_lea.vmem [#allocation0], 4294967220
    %s352 = smov 48
    %v353 = vld [vmem:[%s351] ss:$19 sm:%s352]
    %vm354 = vcmask 1045508
    %v355 = vsel %vm354, %v353, %v350
    %s356 = scalar_lea.vmem [#allocation0], 4294967190
    %s357 = smov 192
    %v358 = vld [vmem:[%s356] ss:$19 sm:%s357]
    %vm359 = vcmask 1047558
    %v360 = vsel %vm359, %v358, %v355
    %361 = vrot.lane.b32.xlu0 %v360, 100
    %v362 = vpop.permute.xlu0 %361
    %vm363 = vcmask 31744
    %s364 = scalar_lea.vmem %s1, 97
    %365 = vst.msk [vmem:[%s364] ss:$-63 sm:$0x3] %vm363, %v362
    %s366 = scalar_lea.vmem %s1, 259
    %367 = vst.msk [vmem:[%s366] ss:$-63 sm:$0x1c] %vm363, %v362
    %s368 = scalar_lea.vmem %s1, 421
    %369 = vst.msk [vmem:[%s368] ss:$-63 sm:$0x60] %vm363, %v362
    %s370 = scalar_lea.vmem %s1, 135
    %371 = vst.msk [vmem:[%s370] sm:$0x80] %vm363, %v362
    %s372 = scalar_lea.vmem [#allocation0], 16
    %s373 = smov 3
    %v374 = vld [vmem:[%s372] ss:$-15 sm:%s373]
    %s375 = scalar_lea.vmem [#allocation0], 9
    %v376 = vld.sshfl [vmem:[%s375] sm:$0xff pattern:$0x88880fff]
    %vm377 = vcmask 1044482
    %v378 = vsel %vm377, %v376, %v374
    %s379 = scalar_lea.vmem [#allocation0], 4294967183
    %s380 = smov 96
    %v381 = vld [vmem:[%s379] ss:$23 sm:%s380]
    %vm382 = vcmask 1046533
    %v383 = vsel %vm382, %v381, %v378
    %s384 = scalar_lea.vmem [#allocation0], 3
    %v385 = vld [vmem:[%s384] sm:$0x80]
    %vm386 = vcmask 1047559
    %v387 = vsel %vm386, %v385, %v383
    %388 = vrot.lane.b32.xlu0 %v387, 100
    %v389 = vpop.permute.xlu0 %388
    %vm390 = vcmask 31744
    %s391 = scalar_lea.vmem %s1, 79
    %392 = vst.msk [vmem:[%s391] ss:$-63 sm:$0x3] %vm390, %v389
    %s393 = scalar_lea.vmem %s1, 241
    %394 = vst.msk [vmem:[%s393] ss:$-63 sm:$0xc] %vm390, %v389
    %s395 = scalar_lea.vmem %s1, 340
    %396 = vst.msk [vmem:[%s395] ss:$-63 sm:$0x30] %vm390, %v389
    %s397 = scalar_lea.vmem %s1, 502
    %398 = vst.msk [vmem:[%s397] ss:$-63 sm:$0xc0] %vm390, %v389
    %s399 = scalar_lea.vmem [#allocation0], 18
    %s400 = smov 3
    %v401 = vld [vmem:[%s399] ss:$-15 sm:%s400]
    %s402 = scalar_lea.vmem [#allocation0], 56
    %s403 = smov 12
    %v404 = vld [vmem:[%s402] ss:$-15 sm:%s403]
    %vm405 = vcmask 1043458
    %v406 = vsel %vm405, %v404, %v401
    %s407 = scalar_lea.vmem [#allocation0], 4294967220
    %s408 = smov 48
    %v409 = vld [vmem:[%s407] ss:$19 sm:%s408]
    %vm410 = vcmask 1045508
    %v411 = vsel %vm410, %v409, %v406
    %s412 = scalar_lea.vmem [#allocation0], 4294967190
    %s413 = smov 192
    %v414 = vld [vmem:[%s412] ss:$19 sm:%s413]
    %vm415 = vcmask 1047558
    %v416 = vsel %vm415, %v414, %v411
    %417 = vrot.lane.b32.xlu0 %v416, 96
    %v418 = vpop.permute.xlu0 %417
    %vm419 = vcmask 31744
    %s420 = scalar_lea.vmem %s1, 98
    %421 = vst.msk [vmem:[%s420] ss:$-63 sm:$0x3] %vm419, %v418
    %s422 = scalar_lea.vmem %s1, 260
    %423 = vst.msk [vmem:[%s422] ss:$-63 sm:$0x1c] %vm419, %v418
    %s424 = scalar_lea.vmem %s1, 422
    %425 = vst.msk [vmem:[%s424] ss:$-63 sm:$0x60] %vm419, %v418
    %s426 = scalar_lea.vmem %s1, 136
    %427 = vst.msk [vmem:[%s426] sm:$0x80] %vm419, %v418
    %s428 = scalar_lea.vmem [#allocation0], 16
    %s429 = smov 3
    %v430 = vld [vmem:[%s428] ss:$-15 sm:%s429]
    %s431 = scalar_lea.vmem [#allocation0], 9
    %v432 = vld.sshfl [vmem:[%s431] sm:$0xff pattern:$0x88880fff]
    %vm433 = vcmask 1044482
    %v434 = vsel %vm433, %v432, %v430
    %s435 = scalar_lea.vmem [#allocation0], 4294967183
    %s436 = smov 96
    %v437 = vld [vmem:[%s435] ss:$23 sm:%s436]
    %vm438 = vcmask 1046533
    %v439 = vsel %vm438, %v437, %v434
    %s440 = scalar_lea.vmem [#allocation0], 3
    %v441 = vld [vmem:[%s440] sm:$0x80]
    %vm442 = vcmask 1047559
    %v443 = vsel %vm442, %v441, %v439
    %444 = vrot.lane.b32.xlu0 %v443, 96
    %v445 = vpop.permute.xlu0 %444
    %vm446 = vcmask 31744
    %s447 = scalar_lea.vmem %s1, 80
    %448 = vst.msk [vmem:[%s447] ss:$-63 sm:$0x3] %vm446, %v445
    %s449 = scalar_lea.vmem %s1, 242
    %450 = vst.msk [vmem:[%s449] ss:$-63 sm:$0xc] %vm446, %v445
    %s451 = scalar_lea.vmem %s1, 341
    %452 = vst.msk [vmem:[%s451] ss:$-63 sm:$0x30] %vm446, %v445
    %s453 = scalar_lea.vmem %s1, 503
    %454 = vst.msk [vmem:[%s453] ss:$-63 sm:$0xc0] %vm446, %v445

// kernel: faster_rcnn_forward.13
$region0: #{faster_rcnn_forward.13}
  #allocation0 [shape = 'u32[]', space=smem, size = 0x4, offset = 0x4, fixed_abs, tag = 'smem constant byte address 0x4 - core index']
  #allocation1 [shape = 'u32[144,128]{1,0:T(1,128)}', space=vmem, size = 0x12000, scoped, tag = 'internal scratch']
  %s0 = inlined_call_operand.vmem [shape: bf16[32,576], index: 0, kind: input, shape index: {}]
  %s1 = inlined_call_operand.vmem [shape: bf16[576,128], index: 1, kind: input, shape index: {}]
  %s2 = inlined_call_operand.vmem [shape: f32[1,128], index: 2, kind: input, shape index: {}]
  %s3 = inlined_call_operand.vmem [shape: bf16[32,128], index: 3, kind: output, shape index: {}]
  %s4 = sld [smem:[#allocation0]]
  $region22: #{faster_rcnn_forward.13} parent=0
    _
  %s6 = ssub.s32 1, %s4
  %s7 = scalar_select 0, %s6, %s4
  // Predicated region
  $region2: #{faster_rcnn_forward.13} parent=0 // pred_check
    _
  $region3: #{faster_rcnn_forward.13} parent=0 // pred_check_branch
    %9 = sbr.rel (0) target = $region5
  $region4: #{faster_rcnn_forward.13} parent=0 // pred_region
    _
  $region5: #{faster_rcnn_forward.13} parent=0 // pred_fallthru
    _
  // Predicated region
  $region6: #{faster_rcnn_forward.13} parent=0 // pred_check
    _
  $region7: #{faster_rcnn_forward.13} parent=0 // pred_check_branch
    %11 = sbr.rel (0) target = $region9
  $region8: #{faster_rcnn_forward.13} parent=0 // pred_region
    _
  $region9: #{faster_rcnn_forward.13} parent=0 // pred_fallthru
    _
  // Predicated region
  $region10: #{faster_rcnn_forward.13} parent=0 // pred_check
    _
  $region11: #{faster_rcnn_forward.13} parent=0 // pred_check_branch
    %13 = sbr.rel (0) target = $region13
  $region12: #{faster_rcnn_forward.13} parent=0 // pred_region
    _
  $region13: #{faster_rcnn_forward.13} parent=0 // pred_fallthru
    _
  %v15 = vld [vmem:[%s0] sm:$0xff]
  %v16 = vld [vmem:[%s0 + $0x8] sm:$0xff]
  %v17 = vld [vmem:[%s0 + $0x10] sm:$0xf]
  %v18 = vld [vmem:[%s0 + $0x14] sm:$0xff]
  %v19 = vld [vmem:[%s0 + $0x1c] sm:$0xff]
  %v20 = vld [vmem:[%s0 + $0x24] sm:$0xf]
  %v21 = vld [vmem:[%s0 + $0x28] sm:$0xff]
  %v22 = vld [vmem:[%s0 + $0x30] sm:$0xff]
  %v23 = vld [vmem:[%s0 + $0x38] sm:$0xf]
  %v24 = vld [vmem:[%s0 + $0x3c] sm:$0xff]
  %v25 = vld [vmem:[%s0 + $0x44] sm:$0xff]
  %v26 = vld [vmem:[%s0 + $0x4c] sm:$0xf]
  %v27 = vld [vmem:[%s1] sm:$0xf]
  %v28 = vld [vmem:[%s1 + $0x4] sm:$0xf]
  %v29 = vld [vmem:[%s1 + $0x8] sm:$0xf]
  %v30 = vld [vmem:[%s1 + $0xc] sm:$0xf]
  %v31 = vld [vmem:[%s1 + $0x10] sm:$0xf]
  %v32 = vld [vmem:[%s1 + $0x14] sm:$0xf]
  %v33 = vld [vmem:[%s1 + $0x18] sm:$0xf]
  %v34 = vld [vmem:[%s1 + $0x1c] sm:$0xf]
  %v35 = vld [vmem:[%s1 + $0x20] sm:$0xf]
  %v36 = vld [vmem:[%s1 + $0x24] sm:$0xf]
  %v37 = vld [vmem:[%s1 + $0x28] sm:$0xf]
  %v38 = vld [vmem:[%s1 + $0x2c] sm:$0xf]
  %v39 = vld [vmem:[%s1 + $0x30] sm:$0xf]
  %v40 = vld [vmem:[%s1 + $0x34] sm:$0xf]
  %v41 = vld [vmem:[%s1 + $0x38] sm:$0xf]
  %v42 = vld [vmem:[%s1 + $0x3c] sm:$0xf]
  %v43 = vld [vmem:[%s1 + $0x40] sm:$0xf]
  %v44 = vld [vmem:[%s1 + $0x44] sm:$0xf]
  %v45 = vld [vmem:[%s1 + $0x48] sm:$0xf]
  %v46 = vld [vmem:[%s1 + $0x4c] sm:$0xf]
  %v47 = vld [vmem:[%s1 + $0x50] sm:$0xf]
  %v48 = vld [vmem:[%s1 + $0x54] sm:$0xf]
  %v49 = vld [vmem:[%s1 + $0x58] sm:$0xf]
  %v50 = vld [vmem:[%s1 + $0x5c] sm:$0xf]
  %v51 = vld [vmem:[%s1 + $0x60] sm:$0xf]
  %v52 = vld [vmem:[%s1 + $0x64] sm:$0xf]
  %v53 = vld [vmem:[%s1 + $0x68] sm:$0xf]
  %v54 = vld [vmem:[%s1 + $0x6c] sm:$0xf]
  %v55 = vld [vmem:[%s1 + $0x70] sm:$0xf]
  %v56 = vld [vmem:[%s1 + $0x74] sm:$0xf]
  %v57 = vld [vmem:[%s1 + $0x78] sm:$0xf]
  %v58 = vld [vmem:[%s1 + $0x7c] sm:$0xf]
  %v59 = vld [vmem:[%s1 + $0x80] sm:$0xf]
  %v60 = vld [vmem:[%s1 + $0x84] sm:$0xf]
  %v61 = vld [vmem:[%s1 + $0x88] sm:$0xf]
  %v62 = vld [vmem:[%s1 + $0x8c] sm:$0xf]
  %v63 = vld [vmem:[%s1 + $0x90] sm:$0xf]
  %v64 = vld [vmem:[%s1 + $0x94] sm:$0xf]
  %v65 = vld [vmem:[%s1 + $0x98] sm:$0xf]
  %v66 = vld [vmem:[%s1 + $0x9c] sm:$0xf]
  %v67 = vld [vmem:[%s1 + $0xa0] sm:$0xf]
  %v68 = vld [vmem:[%s1 + $0xa4] sm:$0xf]
  %v69 = vld [vmem:[%s1 + $0xa8] sm:$0xf]
  %v70 = vld [vmem:[%s1 + $0xac] sm:$0xf]
  %v71 = vld [vmem:[%s1 + $0xb0] sm:$0xf]
  %v72 = vld [vmem:[%s1 + $0xb4] sm:$0xf]
  %v73 = vld [vmem:[%s1 + $0xb8] sm:$0xf]
  %v74 = vld [vmem:[%s1 + $0xbc] sm:$0xf]
  %v75 = vld [vmem:[%s1 + $0xc0] sm:$0xf]
  %v76 = vld [vmem:[%s1 + $0xc4] sm:$0xf]
  %v77 = vld [vmem:[%s1 + $0xc8] sm:$0xf]
  %v78 = vld [vmem:[%s1 + $0xcc] sm:$0xf]
  %v79 = vld [vmem:[%s1 + $0xd0] sm:$0xf]
  %v80 = vld [vmem:[%s1 + $0xd4] sm:$0xf]
  %v81 = vld [vmem:[%s1 + $0xd8] sm:$0xf]
  %v82 = vld [vmem:[%s1 + $0xdc] sm:$0xf]
  %v83 = vld [vmem:[%s1 + $0xe0] sm:$0xf]
  %v84 = vld [vmem:[%s1 + $0xe4] sm:$0xf]
  %v85 = vld [vmem:[%s1 + $0xe8] sm:$0xf]
  %v86 = vld [vmem:[%s1 + $0xec] sm:$0xf]
  %v87 = vld [vmem:[%s1 + $0xf0] sm:$0xf]
  %v88 = vld [vmem:[%s1 + $0xf4] sm:$0xf]
  %v89 = vld [vmem:[%s1 + $0xf8] sm:$0xf]
  %v90 = vld [vmem:[%s1 + $0xfc] sm:$0xf]
  %v91 = vld [vmem:[%s1 + $0x100] sm:$0xf]
  %v92 = vld [vmem:[%s1 + $0x104] sm:$0xf]
  %v93 = vld [vmem:[%s1 + $0x108] sm:$0xf]
  %v94 = vld [vmem:[%s1 + $0x10c] sm:$0xf]
  %v95 = vld [vmem:[%s1 + $0x110] sm:$0xf]
  %v96 = vld [vmem:[%s1 + $0x114] sm:$0xf]
  %v97 = vld [vmem:[%s1 + $0x118] sm:$0xf]
  %v98 = vld [vmem:[%s1 + $0x11c] sm:$0xf]
  %v99 = vld [vmem:[%s2] sm:$0x1]
  %v101 = vlaneseq
  %v102 = vshrl.u32 %v101, 7
  %v103 = vsub.s32 0, %v102
  %v104 = vrot.slane %v99, %v103
  %v118 = vunpack.c.l.b16 %v15
  %v119 = vunpack.c.h.b16 %v15
  %v120 = vunpack.c.l.b16 %v16
  %v121 = vunpack.c.h.b16 %v16
  %v122 = vunpack.c.l.b16 %v17
  %v123 = vunpack.c.l.b16 %v18
  %v124 = vunpack.c.h.b16 %v18
  %v125 = vunpack.c.l.b16 %v19
  %v126 = vunpack.c.h.b16 %v19
  %v127 = vunpack.c.l.b16 %v20
  %v128 = vunpack.c.l.b16 %v21
  %v129 = vunpack.c.h.b16 %v21
  %v130 = vunpack.c.l.b16 %v22
  %v131 = vunpack.c.h.b16 %v22
  %v132 = vunpack.c.l.b16 %v23
  %v133 = vunpack.c.l.b16 %v24
  %v134 = vunpack.c.h.b16 %v24
  %v135 = vunpack.c.l.b16 %v25
  %v136 = vunpack.c.h.b16 %v25
  %v137 = vunpack.c.l.b16 %v26
  %v138 = vpack.c.b16 %v123, %v118
  %v139 = vpack.c.b16 %v124, %v119
  %v140 = vpack.c.b16 %v125, %v120
  %v141 = vpack.c.b16 %v126, %v121
  %v142 = vpack.c.b16 %v127, %v122
  %v143 = vpack.c.b16 %v133, %v128
  %v144 = vpack.c.b16 %v134, %v129
  %v145 = vpack.c.b16 %v135, %v130
  %v146 = vpack.c.b16 %v136, %v131
  %v147 = vpack.c.b16 %v137, %v132
  %v228 = vunpack.c.l.b16 %v27
  %v229 = vunpack.c.l.b16 %v28
  %v230 = vunpack.c.l.b16 %v29
  %v231 = vunpack.c.l.b16 %v30
  %v232 = vunpack.c.l.b16 %v31
  %v233 = vunpack.c.l.b16 %v32
  %v234 = vunpack.c.l.b16 %v33
  %v235 = vunpack.c.l.b16 %v34
  %v236 = vunpack.c.l.b16 %v35
  %v237 = vunpack.c.l.b16 %v36
  %v238 = vunpack.c.l.b16 %v37
  %v239 = vunpack.c.l.b16 %v38
  %v240 = vunpack.c.l.b16 %v39
  %v241 = vunpack.c.l.b16 %v40
  %v242 = vunpack.c.l.b16 %v41
  %v243 = vunpack.c.l.b16 %v42
  %v244 = vunpack.c.l.b16 %v43
  %v245 = vunpack.c.l.b16 %v44
  %v246 = vunpack.c.l.b16 %v45
  %v247 = vunpack.c.l.b16 %v46
  %v248 = vunpack.c.l.b16 %v47
  %v249 = vunpack.c.l.b16 %v48
  %v250 = vunpack.c.l.b16 %v49
  %v251 = vunpack.c.l.b16 %v50
  %v252 = vunpack.c.l.b16 %v51
  %v253 = vunpack.c.l.b16 %v52
  %v254 = vunpack.c.l.b16 %v53
  %v255 = vunpack.c.l.b16 %v54
  %v256 = vunpack.c.l.b16 %v55
  %v257 = vunpack.c.l.b16 %v56
  %v258 = vunpack.c.l.b16 %v57
  %v259 = vunpack.c.l.b16 %v58
  %v260 = vunpack.c.l.b16 %v59
  %v261 = vunpack.c.l.b16 %v60
  %v262 = vunpack.c.l.b16 %v61
  %v263 = vunpack.c.l.b16 %v62
  %v264 = vunpack.c.l.b16 %v63
  %v265 = vunpack.c.l.b16 %v64
  %v266 = vunpack.c.l.b16 %v65
  %v267 = vunpack.c.l.b16 %v66
  %v268 = vunpack.c.l.b16 %v67
  %v269 = vunpack.c.l.b16 %v68
  %v270 = vunpack.c.l.b16 %v69
  %v271 = vunpack.c.l.b16 %v70
  %v272 = vunpack.c.l.b16 %v71
  %v273 = vunpack.c.l.b16 %v72
  %v274 = vunpack.c.l.b16 %v73
  %v275 = vunpack.c.l.b16 %v74
  %v276 = vunpack.c.l.b16 %v75
  %v277 = vunpack.c.l.b16 %v76
  %v278 = vunpack.c.l.b16 %v77
  %v279 = vunpack.c.l.b16 %v78
  %v280 = vunpack.c.l.b16 %v79
  %v281 = vunpack.c.l.b16 %v80
  %v282 = vunpack.c.l.b16 %v81
  %v283 = vunpack.c.l.b16 %v82
  %v284 = vunpack.c.l.b16 %v83
  %v285 = vunpack.c.l.b16 %v84
  %v286 = vunpack.c.l.b16 %v85
  %v287 = vunpack.c.l.b16 %v86
  %v288 = vunpack.c.l.b16 %v87
  %v289 = vunpack.c.l.b16 %v88
  %v290 = vunpack.c.l.b16 %v89
  %v291 = vunpack.c.l.b16 %v90
  %v292 = vunpack.c.l.b16 %v91
  %v293 = vunpack.c.l.b16 %v92
  %v294 = vunpack.c.l.b16 %v93
  %v295 = vunpack.c.l.b16 %v94
  %v296 = vunpack.c.l.b16 %v95
  %v297 = vunpack.c.l.b16 %v96
  %v298 = vunpack.c.l.b16 %v97
  %v299 = vunpack.c.l.b16 %v98
  %v300 = vpack.c.b16 %v229, %v228
  %v301 = vpack.c.b16 %v231, %v230
  %v302 = vpack.c.b16 %v233, %v232
  %v303 = vpack.c.b16 %v235, %v234
  %v304 = vpack.c.b16 %v237, %v236
  %v305 = vpack.c.b16 %v239, %v238
  %v306 = vpack.c.b16 %v241, %v240
  %v307 = vpack.c.b16 %v243, %v242
  %v308 = vpack.c.b16 %v245, %v244
  %v309 = vpack.c.b16 %v247, %v246
  %v310 = vpack.c.b16 %v249, %v248
  %v311 = vpack.c.b16 %v251, %v250
  %v312 = vpack.c.b16 %v253, %v252
  %v313 = vpack.c.b16 %v255, %v254
  %v314 = vpack.c.b16 %v257, %v256
  %v315 = vpack.c.b16 %v259, %v258
  %v316 = vpack.c.b16 %v261, %v260
  %v317 = vpack.c.b16 %v263, %v262
  %v318 = vpack.c.b16 %v265, %v264
  %v319 = vpack.c.b16 %v267, %v266
  %v320 = vpack.c.b16 %v269, %v268
  %v321 = vpack.c.b16 %v271, %v270
  %v322 = vpack.c.b16 %v273, %v272
  %v323 = vpack.c.b16 %v275, %v274
  %v324 = vpack.c.b16 %v277, %v276
  %v325 = vpack.c.b16 %v279, %v278
  %v326 = vpack.c.b16 %v281, %v280
  %v327 = vpack.c.b16 %v283, %v282
  %v328 = vpack.c.b16 %v285, %v284
  %v329 = vpack.c.b16 %v287, %v286
  %v330 = vpack.c.b16 %v289, %v288
  %v331 = vpack.c.b16 %v291, %v290
  %v332 = vpack.c.b16 %v293, %v292
  %v333 = vpack.c.b16 %v295, %v294
  %v334 = vpack.c.b16 %v297, %v296
  %v335 = vpack.c.b16 %v299, %v298
  %vm372 = vcmask 523264
  %v374 = vsel %vm372, %v142, 0
  %v377 = vsel %vm372, %v147, 0
  %379 = vmatprep.subr.bf16.mxu0 0
  %380 = vmatpush1.bf16.msra.mxu0 %v300
  %381 = vmatprep.subr.bf16.mxu0 0
  %382 = vmatpush1.bf16.msra.mxu0 %v301
  %383 = vmatprep.subr.bf16.mxu0 0
  %384 = vmatpush1.bf16.msra.mxu0 %v302
  %385 = vmatprep.subr.bf16.mxu0 0
  %386 = vmatpush1.bf16.msra.mxu0 %v303
  %387 = vmatprep.subr.bf16.mxu0 0
  %388 = vmatpush1.bf16.msra.mxu0 %v304
  %389 = vmatprep.subr.bf16.mxu0 0
  %390 = vmatpush1.bf16.msra.mxu0 %v305
  %391 = vmatprep.subr.bf16.mxu0 0
  %392 = vmatpush1.bf16.msra.mxu0 %v306
  %393 = vmatprep.subr.bf16.mxu0 0
  %394 = vmatpush1.bf16.msra.mxu0 %v307
  %395 = vmatprep.subr.bf16.mxu0 0
  %396 = vmatpush1.bf16.msra.mxu0 %v308
  %397 = vmatprep.subr.bf16.mxu0 0
  %398 = vmatpush1.bf16.msra.mxu0 %v309
  %399 = vmatprep.subr.bf16.mxu0 0
  %400 = vmatpush1.bf16.msra.mxu0 %v310
  %401 = vmatprep.subr.bf16.mxu0 0
  %402 = vmatpush1.bf16.msra.mxu0 %v311
  %403 = vmatprep.subr.bf16.mxu0 0
  %404 = vmatpush1.bf16.msra.mxu0 %v312
  %405 = vmatprep.subr.bf16.mxu0 0
  %406 = vmatpush1.bf16.msra.mxu0 %v313
  %407 = vmatprep.subr.bf16.mxu0 0
  %408 = vmatpush1.bf16.msra.mxu0 %v314
  %409 = vmatprep.subr.bf16.mxu0 0
  %410 = vmatpush1.bf16.msra.mxu0 %v315
  %411 = vmatprep.mubr.bf16.mxu0 %v139
  %412 = vmatmul.mubr.bf16.gmra.mrb[0].mxu0 %v138
  %v413 = vpop.f32.mrb[0].mxu0
  %v414 = vadd.f32 %v104, %v413
  %v415 = vpop.f32.mrb[0].mxu0
  %v416 = vpop.f32.mrb[0].mxu0
  %v417 = vadd.f32 %v104, %v416
  %v418 = vpop.f32.mrb[0].mxu0
  %419 = vmatprep.mubr.bf16.mxu0 %v144
  %420 = vmatmul.mubr.bf16.gmra.mrb[0].mxu0 %v143
  %v421 = vpop.f32.mrb[0].mxu0
  %v422 = vadd.f32 %v104, %v421
  %v423 = vpop.f32.mrb[0].mxu0
  %v424 = vpop.f32.mrb[0].mxu0
  %v425 = vadd.f32 %v104, %v424
  %v426 = vpop.f32.mrb[0].mxu0
  %427 = vdwg.mxu0
  %428 = vmatprep.subr.bf16.mxu0 0
  %429 = vmatpush1.bf16.msra.mxu0 %v316
  %430 = vmatprep.subr.bf16.mxu0 0
  %431 = vmatpush1.bf16.msra.mxu0 %v317
  %432 = vmatprep.subr.bf16.mxu0 0
  %433 = vmatpush1.bf16.msra.mxu0 %v318
  %434 = vmatprep.subr.bf16.mxu0 0
  %435 = vmatpush1.bf16.msra.mxu0 %v319
  %436 = vmatprep.subr.bf16.mxu0 0
  %437 = vmatpush1.bf16.msra.mxu0 %v320
  %438 = vmatprep.subr.bf16.mxu0 0
  %439 = vmatpush1.bf16.msra.mxu0 %v321
  %440 = vmatprep.subr.bf16.mxu0 0
  %441 = vmatpush1.bf16.msra.mxu0 %v322
  %442 = vmatprep.subr.bf16.mxu0 0
  %443 = vmatpush1.bf16.msra.mxu0 %v323
  %444 = vmatprep.subr.bf16.mxu0 0
  %445 = vmatpush1.bf16.msra.mxu0 %v324
  %446 = vmatprep.subr.bf16.mxu0 0
  %447 = vmatpush1.bf16.msra.mxu0 %v325
  %448 = vmatprep.subr.bf16.mxu0 0
  %449 = vmatpush1.bf16.msra.mxu0 %v326
  %450 = vmatprep.subr.bf16.mxu0 0
  %451 = vmatpush1.bf16.msra.mxu0 %v327
  %452 = vmatprep.subr.bf16.mxu0 0
  %453 = vmatpush1.bf16.msra.mxu0 %v328
  %454 = vmatprep.subr.bf16.mxu0 0
  %455 = vmatpush1.bf16.msra.mxu0 %v329
  %456 = vmatprep.subr.bf16.mxu0 0
  %457 = vmatpush1.bf16.msra.mxu0 %v330
  %458 = vmatprep.subr.bf16.mxu0 0
  %459 = vmatpush1.bf16.msra.mxu0 %v331
  %460 = vmatprep.mubr.bf16.mxu0 %v141
  %461 = vmatmul.mubr.bf16.gmra.mrb[0].mxu0 %v140
  %v462 = vpop.f32.mrb[0].mxu0
  %v463 = vadd.f32 %v414, %v462
  %v464 = vpop.f32.mrb[0].mxu0
  %v465 = vpop.f32.mrb[0].mxu0
  %v466 = vadd.f32 %v417, %v465
  %v467 = vpop.f32.mrb[0].mxu0
  %468 = vmatprep.mubr.bf16.mxu0 %v146
  %469 = vmatmul.mubr.bf16.gmra.mrb[0].mxu0 %v145
  %v470 = vpop.f32.mrb[0].mxu0
  %v471 = vadd.f32 %v422, %v470
  %v472 = vpop.f32.mrb[0].mxu0
  %v473 = vpop.f32.mrb[0].mxu0
  %v474 = vadd.f32 %v425, %v473
  %v475 = vpop.f32.mrb[0].mxu0
  %476 = vdwg.mxu0
  %477 = vmatprep.subr.bf16.mxu0 0
  %478 = vmatpush1.bf16.msra.mxu0 %v332
  %479 = vmatprep.subr.bf16.mxu0 0
  %480 = vmatpush1.bf16.msra.mxu0 %v333
  %481 = vmatprep.subr.bf16.mxu0 0
  %482 = vmatpush1.bf16.msra.mxu0 %v334
  %483 = vmatprep.subr.bf16.mxu0 0
  %484 = vmatpush1.bf16.msra.mxu0 %v335
  %485 = vmatprep.subr.bf16.mxu0 0
  %486 = vmatpush1.bf16.msra.mxu0 0
  %487 = vmatprep.subr.bf16.mxu0 0
  %488 = vmatpush1.bf16.msra.mxu0 0
  %489 = vmatprep.subr.bf16.mxu0 0
  %490 = vmatpush1.bf16.msra.mxu0 0
  %491 = vmatprep.subr.bf16.mxu0 0
  %492 = vmatpush1.bf16.msra.mxu0 0
  %493 = vmatprep.subr.bf16.mxu0 0
  %494 = vmatpush1.bf16.msra.mxu0 0
  %495 = vmatprep.subr.bf16.mxu0 0
  %496 = vmatpush1.bf16.msra.mxu0 0
  %497 = vmatprep.subr.bf16.mxu0 0
  %498 = vmatpush1.bf16.msra.mxu0 0
  %499 = vmatprep.subr.bf16.mxu0 0
  %500 = vmatpush1.bf16.msra.mxu0 0
  %501 = vmatprep.subr.bf16.mxu0 0
  %502 = vmatpush1.bf16.msra.mxu0 0
  %503 = vmatprep.subr.bf16.mxu0 0
  %504 = vmatpush1.bf16.msra.mxu0 0
  %505 = vmatprep.subr.bf16.mxu0 0
  %506 = vmatpush1.bf16.msra.mxu0 0
  %507 = vmatprep.subr.bf16.mxu0 0
  %508 = vmatpush1.bf16.msra.mxu0 0
  %509 = vmatprep.mubr.bf16.mxu0 0
  %510 = vmatmul.mubr.bf16.gmra.mrb[0].mxu0 %v374
  %v511 = vpop.f32.mrb[0].mxu0
  %v512 = vadd.f32 %v463, %v511
  %v513 = vpop.f32.mrb[0].mxu0
  %v514 = vpop.f32.mrb[0].mxu0
  %v515 = vadd.f32 %v466, %v514
  %v516 = vpop.f32.mrb[0].mxu0
  %517 = vmatprep.mubr.bf16.mxu0 0
  %518 = vmatmul.mubr.bf16.gmra.mrb[0].mxu0 %v377
  %v519 = vpop.f32.mrb[0].mxu0
  %v520 = vadd.f32 %v471, %v519
  %v521 = vpop.f32.mrb[0].mxu0
  %v522 = vpop.f32.mrb[0].mxu0
  %v523 = vadd.f32 %v474, %v522
  %v524 = vpop.f32.mrb[0].mxu0
  %525 = vdwg.mxu0
  %v526 = vmax.f32 %v512, 0.0
  %v527 = vmax.f32 %v515, 0.0
  %v528 = vmax.f32 %v520, 0.0
  %v529 = vmax.f32 %v523, 0.0
  %v530 = vpack.c.bf16 %v527, %v526
  %v531 = vpack.c.bf16 %v529, %v528
  %v534 = vunpack.c.l.b16 %v530
  %v535 = vunpack.c.h.b16 %v530
  %v536 = vunpack.c.l.b16 %v531
  %v537 = vunpack.c.h.b16 %v531
  %v538 = vpack.c.b16 %v534, %v534
  %v539 = vpack.c.b16 %v535, %v535
  %v540 = vpack.c.b16 %v536, %v536
  %v541 = vpack.c.b16 %v537, %v537
  %546 = vst [vmem:[%s3] sm:$0xf] %v538
  %547 = vst [vmem:[%s3 + $0x4] sm:$0xf] %v539
  %548 = vst [vmem:[%s3 + $0x8] sm:$0xf] %v540
  %549 = vst [vmem:[%s3 + $0xc] sm:$0xf] %v541
  // Predicated region
  $region14: #{faster_rcnn_forward.13} parent=0 // pred_check
    _
  $region15: #{faster_rcnn_forward.13} parent=0 // pred_check_branch
    %551 = sbr.rel (0) target = $region17
  $region16: #{faster_rcnn_forward.13} parent=0 // pred_region
    _
  $region17: #{faster_rcnn_forward.13} parent=0 // pred_fallthru
    _
  // Predicated region
  $region18: #{faster_rcnn_forward.13} parent=0 // pred_check
    _
  $region19: #{faster_rcnn_forward.13} parent=0 // pred_check_branch
    %553 = sbr.rel (0) target = $region21
  $region20: #{faster_rcnn_forward.13} parent=0 // pred_region
    _
  $region21: #{faster_rcnn_forward.13} parent=0 // pred_fallthru
    _

// kernel: faster_rcnn_forward.14
$region0: #{faster_rcnn_forward.14}
  #allocation0 [shape = 'u32[]', space=smem, size = 0x4, offset = 0x4, fixed_abs, tag = 'smem constant byte address 0x4 - core index']
  #allocation1 [shape = 'u32[144,128]{1,0:T(1,128)}', space=vmem, size = 0x12000, scoped, tag = 'internal scratch']
  %s0 = inlined_call_operand.vmem [shape: bf16[32,32], index: 0, kind: input, shape index: {}]
  %s1 = inlined_call_operand.vmem [shape: bf16[32,128], index: 1, kind: input, shape index: {}]
  %s2 = inlined_call_operand.vmem [shape: f32[1,128], index: 2, kind: input, shape index: {}]
  %s3 = inlined_call_operand.vmem [shape: f32[32,128], index: 3, kind: output, shape index: {}]
  %s4 = sld [smem:[#allocation0]]
  $region22: #{faster_rcnn_forward.14} parent=0
    _
  %s6 = ssub.s32 1, %s4
  %s7 = scalar_select 0, %s6, %s4
  // Predicated region
  $region2: #{faster_rcnn_forward.14} parent=0 // pred_check
    _
  $region3: #{faster_rcnn_forward.14} parent=0 // pred_check_branch
    %9 = sbr.rel (0) target = $region5
  $region4: #{faster_rcnn_forward.14} parent=0 // pred_region
    _
  $region5: #{faster_rcnn_forward.14} parent=0 // pred_fallthru
    _
  // Predicated region
  $region6: #{faster_rcnn_forward.14} parent=0 // pred_check
    _
  $region7: #{faster_rcnn_forward.14} parent=0 // pred_check_branch
    %11 = sbr.rel (0) target = $region9
  $region8: #{faster_rcnn_forward.14} parent=0 // pred_region
    _
  $region9: #{faster_rcnn_forward.14} parent=0 // pred_fallthru
    _
  // Predicated region
  $region10: #{faster_rcnn_forward.14} parent=0 // pred_check
    _
  $region11: #{faster_rcnn_forward.14} parent=0 // pred_check_branch
    %13 = sbr.rel (0) target = $region13
  $region12: #{faster_rcnn_forward.14} parent=0 // pred_region
    _
  $region13: #{faster_rcnn_forward.14} parent=0 // pred_fallthru
    _
  %v15 = vld [vmem:[%s0] sm:$0xf]
  %v16 = vld [vmem:[%s0 + $0x4] sm:$0xf]
  %v17 = vld [vmem:[%s0 + $0x8] sm:$0xf]
  %v18 = vld [vmem:[%s0 + $0xc] sm:$0xf]
  %v19 = vld [vmem:[%s1] sm:$0xf]
  %v20 = vld [vmem:[%s1 + $0x4] sm:$0xf]
  %v21 = vld [vmem:[%s1 + $0x8] sm:$0xf]
  %v22 = vld [vmem:[%s1 + $0xc] sm:$0xf]
  %v23 = vld [vmem:[%s2] sm:$0x1]
  %v25 = vlaneseq
  %v26 = vshrl.u32 %v25, 7
  %v27 = vsub.s32 0, %v26
  %v28 = vrot.slane %v23, %v27
  %v34 = vunpack.c.l.b16 %v15
  %v35 = vunpack.c.l.b16 %v16
  %v36 = vunpack.c.l.b16 %v17
  %v37 = vunpack.c.l.b16 %v18
  %v38 = vpack.c.b16 %v35, %v34
  %v39 = vpack.c.b16 %v37, %v36
  %v44 = vunpack.c.l.b16 %v19
  %v45 = vunpack.c.l.b16 %v20
  %v46 = vunpack.c.l.b16 %v21
  %v47 = vunpack.c.l.b16 %v22
  %v48 = vpack.c.b16 %v45, %v44
  %v49 = vpack.c.b16 %v47, %v46
  %vm52 = vcmask 261120
  %v54 = vsel %vm52, %v38, 0
  %v57 = vsel %vm52, %v39, 0
  %59 = vmatprep.subr.bf16.mxu0 0
  %60 = vmatpush1.bf16.msra.mxu0 %v48
  %61 = vmatprep.subr.bf16.mxu0 0
  %62 = vmatpush1.bf16.msra.mxu0 %v49
  %63 = vmatprep.subr.bf16.mxu0 0
  %64 = vmatpush1.bf16.msra.mxu0 0
  %65 = vmatprep.subr.bf16.mxu0 0
  %66 = vmatpush1.bf16.msra.mxu0 0
  %67 = vmatprep.subr.bf16.mxu0 0
  %68 = vmatpush1.bf16.msra.mxu0 0
  %69 = vmatprep.subr.bf16.mxu0 0
  %70 = vmatpush1.bf16.msra.mxu0 0
  %71 = vmatprep.subr.bf16.mxu0 0
  %72 = vmatpush1.bf16.msra.mxu0 0
  %73 = vmatprep.subr.bf16.mxu0 0
  %74 = vmatpush1.bf16.msra.mxu0 0
  %75 = vmatprep.subr.bf16.mxu0 0
  %76 = vmatpush1.bf16.msra.mxu0 0
  %77 = vmatprep.subr.bf16.mxu0 0
  %78 = vmatpush1.bf16.msra.mxu0 0
  %79 = vmatprep.subr.bf16.mxu0 0
  %80 = vmatpush1.bf16.msra.mxu0 0
  %81 = vmatprep.subr.bf16.mxu0 0
  %82 = vmatpush1.bf16.msra.mxu0 0
  %83 = vmatprep.subr.bf16.mxu0 0
  %84 = vmatpush1.bf16.msra.mxu0 0
  %85 = vmatprep.subr.bf16.mxu0 0
  %86 = vmatpush1.bf16.msra.mxu0 0
  %87 = vmatprep.subr.bf16.mxu0 0
  %88 = vmatpush1.bf16.msra.mxu0 0
  %89 = vmatprep.subr.bf16.mxu0 0
  %90 = vmatpush1.bf16.msra.mxu0 0
  %91 = vmatprep.mubr.bf16.mxu0 0
  %92 = vmatmul.mubr.bf16.gmra.mrb[0].mxu0 %v54
  %v93 = vpop.f32.mrb[0].mxu0
  %v94 = vadd.f32 %v28, %v93
  %v95 = vpop.f32.mrb[0].mxu0
  %v96 = vpop.f32.mrb[0].mxu0
  %v97 = vadd.f32 %v28, %v96
  %v98 = vpop.f32.mrb[0].mxu0
  %99 = vmatprep.mubr.bf16.mxu0 0
  %100 = vmatmul.mubr.bf16.gmra.mrb[0].mxu0 %v57
  %v101 = vpop.f32.mrb[0].mxu0
  %v102 = vadd.f32 %v28, %v101
  %v103 = vpop.f32.mrb[0].mxu0
  %v104 = vpop.f32.mrb[0].mxu0
  %v105 = vadd.f32 %v28, %v104
  %v106 = vpop.f32.mrb[0].mxu0
  %107 = vdwg.mxu0
  %108 = vst [vmem:[%s3] sm:$0xff] %v94
  %109 = vst [vmem:[%s3 + $0x8] sm:$0xff] %v97
  %110 = vst [vmem:[%s3 + $0x10] sm:$0xff] %v102
  %111 = vst [vmem:[%s3 + $0x18] sm:$0xff] %v105
  // Predicated region
  $region14: #{faster_rcnn_forward.14} parent=0 // pred_check
    _
  $region15: #{faster_rcnn_forward.14} parent=0 // pred_check_branch
    %113 = sbr.rel (0) target = $region17
  $region16: #{faster_rcnn_forward.14} parent=0 // pred_region
    _
  $region17: #{faster_rcnn_forward.14} parent=0 // pred_fallthru
    _
  // Predicated region
  $region18: #{faster_rcnn_forward.14} parent=0 // pred_check
    _
  $region19: #{faster_rcnn_forward.14} parent=0 // pred_check_branch
    %115 = sbr.rel (0) target = $region21
  $region20: #{faster_rcnn_forward.14} parent=0 // pred_region
    _
  $region21: #{faster_rcnn_forward.14} parent=0 // pred_fallthru
    _

// kernel: faster_rcnn_forward.15
$region0: #{faster_rcnn_forward.15}
  #allocation0 [shape = 'u32[]', space=smem, size = 0x4, offset = 0x4, fixed_abs, tag = 'smem constant byte address 0x4 - core index']
  #allocation1 [shape = 'u32[144,128]{1,0:T(1,128)}', space=vmem, size = 0x12000, scoped, tag = 'internal scratch']
  #allocation2 [shape = 's32[1]{0}', space=sflag, size = 0x4, scoped, tag = 'scoped memory for faster_rcnn_forward.15']
  #allocation3 [shape = 'u8[512]{0}', space=smem, size = 0x200, scoped, tag = 'prefetched SMEM operand 0']
  %s0 = inlined_call_operand.vmem [shape: s32[32], index: 0, kind: input, shape index: {}]
  %s1 = inlined_call_operand.vmem [shape: bf16[32,196,16], index: 1, kind: input, shape index: {}]
  %s2 = inlined_call_operand.vmem [shape: bf16[2,16,64], index: 2, kind: input, shape index: {}]
  %s3 = inlined_call_operand.vmem [shape: bf16[32,196,64], index: 3, kind: output, shape index: {}]
  %s4 = sld [smem:[#allocation0]]
  $region41: #{faster_rcnn_forward.15} parent=0
    _
  %s6 = ssub.s32 1, %s4
  %s7 = scalar_select 0, %s6, %s4
  %s8 = sshll.u32 %s0, 4
  %s9 = int_to_ptr.vmem [resolvable:$true] %s8
  %11 = dma.vmem_to_smem %s9, 16, [#allocation3], [#allocation2]
  %12 = dma.done [#allocation2], 16
  %13 = sfence
  loop: start=0, step=1, limit=34
  $region2: #{faster_rcnn_forward.15} parent=0 // loop_pre_header
    _
  $region3: #{faster_rcnn_forward.15} parent=0 // loop_header
    %s15 = sphi 0, %s19
    %p16 = scmp.ge.s32.totalorder %s15, 34
    %s25 = sphi 0, %s27
    %s28 = sphi 0, %s25
    %s29 = sphi 0, %s28
    %s45 = sphi 0, %s29
    %s53 = sphi 0, %s55
    %s56 = sphi 0, %s53
    %s57 = sphi 0, %s56
    %s73 = sphi 0, %s57
    %s79 = sphi 0, %s81
    %s82 = sphi 0, %s79
    %s83 = sphi 0, %s82
    %s99 = sphi 0, %s83
  $region4: #{faster_rcnn_forward.15} parent=0 // loop_header_branch
    %18 = sbr.rel (%p16) target = $region8
  $region5: #{faster_rcnn_forward.15} parent=0 // loop_body
    %s20 = ssub.s32 %s15, 1
    %s21 = ssub.s32 %s15, 2
    %s22 = sadd.s32 %s15, 1
    %s23 = ssub.s32 %s15, %s22
    %p24 = scmp.eq.s32.totalorder %s23, 0
    %s26 = sadd.s32 %s25, 1
    %s27 = scalar_select %p24, %s25, %s26
    %p30 = pneg %p24
    %p31 = scmp.eq.s32.totalorder %s15, 31
    %p32 = por %p30, %p31
    %p33 = scmp.ne.s32.totalorder %s25, %s28
    %p34 = scmp.eq.s32.totalorder %s15, 0
    %p35 = por %p33, %p34
    %p36 = scmp.ne.s32.totalorder %s25, %s28
    %p37 = scmp.eq.s32.totalorder %s20, 31
    %p38 = por %p36, %p37
    %p39 = scmp.ne.s32.totalorder %s28, %s29
    %p40 = scmp.eq.s32.totalorder %s20, 0
    %p41 = por %p39, %p40
    %p42 = scmp.ne.s32.totalorder %s28, %s29
    %p43 = scmp.eq.s32.totalorder %s21, 31
    %p44 = por %p42, %p43
    %p46 = scmp.ne.s32.totalorder %s29, %s45
    %p47 = scmp.eq.s32.totalorder %s21, 0
    %p48 = por %p46, %p47
    %s49 = sld [smem:[#allocation3 + %s15]]
    %s50 = sld [smem:[#allocation3 + %s22]]
    %s51 = ssub.s32 %s49, %s50
    %p52 = scmp.eq.s32.totalorder %s51, 0
    %s54 = sadd.s32 %s53, 1
    %s55 = scalar_select %p52, %s53, %s54
    %p58 = pneg %p52
    %p59 = scmp.eq.s32.totalorder %s15, 31
    %p60 = por %p58, %p59
    %p61 = scmp.ne.s32.totalorder %s53, %s56
    %p62 = scmp.eq.s32.totalorder %s15, 0
    %p63 = por %p61, %p62
    %p64 = scmp.ne.s32.totalorder %s53, %s56
    %p65 = scmp.eq.s32.totalorder %s20, 31
    %p66 = por %p64, %p65
    %p67 = scmp.ne.s32.totalorder %s56, %s57
    %p68 = scmp.eq.s32.totalorder %s20, 0
    %p69 = por %p67, %p68
    %p70 = scmp.ne.s32.totalorder %s56, %s57
    %p71 = scmp.eq.s32.totalorder %s21, 31
    %p72 = por %p70, %p71
    %p74 = scmp.ne.s32.totalorder %s57, %s73
    %p75 = scmp.eq.s32.totalorder %s21, 0
    %p76 = por %p74, %p75
    %s77 = ssub.s32 %s15, %s22
    %p78 = scmp.eq.s32.totalorder %s77, 0
    %s80 = sadd.s32 %s79, 1
    %s81 = scalar_select %p78, %s79, %s80
    %p84 = pneg %p78
    %p85 = scmp.eq.s32.totalorder %s15, 31
    %p86 = por %p84, %p85
    %p87 = scmp.ne.s32.totalorder %s79, %s82
    %p88 = scmp.eq.s32.totalorder %s15, 0
    %p89 = por %p87, %p88
    %p90 = scmp.ne.s32.totalorder %s79, %s82
    %p91 = scmp.eq.s32.totalorder %s20, 31
    %p92 = por %p90, %p91
    %p93 = scmp.ne.s32.totalorder %s82, %s83
    %p94 = scmp.eq.s32.totalorder %s20, 0
    %p95 = por %p93, %p94
    %p96 = scmp.ne.s32.totalorder %s82, %s83
    %p97 = scmp.eq.s32.totalorder %s21, 31
    %p98 = por %p96, %p97
    %p100 = scmp.ne.s32.totalorder %s83, %s99
    %p101 = scmp.eq.s32.totalorder %s21, 0
    %p102 = por %p100, %p101
    %p103 = scmp.le.s32.totalorder 1, %s15
    %p104 = scmp.lt.s32.totalorder %s15, 33
    %p105 = pnand %p103, %p104
    %p106 = pneg %p105
    // Predicated region
    $region9: #{faster_rcnn_forward.15} parent=5 // pred_check
      _
    $region10: #{faster_rcnn_forward.15} parent=5 // pred_check_branch
      %108 = sbr.rel (%p105) target = $region12
    $region11: #{faster_rcnn_forward.15} parent=5 // pred_region
      %s109 = ssub.s32 %s15, 1
    $region12: #{faster_rcnn_forward.15} parent=5 // pred_fallthru
      _
    %p110 = scmp.lt.s32.totalorder %s15, 32
    // Predicated region
    $region13: #{faster_rcnn_forward.15} parent=5 // pred_check
      %p111 = pneg %p110
    $region14: #{faster_rcnn_forward.15} parent=5 // pred_check_branch
      %113 = sbr.rel (%p111) target = $region16
    $region15: #{faster_rcnn_forward.15} parent=5 // pred_region
      // Predicated region
      $region17: #{faster_rcnn_forward.15} parent=15 // pred_check
        %p114 = pneg %p35
      $region18: #{faster_rcnn_forward.15} parent=15 // pred_check_branch
        %116 = sbr.rel (%p114) target = $region20
      $region19: #{faster_rcnn_forward.15} parent=15 // pred_region
        %p117 = scmp.lt.s32.totalorder %s15, 31
        %s118 = scalar_select %p117, %s15, 31
        %s119 = smul.addr %s118, 25
        %s120 = smul.addr %s119, 4
        %s121 = scalar_lea.vmem %s1, %s120
      $region20: #{faster_rcnn_forward.15} parent=15 // pred_fallthru
        _
      // Predicated region
      $region21: #{faster_rcnn_forward.15} parent=15 // pred_check
        %p122 = pneg %p63
      $region22: #{faster_rcnn_forward.15} parent=15 // pred_check_branch
        %124 = sbr.rel (%p122) target = $region24
      $region23: #{faster_rcnn_forward.15} parent=15 // pred_region
        %s125 = sld [smem:[#allocation3 + %s15]]
        %p126 = scmp.lt.s32.totalorder %s125, 1
        %s127 = scalar_select %p126, %s125, 1
        %s128 = smul.addr %s127, 2
        %s129 = smul.addr %s128, 4
        %s130 = scalar_lea.vmem %s2, %s129
        %s131 = sld [smem:[#allocation3 + %s15]]
      $region24: #{faster_rcnn_forward.15} parent=15 // pred_fallthru
        _
    $region16: #{faster_rcnn_forward.15} parent=5 // pred_fallthru
      _
    %p132 = scmp.le.s32.totalorder 1, %s15
    %p133 = scmp.lt.s32.totalorder %s15, 33
    %p134 = pnand %p132, %p133
    %p135 = pneg %p134
    // Predicated region
    $region25: #{faster_rcnn_forward.15} parent=5 // pred_check
      _
    $region26: #{faster_rcnn_forward.15} parent=5 // pred_check_branch
      %137 = sbr.rel (%p134) target = $region28
    $region27: #{faster_rcnn_forward.15} parent=5 // pred_region
      %s138 = ssub.s32 %s15, 1
      %p139 = scmp.lt.s32.totalorder %s20, 31
      %s140 = scalar_select %p139, %s20, 31
      %s141 = smul.addr %s140, 25
      %s142 = smul.addr %s141, 4
      %s143 = scalar_lea.vmem %s1, %s142
      %p144 = pneg %p41
      %p145 = pneg %p38
      %s146 = sld [smem:[#allocation3 + %s20]]
      %p147 = scmp.lt.s32.totalorder %s146, 1
      %s148 = scalar_select %p147, %s146, 1
      %s149 = smul.addr %s148, 2
      %s150 = smul.addr %s149, 4
      %s151 = scalar_lea.vmem %s2, %s150
      %p152 = pneg %p69
      %p153 = pneg %p66
      %p154 = pneg %p95
      %p155 = pneg %p92
      %p156 = scmp.lt.s32.totalorder %s20, 31
      %s157 = scalar_select %p156, %s20, 31
      %s158 = smul.addr %s157, 25
      %s159 = smul.addr %s158, 4
      %s160 = scalar_lea.vmem %s3, %s159
      %p161 = scmp.lt.s32.totalorder %s20, 31
      %s162 = scalar_select %p161, %s20, 31
      %s163 = smul.addr %s162, 25
      %s164 = smul.addr %s163, 4
      %s165 = scalar_lea.vmem %s1, %s164
      %s166 = sld [smem:[#allocation3 + %s20]]
      %p167 = scmp.lt.s32.totalorder %s166, 1
      %s168 = scalar_select %p167, %s166, 1
      %s169 = smul.addr %s168, 2
      %s170 = smul.addr %s169, 4
      %s171 = scalar_lea.vmem %s2, %s170
      %s172 = sld [smem:[#allocation3 + %s20]]
      %p173 = scmp.lt.s32.totalorder %s20, 31
      %s174 = scalar_select %p173, %s20, 31
      %s175 = smul.addr %s174, 25
      %s176 = smul.addr %s175, 4
      %s177 = scalar_lea.vmem %s3, %s176
      %v179 = vld [vmem:[%s165] sm:$0xf]
      %v180 = vld [vmem:[%s165 + $0x4] sm:$0xf]
      %v181 = vld [vmem:[%s165 + $0x8] sm:$0xf]
      %v182 = vld [vmem:[%s165 + $0xc] sm:$0xf]
      %v183 = vld [vmem:[%s165 + $0x10] sm:$0xf]
      %v184 = vld [vmem:[%s165 + $0x14] sm:$0xf]
      %v185 = vld [vmem:[%s165 + $0x18] sm:$0xf]
      %v186 = vld [vmem:[%s165 + $0x1c] sm:$0xf]
      %v187 = vld [vmem:[%s165 + $0x20] sm:$0xf]
      %v188 = vld [vmem:[%s165 + $0x24] sm:$0xf]
      %v189 = vld [vmem:[%s165 + $0x28] sm:$0xf]
      %v190 = vld [vmem:[%s165 + $0x2c] sm:$0xf]
      %v191 = vld [vmem:[%s165 + $0x30] sm:$0xf]
      %v192 = vld [vmem:[%s165 + $0x34] sm:$0xf]
      %v193 = vld [vmem:[%s165 + $0x38] sm:$0xf]
      %v194 = vld [vmem:[%s165 + $0x3c] sm:$0xf]
      %v195 = vld [vmem:[%s165 + $0x40] sm:$0xf]
      %v196 = vld [vmem:[%s165 + $0x44] sm:$0xf]
      %v197 = vld [vmem:[%s165 + $0x48] sm:$0xf]
      %v198 = vld [vmem:[%s165 + $0x4c] sm:$0xf]
      %v199 = vld [vmem:[%s165 + $0x50] sm:$0xf]
      %v200 = vld [vmem:[%s165 + $0x54] sm:$0xf]
      %v201 = vld [vmem:[%s165 + $0x58] sm:$0xf]
      %v202 = vld [vmem:[%s165 + $0x5c] sm:$0xf]
      %v203 = vld [vmem:[%s165 + $0x60] sm:$0x3]
      %v204 = vld [vmem:[%s171] sm:$0xf]
      %v205 = vld [vmem:[%s171 + $0x4] sm:$0xf]
      %v231 = vunpack.c.l.b16 %v179
      %v232 = vunpack.c.l.b16 %v180
      %v233 = vunpack.c.l.b16 %v181
      %v234 = vunpack.c.l.b16 %v182
      %v235 = vunpack.c.l.b16 %v183
      %v236 = vunpack.c.l.b16 %v184
      %v237 = vunpack.c.l.b16 %v185
      %v238 = vunpack.c.l.b16 %v186
      %v239 = vunpack.c.l.b16 %v187
      %v240 = vunpack.c.l.b16 %v188
      %v241 = vunpack.c.l.b16 %v189
      %v242 = vunpack.c.l.b16 %v190
      %v243 = vunpack.c.l.b16 %v191
      %v244 = vunpack.c.l.b16 %v192
      %v245 = vunpack.c.l.b16 %v193
      %v246 = vunpack.c.l.b16 %v194
      %v247 = vunpack.c.l.b16 %v195
      %v248 = vunpack.c.l.b16 %v196
      %v249 = vunpack.c.l.b16 %v197
      %v250 = vunpack.c.l.b16 %v198
      %v251 = vunpack.c.l.b16 %v199
      %v252 = vunpack.c.l.b16 %v200
      %v253 = vunpack.c.l.b16 %v201
      %v254 = vunpack.c.l.b16 %v202
      %v255 = vunpack.c.l.b16 %v203
      %v256 = vpack.c.b16 %v232, %v231
      %v257 = vpack.c.b16 %v234, %v233
      %v258 = vpack.c.b16 %v236, %v235
      %v259 = vpack.c.b16 %v238, %v237
      %v260 = vpack.c.b16 %v240, %v239
      %v261 = vpack.c.b16 %v242, %v241
      %v262 = vpack.c.b16 %v244, %v243
      %v263 = vpack.c.b16 %v246, %v245
      %v264 = vpack.c.b16 %v248, %v247
      %v265 = vpack.c.b16 %v250, %v249
      %v266 = vpack.c.b16 %v252, %v251
      %v267 = vpack.c.b16 %v254, %v253
      %v268 = vpack.c.b16 %v255, %v255
      %v271 = vunpack.c.l.b16 %v204
      %v272 = vunpack.c.l.b16 %v205
      %v273 = vpack.c.b16 %v272, %v271
      %vm275 = vcmask 130048
      %v277 = vsel %vm275, %v256, 0
      %v280 = vsel %vm275, %v257, 0
      %v283 = vsel %vm275, %v258, 0
      %v286 = vsel %vm275, %v259, 0
      %v289 = vsel %vm275, %v260, 0
      %v292 = vsel %vm275, %v261, 0
      %v295 = vsel %vm275, %v262, 0
      %v298 = vsel %vm275, %v263, 0
      %v301 = vsel %vm275, %v264, 0
      %v304 = vsel %vm275, %v265, 0
      %v307 = vsel %vm275, %v266, 0
      %v310 = vsel %vm275, %v267, 0
      %v313 = vsel %vm275, %v268, 0
      %315 = vmatprep.subr.bf16.mxu0 0
      %316 = vmatpush1.bf16.msra.mxu0 %v273
      %317 = vmatprep.subr.bf16.mxu0 0
      %318 = vmatpush1.bf16.msra.mxu0 0
      %319 = vmatprep.subr.bf16.mxu0 0
      %320 = vmatpush1.bf16.msra.mxu0 0
      %321 = vmatprep.subr.bf16.mxu0 0
      %322 = vmatpush1.bf16.msra.mxu0 0
      %323 = vmatprep.subr.bf16.mxu0 0
      %324 = vmatpush1.bf16.msra.mxu0 0
      %325 = vmatprep.subr.bf16.mxu0 0
      %326 = vmatpush1.bf16.msra.mxu0 0
      %327 = vmatprep.subr.bf16.mxu0 0
      %328 = vmatpush1.bf16.msra.mxu0 0
      %329 = vmatprep.subr.bf16.mxu0 0
      %330 = vmatpush1.bf16.msra.mxu0 0
      %331 = vmatprep.subr.bf16.mxu0 0
      %332 = vmatpush1.bf16.msra.mxu0 0
      %333 = vmatprep.subr.bf16.mxu0 0
      %334 = vmatpush1.bf16.msra.mxu0 0
      %335 = vmatprep.subr.bf16.mxu0 0
      %336 = vmatpush1.bf16.msra.mxu0 0
      %337 = vmatprep.subr.bf16.mxu0 0
      %338 = vmatpush1.bf16.msra.mxu0 0
      %339 = vmatprep.subr.bf16.mxu0 0
      %340 = vmatpush1.bf16.msra.mxu0 0
      %341 = vmatprep.subr.bf16.mxu0 0
      %342 = vmatpush1.bf16.msra.mxu0 0
      %343 = vmatprep.subr.bf16.mxu0 0
      %344 = vmatpush1.bf16.msra.mxu0 0
      %345 = vmatprep.subr.bf16.mxu0 0
      %346 = vmatpush1.bf16.msra.mxu0 0
      %347 = vmatprep.mubr.bf16.mxu0 0
      %348 = vmatmul.mubr.bf16.gmra.mrb[0].mxu0 %v277
      %v349 = vpop.f32.mrb[0].mxu0
      %v350 = vadd.f32 0.0, %v349
      %v351 = vpop.f32.mrb[0].mxu0
      %v352 = vpop.f32.mrb[0].mxu0
      %v353 = vadd.f32 0.0, %v352
      %v354 = vpop.f32.mrb[0].mxu0
      %355 = vmatprep.mubr.bf16.mxu0 0
      %356 = vmatmul.mubr.bf16.gmra.mrb[0].mxu0 %v280
      %v357 = vpop.f32.mrb[0].mxu0
      %v358 = vadd.f32 0.0, %v357
      %v359 = vpop.f32.mrb[0].mxu0
      %v360 = vpop.f32.mrb[0].mxu0
      %v361 = vadd.f32 0.0, %v360
      %v362 = vpop.f32.mrb[0].mxu0
      %363 = vmatprep.mubr.bf16.mxu0 0
      %364 = vmatmul.mubr.bf16.gmra.mrb[0].mxu0 %v283
      %v365 = vpop.f32.mrb[0].mxu0
      %v366 = vadd.f32 0.0, %v365
      %v367 = vpop.f32.mrb[0].mxu0
      %v368 = vpop.f32.mrb[0].mxu0
      %v369 = vadd.f32 0.0, %v368
      %v370 = vpop.f32.mrb[0].mxu0
      %371 = vmatprep.mubr.bf16.mxu0 0
      %372 = vmatmul.mubr.bf16.gmra.mrb[0].mxu0 %v286
      %v373 = vpop.f32.mrb[0].mxu0
      %v374 = vadd.f32 0.0, %v373
      %v375 = vpop.f32.mrb[0].mxu0
      %v376 = vpop.f32.mrb[0].mxu0
      %v377 = vadd.f32 0.0, %v376
      %v378 = vpop.f32.mrb[0].mxu0
      %379 = vmatprep.mubr.bf16.mxu0 0
      %380 = vmatmul.mubr.bf16.gmra.mrb[0].mxu0 %v289
      %v381 = vpop.f32.mrb[0].mxu0
      %v382 = vadd.f32 0.0, %v381
      %v383 = vpop.f32.mrb[0].mxu0
      %v384 = vpop.f32.mrb[0].mxu0
      %v385 = vadd.f32 0.0, %v384
      %v386 = vpop.f32.mrb[0].mxu0
      %387 = vmatprep.mubr.bf16.mxu0 0
      %388 = vmatmul.mubr.bf16.gmra.mrb[0].mxu0 %v292
      %v389 = vpop.f32.mrb[0].mxu0
      %v390 = vadd.f32 0.0, %v389
      %v391 = vpop.f32.mrb[0].mxu0
      %v392 = vpop.f32.mrb[0].mxu0
      %v393 = vadd.f32 0.0, %v392
      %v394 = vpop.f32.mrb[0].mxu0
      %395 = vmatprep.mubr.bf16.mxu0 0
      %396 = vmatmul.mubr.bf16.gmra.mrb[0].mxu0 %v295
      %v397 = vpop.f32.mrb[0].mxu0
      %v398 = vadd.f32 0.0, %v397
      %v399 = vpop.f32.mrb[0].mxu0
      %v400 = vpop.f32.mrb[0].mxu0
      %v401 = vadd.f32 0.0, %v400
      %v402 = vpop.f32.mrb[0].mxu0
      %403 = vmatprep.mubr.bf16.mxu0 0
      %404 = vmatmul.mubr.bf16.gmra.mrb[0].mxu0 %v298
      %v405 = vpop.f32.mrb[0].mxu0
      %v406 = vadd.f32 0.0, %v405
      %v407 = vpop.f32.mrb[0].mxu0
      %v408 = vpop.f32.mrb[0].mxu0
      %v409 = vadd.f32 0.0, %v408
      %v410 = vpop.f32.mrb[0].mxu0
      %411 = vmatprep.mubr.bf16.mxu0 0
      %412 = vmatmul.mubr.bf16.gmra.mrb[0].mxu0 %v301
      %v413 = vpop.f32.mrb[0].mxu0
      %v414 = vadd.f32 0.0, %v413
      %v415 = vpop.f32.mrb[0].mxu0
      %v416 = vpop.f32.mrb[0].mxu0
      %v417 = vadd.f32 0.0, %v416
      %v418 = vpop.f32.mrb[0].mxu0
      %419 = vmatprep.mubr.bf16.mxu0 0
      %420 = vmatmul.mubr.bf16.gmra.mrb[0].mxu0 %v304
      %v421 = vpop.f32.mrb[0].mxu0
      %v422 = vadd.f32 0.0, %v421
      %v423 = vpop.f32.mrb[0].mxu0
      %v424 = vpop.f32.mrb[0].mxu0
      %v425 = vadd.f32 0.0, %v424
      %v426 = vpop.f32.mrb[0].mxu0
      %427 = vmatprep.mubr.bf16.mxu0 0
      %428 = vmatmul.mubr.bf16.gmra.mrb[0].mxu0 %v307
      %v429 = vpop.f32.mrb[0].mxu0
      %v430 = vadd.f32 0.0, %v429
      %v431 = vpop.f32.mrb[0].mxu0
      %v432 = vpop.f32.mrb[0].mxu0
      %v433 = vadd.f32 0.0, %v432
      %v434 = vpop.f32.mrb[0].mxu0
      %435 = vmatprep.mubr.bf16.mxu0 0
      %436 = vmatmul.mubr.bf16.gmra.mrb[0].mxu0 %v310
      %v437 = vpop.f32.mrb[0].mxu0
      %v438 = vadd.f32 0.0, %v437
      %v439 = vpop.f32.mrb[0].mxu0
      %v440 = vpop.f32.mrb[0].mxu0
      %v441 = vadd.f32 0.0, %v440
      %v442 = vpop.f32.mrb[0].mxu0
      %443 = vmatprep.mubr.bf16.mxu0 0
      %444 = vmatmul.mubr.bf16.gmra.mrb[0].mxu0 %v313
      %v445 = vpop.f32.mrb[0].mxu0
      %v446 = vadd.f32 0.0, %v445
      %v447 = vpop.f32.mrb[0].mxu0
      %v448 = vpop.f32.mrb[0].mxu0
      %v449 = vpop.f32.mrb[0].mxu0
      %450 = vdwg.mxu0
      %v451 = vpack.c.bf16 %v353, %v350
      %v452 = vpack.c.bf16 %v361, %v358
      %v453 = vpack.c.bf16 %v369, %v366
      %v454 = vpack.c.bf16 %v377, %v374
      %v455 = vpack.c.bf16 %v385, %v382
      %v456 = vpack.c.bf16 %v393, %v390
      %v457 = vpack.c.bf16 %v401, %v398
      %v458 = vpack.c.bf16 %v409, %v406
      %v459 = vpack.c.bf16 %v417, %v414
      %v460 = vpack.c.bf16 %v425, %v422
      %v461 = vpack.c.bf16 %v433, %v430
      %v462 = vpack.c.bf16 %v441, %v438
      %v463 = vpack.c.bf16 %v446, %v446
      %v477 = vunpack.c.l.b16 %v451
      %v478 = vunpack.c.h.b16 %v451
      %v479 = vunpack.c.l.b16 %v452
      %v480 = vunpack.c.h.b16 %v452
      %v481 = vunpack.c.l.b16 %v453
      %v482 = vunpack.c.h.b16 %v453
      %v483 = vunpack.c.l.b16 %v454
      %v484 = vunpack.c.h.b16 %v454
      %v485 = vunpack.c.l.b16 %v455
      %v486 = vunpack.c.h.b16 %v455
      %v487 = vunpack.c.l.b16 %v456
      %v488 = vunpack.c.h.b16 %v456
      %v489 = vunpack.c.l.b16 %v457
      %v490 = vunpack.c.h.b16 %v457
      %v491 = vunpack.c.l.b16 %v458
      %v492 = vunpack.c.h.b16 %v458
      %v493 = vunpack.c.l.b16 %v459
      %v494 = vunpack.c.h.b16 %v459
      %v495 = vunpack.c.l.b16 %v460
      %v496 = vunpack.c.h.b16 %v460
      %v497 = vunpack.c.l.b16 %v461
      %v498 = vunpack.c.h.b16 %v461
      %v499 = vunpack.c.l.b16 %v462
      %v500 = vunpack.c.h.b16 %v462
      %v501 = vunpack.c.l.b16 %v463
      %v502 = vpack.c.b16 %v477, %v477
      %v503 = vpack.c.b16 %v478, %v478
      %v504 = vpack.c.b16 %v479, %v479
      %v505 = vpack.c.b16 %v480, %v480
      %v506 = vpack.c.b16 %v481, %v481
      %v507 = vpack.c.b16 %v482, %v482
      %v508 = vpack.c.b16 %v483, %v483
      %v509 = vpack.c.b16 %v484, %v484
      %v510 = vpack.c.b16 %v485, %v485
      %v511 = vpack.c.b16 %v486, %v486
      %v512 = vpack.c.b16 %v487, %v487
      %v513 = vpack.c.b16 %v488, %v488
      %v514 = vpack.c.b16 %v489, %v489
      %v515 = vpack.c.b16 %v490, %v490
      %v516 = vpack.c.b16 %v491, %v491
      %v517 = vpack.c.b16 %v492, %v492
      %v518 = vpack.c.b16 %v493, %v493
      %v519 = vpack.c.b16 %v494, %v494
      %v520 = vpack.c.b16 %v495, %v495
      %v521 = vpack.c.b16 %v496, %v496
      %v522 = vpack.c.b16 %v497, %v497
      %v523 = vpack.c.b16 %v498, %v498
      %v524 = vpack.c.b16 %v499, %v499
      %v525 = vpack.c.b16 %v500, %v500
      %v526 = vpack.c.b16 %v501, %v501
      %vm552 = vcmask 519168
      %553 = vst.msk [vmem:[%s177] sm:$0xf] %vm552, %v502
      %554 = vst.msk [vmem:[%s177 + $0x4] sm:$0xf] %vm552, %v503
      %555 = vst.msk [vmem:[%s177 + $0x8] sm:$0xf] %vm552, %v504
      %556 = vst.msk [vmem:[%s177 + $0xc] sm:$0xf] %vm552, %v505
      %557 = vst.msk [vmem:[%s177 + $0x10] sm:$0xf] %vm552, %v506
      %558 = vst.msk [vmem:[%s177 + $0x14] sm:$0xf] %vm552, %v507
      %559 = vst.msk [vmem:[%s177 + $0x18] sm:$0xf] %vm552, %v508
      %560 = vst.msk [vmem:[%s177 + $0x1c] sm:$0xf] %vm552, %v509
      %561 = vst.msk [vmem:[%s177 + $0x20] sm:$0xf] %vm552, %v510
      %562 = vst.msk [vmem:[%s177 + $0x24] sm:$0xf] %vm552, %v511
      %563 = vst.msk [vmem:[%s177 + $0x28] sm:$0xf] %vm552, %v512
      %564 = vst.msk [vmem:[%s177 + $0x2c] sm:$0xf] %vm552, %v513
      %565 = vst.msk [vmem:[%s177 + $0x30] sm:$0xf] %vm552, %v514
      %566 = vst.msk [vmem:[%s177 + $0x34] sm:$0xf] %vm552, %v515
      %567 = vst.msk [vmem:[%s177 + $0x38] sm:$0xf] %vm552, %v516
      %568 = vst.msk [vmem:[%s177 + $0x3c] sm:$0xf] %vm552, %v517
      %569 = vst.msk [vmem:[%s177 + $0x40] sm:$0xf] %vm552, %v518
      %570 = vst.msk [vmem:[%s177 + $0x44] sm:$0xf] %vm552, %v519
      %571 = vst.msk [vmem:[%s177 + $0x48] sm:$0xf] %vm552, %v520
      %572 = vst.msk [vmem:[%s177 + $0x4c] sm:$0xf] %vm552, %v521
      %573 = vst.msk [vmem:[%s177 + $0x50] sm:$0xf] %vm552, %v522
      %574 = vst.msk [vmem:[%s177 + $0x54] sm:$0xf] %vm552, %v523
      %575 = vst.msk [vmem:[%s177 + $0x58] sm:$0xf] %vm552, %v524
      %576 = vst.msk [vmem:[%s177 + $0x5c] sm:$0xf] %vm552, %v525
      %vm577 = vcmask 517120
      %578 = vst.msk [vmem:[%s177 + $0x60] sm:$0x3] %vm577, %v526
      %p579 = scmp.lt.s32.totalorder %s20, 31
      %s580 = scalar_select %p579, %s20, 31
      %s581 = smul.addr %s580, 25
      %s582 = smul.addr %s581, 4
      %s583 = scalar_lea.vmem %s3, %s582
      // Predicated region
      $region29: #{faster_rcnn_forward.15} parent=27 // pred_check
        %p584 = pneg %p92
      $region30: #{faster_rcnn_forward.15} parent=27 // pred_check_branch
        %586 = sbr.rel (%p584) target = $region32
      $region31: #{faster_rcnn_forward.15} parent=27 // pred_region
        _
      $region32: #{faster_rcnn_forward.15} parent=27 // pred_fallthru
        _
    $region28: #{faster_rcnn_forward.15} parent=5 // pred_fallthru
      _
    %p587 = scmp.le.s32.totalorder 2, %s15
    // Predicated region
    $region33: #{faster_rcnn_forward.15} parent=5 // pred_check
      %p588 = pneg %p587
    $region34: #{faster_rcnn_forward.15} parent=5 // pred_check_branch
      %590 = sbr.rel (%p588) target = $region36
    $region35: #{faster_rcnn_forward.15} parent=5 // pred_region
      %s591 = ssub.s32 %s15, 2
      // Predicated region
      $region37: #{faster_rcnn_forward.15} parent=35 // pred_check
        %p592 = pneg %p98
      $region38: #{faster_rcnn_forward.15} parent=35 // pred_check_branch
        %594 = sbr.rel (%p592) target = $region40
      $region39: #{faster_rcnn_forward.15} parent=35 // pred_region
        %p595 = scmp.lt.s32.totalorder %s21, 31
        %s596 = scalar_select %p595, %s21, 31
        %s597 = smul.addr %s596, 25
        %s598 = smul.addr %s597, 4
        %s599 = scalar_lea.vmem %s3, %s598
      $region40: #{faster_rcnn_forward.15} parent=35 // pred_fallthru
        _
    $region36: #{faster_rcnn_forward.15} parent=5 // pred_fallthru
      _
  $region6: #{faster_rcnn_forward.15} parent=0 // loop_footer
    %s19 = sadd.s32 1, %s15
  $region7: #{faster_rcnn_forward.15} parent=0 // loop_footer_branch
    %14 = sbr.rel target = $region3
  $region8: #{faster_rcnn_forward.15} parent=0 // loop_exit
    _

// kernel: faster_rcnn_forward.16
$region0: #{faster_rcnn_forward.16}
  #allocation0 [shape = 'u32[]', space=smem, size = 0x4, offset = 0x4, fixed_abs, tag = 'smem constant byte address 0x4 - core index']
  #allocation1 [shape = 'u32[144,128]{1,0:T(1,128)}', space=vmem, size = 0x12000, scoped, tag = 'internal scratch']
  %s0 = inlined_call_operand.vmem [shape: bf16[1568,576], index: 0, kind: input, shape index: {}]
  %s1 = inlined_call_operand.vmem [shape: bf16[576,128], index: 1, kind: input, shape index: {}]
  %s2 = inlined_call_operand.vmem [shape: f32[1,128], index: 2, kind: input, shape index: {}]
  %s3 = inlined_call_operand.vmem [shape: bf16[1568,128], index: 3, kind: output, shape index: {}]
  %s4 = sld [smem:[#allocation0]]
  $region45: #{faster_rcnn_forward.16} parent=0
    _
  %s6 = ssub.s32 1, %s4
  %s7 = scalar_select 0, %s6, %s4
  loop: start=0, step=1, limit=6
  $region2: #{faster_rcnn_forward.16} parent=0 // loop_pre_header
    _
  $region3: #{faster_rcnn_forward.16} parent=0 // loop_header
    %s9 = sphi 0, %s13
    %p10 = scmp.ge.s32.totalorder %s9, 6
    %s19 = sphi 0, %s21
    %s22 = sphi 0, %s19
    %s23 = sphi 0, %s22
    %s39 = sphi 0, %s23
    %s43 = sphi 0, %s43
    %s45 = sphi 0, %s43
    %s46 = sphi 0, %s45
    %s60 = sphi 0, %s46
    %s64 = sphi 0, %s64
    %s66 = sphi 0, %s64
    %s67 = sphi 0, %s66
    %s81 = sphi 0, %s67
    %s87 = sphi 0, %s89
    %s90 = sphi 0, %s87
    %s91 = sphi 0, %s90
    %s107 = sphi 0, %s91
  $region4: #{faster_rcnn_forward.16} parent=0 // loop_header_branch
    %12 = sbr.rel (%p10) target = $region8
  $region5: #{faster_rcnn_forward.16} parent=0 // loop_body
    %s14 = ssub.s32 %s9, 1
    %s15 = ssub.s32 %s9, 2
    %s16 = sadd.s32 %s9, 1
    %s17 = ssub.s32 %s9, %s16
    %p18 = scmp.eq.s32.totalorder %s17, 0
    %s20 = sadd.s32 %s19, 1
    %s21 = scalar_select %p18, %s19, %s20
    %p24 = pneg %p18
    %p25 = scmp.eq.s32.totalorder %s9, 3
    %p26 = por %p24, %p25
    %p27 = scmp.ne.s32.totalorder %s19, %s22
    %p28 = scmp.eq.s32.totalorder %s9, 0
    %p29 = por %p27, %p28
    %p30 = scmp.ne.s32.totalorder %s19, %s22
    %p31 = scmp.eq.s32.totalorder %s14, 3
    %p32 = por %p30, %p31
    %p33 = scmp.ne.s32.totalorder %s22, %s23
    %p34 = scmp.eq.s32.totalorder %s14, 0
    %p35 = por %p33, %p34
    %p36 = scmp.ne.s32.totalorder %s22, %s23
    %p37 = scmp.eq.s32.totalorder %s15, 3
    %p38 = por %p36, %p37
    %p40 = scmp.ne.s32.totalorder %s23, %s39
    %p41 = scmp.eq.s32.totalorder %s15, 0
    %p42 = por %p40, %p41
    %s44 = sadd.s32 %s43, 1
    %p47 = scmp.eq.s32.totalorder %s9, 3
    %p48 = scmp.ne.s32.totalorder %s43, %s45
    %p49 = scmp.eq.s32.totalorder %s9, 0
    %p50 = por %p48, %p49
    %p51 = scmp.ne.s32.totalorder %s43, %s45
    %p52 = scmp.eq.s32.totalorder %s14, 3
    %p53 = por %p51, %p52
    %p54 = scmp.ne.s32.totalorder %s45, %s46
    %p55 = scmp.eq.s32.totalorder %s14, 0
    %p56 = por %p54, %p55
    %p57 = scmp.ne.s32.totalorder %s45, %s46
    %p58 = scmp.eq.s32.totalorder %s15, 3
    %p59 = por %p57, %p58
    %p61 = scmp.ne.s32.totalorder %s46, %s60
    %p62 = scmp.eq.s32.totalorder %s15, 0
    %p63 = por %p61, %p62
    %s65 = sadd.s32 %s64, 1
    %p68 = scmp.eq.s32.totalorder %s9, 3
    %p69 = scmp.ne.s32.totalorder %s64, %s66
    %p70 = scmp.eq.s32.totalorder %s9, 0
    %p71 = por %p69, %p70
    %p72 = scmp.ne.s32.totalorder %s64, %s66
    %p73 = scmp.eq.s32.totalorder %s14, 3
    %p74 = por %p72, %p73
    %p75 = scmp.ne.s32.totalorder %s66, %s67
    %p76 = scmp.eq.s32.totalorder %s14, 0
    %p77 = por %p75, %p76
    %p78 = scmp.ne.s32.totalorder %s66, %s67
    %p79 = scmp.eq.s32.totalorder %s15, 3
    %p80 = por %p78, %p79
    %p82 = scmp.ne.s32.totalorder %s67, %s81
    %p83 = scmp.eq.s32.totalorder %s15, 0
    %p84 = por %p82, %p83
    %s85 = ssub.s32 %s9, %s16
    %p86 = scmp.eq.s32.totalorder %s85, 0
    %s88 = sadd.s32 %s87, 1
    %s89 = scalar_select %p86, %s87, %s88
    %p92 = pneg %p86
    %p93 = scmp.eq.s32.totalorder %s9, 3
    %p94 = por %p92, %p93
    %p95 = scmp.ne.s32.totalorder %s87, %s90
    %p96 = scmp.eq.s32.totalorder %s9, 0
    %p97 = por %p95, %p96
    %p98 = scmp.ne.s32.totalorder %s87, %s90
    %p99 = scmp.eq.s32.totalorder %s14, 3
    %p100 = por %p98, %p99
    %p101 = scmp.ne.s32.totalorder %s90, %s91
    %p102 = scmp.eq.s32.totalorder %s14, 0
    %p103 = por %p101, %p102
    %p104 = scmp.ne.s32.totalorder %s90, %s91
    %p105 = scmp.eq.s32.totalorder %s15, 3
    %p106 = por %p104, %p105
    %p108 = scmp.ne.s32.totalorder %s91, %s107
    %p109 = scmp.eq.s32.totalorder %s15, 0
    %p110 = por %p108, %p109
    %p111 = scmp.le.s32.totalorder 1, %s9
    %p112 = scmp.lt.s32.totalorder %s9, 5
    %p113 = pnand %p111, %p112
    %p114 = pneg %p113
    // Predicated region
    $region9: #{faster_rcnn_forward.16} parent=5 // pred_check
      _
    $region10: #{faster_rcnn_forward.16} parent=5 // pred_check_branch
      %116 = sbr.rel (%p113) target = $region12
    $region11: #{faster_rcnn_forward.16} parent=5 // pred_region
      %s117 = ssub.s32 %s9, 1
      // Predicated region
      $region13: #{faster_rcnn_forward.16} parent=11 // pred_check
        %p118 = pneg %p56
      $region14: #{faster_rcnn_forward.16} parent=11 // pred_check_branch
        %120 = sbr.rel (%p118) target = $region16
      $region15: #{faster_rcnn_forward.16} parent=11 // pred_region
        _
      $region16: #{faster_rcnn_forward.16} parent=11 // pred_fallthru
        _
      // Predicated region
      $region17: #{faster_rcnn_forward.16} parent=11 // pred_check
        %p121 = pneg %p77
      $region18: #{faster_rcnn_forward.16} parent=11 // pred_check_branch
        %123 = sbr.rel (%p121) target = $region20
      $region19: #{faster_rcnn_forward.16} parent=11 // pred_region
        _
      $region20: #{faster_rcnn_forward.16} parent=11 // pred_fallthru
        _
    $region12: #{faster_rcnn_forward.16} parent=5 // pred_fallthru
      _
    %p124 = scmp.lt.s32.totalorder %s9, 4
    // Predicated region
    $region21: #{faster_rcnn_forward.16} parent=5 // pred_check
      %p125 = pneg %p124
    $region22: #{faster_rcnn_forward.16} parent=5 // pred_check_branch
      %127 = sbr.rel (%p125) target = $region24
    $region23: #{faster_rcnn_forward.16} parent=5 // pred_region
      // Predicated region
      $region25: #{faster_rcnn_forward.16} parent=23 // pred_check
        %p128 = pneg %p29
      $region26: #{faster_rcnn_forward.16} parent=23 // pred_check_branch
        %130 = sbr.rel (%p128) target = $region28
      $region27: #{faster_rcnn_forward.16} parent=23 // pred_region
        %s131 = smul.u32 49, %s9
        %p132 = scmp.lt.s32.totalorder %s131, 195
        %s133 = scalar_select %p132, %s131, 195
        %s134 = smul.addr %s133, 5
        %s135 = smul.addr %s134, 4
        %s136 = scalar_lea.vmem %s0, %s135
        %s137 = smul.u32 49, %s9
      $region28: #{faster_rcnn_forward.16} parent=23 // pred_fallthru
        _
    $region24: #{faster_rcnn_forward.16} parent=5 // pred_fallthru
      _
    %p138 = scmp.le.s32.totalorder 1, %s9
    %p139 = scmp.lt.s32.totalorder %s9, 5
    %p140 = pnand %p138, %p139
    %p141 = pneg %p140
    // Predicated region
    $region29: #{faster_rcnn_forward.16} parent=5 // pred_check
      _
    $region30: #{faster_rcnn_forward.16} parent=5 // pred_check_branch
      %143 = sbr.rel (%p140) target = $region32
    $region31: #{faster_rcnn_forward.16} parent=5 // pred_region
      %s144 = ssub.s32 %s9, 1
      %s145 = smul.u32 49, %s14
      %p146 = scmp.lt.s32.totalorder %s145, 195
      %s147 = scalar_select %p146, %s145, 195
      %s148 = smul.addr %s147, 5
      %s149 = smul.addr %s148, 4
      %s150 = scalar_lea.vmem %s0, %s149
      %p151 = pneg %p35
      %p152 = pneg %p32
      %p153 = pneg %p56
      %p154 = pneg %p53
      %p155 = pneg %p77
      %p156 = pneg %p74
      %p157 = pneg %p103
      %p158 = pneg %p100
      %s159 = smul.u32 49, %s14
      %p160 = scmp.lt.s32.totalorder %s159, 195
      %s161 = scalar_select %p160, %s159, 195
      %s162 = smul.addr %s161, 4
      %s163 = scalar_lea.vmem %s3, %s162
      %s164 = smul.u32 49, %s14
      %p165 = scmp.lt.s32.totalorder %s164, 195
      %s166 = scalar_select %p165, %s164, 195
      %s167 = smul.addr %s166, 5
      %s168 = smul.addr %s167, 4
      %s169 = scalar_lea.vmem %s0, %s168
      %s170 = smul.u32 49, %s14
      %s171 = smul.u32 49, %s14
      %p172 = scmp.lt.s32.totalorder %s171, 195
      %s173 = scalar_select %p172, %s171, 195
      %s174 = smul.addr %s173, 4
      %s175 = scalar_lea.vmem %s3, %s174
      %s176 = smul.u32 49, %s14
      %v178 = vld [vmem:[%s169] sm:$0xff]
      %v179 = vld [vmem:[%s169 + $0x8] sm:$0xff]
      %v180 = vld [vmem:[%s169 + $0x10] sm:$0xf]
      %v181 = vld [vmem:[%s169 + $0x14] sm:$0xff]
      %v182 = vld [vmem:[%s169 + $0x1c] sm:$0xff]
      %v183 = vld [vmem:[%s169 + $0x24] sm:$0xf]
      %v184 = vld [vmem:[%s169 + $0x28] sm:$0xff]
      %v185 = vld [vmem:[%s169 + $0x30] sm:$0xff]
      %v186 = vld [vmem:[%s169 + $0x38] sm:$0xf]
      %v187 = vld [vmem:[%s169 + $0x3c] sm:$0xff]
      %v188 = vld [vmem:[%s169 + $0x44] sm:$0xff]
      %v189 = vld [vmem:[%s169 + $0x4c] sm:$0xf]
      %v190 = vld [vmem:[%s169 + $0x50] sm:$0xff]
      %v191 = vld [vmem:[%s169 + $0x58] sm:$0xff]
      %v192 = vld [vmem:[%s169 + $0x60] sm:$0xf]
      %v193 = vld [vmem:[%s169 + $0x64] sm:$0xff]
      %v194 = vld [vmem:[%s169 + $0x6c] sm:$0xff]
      %v195 = vld [vmem:[%s169 + $0x74] sm:$0xf]
      %v196 = vld [vmem:[%s169 + $0x78] sm:$0xff]
      %v197 = vld [vmem:[%s169 + $0x80] sm:$0xff]
      %v198 = vld [vmem:[%s169 + $0x88] sm:$0xf]
      %v199 = vld [vmem:[%s169 + $0x8c] sm:$0xff]
      %v200 = vld [vmem:[%s169 + $0x94] sm:$0xff]
      %v201 = vld [vmem:[%s169 + $0x9c] sm:$0xf]
      %v202 = vld [vmem:[%s169 + $0xa0] sm:$0xff]
      %v203 = vld [vmem:[%s169 + $0xa8] sm:$0xff]
      %v204 = vld [vmem:[%s169 + $0xb0] sm:$0xf]
      %v205 = vld [vmem:[%s169 + $0xb4] sm:$0xff]
      %v206 = vld [vmem:[%s169 + $0xbc] sm:$0xff]
      %v207 = vld [vmem:[%s169 + $0xc4] sm:$0xf]
      %v208 = vld [vmem:[%s169 + $0xc8] sm:$0xff]
      %v209 = vld [vmem:[%s169 + $0xd0] sm:$0xff]
      %v210 = vld [vmem:[%s169 + $0xd8] sm:$0xf]
      %v211 = vld [vmem:[%s169 + $0xdc] sm:$0xff]
      %v212 = vld [vmem:[%s169 + $0xe4] sm:$0xff]
      %v213 = vld [vmem:[%s169 + $0xec] sm:$0xf]
      %v214 = vld [vmem:[%s169 + $0xf0] sm:$0xff]
      %v215 = vld [vmem:[%s169 + $0xf8] sm:$0xff]
      %v216 = vld [vmem:[%s169 + $0x100] sm:$0xf]
      %v217 = vld [vmem:[%s169 + $0x104] sm:$0xff]
      %v218 = vld [vmem:[%s169 + $0x10c] sm:$0xff]
      %v219 = vld [vmem:[%s169 + $0x114] sm:$0xf]
      %v220 = vld [vmem:[%s169 + $0x118] sm:$0xff]
      %v221 = vld [vmem:[%s169 + $0x120] sm:$0xff]
      %v222 = vld [vmem:[%s169 + $0x128] sm:$0xf]
      %v223 = vld [vmem:[%s169 + $0x12c] sm:$0xff]
      %v224 = vld [vmem:[%s169 + $0x134] sm:$0xff]
      %v225 = vld [vmem:[%s169 + $0x13c] sm:$0xf]
      %v226 = vld [vmem:[%s169 + $0x140] sm:$0xff]
      %v227 = vld [vmem:[%s169 + $0x148] sm:$0xff]
      %v228 = vld [vmem:[%s169 + $0x150] sm:$0xf]
      %v229 = vld [vmem:[%s169 + $0x154] sm:$0xff]
      %v230 = vld [vmem:[%s169 + $0x15c] sm:$0xff]
      %v231 = vld [vmem:[%s169 + $0x164] sm:$0xf]
      %v232 = vld [vmem:[%s169 + $0x168] sm:$0xff]
      %v233 = vld [vmem:[%s169 + $0x170] sm:$0xff]
      %v234 = vld [vmem:[%s169 + $0x178] sm:$0xf]
      %v235 = vld [vmem:[%s169 + $0x17c] sm:$0xff]
      %v236 = vld [vmem:[%s169 + $0x184] sm:$0xff]
      %v237 = vld [vmem:[%s169 + $0x18c] sm:$0xf]
      %v238 = vld [vmem:[%s169 + $0x190] sm:$0xff]
      %v239 = vld [vmem:[%s169 + $0x198] sm:$0xff]
      %v240 = vld [vmem:[%s169 + $0x1a0] sm:$0xf]
      %v241 = vld [vmem:[%s169 + $0x1a4] sm:$0xff]
      %v242 = vld [vmem:[%s169 + $0x1ac] sm:$0xff]
      %v243 = vld [vmem:[%s169 + $0x1b4] sm:$0xf]
      %v244 = vld [vmem:[%s169 + $0x1b8] sm:$0xff]
      %v245 = vld [vmem:[%s169 + $0x1c0] sm:$0xff]
      %v246 = vld [vmem:[%s169 + $0x1c8] sm:$0xf]
      %v247 = vld [vmem:[%s169 + $0x1cc] sm:$0xff]
      %v248 = vld [vmem:[%s169 + $0x1d4] sm:$0xff]
      %v249 = vld [vmem:[%s169 + $0x1dc] sm:$0xf]
      %v250 = vld [vmem:[%s169 + $0x1e0] sm:$0xff]
      %v251 = vld [vmem:[%s169 + $0x1e8] sm:$0xff]
      %v252 = vld [vmem:[%s169 + $0x1f0] sm:$0xf]
      %v253 = vld [vmem:[%s169 + $0x1f4] sm:$0xff]
      %v254 = vld [vmem:[%s169 + $0x1fc] sm:$0xff]
      %v255 = vld [vmem:[%s169 + $0x204] sm:$0xf]
      %v256 = vld [vmem:[%s169 + $0x208] sm:$0xff]
      %v257 = vld [vmem:[%s169 + $0x210] sm:$0xff]
      %v258 = vld [vmem:[%s169 + $0x218] sm:$0xf]
      %v259 = vld [vmem:[%s169 + $0x21c] sm:$0xff]
      %v260 = vld [vmem:[%s169 + $0x224] sm:$0xff]
      %v261 = vld [vmem:[%s169 + $0x22c] sm:$0xf]
      %v262 = vld [vmem:[%s169 + $0x230] sm:$0xff]
      %v263 = vld [vmem:[%s169 + $0x238] sm:$0xff]
      %v264 = vld [vmem:[%s169 + $0x240] sm:$0xf]
      %v265 = vld [vmem:[%s169 + $0x244] sm:$0xff]
      %v266 = vld [vmem:[%s169 + $0x24c] sm:$0xff]
      %v267 = vld [vmem:[%s169 + $0x254] sm:$0xf]
      %v268 = vld [vmem:[%s169 + $0x258] sm:$0xff]
      %v269 = vld [vmem:[%s169 + $0x260] sm:$0xff]
      %v270 = vld [vmem:[%s169 + $0x268] sm:$0xf]
      %v271 = vld [vmem:[%s169 + $0x26c] sm:$0xff]
      %v272 = vld [vmem:[%s169 + $0x274] sm:$0xff]
      %v273 = vld [vmem:[%s169 + $0x27c] sm:$0xf]
      %v274 = vld [vmem:[%s169 + $0x280] sm:$0xff]
      %v275 = vld [vmem:[%s169 + $0x288] sm:$0xff]
      %v276 = vld [vmem:[%s169 + $0x290] sm:$0xf]
      %v277 = vld [vmem:[%s169 + $0x294] sm:$0xff]
      %v278 = vld [vmem:[%s169 + $0x29c] sm:$0xff]
      %v279 = vld [vmem:[%s169 + $0x2a4] sm:$0xf]
      %v280 = vld [vmem:[%s169 + $0x2a8] sm:$0xff]
      %v281 = vld [vmem:[%s169 + $0x2b0] sm:$0xff]
      %v282 = vld [vmem:[%s169 + $0x2b8] sm:$0xf]
      %v283 = vld [vmem:[%s169 + $0x2bc] sm:$0xff]
      %v284 = vld [vmem:[%s169 + $0x2c4] sm:$0xff]
      %v285 = vld [vmem:[%s169 + $0x2cc] sm:$0xf]
      %v286 = vld [vmem:[%s169 + $0x2d0] sm:$0xff]
      %v287 = vld [vmem:[%s169 + $0x2d8] sm:$0xff]
      %v288 = vld [vmem:[%s169 + $0x2e0] sm:$0xf]
      %v289 = vld [vmem:[%s169 + $0x2e4] sm:$0xff]
      %v290 = vld [vmem:[%s169 + $0x2ec] sm:$0xff]
      %v291 = vld [vmem:[%s169 + $0x2f4] sm:$0xf]
      %v292 = vld [vmem:[%s169 + $0x2f8] sm:$0xff]
      %v293 = vld [vmem:[%s169 + $0x300] sm:$0xff]
      %v294 = vld [vmem:[%s169 + $0x308] sm:$0xf]
      %v295 = vld [vmem:[%s169 + $0x30c] sm:$0xff]
      %v296 = vld [vmem:[%s169 + $0x314] sm:$0xff]
      %v297 = vld [vmem:[%s169 + $0x31c] sm:$0xf]
      %v298 = vld [vmem:[%s169 + $0x320] sm:$0xff]
      %v299 = vld [vmem:[%s169 + $0x328] sm:$0xff]
      %v300 = vld [vmem:[%s169 + $0x330] sm:$0xf]
      %v301 = vld [vmem:[%s169 + $0x334] sm:$0xff]
      %v302 = vld [vmem:[%s169 + $0x33c] sm:$0xff]
      %v303 = vld [vmem:[%s169 + $0x344] sm:$0xf]
      %v304 = vld [vmem:[%s169 + $0x348] sm:$0xff]
      %v305 = vld [vmem:[%s169 + $0x350] sm:$0xff]
      %v306 = vld [vmem:[%s169 + $0x358] sm:$0xf]
      %v307 = vld [vmem:[%s169 + $0x35c] sm:$0xff]
      %v308 = vld [vmem:[%s169 + $0x364] sm:$0xff]
      %v309 = vld [vmem:[%s169 + $0x36c] sm:$0xf]
      %v310 = vld [vmem:[%s169 + $0x370] sm:$0xff]
      %v311 = vld [vmem:[%s169 + $0x378] sm:$0xff]
      %v312 = vld [vmem:[%s169 + $0x380] sm:$0xf]
      %v313 = vld [vmem:[%s169 + $0x384] sm:$0xff]
      %v314 = vld [vmem:[%s169 + $0x38c] sm:$0xff]
      %v315 = vld [vmem:[%s169 + $0x394] sm:$0xf]
      %v316 = vld [vmem:[%s169 + $0x398] sm:$0xff]
      %v317 = vld [vmem:[%s169 + $0x3a0] sm:$0xff]
      %v318 = vld [vmem:[%s169 + $0x3a8] sm:$0xf]
      %v319 = vld [vmem:[%s169 + $0x3ac] sm:$0xff]
      %v320 = vld [vmem:[%s169 + $0x3b4] sm:$0xff]
      %v321 = vld [vmem:[%s169 + $0x3bc] sm:$0xf]
      %v322 = vld [vmem:[%s169 + $0x3c0] sm:$0xff]
      %v323 = vld [vmem:[%s169 + $0x3c8] sm:$0xff]
      %v324 = vld [vmem:[%s169 + $0x3d0] sm:$0xf]
      %v325 = vld [vmem:[%s1] sm:$0xf]
      %v326 = vld [vmem:[%s1 + $0x4] sm:$0xf]
      %v327 = vld [vmem:[%s1 + $0x8] sm:$0xf]
      %v328 = vld [vmem:[%s1 + $0xc] sm:$0xf]
      %v329 = vld [vmem:[%s1 + $0x10] sm:$0xf]
      %v330 = vld [vmem:[%s1 + $0x14] sm:$0xf]
      %v331 = vld [vmem:[%s1 + $0x18] sm:$0xf]
      %v332 = vld [vmem:[%s1 + $0x1c] sm:$0xf]
      %v333 = vld [vmem:[%s1 + $0x20] sm:$0xf]
      %v334 = vld [vmem:[%s1 + $0x24] sm:$0xf]
      %v335 = vld [vmem:[%s1 + $0x28] sm:$0xf]
      %v336 = vld [vmem:[%s1 + $0x2c] sm:$0xf]
      %v337 = vld [vmem:[%s1 + $0x30] sm:$0xf]
      %v338 = vld [vmem:[%s1 + $0x34] sm:$0xf]
      %v339 = vld [vmem:[%s1 + $0x38] sm:$0xf]
      %v340 = vld [vmem:[%s1 + $0x3c] sm:$0xf]
      %v341 = vld [vmem:[%s1 + $0x40] sm:$0xf]
      %v342 = vld [vmem:[%s1 + $0x44] sm:$0xf]
      %v343 = vld [vmem:[%s1 + $0x48] sm:$0xf]
      %v344 = vld [vmem:[%s1 + $0x4c] sm:$0xf]
      %v345 = vld [vmem:[%s1 + $0x50] sm:$0xf]
      %v346 = vld [vmem:[%s1 + $0x54] sm:$0xf]
      %v347 = vld [vmem:[%s1 + $0x58] sm:$0xf]
      %v348 = vld [vmem:[%s1 + $0x5c] sm:$0xf]
      %v349 = vld [vmem:[%s1 + $0x60] sm:$0xf]
      %v350 = vld [vmem:[%s1 + $0x64] sm:$0xf]
      %v351 = vld [vmem:[%s1 + $0x68] sm:$0xf]
      %v352 = vld [vmem:[%s1 + $0x6c] sm:$0xf]
      %v353 = vld [vmem:[%s1 + $0x70] sm:$0xf]
      %v354 = vld [vmem:[%s1 + $0x74] sm:$0xf]
      %v355 = vld [vmem:[%s1 + $0x78] sm:$0xf]
      %v356 = vld [vmem:[%s1 + $0x7c] sm:$0xf]
      %v357 = vld [vmem:[%s1 + $0x80] sm:$0xf]
      %v358 = vld [vmem:[%s1 + $0x84] sm:$0xf]
      %v359 = vld [vmem:[%s1 + $0x88] sm:$0xf]
      %v360 = vld [vmem:[%s1 + $0x8c] sm:$0xf]
      %v361 = vld [vmem:[%s1 + $0x90] sm:$0xf]
      %v362 = vld [vmem:[%s1 + $0x94] sm:$0xf]
      %v363 = vld [vmem:[%s1 + $0x98] sm:$0xf]
      %v364 = vld [vmem:[%s1 + $0x9c] sm:$0xf]
      %v365 = vld [vmem:[%s1 + $0xa0] sm:$0xf]
      %v366 = vld [vmem:[%s1 + $0xa4] sm:$0xf]
      %v367 = vld [vmem:[%s1 + $0xa8] sm:$0xf]
      %v368 = vld [vmem:[%s1 + $0xac] sm:$0xf]
      %v369 = vld [vmem:[%s1 + $0xb0] sm:$0xf]
      %v370 = vld [vmem:[%s1 + $0xb4] sm:$0xf]
      %v371 = vld [vmem:[%s1 + $0xb8] sm:$0xf]
      %v372 = vld [vmem:[%s1 + $0xbc] sm:$0xf]
      %v373 = vld [vmem:[%s1 + $0xc0] sm:$0xf]
      %v374 = vld [vmem:[%s1 + $0xc4] sm:$0xf]
      %v375 = vld [vmem:[%s1 + $0xc8] sm:$0xf]
      %v376 = vld [vmem:[%s1 + $0xcc] sm:$0xf]
      %v377 = vld [vmem:[%s1 + $0xd0] sm:$0xf]
      %v378 = vld [vmem:[%s1 + $0xd4] sm:$0xf]
      %v379 = vld [vmem:[%s1 + $0xd8] sm:$0xf]
      %v380 = vld [vmem:[%s1 + $0xdc] sm:$0xf]
      %v381 = vld [vmem:[%s1 + $0xe0] sm:$0xf]
      %v382 = vld [vmem:[%s1 + $0xe4] sm:$0xf]
      %v383 = vld [vmem:[%s1 + $0xe8] sm:$0xf]
      %v384 = vld [vmem:[%s1 + $0xec] sm:$0xf]
      %v385 = vld [vmem:[%s1 + $0xf0] sm:$0xf]
      %v386 = vld [vmem:[%s1 + $0xf4] sm:$0xf]
      %v387 = vld [vmem:[%s1 + $0xf8] sm:$0xf]
      %v388 = vld [vmem:[%s1 + $0xfc] sm:$0xf]
      %v389 = vld [vmem:[%s1 + $0x100] sm:$0xf]
      %v390 = vld [vmem:[%s1 + $0x104] sm:$0xf]
      %v391 = vld [vmem:[%s1 + $0x108] sm:$0xf]
      %v392 = vld [vmem:[%s1 + $0x10c] sm:$0xf]
      %v393 = vld [vmem:[%s1 + $0x110] sm:$0xf]
      %v394 = vld [vmem:[%s1 + $0x114] sm:$0xf]
      %v395 = vld [vmem:[%s1 + $0x118] sm:$0xf]
      %v396 = vld [vmem:[%s1 + $0x11c] sm:$0xf]
      %v397 = vld [vmem:[%s2] sm:$0x1]
      %v399 = vlaneseq
      %v400 = vshrl.u32 %v399, 7
      %v401 = vsub.s32 0, %v400
      %v402 = vrot.slane %v397, %v401
      %v551 = vunpack.c.l.b16 %v178
      %v552 = vunpack.c.h.b16 %v178
      %v553 = vunpack.c.l.b16 %v179
      %v554 = vunpack.c.h.b16 %v179
      %v555 = vunpack.c.l.b16 %v180
      %v556 = vunpack.c.l.b16 %v181
      %v557 = vunpack.c.h.b16 %v181
      %v558 = vunpack.c.l.b16 %v182
      %v559 = vunpack.c.h.b16 %v182
      %v560 = vunpack.c.l.b16 %v183
      %v561 = vunpack.c.l.b16 %v184
      %v562 = vunpack.c.h.b16 %v184
      %v563 = vunpack.c.l.b16 %v185
      %v564 = vunpack.c.h.b16 %v185
      %v565 = vunpack.c.l.b16 %v186
      %v566 = vunpack.c.l.b16 %v187
      %v567 = vunpack.c.h.b16 %v187
      %v568 = vunpack.c.l.b16 %v188
      %v569 = vunpack.c.h.b16 %v188
      %v570 = vunpack.c.l.b16 %v189
      %v571 = vunpack.c.l.b16 %v190
      %v572 = vunpack.c.h.b16 %v190
      %v573 = vunpack.c.l.b16 %v191
      %v574 = vunpack.c.h.b16 %v191
      %v575 = vunpack.c.l.b16 %v192
      %v576 = vunpack.c.l.b16 %v193
      %v577 = vunpack.c.h.b16 %v193
      %v578 = vunpack.c.l.b16 %v194
      %v579 = vunpack.c.h.b16 %v194
      %v580 = vunpack.c.l.b16 %v195
      %v581 = vunpack.c.l.b16 %v196
      %v582 = vunpack.c.h.b16 %v196
      %v583 = vunpack.c.l.b16 %v197
      %v584 = vunpack.c.h.b16 %v197
      %v585 = vunpack.c.l.b16 %v198
      %v586 = vunpack.c.l.b16 %v199
      %v587 = vunpack.c.h.b16 %v199
      %v588 = vunpack.c.l.b16 %v200
      %v589 = vunpack.c.h.b16 %v200
      %v590 = vunpack.c.l.b16 %v201
      %v591 = vunpack.c.l.b16 %v202
      %v592 = vunpack.c.h.b16 %v202
      %v593 = vunpack.c.l.b16 %v203
      %v594 = vunpack.c.h.b16 %v203
      %v595 = vunpack.c.l.b16 %v204
      %v596 = vunpack.c.l.b16 %v205
      %v597 = vunpack.c.h.b16 %v205
      %v598 = vunpack.c.l.b16 %v206
      %v599 = vunpack.c.h.b16 %v206
      %v600 = vunpack.c.l.b16 %v207
      %v601 = vunpack.c.l.b16 %v208
      %v602 = vunpack.c.h.b16 %v208
      %v603 = vunpack.c.l.b16 %v209
      %v604 = vunpack.c.h.b16 %v209
      %v605 = vunpack.c.l.b16 %v210
      %v606 = vunpack.c.l.b16 %v211
      %v607 = vunpack.c.h.b16 %v211
      %v608 = vunpack.c.l.b16 %v212
      %v609 = vunpack.c.h.b16 %v212
      %v610 = vunpack.c.l.b16 %v213
      %v611 = vunpack.c.l.b16 %v214
      %v612 = vunpack.c.h.b16 %v214
      %v613 = vunpack.c.l.b16 %v215
      %v614 = vunpack.c.h.b16 %v215
      %v615 = vunpack.c.l.b16 %v216
      %v616 = vunpack.c.l.b16 %v217
      %v617 = vunpack.c.h.b16 %v217
      %v618 = vunpack.c.l.b16 %v218
      %v619 = vunpack.c.h.b16 %v218
      %v620 = vunpack.c.l.b16 %v219
      %v621 = vunpack.c.l.b16 %v220
      %v622 = vunpack.c.h.b16 %v220
      %v623 = vunpack.c.l.b16 %v221
      %v624 = vunpack.c.h.b16 %v221
      %v625 = vunpack.c.l.b16 %v222
      %v626 = vunpack.c.l.b16 %v223
      %v627 = vunpack.c.h.b16 %v223
      %v628 = vunpack.c.l.b16 %v224
      %v629 = vunpack.c.h.b16 %v224
      %v630 = vunpack.c.l.b16 %v225
      %v631 = vunpack.c.l.b16 %v226
      %v632 = vunpack.c.h.b16 %v226
      %v633 = vunpack.c.l.b16 %v227
      %v634 = vunpack.c.h.b16 %v227
      %v635 = vunpack.c.l.b16 %v228
      %v636 = vunpack.c.l.b16 %v229
      %v637 = vunpack.c.h.b16 %v229
      %v638 = vunpack.c.l.b16 %v230
      %v639 = vunpack.c.h.b16 %v230
      %v640 = vunpack.c.l.b16 %v231
      %v641 = vunpack.c.l.b16 %v232
      %v642 = vunpack.c.h.b16 %v232
      %v643 = vunpack.c.l.b16 %v233
      %v644 = vunpack.c.h.b16 %v233
      %v645 = vunpack.c.l.b16 %v234
      %v646 = vunpack.c.l.b16 %v235
      %v647 = vunpack.c.h.b16 %v235
      %v648 = vunpack.c.l.b16 %v236
      %v649 = vunpack.c.h.b16 %v236
      %v650 = vunpack.c.l.b16 %v237
      %v651 = vunpack.c.l.b16 %v238
      %v652 = vunpack.c.h.b16 %v238
      %v653 = vunpack.c.l.b16 %v239
      %v654 = vunpack.c.h.b16 %v239
      %v655 = vunpack.c.l.b16 %v240
      %v656 = vunpack.c.l.b16 %v241
      %v657 = vunpack.c.h.b16 %v241
      %v658 = vunpack.c.l.b16 %v242
      %v659 = vunpack.c.h.b16 %v242
      %v660 = vunpack.c.l.b16 %v243
      %v661 = vunpack.c.l.b16 %v244
      %v662 = vunpack.c.h.b16 %v244
      %v663 = vunpack.c.l.b16 %v245
      %v664 = vunpack.c.h.b16 %v245
      %v665 = vunpack.c.l.b16 %v246
      %v666 = vunpack.c.l.b16 %v247
      %v667 = vunpack.c.h.b16 %v247
      %v668 = vunpack.c.l.b16 %v248
      %v669 = vunpack.c.h.b16 %v248
      %v670 = vunpack.c.l.b16 %v249
      %v671 = vunpack.c.l.b16 %v250
      %v672 = vunpack.c.h.b16 %v250
      %v673 = vunpack.c.l.b16 %v251
      %v674 = vunpack.c.h.b16 %v251
      %v675 = vunpack.c.l.b16 %v252
      %v676 = vunpack.c.l.b16 %v253
      %v677 = vunpack.c.h.b16 %v253
      %v678 = vunpack.c.l.b16 %v254
      %v679 = vunpack.c.h.b16 %v254
      %v680 = vunpack.c.l.b16 %v255
      %v681 = vunpack.c.l.b16 %v256
      %v682 = vunpack.c.h.b16 %v256
      %v683 = vunpack.c.l.b16 %v257
      %v684 = vunpack.c.h.b16 %v257
      %v685 = vunpack.c.l.b16 %v258
      %v686 = vunpack.c.l.b16 %v259
      %v687 = vunpack.c.h.b16 %v259
      %v688 = vunpack.c.l.b16 %v260
      %v689 = vunpack.c.h.b16 %v260
      %v690 = vunpack.c.l.b16 %v261
      %v691 = vunpack.c.l.b16 %v262
      %v692 = vunpack.c.h.b16 %v262
      %v693 = vunpack.c.l.b16 %v263
      %v694 = vunpack.c.h.b16 %v263
      %v695 = vunpack.c.l.b16 %v264
      %v696 = vunpack.c.l.b16 %v265
      %v697 = vunpack.c.h.b16 %v265
      %v698 = vunpack.c.l.b16 %v266
      %v699 = vunpack.c.h.b16 %v266
      %v700 = vunpack.c.l.b16 %v267
      %v701 = vunpack.c.l.b16 %v268
      %v702 = vunpack.c.h.b16 %v268
      %v703 = vunpack.c.l.b16 %v269
      %v704 = vunpack.c.h.b16 %v269
      %v705 = vunpack.c.l.b16 %v270
      %v706 = vunpack.c.l.b16 %v271
      %v707 = vunpack.c.h.b16 %v271
      %v708 = vunpack.c.l.b16 %v272
      %v709 = vunpack.c.h.b16 %v272
      %v710 = vunpack.c.l.b16 %v273
      %v711 = vunpack.c.l.b16 %v274
      %v712 = vunpack.c.h.b16 %v274
      %v713 = vunpack.c.l.b16 %v275
      %v714 = vunpack.c.h.b16 %v275
      %v715 = vunpack.c.l.b16 %v276
      %v716 = vunpack.c.l.b16 %v277
      %v717 = vunpack.c.h.b16 %v277
      %v718 = vunpack.c.l.b16 %v278
      %v719 = vunpack.c.h.b16 %v278
      %v720 = vunpack.c.l.b16 %v279
      %v721 = vunpack.c.l.b16 %v280
      %v722 = vunpack.c.h.b16 %v280
      %v723 = vunpack.c.l.b16 %v281
      %v724 = vunpack.c.h.b16 %v281
      %v725 = vunpack.c.l.b16 %v282
      %v726 = vunpack.c.l.b16 %v283
      %v727 = vunpack.c.h.b16 %v283
      %v728 = vunpack.c.l.b16 %v284
      %v729 = vunpack.c.h.b16 %v284
      %v730 = vunpack.c.l.b16 %v285
      %v731 = vunpack.c.l.b16 %v286
      %v732 = vunpack.c.h.b16 %v286
      %v733 = vunpack.c.l.b16 %v287
      %v734 = vunpack.c.h.b16 %v287
      %v735 = vunpack.c.l.b16 %v288
      %v736 = vunpack.c.l.b16 %v289
      %v737 = vunpack.c.h.b16 %v289
      %v738 = vunpack.c.l.b16 %v290
      %v739 = vunpack.c.h.b16 %v290
      %v740 = vunpack.c.l.b16 %v291
      %v741 = vunpack.c.l.b16 %v292
      %v742 = vunpack.c.h.b16 %v292
      %v743 = vunpack.c.l.b16 %v293
      %v744 = vunpack.c.h.b16 %v293
      %v745 = vunpack.c.l.b16 %v294
      %v746 = vunpack.c.l.b16 %v295
      %v747 = vunpack.c.h.b16 %v295
      %v748 = vunpack.c.l.b16 %v296
      %v749 = vunpack.c.h.b16 %v296
      %v750 = vunpack.c.l.b16 %v297
      %v751 = vunpack.c.l.b16 %v298
      %v752 = vunpack.c.h.b16 %v298
      %v753 = vunpack.c.l.b16 %v299
      %v754 = vunpack.c.h.b16 %v299
      %v755 = vunpack.c.l.b16 %v300
      %v756 = vunpack.c.l.b16 %v301
      %v757 = vunpack.c.h.b16 %v301
      %v758 = vunpack.c.l.b16 %v302
      %v759 = vunpack.c.h.b16 %v302
      %v760 = vunpack.c.l.b16 %v303
      %v761 = vunpack.c.l.b16 %v304
      %v762 = vunpack.c.h.b16 %v304
      %v763 = vunpack.c.l.b16 %v305
      %v764 = vunpack.c.h.b16 %v305
      %v765 = vunpack.c.l.b16 %v306
      %v766 = vunpack.c.l.b16 %v307
      %v767 = vunpack.c.h.b16 %v307
      %v768 = vunpack.c.l.b16 %v308
      %v769 = vunpack.c.h.b16 %v308
      %v770 = vunpack.c.l.b16 %v309
      %v771 = vunpack.c.l.b16 %v310
      %v772 = vunpack.c.h.b16 %v310
      %v773 = vunpack.c.l.b16 %v311
      %v774 = vunpack.c.h.b16 %v311
      %v775 = vunpack.c.l.b16 %v312
      %v776 = vunpack.c.l.b16 %v313
      %v777 = vunpack.c.h.b16 %v313
      %v778 = vunpack.c.l.b16 %v314
      %v779 = vunpack.c.h.b16 %v314
      %v780 = vunpack.c.l.b16 %v315
      %v781 = vunpack.c.l.b16 %v316
      %v782 = vunpack.c.h.b16 %v316
      %v783 = vunpack.c.l.b16 %v317
      %v784 = vunpack.c.h.b16 %v317
      %v785 = vunpack.c.l.b16 %v318
      %v786 = vunpack.c.l.b16 %v319
      %v787 = vunpack.c.h.b16 %v319
      %v788 = vunpack.c.l.b16 %v320
      %v789 = vunpack.c.h.b16 %v320
      %v790 = vunpack.c.l.b16 %v321
      %v791 = vunpack.c.l.b16 %v322
      %v792 = vunpack.c.h.b16 %v322
      %v793 = vunpack.c.l.b16 %v323
      %v794 = vunpack.c.h.b16 %v323
      %v795 = vunpack.c.l.b16 %v324
      %v796 = vpack.c.b16 %v556, %v551
      %v797 = vpack.c.b16 %v557, %v552
      %v798 = vpack.c.b16 %v558, %v553
      %v799 = vpack.c.b16 %v559, %v554
      %v800 = vpack.c.b16 %v560, %v555
      %v801 = vpack.c.b16 %v566, %v561
      %v802 = vpack.c.b16 %v567, %v562
      %v803 = vpack.c.b16 %v568, %v563
      %v804 = vpack.c.b16 %v569, %v564
      %v805 = vpack.c.b16 %v570, %v565
      %v806 = vpack.c.b16 %v576, %v571
      %v807 = vpack.c.b16 %v577, %v572
      %v808 = vpack.c.b16 %v578, %v573
      %v809 = vpack.c.b16 %v579, %v574
      %v810 = vpack.c.b16 %v580, %v575
      %v811 = vpack.c.b16 %v586, %v581
      %v812 = vpack.c.b16 %v587, %v582
      %v813 = vpack.c.b16 %v588, %v583
      %v814 = vpack.c.b16 %v589, %v584
      %v815 = vpack.c.b16 %v590, %v585
      %v816 = vpack.c.b16 %v596, %v591
      %v817 = vpack.c.b16 %v597, %v592
      %v818 = vpack.c.b16 %v598, %v593
      %v819 = vpack.c.b16 %v599, %v594
      %v820 = vpack.c.b16 %v600, %v595
      %v821 = vpack.c.b16 %v606, %v601
      %v822 = vpack.c.b16 %v607, %v602
      %v823 = vpack.c.b16 %v608, %v603
      %v824 = vpack.c.b16 %v609, %v604
      %v825 = vpack.c.b16 %v610, %v605
      %v826 = vpack.c.b16 %v616, %v611
      %v827 = vpack.c.b16 %v617, %v612
      %v828 = vpack.c.b16 %v618, %v613
      %v829 = vpack.c.b16 %v619, %v614
      %v830 = vpack.c.b16 %v620, %v615
      %v831 = vpack.c.b16 %v626, %v621
      %v832 = vpack.c.b16 %v627, %v622
      %v833 = vpack.c.b16 %v628, %v623
      %v834 = vpack.c.b16 %v629, %v624
      %v835 = vpack.c.b16 %v630, %v625
      %v836 = vpack.c.b16 %v636, %v631
      %v837 = vpack.c.b16 %v637, %v632
      %v838 = vpack.c.b16 %v638, %v633
      %v839 = vpack.c.b16 %v639, %v634
      %v840 = vpack.c.b16 %v640, %v635
      %v841 = vpack.c.b16 %v646, %v641
      %v842 = vpack.c.b16 %v647, %v642
      %v843 = vpack.c.b16 %v648, %v643
      %v844 = vpack.c.b16 %v649, %v644
      %v845 = vpack.c.b16 %v650, %v645
      %v846 = vpack.c.b16 %v656, %v651
      %v847 = vpack.c.b16 %v657, %v652
      %v848 = vpack.c.b16 %v658, %v653
      %v849 = vpack.c.b16 %v659, %v654
      %v850 = vpack.c.b16 %v660, %v655
      %v851 = vpack.c.b16 %v666, %v661
      %v852 = vpack.c.b16 %v667, %v662
      %v853 = vpack.c.b16 %v668, %v663
      %v854 = vpack.c.b16 %v669, %v664
      %v855 = vpack.c.b16 %v670, %v665
      %v856 = vpack.c.b16 %v676, %v671
      %v857 = vpack.c.b16 %v677, %v672
      %v858 = vpack.c.b16 %v678, %v673
      %v859 = vpack.c.b16 %v679, %v674
      %v860 = vpack.c.b16 %v680, %v675
      %v861 = vpack.c.b16 %v686, %v681
      %v862 = vpack.c.b16 %v687, %v682
      %v863 = vpack.c.b16 %v688, %v683
      %v864 = vpack.c.b16 %v689, %v684
      %v865 = vpack.c.b16 %v690, %v685
      %v866 = vpack.c.b16 %v696, %v691
      %v867 = vpack.c.b16 %v697, %v692
      %v868 = vpack.c.b16 %v698, %v693
      %v869 = vpack.c.b16 %v699, %v694
      %v870 = vpack.c.b16 %v700, %v695
      %v871 = vpack.c.b16 %v706, %v701
      %v872 = vpack.c.b16 %v707, %v702
      %v873 = vpack.c.b16 %v708, %v703
      %v874 = vpack.c.b16 %v709, %v704
      %v875 = vpack.c.b16 %v710, %v705
      %v876 = vpack.c.b16 %v716, %v711
      %v877 = vpack.c.b16 %v717, %v712
      %v878 = vpack.c.b16 %v718, %v713
      %v879 = vpack.c.b16 %v719, %v714
      %v880 = vpack.c.b16 %v720, %v715
      %v881 = vpack.c.b16 %v726, %v721
      %v882 = vpack.c.b16 %v727, %v722
      %v883 = vpack.c.b16 %v728, %v723
      %v884 = vpack.c.b16 %v729, %v724
      %v885 = vpack.c.b16 %v730, %v725
      %v886 = vpack.c.b16 %v736, %v731
      %v887 = vpack.c.b16 %v737, %v732
      %v888 = vpack.c.b16 %v738, %v733
      %v889 = vpack.c.b16 %v739, %v734
      %v890 = vpack.c.b16 %v740, %v735
      %v891 = vpack.c.b16 %v746, %v741
      %v892 = vpack.c.b16 %v747, %v742
      %v893 = vpack.c.b16 %v748, %v743
      %v894 = vpack.c.b16 %v749, %v744
      %v895 = vpack.c.b16 %v750, %v745
      %v896 = vpack.c.b16 %v756, %v751
      %v897 = vpack.c.b16 %v757, %v752
      %v898 = vpack.c.b16 %v758, %v753
      %v899 = vpack.c.b16 %v759, %v754
      %v900 = vpack.c.b16 %v760, %v755
      %v901 = vpack.c.b16 %v766, %v761
      %v902 = vpack.c.b16 %v767, %v762
      %v903 = vpack.c.b16 %v768, %v763
      %v904 = vpack.c.b16 %v769, %v764
      %v905 = vpack.c.b16 %v770, %v765
      %v906 = vpack.c.b16 %v776, %v771
      %v907 = vpack.c.b16 %v777, %v772
      %v908 = vpack.c.b16 %v778, %v773
      %v909 = vpack.c.b16 %v779, %v774
      %v910 = vpack.c.b16 %v780, %v775
      %v911 = vpack.c.b16 %v786, %v781
      %v912 = vpack.c.b16 %v787, %v782
      %v913 = vpack.c.b16 %v788, %v783
      %v914 = vpack.c.b16 %v789, %v784
      %v915 = vpack.c.b16 %v790, %v785
      %v916 = vpack.c.b16 %v791, %v791
      %v917 = vpack.c.b16 %v792, %v792
      %v918 = vpack.c.b16 %v793, %v793
      %v919 = vpack.c.b16 %v794, %v794
      %v920 = vpack.c.b16 %v795, %v795
      %v1093 = vunpack.c.l.b16 %v325
      %v1094 = vunpack.c.l.b16 %v326
      %v1095 = vunpack.c.l.b16 %v327
      %v1096 = vunpack.c.l.b16 %v328
      %v1097 = vunpack.c.l.b16 %v329
      %v1098 = vunpack.c.l.b16 %v330
      %v1099 = vunpack.c.l.b16 %v331
      %v1100 = vunpack.c.l.b16 %v332
      %v1101 = vunpack.c.l.b16 %v333
      %v1102 = vunpack.c.l.b16 %v334
      %v1103 = vunpack.c.l.b16 %v335
      %v1104 = vunpack.c.l.b16 %v336
      %v1105 = vunpack.c.l.b16 %v337
      %v1106 = vunpack.c.l.b16 %v338
      %v1107 = vunpack.c.l.b16 %v339
      %v1108 = vunpack.c.l.b16 %v340
      %v1109 = vunpack.c.l.b16 %v341
      %v1110 = vunpack.c.l.b16 %v342
      %v1111 = vunpack.c.l.b16 %v343
      %v1112 = vunpack.c.l.b16 %v344
      %v1113 = vunpack.c.l.b16 %v345
      %v1114 = vunpack.c.l.b16 %v346
      %v1115 = vunpack.c.l.b16 %v347
      %v1116 = vunpack.c.l.b16 %v348
      %v1117 = vunpack.c.l.b16 %v349
      %v1118 = vunpack.c.l.b16 %v350
      %v1119 = vunpack.c.l.b16 %v351
      %v1120 = vunpack.c.l.b16 %v352
      %v1121 = vunpack.c.l.b16 %v353
      %v1122 = vunpack.c.l.b16 %v354
      %v1123 = vunpack.c.l.b16 %v355
      %v1124 = vunpack.c.l.b16 %v356
      %v1125 = vunpack.c.l.b16 %v357
      %v1126 = vunpack.c.l.b16 %v358
      %v1127 = vunpack.c.l.b16 %v359
      %v1128 = vunpack.c.l.b16 %v360
      %v1129 = vunpack.c.l.b16 %v361
      %v1130 = vunpack.c.l.b16 %v362
      %v1131 = vunpack.c.l.b16 %v363
      %v1132 = vunpack.c.l.b16 %v364
      %v1133 = vunpack.c.l.b16 %v365
      %v1134 = vunpack.c.l.b16 %v366
      %v1135 = vunpack.c.l.b16 %v367
      %v1136 = vunpack.c.l.b16 %v368
      %v1137 = vunpack.c.l.b16 %v369
      %v1138 = vunpack.c.l.b16 %v370
      %v1139 = vunpack.c.l.b16 %v371
      %v1140 = vunpack.c.l.b16 %v372
      %v1141 = vunpack.c.l.b16 %v373
      %v1142 = vunpack.c.l.b16 %v374
      %v1143 = vunpack.c.l.b16 %v375
      %v1144 = vunpack.c.l.b16 %v376
      %v1145 = vunpack.c.l.b16 %v377
      %v1146 = vunpack.c.l.b16 %v378
      %v1147 = vunpack.c.l.b16 %v379
      %v1148 = vunpack.c.l.b16 %v380
      %v1149 = vunpack.c.l.b16 %v381
      %v1150 = vunpack.c.l.b16 %v382
      %v1151 = vunpack.c.l.b16 %v383
      %v1152 = vunpack.c.l.b16 %v384
      %v1153 = vunpack.c.l.b16 %v385
      %v1154 = vunpack.c.l.b16 %v386
      %v1155 = vunpack.c.l.b16 %v387
      %v1156 = vunpack.c.l.b16 %v388
      %v1157 = vunpack.c.l.b16 %v389
      %v1158 = vunpack.c.l.b16 %v390
      %v1159 = vunpack.c.l.b16 %v391
      %v1160 = vunpack.c.l.b16 %v392
      %v1161 = vunpack.c.l.b16 %v393
      %v1162 = vunpack.c.l.b16 %v394
      %v1163 = vunpack.c.l.b16 %v395
      %v1164 = vunpack.c.l.b16 %v396
      %v1165 = vpack.c.b16 %v1094, %v1093
      %v1166 = vpack.c.b16 %v1096, %v1095
      %v1167 = vpack.c.b16 %v1098, %v1097
      %v1168 = vpack.c.b16 %v1100, %v1099
      %v1169 = vpack.c.b16 %v1102, %v1101
      %v1170 = vpack.c.b16 %v1104, %v1103
      %v1171 = vpack.c.b16 %v1106, %v1105
      %v1172 = vpack.c.b16 %v1108, %v1107
      %v1173 = vpack.c.b16 %v1110, %v1109
      %v1174 = vpack.c.b16 %v1112, %v1111
      %v1175 = vpack.c.b16 %v1114, %v1113
      %v1176 = vpack.c.b16 %v1116, %v1115
      %v1177 = vpack.c.b16 %v1118, %v1117
      %v1178 = vpack.c.b16 %v1120, %v1119
      %v1179 = vpack.c.b16 %v1122, %v1121
      %v1180 = vpack.c.b16 %v1124, %v1123
      %v1181 = vpack.c.b16 %v1126, %v1125
      %v1182 = vpack.c.b16 %v1128, %v1127
      %v1183 = vpack.c.b16 %v1130, %v1129
      %v1184 = vpack.c.b16 %v1132, %v1131
      %v1185 = vpack.c.b16 %v1134, %v1133
      %v1186 = vpack.c.b16 %v1136, %v1135
      %v1187 = vpack.c.b16 %v1138, %v1137
      %v1188 = vpack.c.b16 %v1140, %v1139
      %v1189 = vpack.c.b16 %v1142, %v1141
      %v1190 = vpack.c.b16 %v1144, %v1143
      %v1191 = vpack.c.b16 %v1146, %v1145
      %v1192 = vpack.c.b16 %v1148, %v1147
      %v1193 = vpack.c.b16 %v1150, %v1149
      %v1194 = vpack.c.b16 %v1152, %v1151
      %v1195 = vpack.c.b16 %v1154, %v1153
      %v1196 = vpack.c.b16 %v1156, %v1155
      %v1197 = vpack.c.b16 %v1158, %v1157
      %v1198 = vpack.c.b16 %v1160, %v1159
      %v1199 = vpack.c.b16 %v1162, %v1161
      %v1200 = vpack.c.b16 %v1164, %v1163
      %vm1237 = vcmask 523264
      %v1239 = vsel %vm1237, %v800, 0
      %v1242 = vsel %vm1237, %v805, 0
      %v1245 = vsel %vm1237, %v810, 0
      %v1248 = vsel %vm1237, %v815, 0
      %v1251 = vsel %vm1237, %v820, 0
      %v1254 = vsel %vm1237, %v825, 0
      %v1257 = vsel %vm1237, %v830, 0
      %v1260 = vsel %vm1237, %v835, 0
      %v1263 = vsel %vm1237, %v840, 0
      %v1266 = vsel %vm1237, %v845, 0
      %v1269 = vsel %vm1237, %v850, 0
      %v1272 = vsel %vm1237, %v855, 0
      %v1275 = vsel %vm1237, %v860, 0
      %v1278 = vsel %vm1237, %v865, 0
      %v1281 = vsel %vm1237, %v870, 0
      %v1284 = vsel %vm1237, %v875, 0
      %v1287 = vsel %vm1237, %v880, 0
      %v1290 = vsel %vm1237, %v885, 0
      %v1293 = vsel %vm1237, %v890, 0
      %v1296 = vsel %vm1237, %v895, 0
      %v1299 = vsel %vm1237, %v900, 0
      %v1302 = vsel %vm1237, %v905, 0
      %v1305 = vsel %vm1237, %v910, 0
      %v1308 = vsel %vm1237, %v915, 0
      %v1311 = vsel %vm1237, %v920, 0
      %1313 = vmatprep.subr.bf16.mxu0 0
      %1314 = vmatpush1.bf16.msra.mxu0 %v1165
      %1315 = vmatprep.subr.bf16.mxu0 0
      %1316 = vmatpush1.bf16.msra.mxu0 %v1166
      %1317 = vmatprep.subr.bf16.mxu0 0
      %1318 = vmatpush1.bf16.msra.mxu0 %v1167
      %1319 = vmatprep.subr.bf16.mxu0 0
      %1320 = vmatpush1.bf16.msra.mxu0 %v1168
      %1321 = vmatprep.subr.bf16.mxu0 0
      %1322 = vmatpush1.bf16.msra.mxu0 %v1169
      %1323 = vmatprep.subr.bf16.mxu0 0
      %1324 = vmatpush1.bf16.msra.mxu0 %v1170
      %1325 = vmatprep.subr.bf16.mxu0 0
      %1326 = vmatpush1.bf16.msra.mxu0 %v1171
      %1327 = vmatprep.subr.bf16.mxu0 0
      %1328 = vmatpush1.bf16.msra.mxu0 %v1172
      %1329 = vmatprep.subr.bf16.mxu0 0
      %1330 = vmatpush1.bf16.msra.mxu0 %v1173
      %1331 = vmatprep.subr.bf16.mxu0 0
      %1332 = vmatpush1.bf16.msra.mxu0 %v1174
      %1333 = vmatprep.subr.bf16.mxu0 0
      %1334 = vmatpush1.bf16.msra.mxu0 %v1175
      %1335 = vmatprep.subr.bf16.mxu0 0
      %1336 = vmatpush1.bf16.msra.mxu0 %v1176
      %1337 = vmatprep.subr.bf16.mxu0 0
      %1338 = vmatpush1.bf16.msra.mxu0 %v1177
      %1339 = vmatprep.subr.bf16.mxu0 0
      %1340 = vmatpush1.bf16.msra.mxu0 %v1178
      %1341 = vmatprep.subr.bf16.mxu0 0
      %1342 = vmatpush1.bf16.msra.mxu0 %v1179
      %1343 = vmatprep.subr.bf16.mxu0 0
      %1344 = vmatpush1.bf16.msra.mxu0 %v1180
      %1345 = vmatprep.mubr.bf16.mxu0 %v797
      %1346 = vmatmul.mubr.bf16.gmra.mrb[0].mxu0 %v796
      %v1347 = vpop.f32.mrb[0].mxu0
      %v1348 = vadd.f32 %v402, %v1347
      %v1349 = vpop.f32.mrb[0].mxu0
      %v1350 = vpop.f32.mrb[0].mxu0
      %v1351 = vadd.f32 %v402, %v1350
      %v1352 = vpop.f32.mrb[0].mxu0
      %1353 = vmatprep.mubr.bf16.mxu0 %v802
      %1354 = vmatmul.mubr.bf16.gmra.mrb[0].mxu0 %v801
      %v1355 = vpop.f32.mrb[0].mxu0
      %v1356 = vadd.f32 %v402, %v1355
      %v1357 = vpop.f32.mrb[0].mxu0
      %v1358 = vpop.f32.mrb[0].mxu0
      %v1359 = vadd.f32 %v402, %v1358
      %v1360 = vpop.f32.mrb[0].mxu0
      %1361 = vmatprep.mubr.bf16.mxu0 %v807
      %1362 = vmatmul.mubr.bf16.gmra.mrb[0].mxu0 %v806
      %v1363 = vpop.f32.mrb[0].mxu0
      %v1364 = vadd.f32 %v402, %v1363
      %v1365 = vpop.f32.mrb[0].mxu0
      %v1366 = vpop.f32.mrb[0].mxu0
      %v1367 = vadd.f32 %v402, %v1366
      %v1368 = vpop.f32.mrb[0].mxu0
      %1369 = vmatprep.mubr.bf16.mxu0 %v812
      %1370 = vmatmul.mubr.bf16.gmra.mrb[0].mxu0 %v811
      %v1371 = vpop.f32.mrb[0].mxu0
      %v1372 = vadd.f32 %v402, %v1371
      %v1373 = vpop.f32.mrb[0].mxu0
      %v1374 = vpop.f32.mrb[0].mxu0
      %v1375 = vadd.f32 %v402, %v1374
      %v1376 = vpop.f32.mrb[0].mxu0
      %1377 = vmatprep.mubr.bf16.mxu0 %v817
      %1378 = vmatmul.mubr.bf16.gmra.mrb[0].mxu0 %v816
      %v1379 = vpop.f32.mrb[0].mxu0
      %v1380 = vadd.f32 %v402, %v1379
      %v1381 = vpop.f32.mrb[0].mxu0
      %v1382 = vpop.f32.mrb[0].mxu0
      %v1383 = vadd.f32 %v402, %v1382
      %v1384 = vpop.f32.mrb[0].mxu0
      %1385 = vmatprep.mubr.bf16.mxu0 %v822
      %1386 = vmatmul.mubr.bf16.gmra.mrb[0].mxu0 %v821
      %v1387 = vpop.f32.mrb[0].mxu0
      %v1388 = vadd.f32 %v402, %v1387
      %v1389 = vpop.f32.mrb[0].mxu0
      %v1390 = vpop.f32.mrb[0].mxu0
      %v1391 = vadd.f32 %v402, %v1390
      %v1392 = vpop.f32.mrb[0].mxu0
      %1393 = vmatprep.mubr.bf16.mxu0 %v827
      %1394 = vmatmul.mubr.bf16.gmra.mrb[0].mxu0 %v826
      %v1395 = vpop.f32.mrb[0].mxu0
      %v1396 = vadd.f32 %v402, %v1395
      %v1397 = vpop.f32.mrb[0].mxu0
      %v1398 = vpop.f32.mrb[0].mxu0
      %v1399 = vadd.f32 %v402, %v1398
      %v1400 = vpop.f32.mrb[0].mxu0
      %1401 = vmatprep.mubr.bf16.mxu0 %v832
      %1402 = vmatmul.mubr.bf16.gmra.mrb[0].mxu0 %v831
      %v1403 = vpop.f32.mrb[0].mxu0
      %v1404 = vadd.f32 %v402, %v1403
      %v1405 = vpop.f32.mrb[0].mxu0
      %v1406 = vpop.f32.mrb[0].mxu0
      %v1407 = vadd.f32 %v402, %v1406
      %v1408 = vpop.f32.mrb[0].mxu0
      %1409 = vmatprep.mubr.bf16.mxu0 %v837
      %1410 = vmatmul.mubr.bf16.gmra.mrb[0].mxu0 %v836
      %v1411 = vpop.f32.mrb[0].mxu0
      %v1412 = vadd.f32 %v402, %v1411
      %v1413 = vpop.f32.mrb[0].mxu0
      %v1414 = vpop.f32.mrb[0].mxu0
      %v1415 = vadd.f32 %v402, %v1414
      %v1416 = vpop.f32.mrb[0].mxu0
      %1417 = vmatprep.mubr.bf16.mxu0 %v842
      %1418 = vmatmul.mubr.bf16.gmra.mrb[0].mxu0 %v841
      %v1419 = vpop.f32.mrb[0].mxu0
      %v1420 = vadd.f32 %v402, %v1419
      %v1421 = vpop.f32.mrb[0].mxu0
      %v1422 = vpop.f32.mrb[0].mxu0
      %v1423 = vadd.f32 %v402, %v1422
      %v1424 = vpop.f32.mrb[0].mxu0
      %1425 = vmatprep.mubr.bf16.mxu0 %v847
      %1426 = vmatmul.mubr.bf16.gmra.mrb[0].mxu0 %v846
      %v1427 = vpop.f32.mrb[0].mxu0
      %v1428 = vadd.f32 %v402, %v1427
      %v1429 = vpop.f32.mrb[0].mxu0
      %v1430 = vpop.f32.mrb[0].mxu0
      %v1431 = vadd.f32 %v402, %v1430
      %v1432 = vpop.f32.mrb[0].mxu0
      %1433 = vmatprep.mubr.bf16.mxu0 %v852
      %1434 = vmatmul.mubr.bf16.gmra.mrb[0].mxu0 %v851
      %v1435 = vpop.f32.mrb[0].mxu0
      %v1436 = vadd.f32 %v402, %v1435
      %v1437 = vpop.f32.mrb[0].mxu0
      %v1438 = vpop.f32.mrb[0].mxu0
      %v1439 = vadd.f32 %v402, %v1438
      %v1440 = vpop.f32.mrb[0].mxu0
      %1441 = vmatprep.mubr.bf16.mxu0 %v857
      %1442 = vmatmul.mubr.bf16.gmra.mrb[0].mxu0 %v856
      %v1443 = vpop.f32.mrb[0].mxu0
      %v1444 = vadd.f32 %v402, %v1443
      %v1445 = vpop.f32.mrb[0].mxu0
      %v1446 = vpop.f32.mrb[0].mxu0
      %v1447 = vadd.f32 %v402, %v1446
      %v1448 = vpop.f32.mrb[0].mxu0
      %1449 = vmatprep.mubr.bf16.mxu0 %v862
      %1450 = vmatmul.mubr.bf16.gmra.mrb[0].mxu0 %v861
      %v1451 = vpop.f32.mrb[0].mxu0
      %v1452 = vadd.f32 %v402, %v1451
      %v1453 = vpop.f32.mrb[0].mxu0
      %v1454 = vpop.f32.mrb[0].mxu0
      %v1455 = vadd.f32 %v402, %v1454
      %v1456 = vpop.f32.mrb[0].mxu0
      %1457 = vmatprep.mubr.bf16.mxu0 %v867
      %1458 = vmatmul.mubr.bf16.gmra.mrb[0].mxu0 %v866
      %v1459 = vpop.f32.mrb[0].mxu0
      %v1460 = vadd.f32 %v402, %v1459
      %v1461 = vpop.f32.mrb[0].mxu0
      %v1462 = vpop.f32.mrb[0].mxu0
      %v1463 = vadd.f32 %v402, %v1462
      %v1464 = vpop.f32.mrb[0].mxu0
      %1465 = vmatprep.mubr.bf16.mxu0 %v872
      %1466 = vmatmul.mubr.bf16.gmra.mrb[0].mxu0 %v871
      %v1467 = vpop.f32.mrb[0].mxu0
      %v1468 = vadd.f32 %v402, %v1467
      %v1469 = vpop.f32.mrb[0].mxu0
      %v1470 = vpop.f32.mrb[0].mxu0
      %v1471 = vadd.f32 %v402, %v1470
      %v1472 = vpop.f32.mrb[0].mxu0
      %1473 = vmatprep.mubr.bf16.mxu0 %v877
      %1474 = vmatmul.mubr.bf16.gmra.mrb[0].mxu0 %v876
      %v1475 = vpop.f32.mrb[0].mxu0
      %v1476 = vadd.f32 %v402, %v1475
      %v1477 = vpop.f32.mrb[0].mxu0
      %v1478 = vpop.f32.mrb[0].mxu0
      %v1479 = vadd.f32 %v402, %v1478
      %v1480 = vpop.f32.mrb[0].mxu0
      %1481 = vmatprep.mubr.bf16.mxu0 %v882
      %1482 = vmatmul.mubr.bf16.gmra.mrb[0].mxu0 %v881
      %v1483 = vpop.f32.mrb[0].mxu0
      %v1484 = vadd.f32 %v402, %v1483
      %v1485 = vpop.f32.mrb[0].mxu0
      %v1486 = vpop.f32.mrb[0].mxu0
      %v1487 = vadd.f32 %v402, %v1486
      %v1488 = vpop.f32.mrb[0].mxu0
      %1489 = vmatprep.mubr.bf16.mxu0 %v887
      %1490 = vmatmul.mubr.bf16.gmra.mrb[0].mxu0 %v886
      %v1491 = vpop.f32.mrb[0].mxu0
      %v1492 = vadd.f32 %v402, %v1491
      %v1493 = vpop.f32.mrb[0].mxu0
      %v1494 = vpop.f32.mrb[0].mxu0
      %v1495 = vadd.f32 %v402, %v1494
      %v1496 = vpop.f32.mrb[0].mxu0
      %1497 = vmatprep.mubr.bf16.mxu0 %v892
      %1498 = vmatmul.mubr.bf16.gmra.mrb[0].mxu0 %v891
      %v1499 = vpop.f32.mrb[0].mxu0
      %v1500 = vadd.f32 %v402, %v1499
      %v1501 = vpop.f32.mrb[0].mxu0
      %v1502 = vpop.f32.mrb[0].mxu0
      %v1503 = vadd.f32 %v402, %v1502
      %v1504 = vpop.f32.mrb[0].mxu0
      %1505 = vmatprep.mubr.bf16.mxu0 %v897
      %1506 = vmatmul.mubr.bf16.gmra.mrb[0].mxu0 %v896
      %v1507 = vpop.f32.mrb[0].mxu0
      %v1508 = vadd.f32 %v402, %v1507
      %v1509 = vpop.f32.mrb[0].mxu0
      %v1510 = vpop.f32.mrb[0].mxu0
      %v1511 = vadd.f32 %v402, %v1510
      %v1512 = vpop.f32.mrb[0].mxu0
      %1513 = vmatprep.mubr.bf16.mxu0 %v902
      %1514 = vmatmul.mubr.bf16.gmra.mrb[0].mxu0 %v901
      %v1515 = vpop.f32.mrb[0].mxu0
      %v1516 = vadd.f32 %v402, %v1515
      %v1517 = vpop.f32.mrb[0].mxu0
      %v1518 = vpop.f32.mrb[0].mxu0
      %v1519 = vadd.f32 %v402, %v1518
      %v1520 = vpop.f32.mrb[0].mxu0
      %1521 = vmatprep.mubr.bf16.mxu0 %v907
      %1522 = vmatmul.mubr.bf16.gmra.mrb[0].mxu0 %v906
      %v1523 = vpop.f32.mrb[0].mxu0
      %v1524 = vadd.f32 %v402, %v1523
      %v1525 = vpop.f32.mrb[0].mxu0
      %v1526 = vpop.f32.mrb[0].mxu0
      %v1527 = vadd.f32 %v402, %v1526
      %v1528 = vpop.f32.mrb[0].mxu0
      %1529 = vmatprep.mubr.bf16.mxu0 %v912
      %1530 = vmatmul.mubr.bf16.gmra.mrb[0].mxu0 %v911
      %v1531 = vpop.f32.mrb[0].mxu0
      %v1532 = vadd.f32 %v402, %v1531
      %v1533 = vpop.f32.mrb[0].mxu0
      %v1534 = vpop.f32.mrb[0].mxu0
      %v1535 = vadd.f32 %v402, %v1534
      %v1536 = vpop.f32.mrb[0].mxu0
      %1537 = vmatprep.mubr.bf16.mxu0 %v917
      %1538 = vmatmul.mubr.bf16.gmra.mrb[0].mxu0 %v916
      %v1539 = vpop.f32.mrb[0].mxu0
      %v1540 = vadd.f32 %v402, %v1539
      %v1541 = vpop.f32.mrb[0].mxu0
      %v1542 = vpop.f32.mrb[0].mxu0
      %v1543 = vpop.f32.mrb[0].mxu0
      %1544 = vdwg.mxu0
      %1545 = vmatprep.subr.bf16.mxu0 0
      %1546 = vmatpush1.bf16.msra.mxu0 %v1181
      %1547 = vmatprep.subr.bf16.mxu0 0
      %1548 = vmatpush1.bf16.msra.mxu0 %v1182
      %1549 = vmatprep.subr.bf16.mxu0 0
      %1550 = vmatpush1.bf16.msra.mxu0 %v1183
      %1551 = vmatprep.subr.bf16.mxu0 0
      %1552 = vmatpush1.bf16.msra.mxu0 %v1184
      %1553 = vmatprep.subr.bf16.mxu0 0
      %1554 = vmatpush1.bf16.msra.mxu0 %v1185
      %1555 = vmatprep.subr.bf16.mxu0 0
      %1556 = vmatpush1.bf16.msra.mxu0 %v1186
      %1557 = vmatprep.subr.bf16.mxu0 0
      %1558 = vmatpush1.bf16.msra.mxu0 %v1187
      %1559 = vmatprep.subr.bf16.mxu0 0
      %1560 = vmatpush1.bf16.msra.mxu0 %v1188
      %1561 = vmatprep.subr.bf16.mxu0 0
      %1562 = vmatpush1.bf16.msra.mxu0 %v1189
      %1563 = vmatprep.subr.bf16.mxu0 0
      %1564 = vmatpush1.bf16.msra.mxu0 %v1190
      %1565 = vmatprep.subr.bf16.mxu0 0
      %1566 = vmatpush1.bf16.msra.mxu0 %v1191
      %1567 = vmatprep.subr.bf16.mxu0 0
      %1568 = vmatpush1.bf16.msra.mxu0 %v1192
      %1569 = vmatprep.subr.bf16.mxu0 0
      %1570 = vmatpush1.bf16.msra.mxu0 %v1193
      %1571 = vmatprep.subr.bf16.mxu0 0
      %1572 = vmatpush1.bf16.msra.mxu0 %v1194
      %1573 = vmatprep.subr.bf16.mxu0 0
      %1574 = vmatpush1.bf16.msra.mxu0 %v1195
      %1575 = vmatprep.subr.bf16.mxu0 0
      %1576 = vmatpush1.bf16.msra.mxu0 %v1196
      %1577 = vmatprep.mubr.bf16.mxu0 %v799
      %1578 = vmatmul.mubr.bf16.gmra.mrb[0].mxu0 %v798
      %v1579 = vpop.f32.mrb[0].mxu0
      %v1580 = vadd.f32 %v1348, %v1579
      %v1581 = vpop.f32.mrb[0].mxu0
      %v1582 = vpop.f32.mrb[0].mxu0
      %v1583 = vadd.f32 %v1351, %v1582
      %v1584 = vpop.f32.mrb[0].mxu0
      %1585 = vmatprep.mubr.bf16.mxu0 %v804
      %1586 = vmatmul.mubr.bf16.gmra.mrb[0].mxu0 %v803
      %v1587 = vpop.f32.mrb[0].mxu0
      %v1588 = vadd.f32 %v1356, %v1587
      %v1589 = vpop.f32.mrb[0].mxu0
      %v1590 = vpop.f32.mrb[0].mxu0
      %v1591 = vadd.f32 %v1359, %v1590
      %v1592 = vpop.f32.mrb[0].mxu0
      %1593 = vmatprep.mubr.bf16.mxu0 %v809
      %1594 = vmatmul.mubr.bf16.gmra.mrb[0].mxu0 %v808
      %v1595 = vpop.f32.mrb[0].mxu0
      %v1596 = vadd.f32 %v1364, %v1595
      %v1597 = vpop.f32.mrb[0].mxu0
      %v1598 = vpop.f32.mrb[0].mxu0
      %v1599 = vadd.f32 %v1367, %v1598
      %v1600 = vpop.f32.mrb[0].mxu0
      %1601 = vmatprep.mubr.bf16.mxu0 %v814
      %1602 = vmatmul.mubr.bf16.gmra.mrb[0].mxu0 %v813
      %v1603 = vpop.f32.mrb[0].mxu0
      %v1604 = vadd.f32 %v1372, %v1603
      %v1605 = vpop.f32.mrb[0].mxu0
      %v1606 = vpop.f32.mrb[0].mxu0
      %v1607 = vadd.f32 %v1375, %v1606
      %v1608 = vpop.f32.mrb[0].mxu0
      %1609 = vmatprep.mubr.bf16.mxu0 %v819
      %1610 = vmatmul.mubr.bf16.gmra.mrb[0].mxu0 %v818
      %v1611 = vpop.f32.mrb[0].mxu0
      %v1612 = vadd.f32 %v1380, %v1611
      %v1613 = vpop.f32.mrb[0].mxu0
      %v1614 = vpop.f32.mrb[0].mxu0
      %v1615 = vadd.f32 %v1383, %v1614
      %v1616 = vpop.f32.mrb[0].mxu0
      %1617 = vmatprep.mubr.bf16.mxu0 %v824
      %1618 = vmatmul.mubr.bf16.gmra.mrb[0].mxu0 %v823
      %v1619 = vpop.f32.mrb[0].mxu0
      %v1620 = vadd.f32 %v1388, %v1619
      %v1621 = vpop.f32.mrb[0].mxu0
      %v1622 = vpop.f32.mrb[0].mxu0
      %v1623 = vadd.f32 %v1391, %v1622
      %v1624 = vpop.f32.mrb[0].mxu0
      %1625 = vmatprep.mubr.bf16.mxu0 %v829
      %1626 = vmatmul.mubr.bf16.gmra.mrb[0].mxu0 %v828
      %v1627 = vpop.f32.mrb[0].mxu0
      %v1628 = vadd.f32 %v1396, %v1627
      %v1629 = vpop.f32.mrb[0].mxu0
      %v1630 = vpop.f32.mrb[0].mxu0
      %v1631 = vadd.f32 %v1399, %v1630
      %v1632 = vpop.f32.mrb[0].mxu0
      %1633 = vmatprep.mubr.bf16.mxu0 %v834
      %1634 = vmatmul.mubr.bf16.gmra.mrb[0].mxu0 %v833
      %v1635 = vpop.f32.mrb[0].mxu0
      %v1636 = vadd.f32 %v1404, %v1635
      %v1637 = vpop.f32.mrb[0].mxu0
      %v1638 = vpop.f32.mrb[0].mxu0
      %v1639 = vadd.f32 %v1407, %v1638
      %v1640 = vpop.f32.mrb[0].mxu0
      %1641 = vmatprep.mubr.bf16.mxu0 %v839
      %1642 = vmatmul.mubr.bf16.gmra.mrb[0].mxu0 %v838
      %v1643 = vpop.f32.mrb[0].mxu0
      %v1644 = vadd.f32 %v1412, %v1643
      %v1645 = vpop.f32.mrb[0].mxu0
      %v1646 = vpop.f32.mrb[0].mxu0
      %v1647 = vadd.f32 %v1415, %v1646
      %v1648 = vpop.f32.mrb[0].mxu0
      %1649 = vmatprep.mubr.bf16.mxu0 %v844
      %1650 = vmatmul.mubr.bf16.gmra.mrb[0].mxu0 %v843
      %v1651 = vpop.f32.mrb[0].mxu0
      %v1652 = vadd.f32 %v1420, %v1651
      %v1653 = vpop.f32.mrb[0].mxu0
      %v1654 = vpop.f32.mrb[0].mxu0
      %v1655 = vadd.f32 %v1423, %v1654
      %v1656 = vpop.f32.mrb[0].mxu0
      %1657 = vmatprep.mubr.bf16.mxu0 %v849
      %1658 = vmatmul.mubr.bf16.gmra.mrb[0].mxu0 %v848
      %v1659 = vpop.f32.mrb[0].mxu0
      %v1660 = vadd.f32 %v1428, %v1659
      %v1661 = vpop.f32.mrb[0].mxu0
      %v1662 = vpop.f32.mrb[0].mxu0
      %v1663 = vadd.f32 %v1431, %v1662
      %v1664 = vpop.f32.mrb[0].mxu0
      %1665 = vmatprep.mubr.bf16.mxu0 %v854
      %1666 = vmatmul.mubr.bf16.gmra.mrb[0].mxu0 %v853
      %v1667 = vpop.f32.mrb[0].mxu0
      %v1668 = vadd.f32 %v1436, %v1667
      %v1669 = vpop.f32.mrb[0].mxu0
      %v1670 = vpop.f32.mrb[0].mxu0
      %v1671 = vadd.f32 %v1439, %v1670
      %v1672 = vpop.f32.mrb[0].mxu0
      %1673 = vmatprep.mubr.bf16.mxu0 %v859
      %1674 = vmatmul.mubr.bf16.gmra.mrb[0].mxu0 %v858
      %v1675 = vpop.f32.mrb[0].mxu0
      %v1676 = vadd.f32 %v1444, %v1675
      %v1677 = vpop.f32.mrb[0].mxu0
      %v1678 = vpop.f32.mrb[0].mxu0
      %v1679 = vadd.f32 %v1447, %v1678
      %v1680 = vpop.f32.mrb[0].mxu0
      %1681 = vmatprep.mubr.bf16.mxu0 %v864
      %1682 = vmatmul.mubr.bf16.gmra.mrb[0].mxu0 %v863
      %v1683 = vpop.f32.mrb[0].mxu0
      %v1684 = vadd.f32 %v1452, %v1683
      %v1685 = vpop.f32.mrb[0].mxu0
      %v1686 = vpop.f32.mrb[0].mxu0
      %v1687 = vadd.f32 %v1455, %v1686
      %v1688 = vpop.f32.mrb[0].mxu0
      %1689 = vmatprep.mubr.bf16.mxu0 %v869
      %1690 = vmatmul.mubr.bf16.gmra.mrb[0].mxu0 %v868
      %v1691 = vpop.f32.mrb[0].mxu0
      %v1692 = vadd.f32 %v1460, %v1691
      %v1693 = vpop.f32.mrb[0].mxu0
      %v1694 = vpop.f32.mrb[0].mxu0
      %v1695 = vadd.f32 %v1463, %v1694
      %v1696 = vpop.f32.mrb[0].mxu0
      %1697 = vmatprep.mubr.bf16.mxu0 %v874
      %1698 = vmatmul.mubr.bf16.gmra.mrb[0].mxu0 %v873
      %v1699 = vpop.f32.mrb[0].mxu0
      %v1700 = vadd.f32 %v1468, %v1699
      %v1701 = vpop.f32.mrb[0].mxu0
      %v1702 = vpop.f32.mrb[0].mxu0
      %v1703 = vadd.f32 %v1471, %v1702
      %v1704 = vpop.f32.mrb[0].mxu0
      %1705 = vmatprep.mubr.bf16.mxu0 %v879
      %1706 = vmatmul.mubr.bf16.gmra.mrb[0].mxu0 %v878
      %v1707 = vpop.f32.mrb[0].mxu0
      %v1708 = vadd.f32 %v1476, %v1707
      %v1709 = vpop.f32.mrb[0].mxu0
      %v1710 = vpop.f32.mrb[0].mxu0
      %v1711 = vadd.f32 %v1479, %v1710
      %v1712 = vpop.f32.mrb[0].mxu0
      %1713 = vmatprep.mubr.bf16.mxu0 %v884
      %1714 = vmatmul.mubr.bf16.gmra.mrb[0].mxu0 %v883
      %v1715 = vpop.f32.mrb[0].mxu0
      %v1716 = vadd.f32 %v1484, %v1715
      %v1717 = vpop.f32.mrb[0].mxu0
      %v1718 = vpop.f32.mrb[0].mxu0
      %v1719 = vadd.f32 %v1487, %v1718
      %v1720 = vpop.f32.mrb[0].mxu0
      %1721 = vmatprep.mubr.bf16.mxu0 %v889
      %1722 = vmatmul.mubr.bf16.gmra.mrb[0].mxu0 %v888
      %v1723 = vpop.f32.mrb[0].mxu0
      %v1724 = vadd.f32 %v1492, %v1723
      %v1725 = vpop.f32.mrb[0].mxu0
      %v1726 = vpop.f32.mrb[0].mxu0
      %v1727 = vadd.f32 %v1495, %v1726
      %v1728 = vpop.f32.mrb[0].mxu0
      %1729 = vmatprep.mubr.bf16.mxu0 %v894
      %1730 = vmatmul.mubr.bf16.gmra.mrb[0].mxu0 %v893
      %v1731 = vpop.f32.mrb[0].mxu0
      %v1732 = vadd.f32 %v1500, %v1731
      %v1733 = vpop.f32.mrb[0].mxu0
      %v1734 = vpop.f32.mrb[0].mxu0
      %v1735 = vadd.f32 %v1503, %v1734
      %v1736 = vpop.f32.mrb[0].mxu0
      %1737 = vmatprep.mubr.bf16.mxu0 %v899
      %1738 = vmatmul.mubr.bf16.gmra.mrb[0].mxu0 %v898
      %v1739 = vpop.f32.mrb[0].mxu0
      %v1740 = vadd.f32 %v1508, %v1739
      %v1741 = vpop.f32.mrb[0].mxu0
      %v1742 = vpop.f32.mrb[0].mxu0
      %v1743 = vadd.f32 %v1511, %v1742
      %v1744 = vpop.f32.mrb[0].mxu0
      %1745 = vmatprep.mubr.bf16.mxu0 %v904
      %1746 = vmatmul.mubr.bf16.gmra.mrb[0].mxu0 %v903
      %v1747 = vpop.f32.mrb[0].mxu0
      %v1748 = vadd.f32 %v1516, %v1747
      %v1749 = vpop.f32.mrb[0].mxu0
      %v1750 = vpop.f32.mrb[0].mxu0
      %v1751 = vadd.f32 %v1519, %v1750
      %v1752 = vpop.f32.mrb[0].mxu0
      %1753 = vmatprep.mubr.bf16.mxu0 %v909
      %1754 = vmatmul.mubr.bf16.gmra.mrb[0].mxu0 %v908
      %v1755 = vpop.f32.mrb[0].mxu0
      %v1756 = vadd.f32 %v1524, %v1755
      %v1757 = vpop.f32.mrb[0].mxu0
      %v1758 = vpop.f32.mrb[0].mxu0
      %v1759 = vadd.f32 %v1527, %v1758
      %v1760 = vpop.f32.mrb[0].mxu0
      %1761 = vmatprep.mubr.bf16.mxu0 %v914
      %1762 = vmatmul.mubr.bf16.gmra.mrb[0].mxu0 %v913
      %v1763 = vpop.f32.mrb[0].mxu0
      %v1764 = vadd.f32 %v1532, %v1763
      %v1765 = vpop.f32.mrb[0].mxu0
      %v1766 = vpop.f32.mrb[0].mxu0
      %v1767 = vadd.f32 %v1535, %v1766
      %v1768 = vpop.f32.mrb[0].mxu0
      %1769 = vmatprep.mubr.bf16.mxu0 %v919
      %1770 = vmatmul.mubr.bf16.gmra.mrb[0].mxu0 %v918
      %v1771 = vpop.f32.mrb[0].mxu0
      %v1772 = vadd.f32 %v1540, %v1771
      %v1773 = vpop.f32.mrb[0].mxu0
      %v1774 = vpop.f32.mrb[0].mxu0
      %v1775 = vpop.f32.mrb[0].mxu0
      %1776 = vdwg.mxu0
      %1777 = vmatprep.subr.bf16.mxu0 0
      %1778 = vmatpush1.bf16.msra.mxu0 %v1197
      %1779 = vmatprep.subr.bf16.mxu0 0
      %1780 = vmatpush1.bf16.msra.mxu0 %v1198
      %1781 = vmatprep.subr.bf16.mxu0 0
      %1782 = vmatpush1.bf16.msra.mxu0 %v1199
      %1783 = vmatprep.subr.bf16.mxu0 0
      %1784 = vmatpush1.bf16.msra.mxu0 %v1200
      %1785 = vmatprep.subr.bf16.mxu0 0
      %1786 = vmatpush1.bf16.msra.mxu0 0
      %1787 = vmatprep.subr.bf16.mxu0 0
      %1788 = vmatpush1.bf16.msra.mxu0 0
      %1789 = vmatprep.subr.bf16.mxu0 0
      %1790 = vmatpush1.bf16.msra.mxu0 0
      %1791 = vmatprep.subr.bf16.mxu0 0
      %1792 = vmatpush1.bf16.msra.mxu0 0
      %1793 = vmatprep.subr.bf16.mxu0 0
      %1794 = vmatpush1.bf16.msra.mxu0 0
      %1795 = vmatprep.subr.bf16.mxu0 0
      %1796 = vmatpush1.bf16.msra.mxu0 0
      %1797 = vmatprep.subr.bf16.mxu0 0
      %1798 = vmatpush1.bf16.msra.mxu0 0
      %1799 = vmatprep.subr.bf16.mxu0 0
      %1800 = vmatpush1.bf16.msra.mxu0 0
      %1801 = vmatprep.subr.bf16.mxu0 0
      %1802 = vmatpush1.bf16.msra.mxu0 0
      %1803 = vmatprep.subr.bf16.mxu0 0
      %1804 = vmatpush1.bf16.msra.mxu0 0
      %1805 = vmatprep.subr.bf16.mxu0 0
      %1806 = vmatpush1.bf16.msra.mxu0 0
      %1807 = vmatprep.subr.bf16.mxu0 0
      %1808 = vmatpush1.bf16.msra.mxu0 0
      %1809 = vmatprep.mubr.bf16.mxu0 0
      %1810 = vmatmul.mubr.bf16.gmra.mrb[0].mxu0 %v1239
      %v1811 = vpop.f32.mrb[0].mxu0
      %v1812 = vadd.f32 %v1580, %v1811
      %v1813 = vpop.f32.mrb[0].mxu0
      %v1814 = vpop.f32.mrb[0].mxu0
      %v1815 = vadd.f32 %v1583, %v1814
      %v1816 = vpop.f32.mrb[0].mxu0
      %1817 = vmatprep.mubr.bf16.mxu0 0
      %1818 = vmatmul.mubr.bf16.gmra.mrb[0].mxu0 %v1242
      %v1819 = vpop.f32.mrb[0].mxu0
      %v1820 = vadd.f32 %v1588, %v1819
      %v1821 = vpop.f32.mrb[0].mxu0
      %v1822 = vpop.f32.mrb[0].mxu0
      %v1823 = vadd.f32 %v1591, %v1822
      %v1824 = vpop.f32.mrb[0].mxu0
      %1825 = vmatprep.mubr.bf16.mxu0 0
      %1826 = vmatmul.mubr.bf16.gmra.mrb[0].mxu0 %v1245
      %v1827 = vpop.f32.mrb[0].mxu0
      %v1828 = vadd.f32 %v1596, %v1827
      %v1829 = vpop.f32.mrb[0].mxu0
      %v1830 = vpop.f32.mrb[0].mxu0
      %v1831 = vadd.f32 %v1599, %v1830
      %v1832 = vpop.f32.mrb[0].mxu0
      %1833 = vmatprep.mubr.bf16.mxu0 0
      %1834 = vmatmul.mubr.bf16.gmra.mrb[0].mxu0 %v1248
      %v1835 = vpop.f32.mrb[0].mxu0
      %v1836 = vadd.f32 %v1604, %v1835
      %v1837 = vpop.f32.mrb[0].mxu0
      %v1838 = vpop.f32.mrb[0].mxu0
      %v1839 = vadd.f32 %v1607, %v1838
      %v1840 = vpop.f32.mrb[0].mxu0
      %1841 = vmatprep.mubr.bf16.mxu0 0
      %1842 = vmatmul.mubr.bf16.gmra.mrb[0].mxu0 %v1251
      %v1843 = vpop.f32.mrb[0].mxu0
      %v1844 = vadd.f32 %v1612, %v1843
      %v1845 = vpop.f32.mrb[0].mxu0
      %v1846 = vpop.f32.mrb[0].mxu0
      %v1847 = vadd.f32 %v1615, %v1846
      %v1848 = vpop.f32.mrb[0].mxu0
      %1849 = vmatprep.mubr.bf16.mxu0 0
      %1850 = vmatmul.mubr.bf16.gmra.mrb[0].mxu0 %v1254
      %v1851 = vpop.f32.mrb[0].mxu0
      %v1852 = vadd.f32 %v1620, %v1851
      %v1853 = vpop.f32.mrb[0].mxu0
      %v1854 = vpop.f32.mrb[0].mxu0
      %v1855 = vadd.f32 %v1623, %v1854
      %v1856 = vpop.f32.mrb[0].mxu0
      %1857 = vmatprep.mubr.bf16.mxu0 0
      %1858 = vmatmul.mubr.bf16.gmra.mrb[0].mxu0 %v1257
      %v1859 = vpop.f32.mrb[0].mxu0
      %v1860 = vadd.f32 %v1628, %v1859
      %v1861 = vpop.f32.mrb[0].mxu0
      %v1862 = vpop.f32.mrb[0].mxu0
      %v1863 = vadd.f32 %v1631, %v1862
      %v1864 = vpop.f32.mrb[0].mxu0
      %1865 = vmatprep.mubr.bf16.mxu0 0
      %1866 = vmatmul.mubr.bf16.gmra.mrb[0].mxu0 %v1260
      %v1867 = vpop.f32.mrb[0].mxu0
      %v1868 = vadd.f32 %v1636, %v1867
      %v1869 = vpop.f32.mrb[0].mxu0
      %v1870 = vpop.f32.mrb[0].mxu0
      %v1871 = vadd.f32 %v1639, %v1870
      %v1872 = vpop.f32.mrb[0].mxu0
      %1873 = vmatprep.mubr.bf16.mxu0 0
      %1874 = vmatmul.mubr.bf16.gmra.mrb[0].mxu0 %v1263
      %v1875 = vpop.f32.mrb[0].mxu0
      %v1876 = vadd.f32 %v1644, %v1875
      %v1877 = vpop.f32.mrb[0].mxu0
      %v1878 = vpop.f32.mrb[0].mxu0
      %v1879 = vadd.f32 %v1647, %v1878
      %v1880 = vpop.f32.mrb[0].mxu0
      %1881 = vmatprep.mubr.bf16.mxu0 0
      %1882 = vmatmul.mubr.bf16.gmra.mrb[0].mxu0 %v1266
      %v1883 = vpop.f32.mrb[0].mxu0
      %v1884 = vadd.f32 %v1652, %v1883
      %v1885 = vpop.f32.mrb[0].mxu0
      %v1886 = vpop.f32.mrb[0].mxu0
      %v1887 = vadd.f32 %v1655, %v1886
      %v1888 = vpop.f32.mrb[0].mxu0
      %1889 = vmatprep.mubr.bf16.mxu0 0
      %1890 = vmatmul.mubr.bf16.gmra.mrb[0].mxu0 %v1269
      %v1891 = vpop.f32.mrb[0].mxu0
      %v1892 = vadd.f32 %v1660, %v1891
      %v1893 = vpop.f32.mrb[0].mxu0
      %v1894 = vpop.f32.mrb[0].mxu0
      %v1895 = vadd.f32 %v1663, %v1894
      %v1896 = vpop.f32.mrb[0].mxu0
      %1897 = vmatprep.mubr.bf16.mxu0 0
      %1898 = vmatmul.mubr.bf16.gmra.mrb[0].mxu0 %v1272
      %v1899 = vpop.f32.mrb[0].mxu0
      %v1900 = vadd.f32 %v1668, %v1899
      %v1901 = vpop.f32.mrb[0].mxu0
      %v1902 = vpop.f32.mrb[0].mxu0
      %v1903 = vadd.f32 %v1671, %v1902
      %v1904 = vpop.f32.mrb[0].mxu0
      %1905 = vmatprep.mubr.bf16.mxu0 0
      %1906 = vmatmul.mubr.bf16.gmra.mrb[0].mxu0 %v1275
      %v1907 = vpop.f32.mrb[0].mxu0
      %v1908 = vadd.f32 %v1676, %v1907
      %v1909 = vpop.f32.mrb[0].mxu0
      %v1910 = vpop.f32.mrb[0].mxu0
      %v1911 = vadd.f32 %v1679, %v1910
      %v1912 = vpop.f32.mrb[0].mxu0
      %1913 = vmatprep.mubr.bf16.mxu0 0
      %1914 = vmatmul.mubr.bf16.gmra.mrb[0].mxu0 %v1278
      %v1915 = vpop.f32.mrb[0].mxu0
      %v1916 = vadd.f32 %v1684, %v1915
      %v1917 = vpop.f32.mrb[0].mxu0
      %v1918 = vpop.f32.mrb[0].mxu0
      %v1919 = vadd.f32 %v1687, %v1918
      %v1920 = vpop.f32.mrb[0].mxu0
      %1921 = vmatprep.mubr.bf16.mxu0 0
      %1922 = vmatmul.mubr.bf16.gmra.mrb[0].mxu0 %v1281
      %v1923 = vpop.f32.mrb[0].mxu0
      %v1924 = vadd.f32 %v1692, %v1923
      %v1925 = vpop.f32.mrb[0].mxu0
      %v1926 = vpop.f32.mrb[0].mxu0
      %v1927 = vadd.f32 %v1695, %v1926
      %v1928 = vpop.f32.mrb[0].mxu0
      %1929 = vmatprep.mubr.bf16.mxu0 0
      %1930 = vmatmul.mubr.bf16.gmra.mrb[0].mxu0 %v1284
      %v1931 = vpop.f32.mrb[0].mxu0
      %v1932 = vadd.f32 %v1700, %v1931
      %v1933 = vpop.f32.mrb[0].mxu0
      %v1934 = vpop.f32.mrb[0].mxu0
      %v1935 = vadd.f32 %v1703, %v1934
      %v1936 = vpop.f32.mrb[0].mxu0
      %1937 = vmatprep.mubr.bf16.mxu0 0
      %1938 = vmatmul.mubr.bf16.gmra.mrb[0].mxu0 %v1287
      %v1939 = vpop.f32.mrb[0].mxu0
      %v1940 = vadd.f32 %v1708, %v1939
      %v1941 = vpop.f32.mrb[0].mxu0
      %v1942 = vpop.f32.mrb[0].mxu0
      %v1943 = vadd.f32 %v1711, %v1942
      %v1944 = vpop.f32.mrb[0].mxu0
      %1945 = vmatprep.mubr.bf16.mxu0 0
      %1946 = vmatmul.mubr.bf16.gmra.mrb[0].mxu0 %v1290
      %v1947 = vpop.f32.mrb[0].mxu0
      %v1948 = vadd.f32 %v1716, %v1947
      %v1949 = vpop.f32.mrb[0].mxu0
      %v1950 = vpop.f32.mrb[0].mxu0
      %v1951 = vadd.f32 %v1719, %v1950
      %v1952 = vpop.f32.mrb[0].mxu0
      %1953 = vmatprep.mubr.bf16.mxu0 0
      %1954 = vmatmul.mubr.bf16.gmra.mrb[0].mxu0 %v1293
      %v1955 = vpop.f32.mrb[0].mxu0
      %v1956 = vadd.f32 %v1724, %v1955
      %v1957 = vpop.f32.mrb[0].mxu0
      %v1958 = vpop.f32.mrb[0].mxu0
      %v1959 = vadd.f32 %v1727, %v1958
      %v1960 = vpop.f32.mrb[0].mxu0
      %1961 = vmatprep.mubr.bf16.mxu0 0
      %1962 = vmatmul.mubr.bf16.gmra.mrb[0].mxu0 %v1296
      %v1963 = vpop.f32.mrb[0].mxu0
      %v1964 = vadd.f32 %v1732, %v1963
      %v1965 = vpop.f32.mrb[0].mxu0
      %v1966 = vpop.f32.mrb[0].mxu0
      %v1967 = vadd.f32 %v1735, %v1966
      %v1968 = vpop.f32.mrb[0].mxu0
      %1969 = vmatprep.mubr.bf16.mxu0 0
      %1970 = vmatmul.mubr.bf16.gmra.mrb[0].mxu0 %v1299
      %v1971 = vpop.f32.mrb[0].mxu0
      %v1972 = vadd.f32 %v1740, %v1971
      %v1973 = vpop.f32.mrb[0].mxu0
      %v1974 = vpop.f32.mrb[0].mxu0
      %v1975 = vadd.f32 %v1743, %v1974
      %v1976 = vpop.f32.mrb[0].mxu0
      %1977 = vmatprep.mubr.bf16.mxu0 0
      %1978 = vmatmul.mubr.bf16.gmra.mrb[0].mxu0 %v1302
      %v1979 = vpop.f32.mrb[0].mxu0
      %v1980 = vadd.f32 %v1748, %v1979
      %v1981 = vpop.f32.mrb[0].mxu0
      %v1982 = vpop.f32.mrb[0].mxu0
      %v1983 = vadd.f32 %v1751, %v1982
      %v1984 = vpop.f32.mrb[0].mxu0
      %1985 = vmatprep.mubr.bf16.mxu0 0
      %1986 = vmatmul.mubr.bf16.gmra.mrb[0].mxu0 %v1305
      %v1987 = vpop.f32.mrb[0].mxu0
      %v1988 = vadd.f32 %v1756, %v1987
      %v1989 = vpop.f32.mrb[0].mxu0
      %v1990 = vpop.f32.mrb[0].mxu0
      %v1991 = vadd.f32 %v1759, %v1990
      %v1992 = vpop.f32.mrb[0].mxu0
      %1993 = vmatprep.mubr.bf16.mxu0 0
      %1994 = vmatmul.mubr.bf16.gmra.mrb[0].mxu0 %v1308
      %v1995 = vpop.f32.mrb[0].mxu0
      %v1996 = vadd.f32 %v1764, %v1995
      %v1997 = vpop.f32.mrb[0].mxu0
      %v1998 = vpop.f32.mrb[0].mxu0
      %v1999 = vadd.f32 %v1767, %v1998
      %v2000 = vpop.f32.mrb[0].mxu0
      %2001 = vmatprep.mubr.bf16.mxu0 0
      %2002 = vmatmul.mubr.bf16.gmra.mrb[0].mxu0 %v1311
      %v2003 = vpop.f32.mrb[0].mxu0
      %v2004 = vadd.f32 %v1772, %v2003
      %v2005 = vpop.f32.mrb[0].mxu0
      %v2006 = vpop.f32.mrb[0].mxu0
      %v2007 = vpop.f32.mrb[0].mxu0
      %2008 = vdwg.mxu0
      %v2009 = vmax.f32 %v1812, 0.0
      %v2010 = vmax.f32 %v1815, 0.0
      %v2011 = vmax.f32 %v1820, 0.0
      %v2012 = vmax.f32 %v1823, 0.0
      %v2013 = vmax.f32 %v1828, 0.0
      %v2014 = vmax.f32 %v1831, 0.0
      %v2015 = vmax.f32 %v1836, 0.0
      %v2016 = vmax.f32 %v1839, 0.0
      %v2017 = vmax.f32 %v1844, 0.0
      %v2018 = vmax.f32 %v1847, 0.0
      %v2019 = vmax.f32 %v1852, 0.0
      %v2020 = vmax.f32 %v1855, 0.0
      %v2021 = vmax.f32 %v1860, 0.0
      %v2022 = vmax.f32 %v1863, 0.0
      %v2023 = vmax.f32 %v1868, 0.0
      %v2024 = vmax.f32 %v1871, 0.0
      %v2025 = vmax.f32 %v1876, 0.0
      %v2026 = vmax.f32 %v1879, 0.0
      %v2027 = vmax.f32 %v1884, 0.0
      %v2028 = vmax.f32 %v1887, 0.0
      %v2029 = vmax.f32 %v1892, 0.0
      %v2030 = vmax.f32 %v1895, 0.0
      %v2031 = vmax.f32 %v1900, 0.0
      %v2032 = vmax.f32 %v1903, 0.0
      %v2033 = vmax.f32 %v1908, 0.0
      %v2034 = vmax.f32 %v1911, 0.0
      %v2035 = vmax.f32 %v1916, 0.0
      %v2036 = vmax.f32 %v1919, 0.0
      %v2037 = vmax.f32 %v1924, 0.0
      %v2038 = vmax.f32 %v1927, 0.0
      %v2039 = vmax.f32 %v1932, 0.0
      %v2040 = vmax.f32 %v1935, 0.0
      %v2041 = vmax.f32 %v1940, 0.0
      %v2042 = vmax.f32 %v1943, 0.0
      %v2043 = vmax.f32 %v1948, 0.0
      %v2044 = vmax.f32 %v1951, 0.0
      %v2045 = vmax.f32 %v1956, 0.0
      %v2046 = vmax.f32 %v1959, 0.0
      %v2047 = vmax.f32 %v1964, 0.0
      %v2048 = vmax.f32 %v1967, 0.0
      %v2049 = vmax.f32 %v1972, 0.0
      %v2050 = vmax.f32 %v1975, 0.0
      %v2051 = vmax.f32 %v1980, 0.0
      %v2052 = vmax.f32 %v1983, 0.0
      %v2053 = vmax.f32 %v1988, 0.0
      %v2054 = vmax.f32 %v1991, 0.0
      %v2055 = vmax.f32 %v1996, 0.0
      %v2056 = vmax.f32 %v1999, 0.0
      %v2057 = vmax.f32 %v2004, 0.0
      %v2058 = vpack.c.bf16 %v2010, %v2009
      %v2059 = vpack.c.bf16 %v2012, %v2011
      %v2060 = vpack.c.bf16 %v2014, %v2013
      %v2061 = vpack.c.bf16 %v2016, %v2015
      %v2062 = vpack.c.bf16 %v2018, %v2017
      %v2063 = vpack.c.bf16 %v2020, %v2019
      %v2064 = vpack.c.bf16 %v2022, %v2021
      %v2065 = vpack.c.bf16 %v2024, %v2023
      %v2066 = vpack.c.bf16 %v2026, %v2025
      %v2067 = vpack.c.bf16 %v2028, %v2027
      %v2068 = vpack.c.bf16 %v2030, %v2029
      %v2069 = vpack.c.bf16 %v2032, %v2031
      %v2070 = vpack.c.bf16 %v2034, %v2033
      %v2071 = vpack.c.bf16 %v2036, %v2035
      %v2072 = vpack.c.bf16 %v2038, %v2037
      %v2073 = vpack.c.bf16 %v2040, %v2039
      %v2074 = vpack.c.bf16 %v2042, %v2041
      %v2075 = vpack.c.bf16 %v2044, %v2043
      %v2076 = vpack.c.bf16 %v2046, %v2045
      %v2077 = vpack.c.bf16 %v2048, %v2047
      %v2078 = vpack.c.bf16 %v2050, %v2049
      %v2079 = vpack.c.bf16 %v2052, %v2051
      %v2080 = vpack.c.bf16 %v2054, %v2053
      %v2081 = vpack.c.bf16 %v2056, %v2055
      %v2082 = vpack.c.bf16 %v2057, %v2057
      %v2108 = vunpack.c.l.b16 %v2058
      %v2109 = vunpack.c.h.b16 %v2058
      %v2110 = vunpack.c.l.b16 %v2059
      %v2111 = vunpack.c.h.b16 %v2059
      %v2112 = vunpack.c.l.b16 %v2060
      %v2113 = vunpack.c.h.b16 %v2060
      %v2114 = vunpack.c.l.b16 %v2061
      %v2115 = vunpack.c.h.b16 %v2061
      %v2116 = vunpack.c.l.b16 %v2062
      %v2117 = vunpack.c.h.b16 %v2062
      %v2118 = vunpack.c.l.b16 %v2063
      %v2119 = vunpack.c.h.b16 %v2063
      %v2120 = vunpack.c.l.b16 %v2064
      %v2121 = vunpack.c.h.b16 %v2064
      %v2122 = vunpack.c.l.b16 %v2065
      %v2123 = vunpack.c.h.b16 %v2065
      %v2124 = vunpack.c.l.b16 %v2066
      %v2125 = vunpack.c.h.b16 %v2066
      %v2126 = vunpack.c.l.b16 %v2067
      %v2127 = vunpack.c.h.b16 %v2067
      %v2128 = vunpack.c.l.b16 %v2068
      %v2129 = vunpack.c.h.b16 %v2068
      %v2130 = vunpack.c.l.b16 %v2069
      %v2131 = vunpack.c.h.b16 %v2069
      %v2132 = vunpack.c.l.b16 %v2070
      %v2133 = vunpack.c.h.b16 %v2070
      %v2134 = vunpack.c.l.b16 %v2071
      %v2135 = vunpack.c.h.b16 %v2071
      %v2136 = vunpack.c.l.b16 %v2072
      %v2137 = vunpack.c.h.b16 %v2072
      %v2138 = vunpack.c.l.b16 %v2073
      %v2139 = vunpack.c.h.b16 %v2073
      %v2140 = vunpack.c.l.b16 %v2074
      %v2141 = vunpack.c.h.b16 %v2074
      %v2142 = vunpack.c.l.b16 %v2075
      %v2143 = vunpack.c.h.b16 %v2075
      %v2144 = vunpack.c.l.b16 %v2076
      %v2145 = vunpack.c.h.b16 %v2076
      %v2146 = vunpack.c.l.b16 %v2077
      %v2147 = vunpack.c.h.b16 %v2077
      %v2148 = vunpack.c.l.b16 %v2078
      %v2149 = vunpack.c.h.b16 %v2078
      %v2150 = vunpack.c.l.b16 %v2079
      %v2151 = vunpack.c.h.b16 %v2079
      %v2152 = vunpack.c.l.b16 %v2080
      %v2153 = vunpack.c.h.b16 %v2080
      %v2154 = vunpack.c.l.b16 %v2081
      %v2155 = vunpack.c.h.b16 %v2081
      %v2156 = vunpack.c.l.b16 %v2082
      %v2157 = vpack.c.b16 %v2108, %v2108
      %v2158 = vpack.c.b16 %v2109, %v2109
      %v2159 = vpack.c.b16 %v2110, %v2110
      %v2160 = vpack.c.b16 %v2111, %v2111
      %v2161 = vpack.c.b16 %v2112, %v2112
      %v2162 = vpack.c.b16 %v2113, %v2113
      %v2163 = vpack.c.b16 %v2114, %v2114
      %v2164 = vpack.c.b16 %v2115, %v2115
      %v2165 = vpack.c.b16 %v2116, %v2116
      %v2166 = vpack.c.b16 %v2117, %v2117
      %v2167 = vpack.c.b16 %v2118, %v2118
      %v2168 = vpack.c.b16 %v2119, %v2119
      %v2169 = vpack.c.b16 %v2120, %v2120
      %v2170 = vpack.c.b16 %v2121, %v2121
      %v2171 = vpack.c.b16 %v2122, %v2122
      %v2172 = vpack.c.b16 %v2123, %v2123
      %v2173 = vpack.c.b16 %v2124, %v2124
      %v2174 = vpack.c.b16 %v2125, %v2125
      %v2175 = vpack.c.b16 %v2126, %v2126
      %v2176 = vpack.c.b16 %v2127, %v2127
      %v2177 = vpack.c.b16 %v2128, %v2128
      %v2178 = vpack.c.b16 %v2129, %v2129
      %v2179 = vpack.c.b16 %v2130, %v2130
      %v2180 = vpack.c.b16 %v2131, %v2131
      %v2181 = vpack.c.b16 %v2132, %v2132
      %v2182 = vpack.c.b16 %v2133, %v2133
      %v2183 = vpack.c.b16 %v2134, %v2134
      %v2184 = vpack.c.b16 %v2135, %v2135
      %v2185 = vpack.c.b16 %v2136, %v2136
      %v2186 = vpack.c.b16 %v2137, %v2137
      %v2187 = vpack.c.b16 %v2138, %v2138
      %v2188 = vpack.c.b16 %v2139, %v2139
      %v2189 = vpack.c.b16 %v2140, %v2140
      %v2190 = vpack.c.b16 %v2141, %v2141
      %v2191 = vpack.c.b16 %v2142, %v2142
      %v2192 = vpack.c.b16 %v2143, %v2143
      %v2193 = vpack.c.b16 %v2144, %v2144
      %v2194 = vpack.c.b16 %v2145, %v2145
      %v2195 = vpack.c.b16 %v2146, %v2146
      %v2196 = vpack.c.b16 %v2147, %v2147
      %v2197 = vpack.c.b16 %v2148, %v2148
      %v2198 = vpack.c.b16 %v2149, %v2149
      %v2199 = vpack.c.b16 %v2150, %v2150
      %v2200 = vpack.c.b16 %v2151, %v2151
      %v2201 = vpack.c.b16 %v2152, %v2152
      %v2202 = vpack.c.b16 %v2153, %v2153
      %v2203 = vpack.c.b16 %v2154, %v2154
      %v2204 = vpack.c.b16 %v2155, %v2155
      %v2205 = vpack.c.b16 %v2156, %v2156
      %2255 = vst [vmem:[%s175] sm:$0xf] %v2157
      %2256 = vst [vmem:[%s175 + $0x4] sm:$0xf] %v2158
      %2257 = vst [vmem:[%s175 + $0x8] sm:$0xf] %v2159
      %2258 = vst [vmem:[%s175 + $0xc] sm:$0xf] %v2160
      %2259 = vst [vmem:[%s175 + $0x10] sm:$0xf] %v2161
      %2260 = vst [vmem:[%s175 + $0x14] sm:$0xf] %v2162
      %2261 = vst [vmem:[%s175 + $0x18] sm:$0xf] %v2163
      %2262 = vst [vmem:[%s175 + $0x1c] sm:$0xf] %v2164
      %2263 = vst [vmem:[%s175 + $0x20] sm:$0xf] %v2165
      %2264 = vst [vmem:[%s175 + $0x24] sm:$0xf] %v2166
      %2265 = vst [vmem:[%s175 + $0x28] sm:$0xf] %v2167
      %2266 = vst [vmem:[%s175 + $0x2c] sm:$0xf] %v2168
      %2267 = vst [vmem:[%s175 + $0x30] sm:$0xf] %v2169
      %2268 = vst [vmem:[%s175 + $0x34] sm:$0xf] %v2170
      %2269 = vst [vmem:[%s175 + $0x38] sm:$0xf] %v2171
      %2270 = vst [vmem:[%s175 + $0x3c] sm:$0xf] %v2172
      %2271 = vst [vmem:[%s175 + $0x40] sm:$0xf] %v2173
      %2272 = vst [vmem:[%s175 + $0x44] sm:$0xf] %v2174
      %2273 = vst [vmem:[%s175 + $0x48] sm:$0xf] %v2175
      %2274 = vst [vmem:[%s175 + $0x4c] sm:$0xf] %v2176
      %2275 = vst [vmem:[%s175 + $0x50] sm:$0xf] %v2177
      %2276 = vst [vmem:[%s175 + $0x54] sm:$0xf] %v2178
      %2277 = vst [vmem:[%s175 + $0x58] sm:$0xf] %v2179
      %2278 = vst [vmem:[%s175 + $0x5c] sm:$0xf] %v2180
      %2279 = vst [vmem:[%s175 + $0x60] sm:$0xf] %v2181
      %2280 = vst [vmem:[%s175 + $0x64] sm:$0xf] %v2182
      %2281 = vst [vmem:[%s175 + $0x68] sm:$0xf] %v2183
      %2282 = vst [vmem:[%s175 + $0x6c] sm:$0xf] %v2184
      %2283 = vst [vmem:[%s175 + $0x70] sm:$0xf] %v2185
      %2284 = vst [vmem:[%s175 + $0x74] sm:$0xf] %v2186
      %2285 = vst [vmem:[%s175 + $0x78] sm:$0xf] %v2187
      %2286 = vst [vmem:[%s175 + $0x7c] sm:$0xf] %v2188
      %2287 = vst [vmem:[%s175 + $0x80] sm:$0xf] %v2189
      %2288 = vst [vmem:[%s175 + $0x84] sm:$0xf] %v2190
      %2289 = vst [vmem:[%s175 + $0x88] sm:$0xf] %v2191
      %2290 = vst [vmem:[%s175 + $0x8c] sm:$0xf] %v2192
      %2291 = vst [vmem:[%s175 + $0x90] sm:$0xf] %v2193
      %2292 = vst [vmem:[%s175 + $0x94] sm:$0xf] %v2194
      %2293 = vst [vmem:[%s175 + $0x98] sm:$0xf] %v2195
      %2294 = vst [vmem:[%s175 + $0x9c] sm:$0xf] %v2196
      %2295 = vst [vmem:[%s175 + $0xa0] sm:$0xf] %v2197
      %2296 = vst [vmem:[%s175 + $0xa4] sm:$0xf] %v2198
      %2297 = vst [vmem:[%s175 + $0xa8] sm:$0xf] %v2199
      %2298 = vst [vmem:[%s175 + $0xac] sm:$0xf] %v2200
      %2299 = vst [vmem:[%s175 + $0xb0] sm:$0xf] %v2201
      %2300 = vst [vmem:[%s175 + $0xb4] sm:$0xf] %v2202
      %2301 = vst [vmem:[%s175 + $0xb8] sm:$0xf] %v2203
      %2302 = vst [vmem:[%s175 + $0xbc] sm:$0xf] %v2204
      %2303 = vst [vmem:[%s175 + $0xc0] sm:$0xf] %v2205
      %s2304 = smul.u32 49, %s14
      %p2305 = scmp.lt.s32.totalorder %s2304, 195
      %s2306 = scalar_select %p2305, %s2304, 195
      %s2307 = smul.addr %s2306, 4
      %s2308 = scalar_lea.vmem %s3, %s2307
      // Predicated region
      $region33: #{faster_rcnn_forward.16} parent=31 // pred_check
        %p2309 = pneg %p100
      $region34: #{faster_rcnn_forward.16} parent=31 // pred_check_branch
        %2311 = sbr.rel (%p2309) target = $region36
      $region35: #{faster_rcnn_forward.16} parent=31 // pred_region
        %s2312 = smul.u32 49, %s14
      $region36: #{faster_rcnn_forward.16} parent=31 // pred_fallthru
        _
    $region32: #{faster_rcnn_forward.16} parent=5 // pred_fallthru
      _
    %p2313 = scmp.le.s32.totalorder 2, %s9
    // Predicated region
    $region37: #{faster_rcnn_forward.16} parent=5 // pred_check
      %p2314 = pneg %p2313
    $region38: #{faster_rcnn_forward.16} parent=5 // pred_check_branch
      %2316 = sbr.rel (%p2314) target = $region40
    $region39: #{faster_rcnn_forward.16} parent=5 // pred_region
      %s2317 = ssub.s32 %s9, 2
      // Predicated region
      $region41: #{faster_rcnn_forward.16} parent=39 // pred_check
        %p2318 = pneg %p106
      $region42: #{faster_rcnn_forward.16} parent=39 // pred_check_branch
        %2320 = sbr.rel (%p2318) target = $region44
      $region43: #{faster_rcnn_forward.16} parent=39 // pred_region
        %s2321 = smul.u32 49, %s15
        %p2322 = scmp.lt.s32.totalorder %s2321, 195
        %s2323 = scalar_select %p2322, %s2321, 195
        %s2324 = smul.addr %s2323, 4
        %s2325 = scalar_lea.vmem %s3, %s2324
      $region44: #{faster_rcnn_forward.16} parent=39 // pred_fallthru
        _
    $region40: #{faster_rcnn_forward.16} parent=5 // pred_fallthru
      _
  $region6: #{faster_rcnn_forward.16} parent=0 // loop_footer
    %s13 = sadd.s32 1, %s9
  $region7: #{faster_rcnn_forward.16} parent=0 // loop_footer_branch
    %8 = sbr.rel target = $region3
  $region8: #{faster_rcnn_forward.16} parent=0 // loop_exit
    _

// kernel: faster_rcnn_forward.17
$region0: #{faster_rcnn_forward.17}
  #allocation0 [shape = 'u32[]', space=smem, size = 0x4, offset = 0x4, fixed_abs, tag = 'smem constant byte address 0x4 - core index']
  #allocation1 [shape = 'u32[144,128]{1,0:T(1,128)}', space=vmem, size = 0x12000, scoped, tag = 'internal scratch']
  %s0 = inlined_call_operand.vmem [shape: bf16[32,49,128], index: 0, kind: input, shape index: {}]
  %s1 = inlined_call_operand.vmem [shape: bf16[128,128], index: 1, kind: input, shape index: {}]
  %s2 = inlined_call_operand.vmem [shape: f32[1,128], index: 2, kind: input, shape index: {}]
  %s3 = inlined_call_operand.vmem [shape: f32[32,128], index: 3, kind: output, shape index: {}]
  %s4 = sld [smem:[#allocation0]]
  $region22: #{faster_rcnn_forward.17} parent=0
    _
  %s6 = ssub.s32 1, %s4
  %s7 = scalar_select 0, %s6, %s4
  // Predicated region
  $region2: #{faster_rcnn_forward.17} parent=0 // pred_check
    _
  $region3: #{faster_rcnn_forward.17} parent=0 // pred_check_branch
    %9 = sbr.rel (0) target = $region5
  $region4: #{faster_rcnn_forward.17} parent=0 // pred_region
    _
  $region5: #{faster_rcnn_forward.17} parent=0 // pred_fallthru
    _
  // Predicated region
  $region6: #{faster_rcnn_forward.17} parent=0 // pred_check
    _
  $region7: #{faster_rcnn_forward.17} parent=0 // pred_check_branch
    %11 = sbr.rel (0) target = $region9
  $region8: #{faster_rcnn_forward.17} parent=0 // pred_region
    _
  $region9: #{faster_rcnn_forward.17} parent=0 // pred_fallthru
    _
  // Predicated region
  $region10: #{faster_rcnn_forward.17} parent=0 // pred_check
    _
  $region11: #{faster_rcnn_forward.17} parent=0 // pred_check_branch
    %13 = sbr.rel (0) target = $region13
  $region12: #{faster_rcnn_forward.17} parent=0 // pred_region
    _
  $region13: #{faster_rcnn_forward.17} parent=0 // pred_fallthru
    _
  %v15 = vld [vmem:[%s0] sm:$0xf]
  %v16 = vld [vmem:[%s0 + $0x4] sm:$0xf]
  %v17 = vld [vmem:[%s0 + $0x8] sm:$0xf]
  %v18 = vld [vmem:[%s0 + $0xc] sm:$0xf]
  %v19 = vld [vmem:[%s0 + $0x10] sm:$0xf]
  %v20 = vld [vmem:[%s0 + $0x14] sm:$0xf]
  %v21 = vld [vmem:[%s0 + $0x18] sm:$0x1]
  %v22 = vld [vmem:[%s0 + $0x1c] sm:$0xf]
  %v23 = vld [vmem:[%s0 + $0x20] sm:$0xf]
  %v24 = vld [vmem:[%s0 + $0x24] sm:$0xf]
  %v25 = vld [vmem:[%s0 + $0x28] sm:$0xf]
  %v26 = vld [vmem:[%s0 + $0x2c] sm:$0xf]
  %v27 = vld [vmem:[%s0 + $0x30] sm:$0xf]
  %v28 = vld [vmem:[%s0 + $0x34] sm:$0x1]
  %v29 = vld [vmem:[%s0 + $0x38] sm:$0xf]
  %v30 = vld [vmem:[%s0 + $0x3c] sm:$0xf]
  %v31 = vld [vmem:[%s0 + $0x40] sm:$0xf]
  %v32 = vld [vmem:[%s0 + $0x44] sm:$0xf]
  %v33 = vld [vmem:[%s0 + $0x48] sm:$0xf]
  %v34 = vld [vmem:[%s0 + $0x4c] sm:$0xf]
  %v35 = vld [vmem:[%s0 + $0x50] sm:$0x1]
  %v36 = vld [vmem:[%s0 + $0x54] sm:$0xf]
  %v37 = vld [vmem:[%s0 + $0x58] sm:$0xf]
  %v38 = vld [vmem:[%s0 + $0x5c] sm:$0xf]
  %v39 = vld [vmem:[%s0 + $0x60] sm:$0xf]
  %v40 = vld [vmem:[%s0 + $0x64] sm:$0xf]
  %v41 = vld [vmem:[%s0 + $0x68] sm:$0xf]
  %v42 = vld [vmem:[%s0 + $0x6c] sm:$0x1]
  %v43 = vld [vmem:[%s0 + $0x70] sm:$0xf]
  %v44 = vld [vmem:[%s0 + $0x74] sm:$0xf]
  %v45 = vld [vmem:[%s0 + $0x78] sm:$0xf]
  %v46 = vld [vmem:[%s0 + $0x7c] sm:$0xf]
  %v47 = vld [vmem:[%s0 + $0x80] sm:$0xf]
  %v48 = vld [vmem:[%s0 + $0x84] sm:$0xf]
  %v49 = vld [vmem:[%s0 + $0x88] sm:$0x1]
  %v50 = vld [vmem:[%s0 + $0x8c] sm:$0xf]
  %v51 = vld [vmem:[%s0 + $0x90] sm:$0xf]
  %v52 = vld [vmem:[%s0 + $0x94] sm:$0xf]
  %v53 = vld [vmem:[%s0 + $0x98] sm:$0xf]
  %v54 = vld [vmem:[%s0 + $0x9c] sm:$0xf]
  %v55 = vld [vmem:[%s0 + $0xa0] sm:$0xf]
  %v56 = vld [vmem:[%s0 + $0xa4] sm:$0x1]
  %v57 = vld [vmem:[%s0 + $0xa8] sm:$0xf]
  %v58 = vld [vmem:[%s0 + $0xac] sm:$0xf]
  %v59 = vld [vmem:[%s0 + $0xb0] sm:$0xf]
  %v60 = vld [vmem:[%s0 + $0xb4] sm:$0xf]
  %v61 = vld [vmem:[%s0 + $0xb8] sm:$0xf]
  %v62 = vld [vmem:[%s0 + $0xbc] sm:$0xf]
  %v63 = vld [vmem:[%s0 + $0xc0] sm:$0x1]
  %v64 = vld [vmem:[%s0 + $0xc4] sm:$0xf]
  %v65 = vld [vmem:[%s0 + $0xc8] sm:$0xf]
  %v66 = vld [vmem:[%s0 + $0xcc] sm:$0xf]
  %v67 = vld [vmem:[%s0 + $0xd0] sm:$0xf]
  %v68 = vld [vmem:[%s0 + $0xd4] sm:$0xf]
  %v69 = vld [vmem:[%s0 + $0xd8] sm:$0xf]
  %v70 = vld [vmem:[%s0 + $0xdc] sm:$0x1]
  %v71 = vld [vmem:[%s0 + $0xe0] sm:$0xf]
  %v72 = vld [vmem:[%s0 + $0xe4] sm:$0xf]
  %v73 = vld [vmem:[%s0 + $0xe8] sm:$0xf]
  %v74 = vld [vmem:[%s0 + $0xec] sm:$0xf]
  %v75 = vld [vmem:[%s0 + $0xf0] sm:$0xf]
  %v76 = vld [vmem:[%s0 + $0xf4] sm:$0xf]
  %v77 = vld [vmem:[%s0 + $0xf8] sm:$0x1]
  %v78 = vld [vmem:[%s0 + $0xfc] sm:$0xf]
  %v79 = vld [vmem:[%s0 + $0x100] sm:$0xf]
  %v80 = vld [vmem:[%s0 + $0x104] sm:$0xf]
  %v81 = vld [vmem:[%s0 + $0x108] sm:$0xf]
  %v82 = vld [vmem:[%s0 + $0x10c] sm:$0xf]
  %v83 = vld [vmem:[%s0 + $0x110] sm:$0xf]
  %v84 = vld [vmem:[%s0 + $0x114] sm:$0x1]
  %v85 = vld [vmem:[%s0 + $0x118] sm:$0xf]
  %v86 = vld [vmem:[%s0 + $0x11c] sm:$0xf]
  %v87 = vld [vmem:[%s0 + $0x120] sm:$0xf]
  %v88 = vld [vmem:[%s0 + $0x124] sm:$0xf]
  %v89 = vld [vmem:[%s0 + $0x128] sm:$0xf]
  %v90 = vld [vmem:[%s0 + $0x12c] sm:$0xf]
  %v91 = vld [vmem:[%s0 + $0x130] sm:$0x1]
  %v92 = vld [vmem:[%s0 + $0x134] sm:$0xf]
  %v93 = vld [vmem:[%s0 + $0x138] sm:$0xf]
  %v94 = vld [vmem:[%s0 + $0x13c] sm:$0xf]
  %v95 = vld [vmem:[%s0 + $0x140] sm:$0xf]
  %v96 = vld [vmem:[%s0 + $0x144] sm:$0xf]
  %v97 = vld [vmem:[%s0 + $0x148] sm:$0xf]
  %v98 = vld [vmem:[%s0 + $0x14c] sm:$0x1]
  %v99 = vld [vmem:[%s0 + $0x150] sm:$0xf]
  %v100 = vld [vmem:[%s0 + $0x154] sm:$0xf]
  %v101 = vld [vmem:[%s0 + $0x158] sm:$0xf]
  %v102 = vld [vmem:[%s0 + $0x15c] sm:$0xf]
  %v103 = vld [vmem:[%s0 + $0x160] sm:$0xf]
  %v104 = vld [vmem:[%s0 + $0x164] sm:$0xf]
  %v105 = vld [vmem:[%s0 + $0x168] sm:$0x1]
  %v106 = vld [vmem:[%s0 + $0x16c] sm:$0xf]
  %v107 = vld [vmem:[%s0 + $0x170] sm:$0xf]
  %v108 = vld [vmem:[%s0 + $0x174] sm:$0xf]
  %v109 = vld [vmem:[%s0 + $0x178] sm:$0xf]
  %v110 = vld [vmem:[%s0 + $0x17c] sm:$0xf]
  %v111 = vld [vmem:[%s0 + $0x180] sm:$0xf]
  %v112 = vld [vmem:[%s0 + $0x184] sm:$0x1]
  %v113 = vld [vmem:[%s0 + $0x188] sm:$0xf]
  %v114 = vld [vmem:[%s0 + $0x18c] sm:$0xf]
  %v115 = vld [vmem:[%s0 + $0x190] sm:$0xf]
  %v116 = vld [vmem:[%s0 + $0x194] sm:$0xf]
  %v117 = vld [vmem:[%s0 + $0x198] sm:$0xf]
  %v118 = vld [vmem:[%s0 + $0x19c] sm:$0xf]
  %v119 = vld [vmem:[%s0 + $0x1a0] sm:$0x1]
  %v120 = vld [vmem:[%s0 + $0x1a4] sm:$0xf]
  %v121 = vld [vmem:[%s0 + $0x1a8] sm:$0xf]
  %v122 = vld [vmem:[%s0 + $0x1ac] sm:$0xf]
  %v123 = vld [vmem:[%s0 + $0x1b0] sm:$0xf]
  %v124 = vld [vmem:[%s0 + $0x1b4] sm:$0xf]
  %v125 = vld [vmem:[%s0 + $0x1b8] sm:$0xf]
  %v126 = vld [vmem:[%s0 + $0x1bc] sm:$0x1]
  %v127 = vld [vmem:[%s0 + $0x1c0] sm:$0xf]
  %v128 = vld [vmem:[%s0 + $0x1c4] sm:$0xf]
  %v129 = vld [vmem:[%s0 + $0x1c8] sm:$0xf]
  %v130 = vld [vmem:[%s0 + $0x1cc] sm:$0xf]
  %v131 = vld [vmem:[%s0 + $0x1d0] sm:$0xf]
  %v132 = vld [vmem:[%s0 + $0x1d4] sm:$0xf]
  %v133 = vld [vmem:[%s0 + $0x1d8] sm:$0x1]
  %v134 = vld [vmem:[%s0 + $0x1dc] sm:$0xf]
  %v135 = vld [vmem:[%s0 + $0x1e0] sm:$0xf]
  %v136 = vld [vmem:[%s0 + $0x1e4] sm:$0xf]
  %v137 = vld [vmem:[%s0 + $0x1e8] sm:$0xf]
  %v138 = vld [vmem:[%s0 + $0x1ec] sm:$0xf]
  %v139 = vld [vmem:[%s0 + $0x1f0] sm:$0xf]
  %v140 = vld [vmem:[%s0 + $0x1f4] sm:$0x1]
  %v141 = vld [vmem:[%s0 + $0x1f8] sm:$0xf]
  %v142 = vld [vmem:[%s0 + $0x1fc] sm:$0xf]
  %v143 = vld [vmem:[%s0 + $0x200] sm:$0xf]
  %v144 = vld [vmem:[%s0 + $0x204] sm:$0xf]
  %v145 = vld [vmem:[%s0 + $0x208] sm:$0xf]
  %v146 = vld [vmem:[%s0 + $0x20c] sm:$0xf]
  %v147 = vld [vmem:[%s0 + $0x210] sm:$0x1]
  %v148 = vld [vmem:[%s0 + $0x214] sm:$0xf]
  %v149 = vld [vmem:[%s0 + $0x218] sm:$0xf]
  %v150 = vld [vmem:[%s0 + $0x21c] sm:$0xf]
  %v151 = vld [vmem:[%s0 + $0x220] sm:$0xf]
  %v152 = vld [vmem:[%s0 + $0x224] sm:$0xf]
  %v153 = vld [vmem:[%s0 + $0x228] sm:$0xf]
  %v154 = vld [vmem:[%s0 + $0x22c] sm:$0x1]
  %v155 = vld [vmem:[%s0 + $0x230] sm:$0xf]
  %v156 = vld [vmem:[%s0 + $0x234] sm:$0xf]
  %v157 = vld [vmem:[%s0 + $0x238] sm:$0xf]
  %v158 = vld [vmem:[%s0 + $0x23c] sm:$0xf]
  %v159 = vld [vmem:[%s0 + $0x240] sm:$0xf]
  %v160 = vld [vmem:[%s0 + $0x244] sm:$0xf]
  %v161 = vld [vmem:[%s0 + $0x248] sm:$0x1]
  %v162 = vld [vmem:[%s0 + $0x24c] sm:$0xf]
  %v163 = vld [vmem:[%s0 + $0x250] sm:$0xf]
  %v164 = vld [vmem:[%s0 + $0x254] sm:$0xf]
  %v165 = vld [vmem:[%s0 + $0x258] sm:$0xf]
  %v166 = vld [vmem:[%s0 + $0x25c] sm:$0xf]
  %v167 = vld [vmem:[%s0 + $0x260] sm:$0xf]
  %v168 = vld [vmem:[%s0 + $0x264] sm:$0x1]
  %v169 = vld [vmem:[%s0 + $0x268] sm:$0xf]
  %v170 = vld [vmem:[%s0 + $0x26c] sm:$0xf]
  %v171 = vld [vmem:[%s0 + $0x270] sm:$0xf]
  %v172 = vld [vmem:[%s0 + $0x274] sm:$0xf]
  %v173 = vld [vmem:[%s0 + $0x278] sm:$0xf]
  %v174 = vld [vmem:[%s0 + $0x27c] sm:$0xf]
  %v175 = vld [vmem:[%s0 + $0x280] sm:$0x1]
  %v176 = vld [vmem:[%s0 + $0x284] sm:$0xf]
  %v177 = vld [vmem:[%s0 + $0x288] sm:$0xf]
  %v178 = vld [vmem:[%s0 + $0x28c] sm:$0xf]
  %v179 = vld [vmem:[%s0 + $0x290] sm:$0xf]
  %v180 = vld [vmem:[%s0 + $0x294] sm:$0xf]
  %v181 = vld [vmem:[%s0 + $0x298] sm:$0xf]
  %v182 = vld [vmem:[%s0 + $0x29c] sm:$0x1]
  %v183 = vld [vmem:[%s0 + $0x2a0] sm:$0xf]
  %v184 = vld [vmem:[%s0 + $0x2a4] sm:$0xf]
  %v185 = vld [vmem:[%s0 + $0x2a8] sm:$0xf]
  %v186 = vld [vmem:[%s0 + $0x2ac] sm:$0xf]
  %v187 = vld [vmem:[%s0 + $0x2b0] sm:$0xf]
  %v188 = vld [vmem:[%s0 + $0x2b4] sm:$0xf]
  %v189 = vld [vmem:[%s0 + $0x2b8] sm:$0x1]
  %v190 = vld [vmem:[%s0 + $0x2bc] sm:$0xf]
  %v191 = vld [vmem:[%s0 + $0x2c0] sm:$0xf]
  %v192 = vld [vmem:[%s0 + $0x2c4] sm:$0xf]
  %v193 = vld [vmem:[%s0 + $0x2c8] sm:$0xf]
  %v194 = vld [vmem:[%s0 + $0x2cc] sm:$0xf]
  %v195 = vld [vmem:[%s0 + $0x2d0] sm:$0xf]
  %v196 = vld [vmem:[%s0 + $0x2d4] sm:$0x1]
  %v197 = vld [vmem:[%s0 + $0x2d8] sm:$0xf]
  %v198 = vld [vmem:[%s0 + $0x2dc] sm:$0xf]
  %v199 = vld [vmem:[%s0 + $0x2e0] sm:$0xf]
  %v200 = vld [vmem:[%s0 + $0x2e4] sm:$0xf]
  %v201 = vld [vmem:[%s0 + $0x2e8] sm:$0xf]
  %v202 = vld [vmem:[%s0 + $0x2ec] sm:$0xf]
  %v203 = vld [vmem:[%s0 + $0x2f0] sm:$0x1]
  %v204 = vld [vmem:[%s0 + $0x2f4] sm:$0xf]
  %v205 = vld [vmem:[%s0 + $0x2f8] sm:$0xf]
  %v206 = vld [vmem:[%s0 + $0x2fc] sm:$0xf]
  %v207 = vld [vmem:[%s0 + $0x300] sm:$0xf]
  %v208 = vld [vmem:[%s0 + $0x304] sm:$0xf]
  %v209 = vld [vmem:[%s0 + $0x308] sm:$0xf]
  %v210 = vld [vmem:[%s0 + $0x30c] sm:$0x1]
  %v211 = vld [vmem:[%s0 + $0x310] sm:$0xf]
  %v212 = vld [vmem:[%s0 + $0x314] sm:$0xf]
  %v213 = vld [vmem:[%s0 + $0x318] sm:$0xf]
  %v214 = vld [vmem:[%s0 + $0x31c] sm:$0xf]
  %v215 = vld [vmem:[%s0 + $0x320] sm:$0xf]
  %v216 = vld [vmem:[%s0 + $0x324] sm:$0xf]
  %v217 = vld [vmem:[%s0 + $0x328] sm:$0x1]
  %v218 = vld [vmem:[%s0 + $0x32c] sm:$0xf]
  %v219 = vld [vmem:[%s0 + $0x330] sm:$0xf]
  %v220 = vld [vmem:[%s0 + $0x334] sm:$0xf]
  %v221 = vld [vmem:[%s0 + $0x338] sm:$0xf]
  %v222 = vld [vmem:[%s0 + $0x33c] sm:$0xf]
  %v223 = vld [vmem:[%s0 + $0x340] sm:$0xf]
  %v224 = vld [vmem:[%s0 + $0x344] sm:$0x1]
  %v225 = vld [vmem:[%s0 + $0x348] sm:$0xf]
  %v226 = vld [vmem:[%s0 + $0x34c] sm:$0xf]
  %v227 = vld [vmem:[%s0 + $0x350] sm:$0xf]
  %v228 = vld [vmem:[%s0 + $0x354] sm:$0xf]
  %v229 = vld [vmem:[%s0 + $0x358] sm:$0xf]
  %v230 = vld [vmem:[%s0 + $0x35c] sm:$0xf]
  %v231 = vld [vmem:[%s0 + $0x360] sm:$0x1]
  %v232 = vld [vmem:[%s0 + $0x364] sm:$0xf]
  %v233 = vld [vmem:[%s0 + $0x368] sm:$0xf]
  %v234 = vld [vmem:[%s0 + $0x36c] sm:$0xf]
  %v235 = vld [vmem:[%s0 + $0x370] sm:$0xf]
  %v236 = vld [vmem:[%s0 + $0x374] sm:$0xf]
  %v237 = vld [vmem:[%s0 + $0x378] sm:$0xf]
  %v238 = vld [vmem:[%s0 + $0x37c] sm:$0x1]
  %v239 = vunpack.c.l.bf16 %v15
  %v240 = vunpack.c.l.bf16 %v16
  %v241 = vunpack.c.l.bf16 %v17
  %v242 = vunpack.c.l.bf16 %v18
  %v243 = vunpack.c.l.bf16 %v19
  %v244 = vunpack.c.l.bf16 %v20
  %v245 = vunpack.c.l.bf16 %v21
  %v246 = vunpack.c.l.bf16 %v22
  %v247 = vunpack.c.l.bf16 %v23
  %v248 = vunpack.c.l.bf16 %v24
  %v249 = vunpack.c.l.bf16 %v25
  %v250 = vunpack.c.l.bf16 %v26
  %v251 = vunpack.c.l.bf16 %v27
  %v252 = vunpack.c.l.bf16 %v28
  %v253 = vunpack.c.l.bf16 %v29
  %v254 = vunpack.c.l.bf16 %v30
  %v255 = vunpack.c.l.bf16 %v31
  %v256 = vunpack.c.l.bf16 %v32
  %v257 = vunpack.c.l.bf16 %v33
  %v258 = vunpack.c.l.bf16 %v34
  %v259 = vunpack.c.l.bf16 %v35
  %v260 = vunpack.c.l.bf16 %v36
  %v261 = vunpack.c.l.bf16 %v37
  %v262 = vunpack.c.l.bf16 %v38
  %v263 = vunpack.c.l.bf16 %v39
  %v264 = vunpack.c.l.bf16 %v40
  %v265 = vunpack.c.l.bf16 %v41
  %v266 = vunpack.c.l.bf16 %v42
  %v267 = vunpack.c.l.bf16 %v43
  %v268 = vunpack.c.l.bf16 %v44
  %v269 = vunpack.c.l.bf16 %v45
  %v270 = vunpack.c.l.bf16 %v46
  %v271 = vunpack.c.l.bf16 %v47
  %v272 = vunpack.c.l.bf16 %v48
  %v273 = vunpack.c.l.bf16 %v49
  %v274 = vunpack.c.l.bf16 %v50
  %v275 = vunpack.c.l.bf16 %v51
  %v276 = vunpack.c.l.bf16 %v52
  %v277 = vunpack.c.l.bf16 %v53
  %v278 = vunpack.c.l.bf16 %v54
  %v279 = vunpack.c.l.bf16 %v55
  %v280 = vunpack.c.l.bf16 %v56
  %v281 = vunpack.c.l.bf16 %v57
  %v282 = vunpack.c.l.bf16 %v58
  %v283 = vunpack.c.l.bf16 %v59
  %v284 = vunpack.c.l.bf16 %v60
  %v285 = vunpack.c.l.bf16 %v61
  %v286 = vunpack.c.l.bf16 %v62
  %v287 = vunpack.c.l.bf16 %v63
  %v288 = vunpack.c.l.bf16 %v64
  %v289 = vunpack.c.l.bf16 %v65
  %v290 = vunpack.c.l.bf16 %v66
  %v291 = vunpack.c.l.bf16 %v67
  %v292 = vunpack.c.l.bf16 %v68
  %v293 = vunpack.c.l.bf16 %v69
  %v294 = vunpack.c.l.bf16 %v70
  %v295 = vunpack.c.l.bf16 %v71
  %v296 = vunpack.c.l.bf16 %v72
  %v297 = vunpack.c.l.bf16 %v73
  %v298 = vunpack.c.l.bf16 %v74
  %v299 = vunpack.c.l.bf16 %v75
  %v300 = vunpack.c.l.bf16 %v76
  %v301 = vunpack.c.l.bf16 %v77
  %v302 = vunpack.c.l.bf16 %v78
  %v303 = vunpack.c.l.bf16 %v79
  %v304 = vunpack.c.l.bf16 %v80
  %v305 = vunpack.c.l.bf16 %v81
  %v306 = vunpack.c.l.bf16 %v82
  %v307 = vunpack.c.l.bf16 %v83
  %v308 = vunpack.c.l.bf16 %v84
  %v309 = vunpack.c.l.bf16 %v85
  %v310 = vunpack.c.l.bf16 %v86
  %v311 = vunpack.c.l.bf16 %v87
  %v312 = vunpack.c.l.bf16 %v88
  %v313 = vunpack.c.l.bf16 %v89
  %v314 = vunpack.c.l.bf16 %v90
  %v315 = vunpack.c.l.bf16 %v91
  %v316 = vunpack.c.l.bf16 %v92
  %v317 = vunpack.c.l.bf16 %v93
  %v318 = vunpack.c.l.bf16 %v94
  %v319 = vunpack.c.l.bf16 %v95
  %v320 = vunpack.c.l.bf16 %v96
  %v321 = vunpack.c.l.bf16 %v97
  %v322 = vunpack.c.l.bf16 %v98
  %v323 = vunpack.c.l.bf16 %v99
  %v324 = vunpack.c.l.bf16 %v100
  %v325 = vunpack.c.l.bf16 %v101
  %v326 = vunpack.c.l.bf16 %v102
  %v327 = vunpack.c.l.bf16 %v103
  %v328 = vunpack.c.l.bf16 %v104
  %v329 = vunpack.c.l.bf16 %v105
  %v330 = vunpack.c.l.bf16 %v106
  %v331 = vunpack.c.l.bf16 %v107
  %v332 = vunpack.c.l.bf16 %v108
  %v333 = vunpack.c.l.bf16 %v109
  %v334 = vunpack.c.l.bf16 %v110
  %v335 = vunpack.c.l.bf16 %v111
  %v336 = vunpack.c.l.bf16 %v112
  %v337 = vunpack.c.l.bf16 %v113
  %v338 = vunpack.c.l.bf16 %v114
  %v339 = vunpack.c.l.bf16 %v115
  %v340 = vunpack.c.l.bf16 %v116
  %v341 = vunpack.c.l.bf16 %v117
  %v342 = vunpack.c.l.bf16 %v118
  %v343 = vunpack.c.l.bf16 %v119
  %v344 = vunpack.c.l.bf16 %v120
  %v345 = vunpack.c.l.bf16 %v121
  %v346 = vunpack.c.l.bf16 %v122
  %v347 = vunpack.c.l.bf16 %v123
  %v348 = vunpack.c.l.bf16 %v124
  %v349 = vunpack.c.l.bf16 %v125
  %v350 = vunpack.c.l.bf16 %v126
  %v351 = vunpack.c.l.bf16 %v127
  %v352 = vunpack.c.l.bf16 %v128
  %v353 = vunpack.c.l.bf16 %v129
  %v354 = vunpack.c.l.bf16 %v130
  %v355 = vunpack.c.l.bf16 %v131
  %v356 = vunpack.c.l.bf16 %v132
  %v357 = vunpack.c.l.bf16 %v133
  %v358 = vunpack.c.l.bf16 %v134
  %v359 = vunpack.c.l.bf16 %v135
  %v360 = vunpack.c.l.bf16 %v136
  %v361 = vunpack.c.l.bf16 %v137
  %v362 = vunpack.c.l.bf16 %v138
  %v363 = vunpack.c.l.bf16 %v139
  %v364 = vunpack.c.l.bf16 %v140
  %v365 = vunpack.c.l.bf16 %v141
  %v366 = vunpack.c.l.bf16 %v142
  %v367 = vunpack.c.l.bf16 %v143
  %v368 = vunpack.c.l.bf16 %v144
  %v369 = vunpack.c.l.bf16 %v145
  %v370 = vunpack.c.l.bf16 %v146
  %v371 = vunpack.c.l.bf16 %v147
  %v372 = vunpack.c.l.bf16 %v148
  %v373 = vunpack.c.l.bf16 %v149
  %v374 = vunpack.c.l.bf16 %v150
  %v375 = vunpack.c.l.bf16 %v151
  %v376 = vunpack.c.l.bf16 %v152
  %v377 = vunpack.c.l.bf16 %v153
  %v378 = vunpack.c.l.bf16 %v154
  %v379 = vunpack.c.l.bf16 %v155
  %v380 = vunpack.c.l.bf16 %v156
  %v381 = vunpack.c.l.bf16 %v157
  %v382 = vunpack.c.l.bf16 %v158
  %v383 = vunpack.c.l.bf16 %v159
  %v384 = vunpack.c.l.bf16 %v160
  %v385 = vunpack.c.l.bf16 %v161
  %v386 = vunpack.c.l.bf16 %v162
  %v387 = vunpack.c.l.bf16 %v163
  %v388 = vunpack.c.l.bf16 %v164
  %v389 = vunpack.c.l.bf16 %v165
  %v390 = vunpack.c.l.bf16 %v166
  %v391 = vunpack.c.l.bf16 %v167
  %v392 = vunpack.c.l.bf16 %v168
  %v393 = vunpack.c.l.bf16 %v169
  %v394 = vunpack.c.l.bf16 %v170
  %v395 = vunpack.c.l.bf16 %v171
  %v396 = vunpack.c.l.bf16 %v172
  %v397 = vunpack.c.l.bf16 %v173
  %v398 = vunpack.c.l.bf16 %v174
  %v399 = vunpack.c.l.bf16 %v175
  %v400 = vunpack.c.l.bf16 %v176
  %v401 = vunpack.c.l.bf16 %v177
  %v402 = vunpack.c.l.bf16 %v178
  %v403 = vunpack.c.l.bf16 %v179
  %v404 = vunpack.c.l.bf16 %v180
  %v405 = vunpack.c.l.bf16 %v181
  %v406 = vunpack.c.l.bf16 %v182
  %v407 = vunpack.c.l.bf16 %v183
  %v408 = vunpack.c.l.bf16 %v184
  %v409 = vunpack.c.l.bf16 %v185
  %v410 = vunpack.c.l.bf16 %v186
  %v411 = vunpack.c.l.bf16 %v187
  %v412 = vunpack.c.l.bf16 %v188
  %v413 = vunpack.c.l.bf16 %v189
  %v414 = vunpack.c.l.bf16 %v190
  %v415 = vunpack.c.l.bf16 %v191
  %v416 = vunpack.c.l.bf16 %v192
  %v417 = vunpack.c.l.bf16 %v193
  %v418 = vunpack.c.l.bf16 %v194
  %v419 = vunpack.c.l.bf16 %v195
  %v420 = vunpack.c.l.bf16 %v196
  %v421 = vunpack.c.l.bf16 %v197
  %v422 = vunpack.c.l.bf16 %v198
  %v423 = vunpack.c.l.bf16 %v199
  %v424 = vunpack.c.l.bf16 %v200
  %v425 = vunpack.c.l.bf16 %v201
  %v426 = vunpack.c.l.bf16 %v202
  %v427 = vunpack.c.l.bf16 %v203
  %v428 = vunpack.c.l.bf16 %v204
  %v429 = vunpack.c.l.bf16 %v205
  %v430 = vunpack.c.l.bf16 %v206
  %v431 = vunpack.c.l.bf16 %v207
  %v432 = vunpack.c.l.bf16 %v208
  %v433 = vunpack.c.l.bf16 %v209
  %v434 = vunpack.c.l.bf16 %v210
  %v435 = vunpack.c.l.bf16 %v211
  %v436 = vunpack.c.l.bf16 %v212
  %v437 = vunpack.c.l.bf16 %v213
  %v438 = vunpack.c.l.bf16 %v214
  %v439 = vunpack.c.l.bf16 %v215
  %v440 = vunpack.c.l.bf16 %v216
  %v441 = vunpack.c.l.bf16 %v217
  %v442 = vunpack.c.l.bf16 %v218
  %v443 = vunpack.c.l.bf16 %v219
  %v444 = vunpack.c.l.bf16 %v220
  %v445 = vunpack.c.l.bf16 %v221
  %v446 = vunpack.c.l.bf16 %v222
  %v447 = vunpack.c.l.bf16 %v223
  %v448 = vunpack.c.l.bf16 %v224
  %v449 = vunpack.c.l.bf16 %v225
  %v450 = vunpack.c.l.bf16 %v226
  %v451 = vunpack.c.l.bf16 %v227
  %v452 = vunpack.c.l.bf16 %v228
  %v453 = vunpack.c.l.bf16 %v229
  %v454 = vunpack.c.l.bf16 %v230
  %v455 = vunpack.c.l.bf16 %v231
  %v456 = vunpack.c.l.bf16 %v232
  %v457 = vunpack.c.l.bf16 %v233
  %v458 = vunpack.c.l.bf16 %v234
  %v459 = vunpack.c.l.bf16 %v235
  %v460 = vunpack.c.l.bf16 %v236
  %v461 = vunpack.c.l.bf16 %v237
  %v462 = vunpack.c.l.bf16 %v238
  %v463 = vadd.f32 %v239, %v240
  %v464 = vadd.f32 %v463, %v241
  %v465 = vadd.f32 %v464, %v242
  %v466 = vadd.f32 %v465, %v243
  %v467 = vadd.f32 %v466, %v244
  %vm468 = vcmask 1040384
  %v469 = vsel %vm468, %v245, 0.0
  %v470 = vadd.f32 %v467, %v469
  %v471 = vrot.slane %v470, 4
  %v472 = vadd.f32 %v470, %v471
  %v473 = vrot.slane %v472, 2
  %v474 = vadd.f32 %v472, %v473
  %v475 = vrot.slane %v474, 1
  %v476 = vadd.f32 %v474, %v475
  %v477 = vadd.f32 %v246, %v247
  %v478 = vadd.f32 %v477, %v248
  %v479 = vadd.f32 %v478, %v249
  %v480 = vadd.f32 %v479, %v250
  %v481 = vadd.f32 %v480, %v251
  %v482 = vsel %vm468, %v252, 0.0
  %v483 = vadd.f32 %v481, %v482
  %v484 = vrot.slane %v483, 4
  %v485 = vadd.f32 %v483, %v484
  %v486 = vrot.slane %v485, 2
  %v487 = vadd.f32 %v485, %v486
  %v488 = vrot.slane %v487, 1
  %v489 = vadd.f32 %v487, %v488
  %v490 = vadd.f32 %v253, %v254
  %v491 = vadd.f32 %v490, %v255
  %v492 = vadd.f32 %v491, %v256
  %v493 = vadd.f32 %v492, %v257
  %v494 = vadd.f32 %v493, %v258
  %v495 = vsel %vm468, %v259, 0.0
  %v496 = vadd.f32 %v494, %v495
  %v497 = vrot.slane %v496, 4
  %v498 = vadd.f32 %v496, %v497
  %v499 = vrot.slane %v498, 2
  %v500 = vadd.f32 %v498, %v499
  %v501 = vrot.slane %v500, 1
  %v502 = vadd.f32 %v500, %v501
  %v503 = vadd.f32 %v260, %v261
  %v504 = vadd.f32 %v503, %v262
  %v505 = vadd.f32 %v504, %v263
  %v506 = vadd.f32 %v505, %v264
  %v507 = vadd.f32 %v506, %v265
  %v508 = vsel %vm468, %v266, 0.0
  %v509 = vadd.f32 %v507, %v508
  %v510 = vrot.slane %v509, 4
  %v511 = vadd.f32 %v509, %v510
  %v512 = vrot.slane %v511, 2
  %v513 = vadd.f32 %v511, %v512
  %v514 = vrot.slane %v513, 1
  %v515 = vadd.f32 %v513, %v514
  %v516 = vadd.f32 %v267, %v268
  %v517 = vadd.f32 %v516, %v269
  %v518 = vadd.f32 %v517, %v270
  %v519 = vadd.f32 %v518, %v271
  %v520 = vadd.f32 %v519, %v272
  %v521 = vsel %vm468, %v273, 0.0
  %v522 = vadd.f32 %v520, %v521
  %v523 = vrot.slane %v522, 4
  %v524 = vadd.f32 %v522, %v523
  %v525 = vrot.slane %v524, 2
  %v526 = vadd.f32 %v524, %v525
  %v527 = vrot.slane %v526, 1
  %v528 = vadd.f32 %v526, %v527
  %v529 = vadd.f32 %v274, %v275
  %v530 = vadd.f32 %v529, %v276
  %v531 = vadd.f32 %v530, %v277
  %v532 = vadd.f32 %v531, %v278
  %v533 = vadd.f32 %v532, %v279
  %v534 = vsel %vm468, %v280, 0.0
  %v535 = vadd.f32 %v533, %v534
  %v536 = vrot.slane %v535, 4
  %v537 = vadd.f32 %v535, %v536
  %v538 = vrot.slane %v537, 2
  %v539 = vadd.f32 %v537, %v538
  %v540 = vrot.slane %v539, 1
  %v541 = vadd.f32 %v539, %v540
  %v542 = vadd.f32 %v281, %v282
  %v543 = vadd.f32 %v542, %v283
  %v544 = vadd.f32 %v543, %v284
  %v545 = vadd.f32 %v544, %v285
  %v546 = vadd.f32 %v545, %v286
  %v547 = vsel %vm468, %v287, 0.0
  %v548 = vadd.f32 %v546, %v547
  %v549 = vrot.slane %v548, 4
  %v550 = vadd.f32 %v548, %v549
  %v551 = vrot.slane %v550, 2
  %v552 = vadd.f32 %v550, %v551
  %v553 = vrot.slane %v552, 1
  %v554 = vadd.f32 %v552, %v553
  %v555 = vadd.f32 %v288, %v289
  %v556 = vadd.f32 %v555, %v290
  %v557 = vadd.f32 %v556, %v291
  %v558 = vadd.f32 %v557, %v292
  %v559 = vadd.f32 %v558, %v293
  %v560 = vsel %vm468, %v294, 0.0
  %v561 = vadd.f32 %v559, %v560
  %v562 = vrot.slane %v561, 4
  %v563 = vadd.f32 %v561, %v562
  %v564 = vrot.slane %v563, 2
  %v565 = vadd.f32 %v563, %v564
  %v566 = vrot.slane %v565, 1
  %v567 = vadd.f32 %v565, %v566
  %v568 = vadd.f32 %v295, %v296
  %v569 = vadd.f32 %v568, %v297
  %v570 = vadd.f32 %v569, %v298
  %v571 = vadd.f32 %v570, %v299
  %v572 = vadd.f32 %v571, %v300
  %v573 = vsel %vm468, %v301, 0.0
  %v574 = vadd.f32 %v572, %v573
  %v575 = vrot.slane %v574, 4
  %v576 = vadd.f32 %v574, %v575
  %v577 = vrot.slane %v576, 2
  %v578 = vadd.f32 %v576, %v577
  %v579 = vrot.slane %v578, 1
  %v580 = vadd.f32 %v578, %v579
  %v581 = vadd.f32 %v302, %v303
  %v582 = vadd.f32 %v581, %v304
  %v583 = vadd.f32 %v582, %v305
  %v584 = vadd.f32 %v583, %v306
  %v585 = vadd.f32 %v584, %v307
  %v586 = vsel %vm468, %v308, 0.0
  %v587 = vadd.f32 %v585, %v586
  %v588 = vrot.slane %v587, 4
  %v589 = vadd.f32 %v587, %v588
  %v590 = vrot.slane %v589, 2
  %v591 = vadd.f32 %v589, %v590
  %v592 = vrot.slane %v591, 1
  %v593 = vadd.f32 %v591, %v592
  %v594 = vadd.f32 %v309, %v310
  %v595 = vadd.f32 %v594, %v311
  %v596 = vadd.f32 %v595, %v312
  %v597 = vadd.f32 %v596, %v313
  %v598 = vadd.f32 %v597, %v314
  %v599 = vsel %vm468, %v315, 0.0
  %v600 = vadd.f32 %v598, %v599
  %v601 = vrot.slane %v600, 4
  %v602 = vadd.f32 %v600, %v601
  %v603 = vrot.slane %v602, 2
  %v604 = vadd.f32 %v602, %v603
  %v605 = vrot.slane %v604, 1
  %v606 = vadd.f32 %v604, %v605
  %v607 = vadd.f32 %v316, %v317
  %v608 = vadd.f32 %v607, %v318
  %v609 = vadd.f32 %v608, %v319
  %v610 = vadd.f32 %v609, %v320
  %v611 = vadd.f32 %v610, %v321
  %v612 = vsel %vm468, %v322, 0.0
  %v613 = vadd.f32 %v611, %v612
  %v614 = vrot.slane %v613, 4
  %v615 = vadd.f32 %v613, %v614
  %v616 = vrot.slane %v615, 2
  %v617 = vadd.f32 %v615, %v616
  %v618 = vrot.slane %v617, 1
  %v619 = vadd.f32 %v617, %v618
  %v620 = vadd.f32 %v323, %v324
  %v621 = vadd.f32 %v620, %v325
  %v622 = vadd.f32 %v621, %v326
  %v623 = vadd.f32 %v622, %v327
  %v624 = vadd.f32 %v623, %v328
  %v625 = vsel %vm468, %v329, 0.0
  %v626 = vadd.f32 %v624, %v625
  %v627 = vrot.slane %v626, 4
  %v628 = vadd.f32 %v626, %v627
  %v629 = vrot.slane %v628, 2
  %v630 = vadd.f32 %v628, %v629
  %v631 = vrot.slane %v630, 1
  %v632 = vadd.f32 %v630, %v631
  %v633 = vadd.f32 %v330, %v331
  %v634 = vadd.f32 %v633, %v332
  %v635 = vadd.f32 %v634, %v333
  %v636 = vadd.f32 %v635, %v334
  %v637 = vadd.f32 %v636, %v335
  %v638 = vsel %vm468, %v336, 0.0
  %v639 = vadd.f32 %v637, %v638
  %v640 = vrot.slane %v639, 4
  %v641 = vadd.f32 %v639, %v640
  %v642 = vrot.slane %v641, 2
  %v643 = vadd.f32 %v641, %v642
  %v644 = vrot.slane %v643, 1
  %v645 = vadd.f32 %v643, %v644
  %v646 = vadd.f32 %v337, %v338
  %v647 = vadd.f32 %v646, %v339
  %v648 = vadd.f32 %v647, %v340
  %v649 = vadd.f32 %v648, %v341
  %v650 = vadd.f32 %v649, %v342
  %v651 = vsel %vm468, %v343, 0.0
  %v652 = vadd.f32 %v650, %v651
  %v653 = vrot.slane %v652, 4
  %v654 = vadd.f32 %v652, %v653
  %v655 = vrot.slane %v654, 2
  %v656 = vadd.f32 %v654, %v655
  %v657 = vrot.slane %v656, 1
  %v658 = vadd.f32 %v656, %v657
  %v659 = vadd.f32 %v344, %v345
  %v660 = vadd.f32 %v659, %v346
  %v661 = vadd.f32 %v660, %v347
  %v662 = vadd.f32 %v661, %v348
  %v663 = vadd.f32 %v662, %v349
  %v664 = vsel %vm468, %v350, 0.0
  %v665 = vadd.f32 %v663, %v664
  %v666 = vrot.slane %v665, 4
  %v667 = vadd.f32 %v665, %v666
  %v668 = vrot.slane %v667, 2
  %v669 = vadd.f32 %v667, %v668
  %v670 = vrot.slane %v669, 1
  %v671 = vadd.f32 %v669, %v670
  %v672 = vadd.f32 %v351, %v352
  %v673 = vadd.f32 %v672, %v353
  %v674 = vadd.f32 %v673, %v354
  %v675 = vadd.f32 %v674, %v355
  %v676 = vadd.f32 %v675, %v356
  %v677 = vsel %vm468, %v357, 0.0
  %v678 = vadd.f32 %v676, %v677
  %v679 = vrot.slane %v678, 4
  %v680 = vadd.f32 %v678, %v679
  %v681 = vrot.slane %v680, 2
  %v682 = vadd.f32 %v680, %v681
  %v683 = vrot.slane %v682, 1
  %v684 = vadd.f32 %v682, %v683
  %v685 = vadd.f32 %v358, %v359
  %v686 = vadd.f32 %v685, %v360
  %v687 = vadd.f32 %v686, %v361
  %v688 = vadd.f32 %v687, %v362
  %v689 = vadd.f32 %v688, %v363
  %v690 = vsel %vm468, %v364, 0.0
  %v691 = vadd.f32 %v689, %v690
  %v692 = vrot.slane %v691, 4
  %v693 = vadd.f32 %v691, %v692
  %v694 = vrot.slane %v693, 2
  %v695 = vadd.f32 %v693, %v694
  %v696 = vrot.slane %v695, 1
  %v697 = vadd.f32 %v695, %v696
  %v698 = vadd.f32 %v365, %v366
  %v699 = vadd.f32 %v698, %v367
  %v700 = vadd.f32 %v699, %v368
  %v701 = vadd.f32 %v700, %v369
  %v702 = vadd.f32 %v701, %v370
  %v703 = vsel %vm468, %v371, 0.0
  %v704 = vadd.f32 %v702, %v703
  %v705 = vrot.slane %v704, 4
  %v706 = vadd.f32 %v704, %v705
  %v707 = vrot.slane %v706, 2
  %v708 = vadd.f32 %v706, %v707
  %v709 = vrot.slane %v708, 1
  %v710 = vadd.f32 %v708, %v709
  %v711 = vadd.f32 %v372, %v373
  %v712 = vadd.f32 %v711, %v374
  %v713 = vadd.f32 %v712, %v375
  %v714 = vadd.f32 %v713, %v376
  %v715 = vadd.f32 %v714, %v377
  %v716 = vsel %vm468, %v378, 0.0
  %v717 = vadd.f32 %v715, %v716
  %v718 = vrot.slane %v717, 4
  %v719 = vadd.f32 %v717, %v718
  %v720 = vrot.slane %v719, 2
  %v721 = vadd.f32 %v719, %v720
  %v722 = vrot.slane %v721, 1
  %v723 = vadd.f32 %v721, %v722
  %v724 = vadd.f32 %v379, %v380
  %v725 = vadd.f32 %v724, %v381
  %v726 = vadd.f32 %v725, %v382
  %v727 = vadd.f32 %v726, %v383
  %v728 = vadd.f32 %v727, %v384
  %v729 = vsel %vm468, %v385, 0.0
  %v730 = vadd.f32 %v728, %v729
  %v731 = vrot.slane %v730, 4
  %v732 = vadd.f32 %v730, %v731
  %v733 = vrot.slane %v732, 2
  %v734 = vadd.f32 %v732, %v733
  %v735 = vrot.slane %v734, 1
  %v736 = vadd.f32 %v734, %v735
  %v737 = vadd.f32 %v386, %v387
  %v738 = vadd.f32 %v737, %v388
  %v739 = vadd.f32 %v738, %v389
  %v740 = vadd.f32 %v739, %v390
  %v741 = vadd.f32 %v740, %v391
  %v742 = vsel %vm468, %v392, 0.0
  %v743 = vadd.f32 %v741, %v742
  %v744 = vrot.slane %v743, 4
  %v745 = vadd.f32 %v743, %v744
  %v746 = vrot.slane %v745, 2
  %v747 = vadd.f32 %v745, %v746
  %v748 = vrot.slane %v747, 1
  %v749 = vadd.f32 %v747, %v748
  %v750 = vadd.f32 %v393, %v394
  %v751 = vadd.f32 %v750, %v395
  %v752 = vadd.f32 %v751, %v396
  %v753 = vadd.f32 %v752, %v397
  %v754 = vadd.f32 %v753, %v398
  %v755 = vsel %vm468, %v399, 0.0
  %v756 = vadd.f32 %v754, %v755
  %v757 = vrot.slane %v756, 4
  %v758 = vadd.f32 %v756, %v757
  %v759 = vrot.slane %v758, 2
  %v760 = vadd.f32 %v758, %v759
  %v761 = vrot.slane %v760, 1
  %v762 = vadd.f32 %v760, %v761
  %v763 = vadd.f32 %v400, %v401
  %v764 = vadd.f32 %v763, %v402
  %v765 = vadd.f32 %v764, %v403
  %v766 = vadd.f32 %v765, %v404
  %v767 = vadd.f32 %v766, %v405
  %v768 = vsel %vm468, %v406, 0.0
  %v769 = vadd.f32 %v767, %v768
  %v770 = vrot.slane %v769, 4
  %v771 = vadd.f32 %v769, %v770
  %v772 = vrot.slane %v771, 2
  %v773 = vadd.f32 %v771, %v772
  %v774 = vrot.slane %v773, 1
  %v775 = vadd.f32 %v773, %v774
  %v776 = vadd.f32 %v407, %v408
  %v777 = vadd.f32 %v776, %v409
  %v778 = vadd.f32 %v777, %v410
  %v779 = vadd.f32 %v778, %v411
  %v780 = vadd.f32 %v779, %v412
  %v781 = vsel %vm468, %v413, 0.0
  %v782 = vadd.f32 %v780, %v781
  %v783 = vrot.slane %v782, 4
  %v784 = vadd.f32 %v782, %v783
  %v785 = vrot.slane %v784, 2
  %v786 = vadd.f32 %v784, %v785
  %v787 = vrot.slane %v786, 1
  %v788 = vadd.f32 %v786, %v787
  %v789 = vadd.f32 %v414, %v415
  %v790 = vadd.f32 %v789, %v416
  %v791 = vadd.f32 %v790, %v417
  %v792 = vadd.f32 %v791, %v418
  %v793 = vadd.f32 %v792, %v419
  %v794 = vsel %vm468, %v420, 0.0
  %v795 = vadd.f32 %v793, %v794
  %v796 = vrot.slane %v795, 4
  %v797 = vadd.f32 %v795, %v796
  %v798 = vrot.slane %v797, 2
  %v799 = vadd.f32 %v797, %v798
  %v800 = vrot.slane %v799, 1
  %v801 = vadd.f32 %v799, %v800
  %v802 = vadd.f32 %v421, %v422
  %v803 = vadd.f32 %v802, %v423
  %v804 = vadd.f32 %v803, %v424
  %v805 = vadd.f32 %v804, %v425
  %v806 = vadd.f32 %v805, %v426
  %v807 = vsel %vm468, %v427, 0.0
  %v808 = vadd.f32 %v806, %v807
  %v809 = vrot.slane %v808, 4
  %v810 = vadd.f32 %v808, %v809
  %v811 = vrot.slane %v810, 2
  %v812 = vadd.f32 %v810, %v811
  %v813 = vrot.slane %v812, 1
  %v814 = vadd.f32 %v812, %v813
  %v815 = vadd.f32 %v428, %v429
  %v816 = vadd.f32 %v815, %v430
  %v817 = vadd.f32 %v816, %v431
  %v818 = vadd.f32 %v817, %v432
  %v819 = vadd.f32 %v818, %v433
  %v820 = vsel %vm468, %v434, 0.0
  %v821 = vadd.f32 %v819, %v820
  %v822 = vrot.slane %v821, 4
  %v823 = vadd.f32 %v821, %v822
  %v824 = vrot.slane %v823, 2
  %v825 = vadd.f32 %v823, %v824
  %v826 = vrot.slane %v825, 1
  %v827 = vadd.f32 %v825, %v826
  %v828 = vadd.f32 %v435, %v436
  %v829 = vadd.f32 %v828, %v437
  %v830 = vadd.f32 %v829, %v438
  %v831 = vadd.f32 %v830, %v439
  %v832 = vadd.f32 %v831, %v440
  %v833 = vsel %vm468, %v441, 0.0
  %v834 = vadd.f32 %v832, %v833
  %v835 = vrot.slane %v834, 4
  %v836 = vadd.f32 %v834, %v835
  %v837 = vrot.slane %v836, 2
  %v838 = vadd.f32 %v836, %v837
  %v839 = vrot.slane %v838, 1
  %v840 = vadd.f32 %v838, %v839
  %v841 = vadd.f32 %v442, %v443
  %v842 = vadd.f32 %v841, %v444
  %v843 = vadd.f32 %v842, %v445
  %v844 = vadd.f32 %v843, %v446
  %v845 = vadd.f32 %v844, %v447
  %v846 = vsel %vm468, %v448, 0.0
  %v847 = vadd.f32 %v845, %v846
  %v848 = vrot.slane %v847, 4
  %v849 = vadd.f32 %v847, %v848
  %v850 = vrot.slane %v849, 2
  %v851 = vadd.f32 %v849, %v850
  %v852 = vrot.slane %v851, 1
  %v853 = vadd.f32 %v851, %v852
  %v854 = vadd.f32 %v449, %v450
  %v855 = vadd.f32 %v854, %v451
  %v856 = vadd.f32 %v855, %v452
  %v857 = vadd.f32 %v856, %v453
  %v858 = vadd.f32 %v857, %v454
  %v859 = vsel %vm468, %v455, 0.0
  %v860 = vadd.f32 %v858, %v859
  %v861 = vrot.slane %v860, 4
  %v862 = vadd.f32 %v860, %v861
  %v863 = vrot.slane %v862, 2
  %v864 = vadd.f32 %v862, %v863
  %v865 = vrot.slane %v864, 1
  %v866 = vadd.f32 %v864, %v865
  %v867 = vadd.f32 %v456, %v457
  %v868 = vadd.f32 %v867, %v458
  %v869 = vadd.f32 %v868, %v459
  %v870 = vadd.f32 %v869, %v460
  %v871 = vadd.f32 %v870, %v461
  %v872 = vsel %vm468, %v462, 0.0
  %v873 = vadd.f32 %v871, %v872
  %v874 = vrot.slane %v873, 4
  %v875 = vadd.f32 %v873, %v874
  %v876 = vrot.slane %v875, 2
  %v877 = vadd.f32 %v875, %v876
  %v878 = vrot.slane %v877, 1
  %v879 = vadd.f32 %v877, %v878
  %v880 = vrcp.pop 49.0
  %v881 = vmul.f32 %v476, %v880
  %v882 = vmul.f32 %v489, %v880
  %v883 = vmul.f32 %v502, %v880
  %v884 = vmul.f32 %v515, %v880
  %v885 = vmul.f32 %v528, %v880
  %v886 = vmul.f32 %v541, %v880
  %v887 = vmul.f32 %v554, %v880
  %v888 = vmul.f32 %v567, %v880
  %v889 = vmul.f32 %v580, %v880
  %v890 = vmul.f32 %v593, %v880
  %v891 = vmul.f32 %v606, %v880
  %v892 = vmul.f32 %v619, %v880
  %v893 = vmul.f32 %v632, %v880
  %v894 = vmul.f32 %v645, %v880
  %v895 = vmul.f32 %v658, %v880
  %v896 = vmul.f32 %v671, %v880
  %v897 = vmul.f32 %v684, %v880
  %v898 = vmul.f32 %v697, %v880
  %v899 = vmul.f32 %v710, %v880
  %v900 = vmul.f32 %v723, %v880
  %v901 = vmul.f32 %v736, %v880
  %v902 = vmul.f32 %v749, %v880
  %v903 = vmul.f32 %v762, %v880
  %v904 = vmul.f32 %v775, %v880
  %v905 = vmul.f32 %v788, %v880
  %v906 = vmul.f32 %v801, %v880
  %v907 = vmul.f32 %v814, %v880
  %v908 = vmul.f32 %v827, %v880
  %v909 = vmul.f32 %v840, %v880
  %v910 = vmul.f32 %v853, %v880
  %v911 = vmul.f32 %v866, %v880
  %v912 = vmul.f32 %v879, %v880
  %v913 = vpack.c.bf16 %v881, %v881
  %v914 = vpack.c.bf16 %v882, %v882
  %v915 = vpack.c.bf16 %v883, %v883
  %v916 = vpack.c.bf16 %v884, %v884
  %v917 = vpack.c.bf16 %v885, %v885
  %v918 = vpack.c.bf16 %v886, %v886
  %v919 = vpack.c.bf16 %v887, %v887
  %v920 = vpack.c.bf16 %v888, %v888
  %v921 = vpack.c.bf16 %v889, %v889
  %v922 = vpack.c.bf16 %v890, %v890
  %v923 = vpack.c.bf16 %v891, %v891
  %v924 = vpack.c.bf16 %v892, %v892
  %v925 = vpack.c.bf16 %v893, %v893
  %v926 = vpack.c.bf16 %v894, %v894
  %v927 = vpack.c.bf16 %v895, %v895
  %v928 = vpack.c.bf16 %v896, %v896
  %v929 = vpack.c.bf16 %v897, %v897
  %v930 = vpack.c.bf16 %v898, %v898
  %v931 = vpack.c.bf16 %v899, %v899
  %v932 = vpack.c.bf16 %v900, %v900
  %v933 = vpack.c.bf16 %v901, %v901
  %v934 = vpack.c.bf16 %v902, %v902
  %v935 = vpack.c.bf16 %v903, %v903
  %v936 = vpack.c.bf16 %v904, %v904
  %v937 = vpack.c.bf16 %v905, %v905
  %v938 = vpack.c.bf16 %v906, %v906
  %v939 = vpack.c.bf16 %v907, %v907
  %v940 = vpack.c.bf16 %v908, %v908
  %v941 = vpack.c.bf16 %v909, %v909
  %v942 = vpack.c.bf16 %v910, %v910
  %v943 = vpack.c.bf16 %v911, %v911
  %v944 = vpack.c.bf16 %v912, %v912
  %v945 = vld [vmem:[%s1] sm:$0xf]
  %v946 = vld [vmem:[%s1 + $0x4] sm:$0xf]
  %v947 = vld [vmem:[%s1 + $0x8] sm:$0xf]
  %v948 = vld [vmem:[%s1 + $0xc] sm:$0xf]
  %v949 = vld [vmem:[%s1 + $0x10] sm:$0xf]
  %v950 = vld [vmem:[%s1 + $0x14] sm:$0xf]
  %v951 = vld [vmem:[%s1 + $0x18] sm:$0xf]
  %v952 = vld [vmem:[%s1 + $0x1c] sm:$0xf]
  %v953 = vld [vmem:[%s1 + $0x20] sm:$0xf]
  %v954 = vld [vmem:[%s1 + $0x24] sm:$0xf]
  %v955 = vld [vmem:[%s1 + $0x28] sm:$0xf]
  %v956 = vld [vmem:[%s1 + $0x2c] sm:$0xf]
  %v957 = vld [vmem:[%s1 + $0x30] sm:$0xf]
  %v958 = vld [vmem:[%s1 + $0x34] sm:$0xf]
  %v959 = vld [vmem:[%s1 + $0x38] sm:$0xf]
  %v960 = vld [vmem:[%s1 + $0x3c] sm:$0xf]
  %v961 = vld [vmem:[%s2] sm:$0x1]
  %v963 = vlaneseq
  %v964 = vshrl.u32 %v963, 7
  %v965 = vsub.s32 0, %v964
  %v966 = vrot.slane %v961, %v965
  %v1000 = vunpack.c.l.b16 %v913
  %v1001 = vunpack.c.l.b16 %v914
  %v1002 = vunpack.c.l.b16 %v915
  %v1003 = vunpack.c.l.b16 %v916
  %v1004 = vunpack.c.l.b16 %v917
  %v1005 = vunpack.c.l.b16 %v918
  %v1006 = vunpack.c.l.b16 %v919
  %v1007 = vunpack.c.l.b16 %v920
  %v1008 = vunpack.c.l.b16 %v921
  %v1009 = vunpack.c.l.b16 %v922
  %v1010 = vunpack.c.l.b16 %v923
  %v1011 = vunpack.c.l.b16 %v924
  %v1012 = vunpack.c.l.b16 %v925
  %v1013 = vunpack.c.l.b16 %v926
  %v1014 = vunpack.c.l.b16 %v927
  %v1015 = vunpack.c.l.b16 %v928
  %v1016 = vunpack.c.l.b16 %v929
  %v1017 = vunpack.c.l.b16 %v930
  %v1018 = vunpack.c.l.b16 %v931
  %v1019 = vunpack.c.l.b16 %v932
  %v1020 = vunpack.c.l.b16 %v933
  %v1021 = vunpack.c.l.b16 %v934
  %v1022 = vunpack.c.l.b16 %v935
  %v1023 = vunpack.c.l.b16 %v936
  %v1024 = vunpack.c.l.b16 %v937
  %v1025 = vunpack.c.l.b16 %v938
  %v1026 = vunpack.c.l.b16 %v939
  %v1027 = vunpack.c.l.b16 %v940
  %v1028 = vunpack.c.l.b16 %v941
  %v1029 = vunpack.c.l.b16 %v942
  %v1030 = vunpack.c.l.b16 %v943
  %v1031 = vunpack.c.l.b16 %v944
  %vm1032 = vcmask 1041409
  %v1033 = vsel %vm1032, %v1001, %v1000
  %vm1034 = vcmask 1042434
  %v1035 = vsel %vm1034, %v1002, %v1033
  %vm1036 = vcmask 1043459
  %v1037 = vsel %vm1036, %v1003, %v1035
  %vm1038 = vcmask 1044484
  %v1039 = vsel %vm1038, %v1004, %v1037
  %vm1040 = vcmask 1045509
  %v1041 = vsel %vm1040, %v1005, %v1039
  %vm1042 = vcmask 1046534
  %v1043 = vsel %vm1042, %v1006, %v1041
  %vm1044 = vcmask 1047559
  %v1045 = vsel %vm1044, %v1007, %v1043
  %v1046 = vsel %vm1032, %v1009, %v1008
  %v1047 = vsel %vm1034, %v1010, %v1046
  %v1048 = vsel %vm1036, %v1011, %v1047
  %v1049 = vsel %vm1038, %v1012, %v1048
  %v1050 = vsel %vm1040, %v1013, %v1049
  %v1051 = vsel %vm1042, %v1014, %v1050
  %v1052 = vsel %vm1044, %v1015, %v1051
  %v1053 = vsel %vm1032, %v1017, %v1016
  %v1054 = vsel %vm1034, %v1018, %v1053
  %v1055 = vsel %vm1036, %v1019, %v1054
  %v1056 = vsel %vm1038, %v1020, %v1055
  %v1057 = vsel %vm1040, %v1021, %v1056
  %v1058 = vsel %vm1042, %v1022, %v1057
  %v1059 = vsel %vm1044, %v1023, %v1058
  %v1060 = vsel %vm1032, %v1025, %v1024
  %v1061 = vsel %vm1034, %v1026, %v1060
  %v1062 = vsel %vm1036, %v1027, %v1061
  %v1063 = vsel %vm1038, %v1028, %v1062
  %v1064 = vsel %vm1040, %v1029, %v1063
  %v1065 = vsel %vm1042, %v1030, %v1064
  %v1066 = vsel %vm1044, %v1031, %v1065
  %v1067 = vpack.c.b16 %v1052, %v1045
  %v1068 = vpack.c.b16 %v1066, %v1059
  %v1087 = vunpack.c.l.b16 %v945
  %v1088 = vunpack.c.l.b16 %v946
  %v1089 = vunpack.c.l.b16 %v947
  %v1090 = vunpack.c.l.b16 %v948
  %v1091 = vunpack.c.l.b16 %v949
  %v1092 = vunpack.c.l.b16 %v950
  %v1093 = vunpack.c.l.b16 %v951
  %v1094 = vunpack.c.l.b16 %v952
  %v1095 = vunpack.c.l.b16 %v953
  %v1096 = vunpack.c.l.b16 %v954
  %v1097 = vunpack.c.l.b16 %v955
  %v1098 = vunpack.c.l.b16 %v956
  %v1099 = vunpack.c.l.b16 %v957
  %v1100 = vunpack.c.l.b16 %v958
  %v1101 = vunpack.c.l.b16 %v959
  %v1102 = vunpack.c.l.b16 %v960
  %v1103 = vpack.c.b16 %v1088, %v1087
  %v1104 = vpack.c.b16 %v1090, %v1089
  %v1105 = vpack.c.b16 %v1092, %v1091
  %v1106 = vpack.c.b16 %v1094, %v1093
  %v1107 = vpack.c.b16 %v1096, %v1095
  %v1108 = vpack.c.b16 %v1098, %v1097
  %v1109 = vpack.c.b16 %v1100, %v1099
  %v1110 = vpack.c.b16 %v1102, %v1101
  %1119 = vmatprep.subr.bf16.mxu0 0
  %1120 = vmatpush1.bf16.msra.mxu0 %v1103
  %1121 = vmatprep.subr.bf16.mxu0 0
  %1122 = vmatpush1.bf16.msra.mxu0 %v1104
  %1123 = vmatprep.subr.bf16.mxu0 0
  %1124 = vmatpush1.bf16.msra.mxu0 %v1105
  %1125 = vmatprep.subr.bf16.mxu0 0
  %1126 = vmatpush1.bf16.msra.mxu0 %v1106
  %1127 = vmatprep.subr.bf16.mxu0 0
  %1128 = vmatpush1.bf16.msra.mxu0 %v1107
  %1129 = vmatprep.subr.bf16.mxu0 0
  %1130 = vmatpush1.bf16.msra.mxu0 %v1108
  %1131 = vmatprep.subr.bf16.mxu0 0
  %1132 = vmatpush1.bf16.msra.mxu0 %v1109
  %1133 = vmatprep.subr.bf16.mxu0 0
  %1134 = vmatpush1.bf16.msra.mxu0 %v1110
  %1135 = vmatprep.subr.bf16.mxu0 0
  %1136 = vmatpush1.bf16.msra.mxu0 0
  %1137 = vmatprep.subr.bf16.mxu0 0
  %1138 = vmatpush1.bf16.msra.mxu0 0
  %1139 = vmatprep.subr.bf16.mxu0 0
  %1140 = vmatpush1.bf16.msra.mxu0 0
  %1141 = vmatprep.subr.bf16.mxu0 0
  %1142 = vmatpush1.bf16.msra.mxu0 0
  %1143 = vmatprep.subr.bf16.mxu0 0
  %1144 = vmatpush1.bf16.msra.mxu0 0
  %1145 = vmatprep.subr.bf16.mxu0 0
  %1146 = vmatpush1.bf16.msra.mxu0 0
  %1147 = vmatprep.subr.bf16.mxu0 0
  %1148 = vmatpush1.bf16.msra.mxu0 0
  %1149 = vmatprep.subr.bf16.mxu0 0
  %1150 = vmatpush1.bf16.msra.mxu0 0
  %1151 = vmatprep.mubr.bf16.mxu0 0
  %1152 = vmatmul.mubr.bf16.gmra.mrb[0].mxu0 %v1067
  %v1153 = vpop.f32.mrb[0].mxu0
  %v1154 = vadd.f32 %v966, %v1153
  %v1155 = vpop.f32.mrb[0].mxu0
  %v1156 = vpop.f32.mrb[0].mxu0
  %v1157 = vadd.f32 %v966, %v1156
  %v1158 = vpop.f32.mrb[0].mxu0
  %1159 = vmatprep.mubr.bf16.mxu0 0
  %1160 = vmatmul.mubr.bf16.gmra.mrb[0].mxu0 %v1068
  %v1161 = vpop.f32.mrb[0].mxu0
  %v1162 = vadd.f32 %v966, %v1161
  %v1163 = vpop.f32.mrb[0].mxu0
  %v1164 = vpop.f32.mrb[0].mxu0
  %v1165 = vadd.f32 %v966, %v1164
  %v1166 = vpop.f32.mrb[0].mxu0
  %1167 = vdwg.mxu0
  %1168 = vst [vmem:[%s3] sm:$0xff] %v1154
  %1169 = vst [vmem:[%s3 + $0x8] sm:$0xff] %v1157
  %1170 = vst [vmem:[%s3 + $0x10] sm:$0xff] %v1162
  %1171 = vst [vmem:[%s3 + $0x18] sm:$0xff] %v1165
  // Predicated region
  $region14: #{faster_rcnn_forward.17} parent=0 // pred_check
    _
  $region15: #{faster_rcnn_forward.17} parent=0 // pred_check_branch
    %1173 = sbr.rel (0) target = $region17
  $region16: #{faster_rcnn_forward.17} parent=0 // pred_region
    _
  $region17: #{faster_rcnn_forward.17} parent=0 // pred_fallthru
    _
  // Predicated region
  $region18: #{faster_rcnn_forward.17} parent=0 // pred_check
    _
  $region19: #{faster_rcnn_forward.17} parent=0 // pred_check_branch
    %1175 = sbr.rel (0) target = $region21
  $region20: #{faster_rcnn_forward.17} parent=0 // pred_region
    _
  $region21: #{faster_rcnn_forward.17} parent=0 // pred_fallthru
    _

</llo_original>
